<compile_context>
chip_gen: v6e
topology: v6e:2x2x1
jax: 0.10.0
libtpu: 0.0.40
codegen_flags: <defaults>
</compile_context>

<pallas_src>
import jax
import jax.numpy as jnp
from jax.experimental import pallas as pl
from jax.experimental.pallas import tpu as pltpu


def _head_kernel(x_ref, w1t_ref, b1_ref, w2_ref, b2_ref, o_ref):
    # x_ref:   (TB, D) f32   feature tile, native [B, D] layout
    # w1t_ref: (D, H)  bf16  first Linear weight, pre-transposed/cast at init
    # b1_ref:  (1, H)  f32   first Linear bias (lane-dense row)
    # w2_ref:  (1, H)  f32   second Linear weight (lane-dense row)
    # b2_ref:  (1,)    f32   second Linear bias (SMEM scalar)
    # o_ref:   (TB, 1) f32   sigmoid output column
    x_bf = x_ref[...].astype(jnp.bfloat16)                      # VPU cast, hidden under DMA
    h = jnp.dot(x_bf, w1t_ref[...],
                preferred_element_type=jnp.float32)             # MXU, H on N axis, f32 acc
    # Dropout(p=0.2) is identity in eval mode.
    h = jnp.maximum(h + b1_ref[...], 0.0)                       # bias + ReLU (VPU)
    # Linear(H -> 1): row-broadcast multiply + lane (XLU) reduce over H.
    logits = jnp.sum(h * w2_ref[...], axis=1, keepdims=True) + b2_ref[0]
    o_ref[...] = jax.nn.sigmoid(logits)                         # EUP


def prepare_head_params(w1, b1, w2, b2):
    """One-time conversion of PyTorch-layout Linear params to kernel layouts.

    Call this at parameter load / init time, NOT per forward call:
      w1: [H, D] (PyTorch Linear.weight), b1: [H], w2: [H], b2: [1] or scalar.
    """
    H, D = w1.shape
    return {
        "w1t": jnp.asarray(w1).T.astype(jnp.bfloat16),           # [D, H] bf16, done once
        "b1": jnp.asarray(b1, jnp.float32).reshape(1, H),
        "w2": jnp.asarray(w2, jnp.float32).reshape(1, H),
        "b2": jnp.asarray(b2, jnp.float32).reshape(1),
    }


def counterfactual_task_head(features, params, *, tb=128):
    """features: [B, D] f32 (pooled_video ++ pooled_text).
    params: output of prepare_head_params (kernel-ready, converted once).
    Returns [B] f32 == clf(features).reshape(-1) in eval mode.

    tb tuning (per review): one big tile for v5e/v6e-sized small batches
    (single TC, amortize per-step overhead); >= 2 tiles so both v7x
    TensorCores get work once B is large enough to pay for the duplicated
    W1 fetch.  tb=128 keeps full MXU-width use since H sits on the N axis.
    """
    B, D = features.shape
    w1t, b1, w2, b2 = params["w1t"], params["b1"], params["w2"], params["b2"]
    H = w1t.shape[1]
    assert w1t.shape == (D, H)
    assert tb % 8 == 0, "batch tile must be sublane-aligned (multiple of 8)"

    # Ragged last tile: Pallas masks partial edge blocks on writeback, so no
    # wrapper-side jnp.pad pass over x is needed.
    n_tiles = pl.cdiv(B, tb)

    cost = pl.CostEstimate(
        flops=2 * B * D * H + 3 * B * H,
        transcendentals=B,
        bytes_accessed=B * D * 4 + D * H * 2 + 2 * H * 4 + B * 4,
    )

    out = pl.pallas_call(
        _head_kernel,
        out_shape=jax.ShapeDtypeStruct((B, 1), jnp.float32),
        grid_spec=pltpu.PrefetchScalarGridSpec(
            num_scalar_prefetch=0,
            grid=(n_tiles,),
            in_specs=[
                pl.BlockSpec((tb, D), lambda i: (i, 0)),            # x tile, native layout
                pl.BlockSpec((D, H), lambda i: (0, 0)),             # W1^T (grid-invariant)
                pl.BlockSpec((1, H), lambda i: (0, 0)),             # b1 row (lane-dense)
                pl.BlockSpec((1, H), lambda i: (0, 0)),             # w2 row (lane-dense)
                pl.BlockSpec(memory_space=pltpu.MemorySpace.SMEM),  # b2 scalar
            ],
            out_specs=pl.BlockSpec((tb, 1), lambda i: (i, 0)),
        ),
        compiler_params=pltpu.CompilerParams(
            dimension_semantics=("parallel",),   # batch tiles -> megacore / 2 TCs
            vmem_limit_bytes=32 * 1024 * 1024,
        ),
        cost_estimate=cost,
    )(features, w1t, b1, w2, b2)
    return out.reshape(-1)


def _init_params(key, input_dim, hidden):
    """PyTorch-style uniform(-1/sqrt(fan_in), 1/sqrt(fan_in)) init, PyTorch layouts."""
    k1, k2, k3, k4 = jax.random.split(key, 4)
    bound1 = 1.0 / jnp.sqrt(jnp.float32(input_dim))
    bound2 = 1.0 / jnp.sqrt(jnp.float32(hidden))
    w1 = jax.random.uniform(k1, (hidden, input_dim), jnp.float32, -bound1, bound1)
    b1 = jax.random.uniform(k2, (hidden,), jnp.float32, -bound1, bound1)
    w2 = jax.random.uniform(k3, (hidden,), jnp.float32, -bound2, bound2)
    b2 = jax.random.uniform(k4, (1,), jnp.float32, -bound2, bound2)
    return w1, b1, w2, b2


if __name__ == "__main__":
    # Module defaults: input_dim = 768 * 2 = 1536, hidden = 1024, output = 1.
    # B = 256 with tb = 128 -> 2 grid steps (exercises pipelining / both v7x TCs).
    B, D, H = 256, 1536, 1024

    key = jax.random.PRNGKey(0)
    k_x, k_p = jax.random.split(key)
    features = jax.random.normal(k_x, (B, D), jnp.float32)
    w1, b1, w2, b2 = _init_params(k_p, D, H)

    # One-time weight prep (bf16 cast + transpose) at "parameter load" time.
    params = jax.block_until_ready(prepare_head_params(w1, b1, w2, b2))

    out = counterfactual_task_head(features, params, tb=128)
    out = jax.block_until_ready(out)
    assert out.shape == (B,)

    # Reference 1: same bf16-rounded operands, f32 math (isolates kernel math).
    x_bf = features.astype(jnp.bfloat16).astype(jnp.float32)
    w1_bf = w1.astype(jnp.bfloat16).astype(jnp.float32)
    h_bf = jnp.maximum(x_bf @ w1_bf.T + b1, 0.0)
    ref_bf = jax.nn.sigmoid(h_bf @ w2 + b2[0])
    assert jnp.allclose(out, ref_bf, atol=2e-3, rtol=2e-3), "mismatch vs bf16 reference"

    # Reference 2: full f32 (bf16 streaming loosens tolerance).
    h32 = jnp.maximum(
        jnp.matmul(features, w1.T, precision=jax.lax.Precision.HIGHEST) + b1, 0.0)
    ref32 = jax.nn.sigmoid(
        jnp.matmul(h32, w2, precision=jax.lax.Precision.HIGHEST) + b2[0])
    assert float(jnp.max(jnp.abs(out - ref32))) < 2e-2, "mismatch vs f32 reference"

    print("KERNEL_OK")
</pallas_src>

<mosaic_0001>
module attributes {stable_mosaic.version = 11 : i64} {
  func.func @_head_kernel(%arg0: i32, %arg1: memref<128x1536xf32, #tpu.memory_space<vmem>>, %arg2: memref<1536x1024xbf16, #tpu.memory_space<vmem>>, %arg3: memref<1x1024xf32, #tpu.memory_space<vmem>>, %arg4: memref<1x1024xf32, #tpu.memory_space<vmem>>, %arg5: memref<1xf32, #tpu.memory_space<smem>>, %arg6: memref<128x1xf32, #tpu.memory_space<vmem>>) attributes {dimension_semantics = [#tpu.dimension_semantics<parallel>], iteration_bounds = array<i64: 2>, scalar_prefetch = 0 : i64, scratch_operands = 0 : i64, tpu.core_type = #tpu.core_type<tc>, window_params = [{transform_indices = @transform_0, window_bounds = array<i64: 128, 1536>}, {pipeline_mode = #tpu.pipeline_mode<synchronous>, transform_indices = @transform_1, window_bounds = array<i64: 1536, 1024>}, {pipeline_mode = #tpu.pipeline_mode<synchronous>, transform_indices = @transform_2, window_bounds = array<i64: 1, 1024>}, {pipeline_mode = #tpu.pipeline_mode<synchronous>, transform_indices = @transform_3, window_bounds = array<i64: 1, 1024>}, {transform_indices = @transform_4, window_bounds = array<i64: 1>}, {transform_indices = @transform_5, window_bounds = array<i64: 128, 1>}]} {
    %c0 = arith.constant 0 : index
    %c0_0 = arith.constant 0 : index
    %0 = vector.load %arg1[%c0, %c0_0] : memref<128x1536xf32, #tpu.memory_space<vmem>>, vector<128x1536xf32>
    %1 = arith.truncf %0 : vector<128x1536xf32> to vector<128x1536xbf16>
    %c0_1 = arith.constant 0 : index
    %c0_2 = arith.constant 0 : index
    %2 = vector.load %arg2[%c0_1, %c0_2] : memref<1536x1024xbf16, #tpu.memory_space<vmem>>, vector<1536x1024xbf16>
    %cst = arith.constant dense<0.000000e+00> : vector<128x1024xf32>
    %3 = tpu.matmul %1, %2, %cst {dimension_numbers = #tpu.dot_dimension_numbers<[1], [0], [0], [1], [0, 0, 1, 1], [], []>} : vector<128x1536xbf16>, vector<1536x1024xbf16>, vector<128x1024xf32> -> vector<128x1024xf32>
    %c0_3 = arith.constant 0 : index
    %c0_4 = arith.constant 0 : index
    %4 = vector.load %arg3[%c0_3, %c0_4] : memref<1x1024xf32, #tpu.memory_space<vmem>>, vector<1x1024xf32>
    %5 = vector.broadcast %4 : vector<1x1024xf32> to vector<128x1024xf32>
    %6 = arith.addf %3, %5 : vector<128x1024xf32>
    %cst_5 = arith.constant 0.000000e+00 : f32
    %7 = vector.broadcast %cst_5 : f32 to vector<128x1024xf32>
    %8 = arith.maximumf %6, %7 : vector<128x1024xf32>
    %c0_6 = arith.constant 0 : index
    %c0_7 = arith.constant 0 : index
    %9 = vector.load %arg4[%c0_6, %c0_7] : memref<1x1024xf32, #tpu.memory_space<vmem>>, vector<1x1024xf32>
    %10 = vector.broadcast %9 : vector<1x1024xf32> to vector<128x1024xf32>
    %11 = arith.mulf %8, %10 : vector<128x1024xf32>
    %cst_8 = arith.constant dense<0.000000e+00> : vector<128xf32>
    %12 = vector.multi_reduction <add>, %11, %cst_8 [1] : vector<128x1024xf32> to vector<128xf32>
    %13 = vector.shape_cast %12 : vector<128xf32> to vector<128x1xf32>
    %c0_9 = arith.constant 0 : index
    %14 = memref.load %arg5[%c0_9] : memref<1xf32, #tpu.memory_space<smem>>
    %15 = vector.broadcast %14 : f32 to vector<128x1xf32>
    %16 = arith.addf %13, %15 : vector<128x1xf32>
    %17 = arith.negf %16 : vector<128x1xf32>
    %18 = math.exp %17 : vector<128x1xf32>
    %cst_10 = arith.constant 1.000000e+00 : f32
    %19 = vector.broadcast %cst_10 : f32 to vector<128x1xf32>
    %20 = arith.addf %19, %18 : vector<128x1xf32>
    %21 = arith.divf %19, %20 : vector<128x1xf32>
    %c0_11 = arith.constant 0 : index
    %c0_12 = arith.constant 0 : index
    %22 = vector.load %arg6[%c0_11, %c0_12] : memref<128x1xf32, #tpu.memory_space<vmem>>, vector<128x1xf32>
    tpu.vector_store %arg6[%c0_11, %c0_12], %21 {strides = array<i32>} : memref<128x1xf32, #tpu.memory_space<vmem>>, vector<128x1xf32>,
    return
  }
  func.func @transform_0(%arg0: i32) -> (i32, i32) {
    %c0_i32 = arith.constant 0 : i32
    %c0_i32_0 = arith.constant 0 : i32
    return %arg0, %c0_i32 : i32, i32
  }
  func.func @transform_1(%arg0: i32) -> (i32, i32) {
    %c0_i32 = arith.constant 0 : i32
    %c0_i32_0 = arith.constant 0 : i32
    %c0_i32_1 = arith.constant 0 : i32
    return %c0_i32, %c0_i32_0 : i32, i32
  }
  func.func @transform_2(%arg0: i32) -> (i32, i32) {
    %c0_i32 = arith.constant 0 : i32
    %c0_i32_0 = arith.constant 0 : i32
    %c0_i32_1 = arith.constant 0 : i32
    return %c0_i32, %c0_i32_0 : i32, i32
  }
  func.func @transform_3(%arg0: i32) -> (i32, i32) {
    %c0_i32 = arith.constant 0 : i32
    %c0_i32_0 = arith.constant 0 : i32
    %c0_i32_1 = arith.constant 0 : i32
    return %c0_i32, %c0_i32_0 : i32, i32
  }
  func.func @transform_4(%arg0: i32) -> i32 {
    %c0_i32 = arith.constant 0 : i32
    %c0_i32_0 = arith.constant 0 : i32
    return %c0_i32 : i32
  }
  func.func @transform_5(%arg0: i32) -> (i32, i32) {
    %c0_i32 = arith.constant 0 : i32
    %c0_i32_0 = arith.constant 0 : i32
    return %arg0, %c0_i32 : i32, i32
  }
}

</mosaic_0001>

<llo_original>
// kernel: tpu_custom_call.1
$region0: #{tpu_custom_call.1}
  #allocation0 [shape = 'u32[]', space=smem, size = 0x4, offset = 0x4, fixed_abs, tag = 'smem constant byte address 0x4 - core index']
  #allocation1 [shape = 'u32[144,128]{1,0:T(1,128)}', space=vmem, size = 0x12000, scoped, tag = 'internal scratch']
  #allocation2 [shape = 'f32[1]{0:T(128)S(6)}', space=smem, size = 0x200, scoped, tag = 'scoped memory for tpu_custom_call.1']
  %s0 = inlined_call_operand.hbm [shape: f32[256,1536], index: 0, kind: input, shape index: {}]
  %s1 = inlined_call_operand.hbm [shape: bf16[1536,1024], index: 1, kind: input, shape index: {}]
  %s2 = inlined_call_operand.hbm [shape: f32[1,1024], index: 2, kind: input, shape index: {}]
  %s3 = inlined_call_operand.hbm [shape: f32[1,1024], index: 3, kind: input, shape index: {}]
  %s4 = inlined_call_operand.<no memory space> [shape: f32[1], index: 4, kind: input, shape index: {}]
  %s5 = inlined_call_operand.vmem [shape: f32[256,1], index: 5, kind: output, shape index: {}]
  %s6 = sld [smem:[#allocation0]]
  $region69: #{tpu_custom_call.1} parent=0
    _
  %s8 = ssub.s32 1, %s6
  %s9 = scalar_select 0, %s8, %s6
  %10 = sst [smem:[#allocation2]] %s4
  $region1: #{tpu_custom_call.1} parent=0
    #allocation3 [shape = 'u8[1572864]{0}', space=vmem, size = 0x180000, scoped, tag = 'input window, operand 0']
    #allocation4 [shape = 's32[2]{0}', space=sflag, size = 0x8, scoped, tag = 'scoped memory for tpu_custom_call.1']
    #allocation5 [shape = 'u8[3145728]{0}', space=vmem, size = 0x300000, scoped, tag = 'input window, operand 1, single buffered']
    #allocation6 [shape = 's32[1]{0}', space=sflag, size = 0x4, scoped, tag = 'scoped memory for tpu_custom_call.1']
    #allocation7 [shape = 'u8[4096]{0}', space=vmem, size = 0x1000, scoped, tag = 'input window, operand 2, single buffered']
    #allocation8 [shape = 'u8[4096]{0}', space=vmem, size = 0x1000, scoped, tag = 'input window, operand 3, single buffered']
    #allocation9 [shape = 's32[1]{0}', space=sflag, size = 0x4, scoped, tag = 'scoped memory for tpu_custom_call.1']
    %11 = vsyncpa [#allocation4], 0
    %s12 = scalar_lea.sflag [#allocation4], 1
    %13 = vsyncpa %s12, 0
    %14 = vsyncpa [#allocation6], 0
    %15 = vsyncpa [#allocation9], 0
    loop: start=0, step=1, limit=4
    $region2: #{tpu_custom_call.1} parent=1 // loop_pre_header
      _
    $region3: #{tpu_custom_call.1} parent=1 // loop_header
      %s17 = sphi 0, %s21
      %p18 = scmp.ge.s32.totalorder %s17, 4
      %s27 = sphi 0, %s29
      %s30 = sphi 0, %s27
      %s31 = sphi 0, %s30
      %s47 = sphi 0, %s31
      %s51 = sphi 0, %s51
      %s53 = sphi 0, %s51
      %s54 = sphi 0, %s53
      %s68 = sphi 0, %s54
      %s72 = sphi 0, %s72
      %s74 = sphi 0, %s72
      %s75 = sphi 0, %s74
      %s89 = sphi 0, %s75
      %s93 = sphi 0, %s93
      %s95 = sphi 0, %s93
      %s96 = sphi 0, %s95
      %s110 = sphi 0, %s96
      %s114 = sphi 0, %s114
      %s116 = sphi 0, %s114
      %s117 = sphi 0, %s116
      %s131 = sphi 0, %s117
      %s137 = sphi 0, %s139
      %s140 = sphi 0, %s137
      %s141 = sphi 0, %s140
      %s157 = sphi 0, %s141
    $region4: #{tpu_custom_call.1} parent=1 // loop_header_branch
      %20 = sbr.rel (%p18) target = $region8
    $region5: #{tpu_custom_call.1} parent=1 // loop_body
      %s22 = ssub.s32 %s17, 1
      %s23 = ssub.s32 %s17, 2
      %s24 = sadd.s32 %s17, 1
      %s25 = ssub.s32 %s17, %s24
      %p26 = scmp.eq.s32.totalorder %s25, 0
      %s28 = sadd.s32 %s27, 1
      %s29 = scalar_select %p26, %s27, %s28
      %p32 = pneg %p26
      %p33 = scmp.eq.s32.totalorder %s17, 1
      %p34 = por %p32, %p33
      %p35 = scmp.ne.s32.totalorder %s27, %s30
      %p36 = scmp.eq.s32.totalorder %s17, 0
      %p37 = por %p35, %p36
      %p38 = scmp.ne.s32.totalorder %s27, %s30
      %p39 = scmp.eq.s32.totalorder %s22, 1
      %p40 = por %p38, %p39
      %p41 = scmp.ne.s32.totalorder %s30, %s31
      %p42 = scmp.eq.s32.totalorder %s22, 0
      %p43 = por %p41, %p42
      %p44 = scmp.ne.s32.totalorder %s30, %s31
      %p45 = scmp.eq.s32.totalorder %s23, 1
      %p46 = por %p44, %p45
      %p48 = scmp.ne.s32.totalorder %s31, %s47
      %p49 = scmp.eq.s32.totalorder %s23, 0
      %p50 = por %p48, %p49
      %s52 = sadd.s32 %s51, 1
      %p55 = scmp.eq.s32.totalorder %s17, 1
      %p56 = scmp.ne.s32.totalorder %s51, %s53
      %p57 = scmp.eq.s32.totalorder %s17, 0
      %p58 = por %p56, %p57
      %p59 = scmp.ne.s32.totalorder %s51, %s53
      %p60 = scmp.eq.s32.totalorder %s22, 1
      %p61 = por %p59, %p60
      %p62 = scmp.ne.s32.totalorder %s53, %s54
      %p63 = scmp.eq.s32.totalorder %s22, 0
      %p64 = por %p62, %p63
      %p65 = scmp.ne.s32.totalorder %s53, %s54
      %p66 = scmp.eq.s32.totalorder %s23, 1
      %p67 = por %p65, %p66
      %p69 = scmp.ne.s32.totalorder %s54, %s68
      %p70 = scmp.eq.s32.totalorder %s23, 0
      %p71 = por %p69, %p70
      %s73 = sadd.s32 %s72, 1
      %p76 = scmp.eq.s32.totalorder %s17, 1
      %p77 = scmp.ne.s32.totalorder %s72, %s74
      %p78 = scmp.eq.s32.totalorder %s17, 0
      %p79 = por %p77, %p78
      %p80 = scmp.ne.s32.totalorder %s72, %s74
      %p81 = scmp.eq.s32.totalorder %s22, 1
      %p82 = por %p80, %p81
      %p83 = scmp.ne.s32.totalorder %s74, %s75
      %p84 = scmp.eq.s32.totalorder %s22, 0
      %p85 = por %p83, %p84
      %p86 = scmp.ne.s32.totalorder %s74, %s75
      %p87 = scmp.eq.s32.totalorder %s23, 1
      %p88 = por %p86, %p87
      %p90 = scmp.ne.s32.totalorder %s75, %s89
      %p91 = scmp.eq.s32.totalorder %s23, 0
      %p92 = por %p90, %p91
      %s94 = sadd.s32 %s93, 1
      %p97 = scmp.eq.s32.totalorder %s17, 1
      %p98 = scmp.ne.s32.totalorder %s93, %s95
      %p99 = scmp.eq.s32.totalorder %s17, 0
      %p100 = por %p98, %p99
      %p101 = scmp.ne.s32.totalorder %s93, %s95
      %p102 = scmp.eq.s32.totalorder %s22, 1
      %p103 = por %p101, %p102
      %p104 = scmp.ne.s32.totalorder %s95, %s96
      %p105 = scmp.eq.s32.totalorder %s22, 0
      %p106 = por %p104, %p105
      %p107 = scmp.ne.s32.totalorder %s95, %s96
      %p108 = scmp.eq.s32.totalorder %s23, 1
      %p109 = por %p107, %p108
      %p111 = scmp.ne.s32.totalorder %s96, %s110
      %p112 = scmp.eq.s32.totalorder %s23, 0
      %p113 = por %p111, %p112
      %s115 = sadd.s32 %s114, 1
      %p118 = scmp.eq.s32.totalorder %s17, 1
      %p119 = scmp.ne.s32.totalorder %s114, %s116
      %p120 = scmp.eq.s32.totalorder %s17, 0
      %p121 = por %p119, %p120
      %p122 = scmp.ne.s32.totalorder %s114, %s116
      %p123 = scmp.eq.s32.totalorder %s22, 1
      %p124 = por %p122, %p123
      %p125 = scmp.ne.s32.totalorder %s116, %s117
      %p126 = scmp.eq.s32.totalorder %s22, 0
      %p127 = por %p125, %p126
      %p128 = scmp.ne.s32.totalorder %s116, %s117
      %p129 = scmp.eq.s32.totalorder %s23, 1
      %p130 = por %p128, %p129
      %p132 = scmp.ne.s32.totalorder %s117, %s131
      %p133 = scmp.eq.s32.totalorder %s23, 0
      %p134 = por %p132, %p133
      %s135 = ssub.s32 %s17, %s24
      %p136 = scmp.eq.s32.totalorder %s135, 0
      %s138 = sadd.s32 %s137, 1
      %s139 = scalar_select %p136, %s137, %s138
      %p142 = pneg %p136
      %p143 = scmp.eq.s32.totalorder %s17, 1
      %p144 = por %p142, %p143
      %p145 = scmp.ne.s32.totalorder %s137, %s140
      %p146 = scmp.eq.s32.totalorder %s17, 0
      %p147 = por %p145, %p146
      %p148 = scmp.ne.s32.totalorder %s137, %s140
      %p149 = scmp.eq.s32.totalorder %s22, 1
      %p150 = por %p148, %p149
      %p151 = scmp.ne.s32.totalorder %s140, %s141
      %p152 = scmp.eq.s32.totalorder %s22, 0
      %p153 = por %p151, %p152
      %p154 = scmp.ne.s32.totalorder %s140, %s141
      %p155 = scmp.eq.s32.totalorder %s23, 1
      %p156 = por %p154, %p155
      %p158 = scmp.ne.s32.totalorder %s141, %s157
      %p159 = scmp.eq.s32.totalorder %s23, 0
      %p160 = por %p158, %p159
      %p161 = scmp.le.s32.totalorder 1, %s17
      %p162 = scmp.lt.s32.totalorder %s17, 3
      %p163 = pnand %p161, %p162
      %p164 = pneg %p163
      // Predicated region
      $region9: #{tpu_custom_call.1} parent=5 // pred_check
        _
      $region10: #{tpu_custom_call.1} parent=5 // pred_check_branch
        %166 = sbr.rel (%p163) target = $region12
      $region11: #{tpu_custom_call.1} parent=5 // pred_region
        %s167 = ssub.s32 %s17, 1
        // Predicated region
        $region13: #{tpu_custom_call.1} parent=11 // pred_check
          %p168 = pneg %p64
        $region14: #{tpu_custom_call.1} parent=11 // pred_check_branch
          %170 = sbr.rel (%p168) target = $region16
        $region15: #{tpu_custom_call.1} parent=11 // pred_region
          %s172 = ssub.s32 98304, 98304
          %173 = vsyncadd [#allocation6], %s172
          %s174 = sshll.u32 [#allocation5], 4
          %s175 = int_to_ptr.vmem [resolvable:$true] %s174
          %180 = dma.hbm_to_vmem [thread:$0]  %s1, 98304, %s175, [#allocation6], 512, 512, 32
        $region16: #{tpu_custom_call.1} parent=11 // pred_fallthru
          _
        // Predicated region
        $region17: #{tpu_custom_call.1} parent=11 // pred_check
          %p181 = pneg %p85
        $region18: #{tpu_custom_call.1} parent=11 // pred_check_branch
          %183 = sbr.rel (%p181) target = $region20
        $region19: #{tpu_custom_call.1} parent=11 // pred_region
          %s185 = ssub.s32 128, 128
          %186 = vsyncadd [#allocation6], %s185
          %s188 = sshll.u32 [#allocation7], 4
          %s189 = int_to_ptr.vmem [resolvable:$true] %s188
          %191 = dma.hbm_to_vmem [thread:$0]  %s2, 128, %s189, [#allocation6]
        $region20: #{tpu_custom_call.1} parent=11 // pred_fallthru
          _
        // Predicated region
        $region21: #{tpu_custom_call.1} parent=11 // pred_check
          %p192 = pneg %p106
        $region22: #{tpu_custom_call.1} parent=11 // pred_check_branch
          %194 = sbr.rel (%p192) target = $region24
        $region23: #{tpu_custom_call.1} parent=11 // pred_region
          %s196 = ssub.s32 128, 128
          %197 = vsyncadd [#allocation9], %s196
          %s199 = sshll.u32 [#allocation8], 4
          %s200 = int_to_ptr.vmem [resolvable:$true] %s199
          %202 = dma.hbm_to_vmem [thread:$0]  %s3, 128, %s200, [#allocation9]
        $region24: #{tpu_custom_call.1} parent=11 // pred_fallthru
          _
        // Predicated region
        $region25: #{tpu_custom_call.1} parent=11 // pred_check
          %p203 = pneg %p127
        $region26: #{tpu_custom_call.1} parent=11 // pred_check_branch
          %205 = sbr.rel (%p203) target = $region28
        $region27: #{tpu_custom_call.1} parent=11 // pred_region
          _
        $region28: #{tpu_custom_call.1} parent=11 // pred_fallthru
          _
      $region12: #{tpu_custom_call.1} parent=5 // pred_fallthru
        _
      %p206 = scmp.lt.s32.totalorder %s17, 2
      // Predicated region
      $region29: #{tpu_custom_call.1} parent=5 // pred_check
        %p207 = pneg %p206
      $region30: #{tpu_custom_call.1} parent=5 // pred_check_branch
        %209 = sbr.rel (%p207) target = $region32
      $region31: #{tpu_custom_call.1} parent=5 // pred_region
        // Predicated region
        $region33: #{tpu_custom_call.1} parent=31 // pred_check
          %p210 = pneg %p37
        $region34: #{tpu_custom_call.1} parent=31 // pred_check_branch
          %212 = sbr.rel (%p210) target = $region36
        $region35: #{tpu_custom_call.1} parent=31 // pred_region
          %s213 = sand.u32 %s27, 1
          %s214 = scalar_lea.sflag [#allocation4], %s213
          %s215 = sand.u32 %s27, 1
          %s216 = smul.addr %s215, 1536
          %s217 = scalar_lea.vmem [#allocation3], %s216
          %s218 = smul.u32 16, %s17
          %s220 = ssub.s32 24576, 24576
          %221 = vsyncadd %s214, %s220
          %s222 = smul.addr %s218, 12
          %s223 = smul.addr %s222, 128
          %s224 = scalar_lea.hbm %s0, %s223
          %s225 = sshll.u32 %s217, 4
          %s226 = int_to_ptr.vmem [resolvable:$true] %s225
          %231 = dma.hbm_to_vmem [thread:$0]  %s224, 24576, %s226, %s214, 1536, 1536, 96
        $region36: #{tpu_custom_call.1} parent=31 // pred_fallthru
          _
      $region32: #{tpu_custom_call.1} parent=5 // pred_fallthru
        _
      %p232 = scmp.le.s32.totalorder 1, %s17
      %p233 = scmp.lt.s32.totalorder %s17, 3
      %p234 = pnand %p232, %p233
      %p235 = pneg %p234
      // Predicated region
      $region37: #{tpu_custom_call.1} parent=5 // pred_check
        _
      $region38: #{tpu_custom_call.1} parent=5 // pred_check_branch
        %237 = sbr.rel (%p234) target = $region40
      $region39: #{tpu_custom_call.1} parent=5 // pred_region
        %s238 = ssub.s32 %s17, 1
        %s239 = sand.u32 %s30, 1
        %s240 = scalar_lea.sflag [#allocation4], %s239
        %s241 = sand.u32 %s30, 1
        %s242 = smul.addr %s241, 1536
        %s243 = scalar_lea.vmem [#allocation3], %s242
        // Predicated region
        $region41: #{tpu_custom_call.1} parent=39 // pred_check
          %p244 = pneg %p43
        $region42: #{tpu_custom_call.1} parent=39 // pred_check_branch
          %246 = sbr.rel (%p244) target = $region44
        $region43: #{tpu_custom_call.1} parent=39 // pred_region
          %247 = dma.done %s240, 24576
        $region44: #{tpu_custom_call.1} parent=39 // pred_fallthru
          _
        // Predicated region
        $region45: #{tpu_custom_call.1} parent=39 // pred_check
          %p248 = pneg %p64
        $region46: #{tpu_custom_call.1} parent=39 // pred_check_branch
          %250 = sbr.rel (%p248) target = $region48
        $region47: #{tpu_custom_call.1} parent=39 // pred_region
          %251 = dma.done [#allocation6], 98304
        $region48: #{tpu_custom_call.1} parent=39 // pred_fallthru
          _
        // Predicated region
        $region49: #{tpu_custom_call.1} parent=39 // pred_check
          %p252 = pneg %p85
        $region50: #{tpu_custom_call.1} parent=39 // pred_check_branch
          %254 = sbr.rel (%p252) target = $region52
        $region51: #{tpu_custom_call.1} parent=39 // pred_region
          %255 = dma.done [#allocation6], 128
        $region52: #{tpu_custom_call.1} parent=39 // pred_fallthru
          _
        // Predicated region
        $region53: #{tpu_custom_call.1} parent=39 // pred_check
          %p256 = pneg %p106
        $region54: #{tpu_custom_call.1} parent=39 // pred_check_branch
          %258 = sbr.rel (%p256) target = $region56
        $region55: #{tpu_custom_call.1} parent=39 // pred_region
          %259 = dma.done [#allocation9], 128
        $region56: #{tpu_custom_call.1} parent=39 // pred_fallthru
          _
        %s260 = sand.u32 %s30, 1
        %s261 = scalar_lea.sflag [#allocation4], %s260
        %s262 = sand.u32 %s30, 1
        %s263 = smul.addr %s262, 1536
        %s264 = scalar_lea.vmem [#allocation3], %s263
        %p265 = pneg %p43
        %p266 = pneg %p40
        %p267 = pneg %p64
        %p268 = pneg %p61
        %p269 = pneg %p85
        %p270 = pneg %p82
        %p271 = pneg %p106
        %p272 = pneg %p103
        %p273 = pneg %p127
        %p274 = pneg %p124
        %p275 = pneg %p153
        %p276 = pneg %p150
        %s277 = smul.u32 16, %s22
        %p278 = scmp.lt.s32.totalorder %s277, 31
        %s279 = scalar_select %p278, %s277, 31
        %s280 = smul.addr %s279, 8
        %s281 = scalar_lea.vmem %s5, %s280
        %s282 = smul.u32 16, %s22
        %s283 = smul.u32 16, %s22
        %p284 = scmp.lt.s32.totalorder %s283, 31
        %s285 = scalar_select %p284, %s283, 31
        %s286 = smul.addr %s285, 8
        %s287 = scalar_lea.vmem %s5, %s286
        %s288 = smul.u32 16, %s22
        %v289 = vld [vmem:[%s243] sm:$0xff]
        %v290 = vld [vmem:[%s243 + $0x8] sm:$0xff]
        %v291 = vld [vmem:[%s243 + $0x10] sm:$0xff]
        %v292 = vld [vmem:[%s243 + $0x18] sm:$0xff]
        %v293 = vld [vmem:[%s243 + $0x20] sm:$0xff]
        %v294 = vld [vmem:[%s243 + $0x28] sm:$0xff]
        %v295 = vld [vmem:[%s243 + $0x30] sm:$0xff]
        %v296 = vld [vmem:[%s243 + $0x38] sm:$0xff]
        %v297 = vld [vmem:[%s243 + $0x40] sm:$0xff]
        %v298 = vld [vmem:[%s243 + $0x48] sm:$0xff]
        %v299 = vld [vmem:[%s243 + $0x50] sm:$0xff]
        %v300 = vld [vmem:[%s243 + $0x58] sm:$0xff]
        %v301 = vld [vmem:[%s243 + $0x60] sm:$0xff]
        %v302 = vld [vmem:[%s243 + $0x68] sm:$0xff]
        %v303 = vld [vmem:[%s243 + $0x70] sm:$0xff]
        %v304 = vld [vmem:[%s243 + $0x78] sm:$0xff]
        %v305 = vld [vmem:[%s243 + $0x80] sm:$0xff]
        %v306 = vld [vmem:[%s243 + $0x88] sm:$0xff]
        %v307 = vld [vmem:[%s243 + $0x90] sm:$0xff]
        %v308 = vld [vmem:[%s243 + $0x98] sm:$0xff]
        %v309 = vld [vmem:[%s243 + $0xa0] sm:$0xff]
        %v310 = vld [vmem:[%s243 + $0xa8] sm:$0xff]
        %v311 = vld [vmem:[%s243 + $0xb0] sm:$0xff]
        %v312 = vld [vmem:[%s243 + $0xb8] sm:$0xff]
        %v313 = vld [vmem:[%s243 + $0xc0] sm:$0xff]
        %v314 = vld [vmem:[%s243 + $0xc8] sm:$0xff]
        %v315 = vld [vmem:[%s243 + $0xd0] sm:$0xff]
        %v316 = vld [vmem:[%s243 + $0xd8] sm:$0xff]
        %v317 = vld [vmem:[%s243 + $0xe0] sm:$0xff]
        %v318 = vld [vmem:[%s243 + $0xe8] sm:$0xff]
        %v319 = vld [vmem:[%s243 + $0xf0] sm:$0xff]
        %v320 = vld [vmem:[%s243 + $0xf8] sm:$0xff]
        %v321 = vld [vmem:[%s243 + $0x100] sm:$0xff]
        %v322 = vld [vmem:[%s243 + $0x108] sm:$0xff]
        %v323 = vld [vmem:[%s243 + $0x110] sm:$0xff]
        %v324 = vld [vmem:[%s243 + $0x118] sm:$0xff]
        %v325 = vld [vmem:[%s243 + $0x120] sm:$0xff]
        %v326 = vld [vmem:[%s243 + $0x128] sm:$0xff]
        %v327 = vld [vmem:[%s243 + $0x130] sm:$0xff]
        %v328 = vld [vmem:[%s243 + $0x138] sm:$0xff]
        %v329 = vld [vmem:[%s243 + $0x140] sm:$0xff]
        %v330 = vld [vmem:[%s243 + $0x148] sm:$0xff]
        %v331 = vld [vmem:[%s243 + $0x150] sm:$0xff]
        %v332 = vld [vmem:[%s243 + $0x158] sm:$0xff]
        %v333 = vld [vmem:[%s243 + $0x160] sm:$0xff]
        %v334 = vld [vmem:[%s243 + $0x168] sm:$0xff]
        %v335 = vld [vmem:[%s243 + $0x170] sm:$0xff]
        %v336 = vld [vmem:[%s243 + $0x178] sm:$0xff]
        %v337 = vld [vmem:[%s243 + $0x180] sm:$0xff]
        %v338 = vld [vmem:[%s243 + $0x188] sm:$0xff]
        %v339 = vld [vmem:[%s243 + $0x190] sm:$0xff]
        %v340 = vld [vmem:[%s243 + $0x198] sm:$0xff]
        %v341 = vld [vmem:[%s243 + $0x1a0] sm:$0xff]
        %v342 = vld [vmem:[%s243 + $0x1a8] sm:$0xff]
        %v343 = vld [vmem:[%s243 + $0x1b0] sm:$0xff]
        %v344 = vld [vmem:[%s243 + $0x1b8] sm:$0xff]
        %v345 = vld [vmem:[%s243 + $0x1c0] sm:$0xff]
        %v346 = vld [vmem:[%s243 + $0x1c8] sm:$0xff]
        %v347 = vld [vmem:[%s243 + $0x1d0] sm:$0xff]
        %v348 = vld [vmem:[%s243 + $0x1d8] sm:$0xff]
        %v349 = vld [vmem:[%s243 + $0x1e0] sm:$0xff]
        %v350 = vld [vmem:[%s243 + $0x1e8] sm:$0xff]
        %v351 = vld [vmem:[%s243 + $0x1f0] sm:$0xff]
        %v352 = vld [vmem:[%s243 + $0x1f8] sm:$0xff]
        %v353 = vld [vmem:[%s243 + $0x200] sm:$0xff]
        %v354 = vld [vmem:[%s243 + $0x208] sm:$0xff]
        %v355 = vld [vmem:[%s243 + $0x210] sm:$0xff]
        %v356 = vld [vmem:[%s243 + $0x218] sm:$0xff]
        %v357 = vld [vmem:[%s243 + $0x220] sm:$0xff]
        %v358 = vld [vmem:[%s243 + $0x228] sm:$0xff]
        %v359 = vld [vmem:[%s243 + $0x230] sm:$0xff]
        %v360 = vld [vmem:[%s243 + $0x238] sm:$0xff]
        %v361 = vld [vmem:[%s243 + $0x240] sm:$0xff]
        %v362 = vld [vmem:[%s243 + $0x248] sm:$0xff]
        %v363 = vld [vmem:[%s243 + $0x250] sm:$0xff]
        %v364 = vld [vmem:[%s243 + $0x258] sm:$0xff]
        %v365 = vld [vmem:[%s243 + $0x260] sm:$0xff]
        %v366 = vld [vmem:[%s243 + $0x268] sm:$0xff]
        %v367 = vld [vmem:[%s243 + $0x270] sm:$0xff]
        %v368 = vld [vmem:[%s243 + $0x278] sm:$0xff]
        %v369 = vld [vmem:[%s243 + $0x280] sm:$0xff]
        %v370 = vld [vmem:[%s243 + $0x288] sm:$0xff]
        %v371 = vld [vmem:[%s243 + $0x290] sm:$0xff]
        %v372 = vld [vmem:[%s243 + $0x298] sm:$0xff]
        %v373 = vld [vmem:[%s243 + $0x2a0] sm:$0xff]
        %v374 = vld [vmem:[%s243 + $0x2a8] sm:$0xff]
        %v375 = vld [vmem:[%s243 + $0x2b0] sm:$0xff]
        %v376 = vld [vmem:[%s243 + $0x2b8] sm:$0xff]
        %v377 = vld [vmem:[%s243 + $0x2c0] sm:$0xff]
        %v378 = vld [vmem:[%s243 + $0x2c8] sm:$0xff]
        %v379 = vld [vmem:[%s243 + $0x2d0] sm:$0xff]
        %v380 = vld [vmem:[%s243 + $0x2d8] sm:$0xff]
        %v381 = vld [vmem:[%s243 + $0x2e0] sm:$0xff]
        %v382 = vld [vmem:[%s243 + $0x2e8] sm:$0xff]
        %v383 = vld [vmem:[%s243 + $0x2f0] sm:$0xff]
        %v384 = vld [vmem:[%s243 + $0x2f8] sm:$0xff]
        %v385 = vld [vmem:[%s243 + $0x300] sm:$0xff]
        %v386 = vld [vmem:[%s243 + $0x308] sm:$0xff]
        %v387 = vld [vmem:[%s243 + $0x310] sm:$0xff]
        %v388 = vld [vmem:[%s243 + $0x318] sm:$0xff]
        %v389 = vld [vmem:[%s243 + $0x320] sm:$0xff]
        %v390 = vld [vmem:[%s243 + $0x328] sm:$0xff]
        %v391 = vld [vmem:[%s243 + $0x330] sm:$0xff]
        %v392 = vld [vmem:[%s243 + $0x338] sm:$0xff]
        %v393 = vld [vmem:[%s243 + $0x340] sm:$0xff]
        %v394 = vld [vmem:[%s243 + $0x348] sm:$0xff]
        %v395 = vld [vmem:[%s243 + $0x350] sm:$0xff]
        %v396 = vld [vmem:[%s243 + $0x358] sm:$0xff]
        %v397 = vld [vmem:[%s243 + $0x360] sm:$0xff]
        %v398 = vld [vmem:[%s243 + $0x368] sm:$0xff]
        %v399 = vld [vmem:[%s243 + $0x370] sm:$0xff]
        %v400 = vld [vmem:[%s243 + $0x378] sm:$0xff]
        %v401 = vld [vmem:[%s243 + $0x380] sm:$0xff]
        %v402 = vld [vmem:[%s243 + $0x388] sm:$0xff]
        %v403 = vld [vmem:[%s243 + $0x390] sm:$0xff]
        %v404 = vld [vmem:[%s243 + $0x398] sm:$0xff]
        %v405 = vld [vmem:[%s243 + $0x3a0] sm:$0xff]
        %v406 = vld [vmem:[%s243 + $0x3a8] sm:$0xff]
        %v407 = vld [vmem:[%s243 + $0x3b0] sm:$0xff]
        %v408 = vld [vmem:[%s243 + $0x3b8] sm:$0xff]
        %v409 = vld [vmem:[%s243 + $0x3c0] sm:$0xff]
        %v410 = vld [vmem:[%s243 + $0x3c8] sm:$0xff]
        %v411 = vld [vmem:[%s243 + $0x3d0] sm:$0xff]
        %v412 = vld [vmem:[%s243 + $0x3d8] sm:$0xff]
        %v413 = vld [vmem:[%s243 + $0x3e0] sm:$0xff]
        %v414 = vld [vmem:[%s243 + $0x3e8] sm:$0xff]
        %v415 = vld [vmem:[%s243 + $0x3f0] sm:$0xff]
        %v416 = vld [vmem:[%s243 + $0x3f8] sm:$0xff]
        %v417 = vld [vmem:[%s243 + $0x400] sm:$0xff]
        %v418 = vld [vmem:[%s243 + $0x408] sm:$0xff]
        %v419 = vld [vmem:[%s243 + $0x410] sm:$0xff]
        %v420 = vld [vmem:[%s243 + $0x418] sm:$0xff]
        %v421 = vld [vmem:[%s243 + $0x420] sm:$0xff]
        %v422 = vld [vmem:[%s243 + $0x428] sm:$0xff]
        %v423 = vld [vmem:[%s243 + $0x430] sm:$0xff]
        %v424 = vld [vmem:[%s243 + $0x438] sm:$0xff]
        %v425 = vld [vmem:[%s243 + $0x440] sm:$0xff]
        %v426 = vld [vmem:[%s243 + $0x448] sm:$0xff]
        %v427 = vld [vmem:[%s243 + $0x450] sm:$0xff]
        %v428 = vld [vmem:[%s243 + $0x458] sm:$0xff]
        %v429 = vld [vmem:[%s243 + $0x460] sm:$0xff]
        %v430 = vld [vmem:[%s243 + $0x468] sm:$0xff]
        %v431 = vld [vmem:[%s243 + $0x470] sm:$0xff]
        %v432 = vld [vmem:[%s243 + $0x478] sm:$0xff]
        %v433 = vld [vmem:[%s243 + $0x480] sm:$0xff]
        %v434 = vld [vmem:[%s243 + $0x488] sm:$0xff]
        %v435 = vld [vmem:[%s243 + $0x490] sm:$0xff]
        %v436 = vld [vmem:[%s243 + $0x498] sm:$0xff]
        %v437 = vld [vmem:[%s243 + $0x4a0] sm:$0xff]
        %v438 = vld [vmem:[%s243 + $0x4a8] sm:$0xff]
        %v439 = vld [vmem:[%s243 + $0x4b0] sm:$0xff]
        %v440 = vld [vmem:[%s243 + $0x4b8] sm:$0xff]
        %v441 = vld [vmem:[%s243 + $0x4c0] sm:$0xff]
        %v442 = vld [vmem:[%s243 + $0x4c8] sm:$0xff]
        %v443 = vld [vmem:[%s243 + $0x4d0] sm:$0xff]
        %v444 = vld [vmem:[%s243 + $0x4d8] sm:$0xff]
        %v445 = vld [vmem:[%s243 + $0x4e0] sm:$0xff]
        %v446 = vld [vmem:[%s243 + $0x4e8] sm:$0xff]
        %v447 = vld [vmem:[%s243 + $0x4f0] sm:$0xff]
        %v448 = vld [vmem:[%s243 + $0x4f8] sm:$0xff]
        %v449 = vld [vmem:[%s243 + $0x500] sm:$0xff]
        %v450 = vld [vmem:[%s243 + $0x508] sm:$0xff]
        %v451 = vld [vmem:[%s243 + $0x510] sm:$0xff]
        %v452 = vld [vmem:[%s243 + $0x518] sm:$0xff]
        %v453 = vld [vmem:[%s243 + $0x520] sm:$0xff]
        %v454 = vld [vmem:[%s243 + $0x528] sm:$0xff]
        %v455 = vld [vmem:[%s243 + $0x530] sm:$0xff]
        %v456 = vld [vmem:[%s243 + $0x538] sm:$0xff]
        %v457 = vld [vmem:[%s243 + $0x540] sm:$0xff]
        %v458 = vld [vmem:[%s243 + $0x548] sm:$0xff]
        %v459 = vld [vmem:[%s243 + $0x550] sm:$0xff]
        %v460 = vld [vmem:[%s243 + $0x558] sm:$0xff]
        %v461 = vld [vmem:[%s243 + $0x560] sm:$0xff]
        %v462 = vld [vmem:[%s243 + $0x568] sm:$0xff]
        %v463 = vld [vmem:[%s243 + $0x570] sm:$0xff]
        %v464 = vld [vmem:[%s243 + $0x578] sm:$0xff]
        %v465 = vld [vmem:[%s243 + $0x580] sm:$0xff]
        %v466 = vld [vmem:[%s243 + $0x588] sm:$0xff]
        %v467 = vld [vmem:[%s243 + $0x590] sm:$0xff]
        %v468 = vld [vmem:[%s243 + $0x598] sm:$0xff]
        %v469 = vld [vmem:[%s243 + $0x5a0] sm:$0xff]
        %v470 = vld [vmem:[%s243 + $0x5a8] sm:$0xff]
        %v471 = vld [vmem:[%s243 + $0x5b0] sm:$0xff]
        %v472 = vld [vmem:[%s243 + $0x5b8] sm:$0xff]
        %v473 = vld [vmem:[%s243 + $0x5c0] sm:$0xff]
        %v474 = vld [vmem:[%s243 + $0x5c8] sm:$0xff]
        %v475 = vld [vmem:[%s243 + $0x5d0] sm:$0xff]
        %v476 = vld [vmem:[%s243 + $0x5d8] sm:$0xff]
        %v477 = vld [vmem:[%s243 + $0x5e0] sm:$0xff]
        %v478 = vld [vmem:[%s243 + $0x5e8] sm:$0xff]
        %v479 = vld [vmem:[%s243 + $0x5f0] sm:$0xff]
        %v480 = vld [vmem:[%s243 + $0x5f8] sm:$0xff]
        %v481 = vpack.c.bf16 %v301, %v289
        %v482 = vpack.c.bf16 %v302, %v290
        %v483 = vpack.c.bf16 %v303, %v291
        %v484 = vpack.c.bf16 %v304, %v292
        %v485 = vpack.c.bf16 %v305, %v293
        %v486 = vpack.c.bf16 %v306, %v294
        %v487 = vpack.c.bf16 %v307, %v295
        %v488 = vpack.c.bf16 %v308, %v296
        %v489 = vpack.c.bf16 %v309, %v297
        %v490 = vpack.c.bf16 %v310, %v298
        %v491 = vpack.c.bf16 %v311, %v299
        %v492 = vpack.c.bf16 %v312, %v300
        %v493 = vpack.c.bf16 %v325, %v313
        %v494 = vpack.c.bf16 %v326, %v314
        %v495 = vpack.c.bf16 %v327, %v315
        %v496 = vpack.c.bf16 %v328, %v316
        %v497 = vpack.c.bf16 %v329, %v317
        %v498 = vpack.c.bf16 %v330, %v318
        %v499 = vpack.c.bf16 %v331, %v319
        %v500 = vpack.c.bf16 %v332, %v320
        %v501 = vpack.c.bf16 %v333, %v321
        %v502 = vpack.c.bf16 %v334, %v322
        %v503 = vpack.c.bf16 %v335, %v323
        %v504 = vpack.c.bf16 %v336, %v324
        %v505 = vpack.c.bf16 %v349, %v337
        %v506 = vpack.c.bf16 %v350, %v338
        %v507 = vpack.c.bf16 %v351, %v339
        %v508 = vpack.c.bf16 %v352, %v340
        %v509 = vpack.c.bf16 %v353, %v341
        %v510 = vpack.c.bf16 %v354, %v342
        %v511 = vpack.c.bf16 %v355, %v343
        %v512 = vpack.c.bf16 %v356, %v344
        %v513 = vpack.c.bf16 %v357, %v345
        %v514 = vpack.c.bf16 %v358, %v346
        %v515 = vpack.c.bf16 %v359, %v347
        %v516 = vpack.c.bf16 %v360, %v348
        %v517 = vpack.c.bf16 %v373, %v361
        %v518 = vpack.c.bf16 %v374, %v362
        %v519 = vpack.c.bf16 %v375, %v363
        %v520 = vpack.c.bf16 %v376, %v364
        %v521 = vpack.c.bf16 %v377, %v365
        %v522 = vpack.c.bf16 %v378, %v366
        %v523 = vpack.c.bf16 %v379, %v367
        %v524 = vpack.c.bf16 %v380, %v368
        %v525 = vpack.c.bf16 %v381, %v369
        %v526 = vpack.c.bf16 %v382, %v370
        %v527 = vpack.c.bf16 %v383, %v371
        %v528 = vpack.c.bf16 %v384, %v372
        %v529 = vpack.c.bf16 %v397, %v385
        %v530 = vpack.c.bf16 %v398, %v386
        %v531 = vpack.c.bf16 %v399, %v387
        %v532 = vpack.c.bf16 %v400, %v388
        %v533 = vpack.c.bf16 %v401, %v389
        %v534 = vpack.c.bf16 %v402, %v390
        %v535 = vpack.c.bf16 %v403, %v391
        %v536 = vpack.c.bf16 %v404, %v392
        %v537 = vpack.c.bf16 %v405, %v393
        %v538 = vpack.c.bf16 %v406, %v394
        %v539 = vpack.c.bf16 %v407, %v395
        %v540 = vpack.c.bf16 %v408, %v396
        %v541 = vpack.c.bf16 %v421, %v409
        %v542 = vpack.c.bf16 %v422, %v410
        %v543 = vpack.c.bf16 %v423, %v411
        %v544 = vpack.c.bf16 %v424, %v412
        %v545 = vpack.c.bf16 %v425, %v413
        %v546 = vpack.c.bf16 %v426, %v414
        %v547 = vpack.c.bf16 %v427, %v415
        %v548 = vpack.c.bf16 %v428, %v416
        %v549 = vpack.c.bf16 %v429, %v417
        %v550 = vpack.c.bf16 %v430, %v418
        %v551 = vpack.c.bf16 %v431, %v419
        %v552 = vpack.c.bf16 %v432, %v420
        %v553 = vpack.c.bf16 %v445, %v433
        %v554 = vpack.c.bf16 %v446, %v434
        %v555 = vpack.c.bf16 %v447, %v435
        %v556 = vpack.c.bf16 %v448, %v436
        %v557 = vpack.c.bf16 %v449, %v437
        %v558 = vpack.c.bf16 %v450, %v438
        %v559 = vpack.c.bf16 %v451, %v439
        %v560 = vpack.c.bf16 %v452, %v440
        %v561 = vpack.c.bf16 %v453, %v441
        %v562 = vpack.c.bf16 %v454, %v442
        %v563 = vpack.c.bf16 %v455, %v443
        %v564 = vpack.c.bf16 %v456, %v444
        %v565 = vpack.c.bf16 %v469, %v457
        %v566 = vpack.c.bf16 %v470, %v458
        %v567 = vpack.c.bf16 %v471, %v459
        %v568 = vpack.c.bf16 %v472, %v460
        %v569 = vpack.c.bf16 %v473, %v461
        %v570 = vpack.c.bf16 %v474, %v462
        %v571 = vpack.c.bf16 %v475, %v463
        %v572 = vpack.c.bf16 %v476, %v464
        %v573 = vpack.c.bf16 %v477, %v465
        %v574 = vpack.c.bf16 %v478, %v466
        %v575 = vpack.c.bf16 %v479, %v467
        %v576 = vpack.c.bf16 %v480, %v468
        %v577 = vld [vmem:[#allocation5] sm:$0xff]
        %v578 = vld [vmem:[#allocation5 + $0x8] sm:$0xff]
        %v579 = vld [vmem:[#allocation5 + $0x10] sm:$0xff]
        %v580 = vld [vmem:[#allocation5 + $0x18] sm:$0xff]
        %v581 = vld [vmem:[#allocation5 + $0x20] sm:$0xff]
        %v582 = vld [vmem:[#allocation5 + $0x28] sm:$0xff]
        %v583 = vld [vmem:[#allocation5 + $0x30] sm:$0xff]
        %v584 = vld [vmem:[#allocation5 + $0x38] sm:$0xff]
        %v585 = vld [vmem:[#allocation5 + $0x40] sm:$0xff]
        %v586 = vld [vmem:[#allocation5 + $0x48] sm:$0xff]
        %v587 = vld [vmem:[#allocation5 + $0x50] sm:$0xff]
        %v588 = vld [vmem:[#allocation5 + $0x58] sm:$0xff]
        %v589 = vld [vmem:[#allocation5 + $0x60] sm:$0xff]
        %v590 = vld [vmem:[#allocation5 + $0x68] sm:$0xff]
        %v591 = vld [vmem:[#allocation5 + $0x70] sm:$0xff]
        %v592 = vld [vmem:[#allocation5 + $0x78] sm:$0xff]
        %v593 = vld [vmem:[#allocation5 + $0x80] sm:$0xff]
        %v594 = vld [vmem:[#allocation5 + $0x88] sm:$0xff]
        %v595 = vld [vmem:[#allocation5 + $0x90] sm:$0xff]
        %v596 = vld [vmem:[#allocation5 + $0x98] sm:$0xff]
        %v597 = vld [vmem:[#allocation5 + $0xa0] sm:$0xff]
        %v598 = vld [vmem:[#allocation5 + $0xa8] sm:$0xff]
        %v599 = vld [vmem:[#allocation5 + $0xb0] sm:$0xff]
        %v600 = vld [vmem:[#allocation5 + $0xb8] sm:$0xff]
        %v601 = vld [vmem:[#allocation5 + $0xc0] sm:$0xff]
        %v602 = vld [vmem:[#allocation5 + $0xc8] sm:$0xff]
        %v603 = vld [vmem:[#allocation5 + $0xd0] sm:$0xff]
        %v604 = vld [vmem:[#allocation5 + $0xd8] sm:$0xff]
        %v605 = vld [vmem:[#allocation5 + $0xe0] sm:$0xff]
        %v606 = vld [vmem:[#allocation5 + $0xe8] sm:$0xff]
        %v607 = vld [vmem:[#allocation5 + $0xf0] sm:$0xff]
        %v608 = vld [vmem:[#allocation5 + $0xf8] sm:$0xff]
        %v609 = vld [vmem:[#allocation5 + $0x100] sm:$0xff]
        %v610 = vld [vmem:[#allocation5 + $0x108] sm:$0xff]
        %v611 = vld [vmem:[#allocation5 + $0x110] sm:$0xff]
        %v612 = vld [vmem:[#allocation5 + $0x118] sm:$0xff]
        %v613 = vld [vmem:[#allocation5 + $0x120] sm:$0xff]
        %v614 = vld [vmem:[#allocation5 + $0x128] sm:$0xff]
        %v615 = vld [vmem:[#allocation5 + $0x130] sm:$0xff]
        %v616 = vld [vmem:[#allocation5 + $0x138] sm:$0xff]
        %v617 = vld [vmem:[#allocation5 + $0x140] sm:$0xff]
        %v618 = vld [vmem:[#allocation5 + $0x148] sm:$0xff]
        %v619 = vld [vmem:[#allocation5 + $0x150] sm:$0xff]
        %v620 = vld [vmem:[#allocation5 + $0x158] sm:$0xff]
        %v621 = vld [vmem:[#allocation5 + $0x160] sm:$0xff]
        %v622 = vld [vmem:[#allocation5 + $0x168] sm:$0xff]
        %v623 = vld [vmem:[#allocation5 + $0x170] sm:$0xff]
        %v624 = vld [vmem:[#allocation5 + $0x178] sm:$0xff]
        %v625 = vld [vmem:[#allocation5 + $0x180] sm:$0xff]
        %v626 = vld [vmem:[#allocation5 + $0x188] sm:$0xff]
        %v627 = vld [vmem:[#allocation5 + $0x190] sm:$0xff]
        %v628 = vld [vmem:[#allocation5 + $0x198] sm:$0xff]
        %v629 = vld [vmem:[#allocation5 + $0x1a0] sm:$0xff]
        %v630 = vld [vmem:[#allocation5 + $0x1a8] sm:$0xff]
        %v631 = vld [vmem:[#allocation5 + $0x1b0] sm:$0xff]
        %v632 = vld [vmem:[#allocation5 + $0x1b8] sm:$0xff]
        %v633 = vld [vmem:[#allocation5 + $0x1c0] sm:$0xff]
        %v634 = vld [vmem:[#allocation5 + $0x1c8] sm:$0xff]
        %v635 = vld [vmem:[#allocation5 + $0x1d0] sm:$0xff]
        %v636 = vld [vmem:[#allocation5 + $0x1d8] sm:$0xff]
        %v637 = vld [vmem:[#allocation5 + $0x1e0] sm:$0xff]
        %v638 = vld [vmem:[#allocation5 + $0x1e8] sm:$0xff]
        %v639 = vld [vmem:[#allocation5 + $0x1f0] sm:$0xff]
        %v640 = vld [vmem:[#allocation5 + $0x1f8] sm:$0xff]
        %v641 = vld [vmem:[#allocation5 + $0x200] sm:$0xff]
        %v642 = vld [vmem:[#allocation5 + $0x208] sm:$0xff]
        %v643 = vld [vmem:[#allocation5 + $0x210] sm:$0xff]
        %v644 = vld [vmem:[#allocation5 + $0x218] sm:$0xff]
        %v645 = vld [vmem:[#allocation5 + $0x220] sm:$0xff]
        %v646 = vld [vmem:[#allocation5 + $0x228] sm:$0xff]
        %v647 = vld [vmem:[#allocation5 + $0x230] sm:$0xff]
        %v648 = vld [vmem:[#allocation5 + $0x238] sm:$0xff]
        %v649 = vld [vmem:[#allocation5 + $0x240] sm:$0xff]
        %v650 = vld [vmem:[#allocation5 + $0x248] sm:$0xff]
        %v651 = vld [vmem:[#allocation5 + $0x250] sm:$0xff]
        %v652 = vld [vmem:[#allocation5 + $0x258] sm:$0xff]
        %v653 = vld [vmem:[#allocation5 + $0x260] sm:$0xff]
        %v654 = vld [vmem:[#allocation5 + $0x268] sm:$0xff]
        %v655 = vld [vmem:[#allocation5 + $0x270] sm:$0xff]
        %v656 = vld [vmem:[#allocation5 + $0x278] sm:$0xff]
        %v657 = vld [vmem:[#allocation5 + $0x280] sm:$0xff]
        %v658 = vld [vmem:[#allocation5 + $0x288] sm:$0xff]
        %v659 = vld [vmem:[#allocation5 + $0x290] sm:$0xff]
        %v660 = vld [vmem:[#allocation5 + $0x298] sm:$0xff]
        %v661 = vld [vmem:[#allocation5 + $0x2a0] sm:$0xff]
        %v662 = vld [vmem:[#allocation5 + $0x2a8] sm:$0xff]
        %v663 = vld [vmem:[#allocation5 + $0x2b0] sm:$0xff]
        %v664 = vld [vmem:[#allocation5 + $0x2b8] sm:$0xff]
        %v665 = vld [vmem:[#allocation5 + $0x2c0] sm:$0xff]
        %v666 = vld [vmem:[#allocation5 + $0x2c8] sm:$0xff]
        %v667 = vld [vmem:[#allocation5 + $0x2d0] sm:$0xff]
        %v668 = vld [vmem:[#allocation5 + $0x2d8] sm:$0xff]
        %v669 = vld [vmem:[#allocation5 + $0x2e0] sm:$0xff]
        %v670 = vld [vmem:[#allocation5 + $0x2e8] sm:$0xff]
        %v671 = vld [vmem:[#allocation5 + $0x2f0] sm:$0xff]
        %v672 = vld [vmem:[#allocation5 + $0x2f8] sm:$0xff]
        %v673 = vld [vmem:[#allocation5 + $0x300] sm:$0xff]
        %v674 = vld [vmem:[#allocation5 + $0x308] sm:$0xff]
        %v675 = vld [vmem:[#allocation5 + $0x310] sm:$0xff]
        %v676 = vld [vmem:[#allocation5 + $0x318] sm:$0xff]
        %v677 = vld [vmem:[#allocation5 + $0x320] sm:$0xff]
        %v678 = vld [vmem:[#allocation5 + $0x328] sm:$0xff]
        %v679 = vld [vmem:[#allocation5 + $0x330] sm:$0xff]
        %v680 = vld [vmem:[#allocation5 + $0x338] sm:$0xff]
        %v681 = vld [vmem:[#allocation5 + $0x340] sm:$0xff]
        %v682 = vld [vmem:[#allocation5 + $0x348] sm:$0xff]
        %v683 = vld [vmem:[#allocation5 + $0x350] sm:$0xff]
        %v684 = vld [vmem:[#allocation5 + $0x358] sm:$0xff]
        %v685 = vld [vmem:[#allocation5 + $0x360] sm:$0xff]
        %v686 = vld [vmem:[#allocation5 + $0x368] sm:$0xff]
        %v687 = vld [vmem:[#allocation5 + $0x370] sm:$0xff]
        %v688 = vld [vmem:[#allocation5 + $0x378] sm:$0xff]
        %v689 = vld [vmem:[#allocation5 + $0x380] sm:$0xff]
        %v690 = vld [vmem:[#allocation5 + $0x388] sm:$0xff]
        %v691 = vld [vmem:[#allocation5 + $0x390] sm:$0xff]
        %v692 = vld [vmem:[#allocation5 + $0x398] sm:$0xff]
        %v693 = vld [vmem:[#allocation5 + $0x3a0] sm:$0xff]
        %v694 = vld [vmem:[#allocation5 + $0x3a8] sm:$0xff]
        %v695 = vld [vmem:[#allocation5 + $0x3b0] sm:$0xff]
        %v696 = vld [vmem:[#allocation5 + $0x3b8] sm:$0xff]
        %v697 = vld [vmem:[#allocation5 + $0x3c0] sm:$0xff]
        %v698 = vld [vmem:[#allocation5 + $0x3c8] sm:$0xff]
        %v699 = vld [vmem:[#allocation5 + $0x3d0] sm:$0xff]
        %v700 = vld [vmem:[#allocation5 + $0x3d8] sm:$0xff]
        %v701 = vld [vmem:[#allocation5 + $0x3e0] sm:$0xff]
        %v702 = vld [vmem:[#allocation5 + $0x3e8] sm:$0xff]
        %v703 = vld [vmem:[#allocation5 + $0x3f0] sm:$0xff]
        %v704 = vld [vmem:[#allocation5 + $0x3f8] sm:$0xff]
        %v705 = vld [vmem:[#allocation5 + $0x400] sm:$0xff]
        %v706 = vld [vmem:[#allocation5 + $0x408] sm:$0xff]
        %v707 = vld [vmem:[#allocation5 + $0x410] sm:$0xff]
        %v708 = vld [vmem:[#allocation5 + $0x418] sm:$0xff]
        %v709 = vld [vmem:[#allocation5 + $0x420] sm:$0xff]
        %v710 = vld [vmem:[#allocation5 + $0x428] sm:$0xff]
        %v711 = vld [vmem:[#allocation5 + $0x430] sm:$0xff]
        %v712 = vld [vmem:[#allocation5 + $0x438] sm:$0xff]
        %v713 = vld [vmem:[#allocation5 + $0x440] sm:$0xff]
        %v714 = vld [vmem:[#allocation5 + $0x448] sm:$0xff]
        %v715 = vld [vmem:[#allocation5 + $0x450] sm:$0xff]
        %v716 = vld [vmem:[#allocation5 + $0x458] sm:$0xff]
        %v717 = vld [vmem:[#allocation5 + $0x460] sm:$0xff]
        %v718 = vld [vmem:[#allocation5 + $0x468] sm:$0xff]
        %v719 = vld [vmem:[#allocation5 + $0x470] sm:$0xff]
        %v720 = vld [vmem:[#allocation5 + $0x478] sm:$0xff]
        %v721 = vld [vmem:[#allocation5 + $0x480] sm:$0xff]
        %v722 = vld [vmem:[#allocation5 + $0x488] sm:$0xff]
        %v723 = vld [vmem:[#allocation5 + $0x490] sm:$0xff]
        %v724 = vld [vmem:[#allocation5 + $0x498] sm:$0xff]
        %v725 = vld [vmem:[#allocation5 + $0x4a0] sm:$0xff]
        %v726 = vld [vmem:[#allocation5 + $0x4a8] sm:$0xff]
        %v727 = vld [vmem:[#allocation5 + $0x4b0] sm:$0xff]
        %v728 = vld [vmem:[#allocation5 + $0x4b8] sm:$0xff]
        %v729 = vld [vmem:[#allocation5 + $0x4c0] sm:$0xff]
        %v730 = vld [vmem:[#allocation5 + $0x4c8] sm:$0xff]
        %v731 = vld [vmem:[#allocation5 + $0x4d0] sm:$0xff]
        %v732 = vld [vmem:[#allocation5 + $0x4d8] sm:$0xff]
        %v733 = vld [vmem:[#allocation5 + $0x4e0] sm:$0xff]
        %v734 = vld [vmem:[#allocation5 + $0x4e8] sm:$0xff]
        %v735 = vld [vmem:[#allocation5 + $0x4f0] sm:$0xff]
        %v736 = vld [vmem:[#allocation5 + $0x4f8] sm:$0xff]
        %v737 = vld [vmem:[#allocation5 + $0x500] sm:$0xff]
        %v738 = vld [vmem:[#allocation5 + $0x508] sm:$0xff]
        %v739 = vld [vmem:[#allocation5 + $0x510] sm:$0xff]
        %v740 = vld [vmem:[#allocation5 + $0x518] sm:$0xff]
        %v741 = vld [vmem:[#allocation5 + $0x520] sm:$0xff]
        %v742 = vld [vmem:[#allocation5 + $0x528] sm:$0xff]
        %v743 = vld [vmem:[#allocation5 + $0x530] sm:$0xff]
        %v744 = vld [vmem:[#allocation5 + $0x538] sm:$0xff]
        %v745 = vld [vmem:[#allocation5 + $0x540] sm:$0xff]
        %v746 = vld [vmem:[#allocation5 + $0x548] sm:$0xff]
        %v747 = vld [vmem:[#allocation5 + $0x550] sm:$0xff]
        %v748 = vld [vmem:[#allocation5 + $0x558] sm:$0xff]
        %v749 = vld [vmem:[#allocation5 + $0x560] sm:$0xff]
        %v750 = vld [vmem:[#allocation5 + $0x568] sm:$0xff]
        %v751 = vld [vmem:[#allocation5 + $0x570] sm:$0xff]
        %v752 = vld [vmem:[#allocation5 + $0x578] sm:$0xff]
        %v753 = vld [vmem:[#allocation5 + $0x580] sm:$0xff]
        %v754 = vld [vmem:[#allocation5 + $0x588] sm:$0xff]
        %v755 = vld [vmem:[#allocation5 + $0x590] sm:$0xff]
        %v756 = vld [vmem:[#allocation5 + $0x598] sm:$0xff]
        %v757 = vld [vmem:[#allocation5 + $0x5a0] sm:$0xff]
        %v758 = vld [vmem:[#allocation5 + $0x5a8] sm:$0xff]
        %v759 = vld [vmem:[#allocation5 + $0x5b0] sm:$0xff]
        %v760 = vld [vmem:[#allocation5 + $0x5b8] sm:$0xff]
        %v761 = vld [vmem:[#allocation5 + $0x5c0] sm:$0xff]
        %v762 = vld [vmem:[#allocation5 + $0x5c8] sm:$0xff]
        %v763 = vld [vmem:[#allocation5 + $0x5d0] sm:$0xff]
        %v764 = vld [vmem:[#allocation5 + $0x5d8] sm:$0xff]
        %v765 = vld [vmem:[#allocation5 + $0x5e0] sm:$0xff]
        %v766 = vld [vmem:[#allocation5 + $0x5e8] sm:$0xff]
        %v767 = vld [vmem:[#allocation5 + $0x5f0] sm:$0xff]
        %v768 = vld [vmem:[#allocation5 + $0x5f8] sm:$0xff]
        %v769 = vld [vmem:[#allocation5 + $0x600] sm:$0xff]
        %v770 = vld [vmem:[#allocation5 + $0x608] sm:$0xff]
        %v771 = vld [vmem:[#allocation5 + $0x610] sm:$0xff]
        %v772 = vld [vmem:[#allocation5 + $0x618] sm:$0xff]
        %v773 = vld [vmem:[#allocation5 + $0x620] sm:$0xff]
        %v774 = vld [vmem:[#allocation5 + $0x628] sm:$0xff]
        %v775 = vld [vmem:[#allocation5 + $0x630] sm:$0xff]
        %v776 = vld [vmem:[#allocation5 + $0x638] sm:$0xff]
        %v777 = vld [vmem:[#allocation5 + $0x640] sm:$0xff]
        %v778 = vld [vmem:[#allocation5 + $0x648] sm:$0xff]
        %v779 = vld [vmem:[#allocation5 + $0x650] sm:$0xff]
        %v780 = vld [vmem:[#allocation5 + $0x658] sm:$0xff]
        %v781 = vld [vmem:[#allocation5 + $0x660] sm:$0xff]
        %v782 = vld [vmem:[#allocation5 + $0x668] sm:$0xff]
        %v783 = vld [vmem:[#allocation5 + $0x670] sm:$0xff]
        %v784 = vld [vmem:[#allocation5 + $0x678] sm:$0xff]
        %v785 = vld [vmem:[#allocation5 + $0x680] sm:$0xff]
        %v786 = vld [vmem:[#allocation5 + $0x688] sm:$0xff]
        %v787 = vld [vmem:[#allocation5 + $0x690] sm:$0xff]
        %v788 = vld [vmem:[#allocation5 + $0x698] sm:$0xff]
        %v789 = vld [vmem:[#allocation5 + $0x6a0] sm:$0xff]
        %v790 = vld [vmem:[#allocation5 + $0x6a8] sm:$0xff]
        %v791 = vld [vmem:[#allocation5 + $0x6b0] sm:$0xff]
        %v792 = vld [vmem:[#allocation5 + $0x6b8] sm:$0xff]
        %v793 = vld [vmem:[#allocation5 + $0x6c0] sm:$0xff]
        %v794 = vld [vmem:[#allocation5 + $0x6c8] sm:$0xff]
        %v795 = vld [vmem:[#allocation5 + $0x6d0] sm:$0xff]
        %v796 = vld [vmem:[#allocation5 + $0x6d8] sm:$0xff]
        %v797 = vld [vmem:[#allocation5 + $0x6e0] sm:$0xff]
        %v798 = vld [vmem:[#allocation5 + $0x6e8] sm:$0xff]
        %v799 = vld [vmem:[#allocation5 + $0x6f0] sm:$0xff]
        %v800 = vld [vmem:[#allocation5 + $0x6f8] sm:$0xff]
        %v801 = vld [vmem:[#allocation5 + $0x700] sm:$0xff]
        %v802 = vld [vmem:[#allocation5 + $0x708] sm:$0xff]
        %v803 = vld [vmem:[#allocation5 + $0x710] sm:$0xff]
        %v804 = vld [vmem:[#allocation5 + $0x718] sm:$0xff]
        %v805 = vld [vmem:[#allocation5 + $0x720] sm:$0xff]
        %v806 = vld [vmem:[#allocation5 + $0x728] sm:$0xff]
        %v807 = vld [vmem:[#allocation5 + $0x730] sm:$0xff]
        %v808 = vld [vmem:[#allocation5 + $0x738] sm:$0xff]
        %v809 = vld [vmem:[#allocation5 + $0x740] sm:$0xff]
        %v810 = vld [vmem:[#allocation5 + $0x748] sm:$0xff]
        %v811 = vld [vmem:[#allocation5 + $0x750] sm:$0xff]
        %v812 = vld [vmem:[#allocation5 + $0x758] sm:$0xff]
        %v813 = vld [vmem:[#allocation5 + $0x760] sm:$0xff]
        %v814 = vld [vmem:[#allocation5 + $0x768] sm:$0xff]
        %v815 = vld [vmem:[#allocation5 + $0x770] sm:$0xff]
        %v816 = vld [vmem:[#allocation5 + $0x778] sm:$0xff]
        %v817 = vld [vmem:[#allocation5 + $0x780] sm:$0xff]
        %v818 = vld [vmem:[#allocation5 + $0x788] sm:$0xff]
        %v819 = vld [vmem:[#allocation5 + $0x790] sm:$0xff]
        %v820 = vld [vmem:[#allocation5 + $0x798] sm:$0xff]
        %v821 = vld [vmem:[#allocation5 + $0x7a0] sm:$0xff]
        %v822 = vld [vmem:[#allocation5 + $0x7a8] sm:$0xff]
        %v823 = vld [vmem:[#allocation5 + $0x7b0] sm:$0xff]
        %v824 = vld [vmem:[#allocation5 + $0x7b8] sm:$0xff]
        %v825 = vld [vmem:[#allocation5 + $0x7c0] sm:$0xff]
        %v826 = vld [vmem:[#allocation5 + $0x7c8] sm:$0xff]
        %v827 = vld [vmem:[#allocation5 + $0x7d0] sm:$0xff]
        %v828 = vld [vmem:[#allocation5 + $0x7d8] sm:$0xff]
        %v829 = vld [vmem:[#allocation5 + $0x7e0] sm:$0xff]
        %v830 = vld [vmem:[#allocation5 + $0x7e8] sm:$0xff]
        %v831 = vld [vmem:[#allocation5 + $0x7f0] sm:$0xff]
        %v832 = vld [vmem:[#allocation5 + $0x7f8] sm:$0xff]
        %v833 = vld [vmem:[#allocation5 + $0x800] sm:$0xff]
        %v834 = vld [vmem:[#allocation5 + $0x808] sm:$0xff]
        %v835 = vld [vmem:[#allocation5 + $0x810] sm:$0xff]
        %v836 = vld [vmem:[#allocation5 + $0x818] sm:$0xff]
        %v837 = vld [vmem:[#allocation5 + $0x820] sm:$0xff]
        %v838 = vld [vmem:[#allocation5 + $0x828] sm:$0xff]
        %v839 = vld [vmem:[#allocation5 + $0x830] sm:$0xff]
        %v840 = vld [vmem:[#allocation5 + $0x838] sm:$0xff]
        %v841 = vld [vmem:[#allocation5 + $0x840] sm:$0xff]
        %v842 = vld [vmem:[#allocation5 + $0x848] sm:$0xff]
        %v843 = vld [vmem:[#allocation5 + $0x850] sm:$0xff]
        %v844 = vld [vmem:[#allocation5 + $0x858] sm:$0xff]
        %v845 = vld [vmem:[#allocation5 + $0x860] sm:$0xff]
        %v846 = vld [vmem:[#allocation5 + $0x868] sm:$0xff]
        %v847 = vld [vmem:[#allocation5 + $0x870] sm:$0xff]
        %v848 = vld [vmem:[#allocation5 + $0x878] sm:$0xff]
        %v849 = vld [vmem:[#allocation5 + $0x880] sm:$0xff]
        %v850 = vld [vmem:[#allocation5 + $0x888] sm:$0xff]
        %v851 = vld [vmem:[#allocation5 + $0x890] sm:$0xff]
        %v852 = vld [vmem:[#allocation5 + $0x898] sm:$0xff]
        %v853 = vld [vmem:[#allocation5 + $0x8a0] sm:$0xff]
        %v854 = vld [vmem:[#allocation5 + $0x8a8] sm:$0xff]
        %v855 = vld [vmem:[#allocation5 + $0x8b0] sm:$0xff]
        %v856 = vld [vmem:[#allocation5 + $0x8b8] sm:$0xff]
        %v857 = vld [vmem:[#allocation5 + $0x8c0] sm:$0xff]
        %v858 = vld [vmem:[#allocation5 + $0x8c8] sm:$0xff]
        %v859 = vld [vmem:[#allocation5 + $0x8d0] sm:$0xff]
        %v860 = vld [vmem:[#allocation5 + $0x8d8] sm:$0xff]
        %v861 = vld [vmem:[#allocation5 + $0x8e0] sm:$0xff]
        %v862 = vld [vmem:[#allocation5 + $0x8e8] sm:$0xff]
        %v863 = vld [vmem:[#allocation5 + $0x8f0] sm:$0xff]
        %v864 = vld [vmem:[#allocation5 + $0x8f8] sm:$0xff]
        %v865 = vld [vmem:[#allocation5 + $0x900] sm:$0xff]
        %v866 = vld [vmem:[#allocation5 + $0x908] sm:$0xff]
        %v867 = vld [vmem:[#allocation5 + $0x910] sm:$0xff]
        %v868 = vld [vmem:[#allocation5 + $0x918] sm:$0xff]
        %v869 = vld [vmem:[#allocation5 + $0x920] sm:$0xff]
        %v870 = vld [vmem:[#allocation5 + $0x928] sm:$0xff]
        %v871 = vld [vmem:[#allocation5 + $0x930] sm:$0xff]
        %v872 = vld [vmem:[#allocation5 + $0x938] sm:$0xff]
        %v873 = vld [vmem:[#allocation5 + $0x940] sm:$0xff]
        %v874 = vld [vmem:[#allocation5 + $0x948] sm:$0xff]
        %v875 = vld [vmem:[#allocation5 + $0x950] sm:$0xff]
        %v876 = vld [vmem:[#allocation5 + $0x958] sm:$0xff]
        %v877 = vld [vmem:[#allocation5 + $0x960] sm:$0xff]
        %v878 = vld [vmem:[#allocation5 + $0x968] sm:$0xff]
        %v879 = vld [vmem:[#allocation5 + $0x970] sm:$0xff]
        %v880 = vld [vmem:[#allocation5 + $0x978] sm:$0xff]
        %v881 = vld [vmem:[#allocation5 + $0x980] sm:$0xff]
        %v882 = vld [vmem:[#allocation5 + $0x988] sm:$0xff]
        %v883 = vld [vmem:[#allocation5 + $0x990] sm:$0xff]
        %v884 = vld [vmem:[#allocation5 + $0x998] sm:$0xff]
        %v885 = vld [vmem:[#allocation5 + $0x9a0] sm:$0xff]
        %v886 = vld [vmem:[#allocation5 + $0x9a8] sm:$0xff]
        %v887 = vld [vmem:[#allocation5 + $0x9b0] sm:$0xff]
        %v888 = vld [vmem:[#allocation5 + $0x9b8] sm:$0xff]
        %v889 = vld [vmem:[#allocation5 + $0x9c0] sm:$0xff]
        %v890 = vld [vmem:[#allocation5 + $0x9c8] sm:$0xff]
        %v891 = vld [vmem:[#allocation5 + $0x9d0] sm:$0xff]
        %v892 = vld [vmem:[#allocation5 + $0x9d8] sm:$0xff]
        %v893 = vld [vmem:[#allocation5 + $0x9e0] sm:$0xff]
        %v894 = vld [vmem:[#allocation5 + $0x9e8] sm:$0xff]
        %v895 = vld [vmem:[#allocation5 + $0x9f0] sm:$0xff]
        %v896 = vld [vmem:[#allocation5 + $0x9f8] sm:$0xff]
        %v897 = vld [vmem:[#allocation5 + $0xa00] sm:$0xff]
        %v898 = vld [vmem:[#allocation5 + $0xa08] sm:$0xff]
        %v899 = vld [vmem:[#allocation5 + $0xa10] sm:$0xff]
        %v900 = vld [vmem:[#allocation5 + $0xa18] sm:$0xff]
        %v901 = vld [vmem:[#allocation5 + $0xa20] sm:$0xff]
        %v902 = vld [vmem:[#allocation5 + $0xa28] sm:$0xff]
        %v903 = vld [vmem:[#allocation5 + $0xa30] sm:$0xff]
        %v904 = vld [vmem:[#allocation5 + $0xa38] sm:$0xff]
        %v905 = vld [vmem:[#allocation5 + $0xa40] sm:$0xff]
        %v906 = vld [vmem:[#allocation5 + $0xa48] sm:$0xff]
        %v907 = vld [vmem:[#allocation5 + $0xa50] sm:$0xff]
        %v908 = vld [vmem:[#allocation5 + $0xa58] sm:$0xff]
        %v909 = vld [vmem:[#allocation5 + $0xa60] sm:$0xff]
        %v910 = vld [vmem:[#allocation5 + $0xa68] sm:$0xff]
        %v911 = vld [vmem:[#allocation5 + $0xa70] sm:$0xff]
        %v912 = vld [vmem:[#allocation5 + $0xa78] sm:$0xff]
        %v913 = vld [vmem:[#allocation5 + $0xa80] sm:$0xff]
        %v914 = vld [vmem:[#allocation5 + $0xa88] sm:$0xff]
        %v915 = vld [vmem:[#allocation5 + $0xa90] sm:$0xff]
        %v916 = vld [vmem:[#allocation5 + $0xa98] sm:$0xff]
        %v917 = vld [vmem:[#allocation5 + $0xaa0] sm:$0xff]
        %v918 = vld [vmem:[#allocation5 + $0xaa8] sm:$0xff]
        %v919 = vld [vmem:[#allocation5 + $0xab0] sm:$0xff]
        %v920 = vld [vmem:[#allocation5 + $0xab8] sm:$0xff]
        %v921 = vld [vmem:[#allocation5 + $0xac0] sm:$0xff]
        %v922 = vld [vmem:[#allocation5 + $0xac8] sm:$0xff]
        %v923 = vld [vmem:[#allocation5 + $0xad0] sm:$0xff]
        %v924 = vld [vmem:[#allocation5 + $0xad8] sm:$0xff]
        %v925 = vld [vmem:[#allocation5 + $0xae0] sm:$0xff]
        %v926 = vld [vmem:[#allocation5 + $0xae8] sm:$0xff]
        %v927 = vld [vmem:[#allocation5 + $0xaf0] sm:$0xff]
        %v928 = vld [vmem:[#allocation5 + $0xaf8] sm:$0xff]
        %v929 = vld [vmem:[#allocation5 + $0xb00] sm:$0xff]
        %v930 = vld [vmem:[#allocation5 + $0xb08] sm:$0xff]
        %v931 = vld [vmem:[#allocation5 + $0xb10] sm:$0xff]
        %v932 = vld [vmem:[#allocation5 + $0xb18] sm:$0xff]
        %v933 = vld [vmem:[#allocation5 + $0xb20] sm:$0xff]
        %v934 = vld [vmem:[#allocation5 + $0xb28] sm:$0xff]
        %v935 = vld [vmem:[#allocation5 + $0xb30] sm:$0xff]
        %v936 = vld [vmem:[#allocation5 + $0xb38] sm:$0xff]
        %v937 = vld [vmem:[#allocation5 + $0xb40] sm:$0xff]
        %v938 = vld [vmem:[#allocation5 + $0xb48] sm:$0xff]
        %v939 = vld [vmem:[#allocation5 + $0xb50] sm:$0xff]
        %v940 = vld [vmem:[#allocation5 + $0xb58] sm:$0xff]
        %v941 = vld [vmem:[#allocation5 + $0xb60] sm:$0xff]
        %v942 = vld [vmem:[#allocation5 + $0xb68] sm:$0xff]
        %v943 = vld [vmem:[#allocation5 + $0xb70] sm:$0xff]
        %v944 = vld [vmem:[#allocation5 + $0xb78] sm:$0xff]
        %v945 = vld [vmem:[#allocation5 + $0xb80] sm:$0xff]
        %v946 = vld [vmem:[#allocation5 + $0xb88] sm:$0xff]
        %v947 = vld [vmem:[#allocation5 + $0xb90] sm:$0xff]
        %v948 = vld [vmem:[#allocation5 + $0xb98] sm:$0xff]
        %v949 = vld [vmem:[#allocation5 + $0xba0] sm:$0xff]
        %v950 = vld [vmem:[#allocation5 + $0xba8] sm:$0xff]
        %v951 = vld [vmem:[#allocation5 + $0xbb0] sm:$0xff]
        %v952 = vld [vmem:[#allocation5 + $0xbb8] sm:$0xff]
        %v953 = vld [vmem:[#allocation5 + $0xbc0] sm:$0xff]
        %v954 = vld [vmem:[#allocation5 + $0xbc8] sm:$0xff]
        %v955 = vld [vmem:[#allocation5 + $0xbd0] sm:$0xff]
        %v956 = vld [vmem:[#allocation5 + $0xbd8] sm:$0xff]
        %v957 = vld [vmem:[#allocation5 + $0xbe0] sm:$0xff]
        %v958 = vld [vmem:[#allocation5 + $0xbe8] sm:$0xff]
        %v959 = vld [vmem:[#allocation5 + $0xbf0] sm:$0xff]
        %v960 = vld [vmem:[#allocation5 + $0xbf8] sm:$0xff]
        %v961 = vld [vmem:[#allocation5 + $0xc00] sm:$0xff]
        %v962 = vld [vmem:[#allocation5 + $0xc08] sm:$0xff]
        %v963 = vld [vmem:[#allocation5 + $0xc10] sm:$0xff]
        %v964 = vld [vmem:[#allocation5 + $0xc18] sm:$0xff]
        %v965 = vld [vmem:[#allocation5 + $0xc20] sm:$0xff]
        %v966 = vld [vmem:[#allocation5 + $0xc28] sm:$0xff]
        %v967 = vld [vmem:[#allocation5 + $0xc30] sm:$0xff]
        %v968 = vld [vmem:[#allocation5 + $0xc38] sm:$0xff]
        %v969 = vld [vmem:[#allocation5 + $0xc40] sm:$0xff]
        %v970 = vld [vmem:[#allocation5 + $0xc48] sm:$0xff]
        %v971 = vld [vmem:[#allocation5 + $0xc50] sm:$0xff]
        %v972 = vld [vmem:[#allocation5 + $0xc58] sm:$0xff]
        %v973 = vld [vmem:[#allocation5 + $0xc60] sm:$0xff]
        %v974 = vld [vmem:[#allocation5 + $0xc68] sm:$0xff]
        %v975 = vld [vmem:[#allocation5 + $0xc70] sm:$0xff]
        %v976 = vld [vmem:[#allocation5 + $0xc78] sm:$0xff]
        %v977 = vld [vmem:[#allocation5 + $0xc80] sm:$0xff]
        %v978 = vld [vmem:[#allocation5 + $0xc88] sm:$0xff]
        %v979 = vld [vmem:[#allocation5 + $0xc90] sm:$0xff]
        %v980 = vld [vmem:[#allocation5 + $0xc98] sm:$0xff]
        %v981 = vld [vmem:[#allocation5 + $0xca0] sm:$0xff]
        %v982 = vld [vmem:[#allocation5 + $0xca8] sm:$0xff]
        %v983 = vld [vmem:[#allocation5 + $0xcb0] sm:$0xff]
        %v984 = vld [vmem:[#allocation5 + $0xcb8] sm:$0xff]
        %v985 = vld [vmem:[#allocation5 + $0xcc0] sm:$0xff]
        %v986 = vld [vmem:[#allocation5 + $0xcc8] sm:$0xff]
        %v987 = vld [vmem:[#allocation5 + $0xcd0] sm:$0xff]
        %v988 = vld [vmem:[#allocation5 + $0xcd8] sm:$0xff]
        %v989 = vld [vmem:[#allocation5 + $0xce0] sm:$0xff]
        %v990 = vld [vmem:[#allocation5 + $0xce8] sm:$0xff]
        %v991 = vld [vmem:[#allocation5 + $0xcf0] sm:$0xff]
        %v992 = vld [vmem:[#allocation5 + $0xcf8] sm:$0xff]
        %v993 = vld [vmem:[#allocation5 + $0xd00] sm:$0xff]
        %v994 = vld [vmem:[#allocation5 + $0xd08] sm:$0xff]
        %v995 = vld [vmem:[#allocation5 + $0xd10] sm:$0xff]
        %v996 = vld [vmem:[#allocation5 + $0xd18] sm:$0xff]
        %v997 = vld [vmem:[#allocation5 + $0xd20] sm:$0xff]
        %v998 = vld [vmem:[#allocation5 + $0xd28] sm:$0xff]
        %v999 = vld [vmem:[#allocation5 + $0xd30] sm:$0xff]
        %v1000 = vld [vmem:[#allocation5 + $0xd38] sm:$0xff]
        %v1001 = vld [vmem:[#allocation5 + $0xd40] sm:$0xff]
        %v1002 = vld [vmem:[#allocation5 + $0xd48] sm:$0xff]
        %v1003 = vld [vmem:[#allocation5 + $0xd50] sm:$0xff]
        %v1004 = vld [vmem:[#allocation5 + $0xd58] sm:$0xff]
        %v1005 = vld [vmem:[#allocation5 + $0xd60] sm:$0xff]
        %v1006 = vld [vmem:[#allocation5 + $0xd68] sm:$0xff]
        %v1007 = vld [vmem:[#allocation5 + $0xd70] sm:$0xff]
        %v1008 = vld [vmem:[#allocation5 + $0xd78] sm:$0xff]
        %v1009 = vld [vmem:[#allocation5 + $0xd80] sm:$0xff]
        %v1010 = vld [vmem:[#allocation5 + $0xd88] sm:$0xff]
        %v1011 = vld [vmem:[#allocation5 + $0xd90] sm:$0xff]
        %v1012 = vld [vmem:[#allocation5 + $0xd98] sm:$0xff]
        %v1013 = vld [vmem:[#allocation5 + $0xda0] sm:$0xff]
        %v1014 = vld [vmem:[#allocation5 + $0xda8] sm:$0xff]
        %v1015 = vld [vmem:[#allocation5 + $0xdb0] sm:$0xff]
        %v1016 = vld [vmem:[#allocation5 + $0xdb8] sm:$0xff]
        %v1017 = vld [vmem:[#allocation5 + $0xdc0] sm:$0xff]
        %v1018 = vld [vmem:[#allocation5 + $0xdc8] sm:$0xff]
        %v1019 = vld [vmem:[#allocation5 + $0xdd0] sm:$0xff]
        %v1020 = vld [vmem:[#allocation5 + $0xdd8] sm:$0xff]
        %v1021 = vld [vmem:[#allocation5 + $0xde0] sm:$0xff]
        %v1022 = vld [vmem:[#allocation5 + $0xde8] sm:$0xff]
        %v1023 = vld [vmem:[#allocation5 + $0xdf0] sm:$0xff]
        %v1024 = vld [vmem:[#allocation5 + $0xdf8] sm:$0xff]
        %v1025 = vld [vmem:[#allocation5 + $0xe00] sm:$0xff]
        %v1026 = vld [vmem:[#allocation5 + $0xe08] sm:$0xff]
        %v1027 = vld [vmem:[#allocation5 + $0xe10] sm:$0xff]
        %v1028 = vld [vmem:[#allocation5 + $0xe18] sm:$0xff]
        %v1029 = vld [vmem:[#allocation5 + $0xe20] sm:$0xff]
        %v1030 = vld [vmem:[#allocation5 + $0xe28] sm:$0xff]
        %v1031 = vld [vmem:[#allocation5 + $0xe30] sm:$0xff]
        %v1032 = vld [vmem:[#allocation5 + $0xe38] sm:$0xff]
        %v1033 = vld [vmem:[#allocation5 + $0xe40] sm:$0xff]
        %v1034 = vld [vmem:[#allocation5 + $0xe48] sm:$0xff]
        %v1035 = vld [vmem:[#allocation5 + $0xe50] sm:$0xff]
        %v1036 = vld [vmem:[#allocation5 + $0xe58] sm:$0xff]
        %v1037 = vld [vmem:[#allocation5 + $0xe60] sm:$0xff]
        %v1038 = vld [vmem:[#allocation5 + $0xe68] sm:$0xff]
        %v1039 = vld [vmem:[#allocation5 + $0xe70] sm:$0xff]
        %v1040 = vld [vmem:[#allocation5 + $0xe78] sm:$0xff]
        %v1041 = vld [vmem:[#allocation5 + $0xe80] sm:$0xff]
        %v1042 = vld [vmem:[#allocation5 + $0xe88] sm:$0xff]
        %v1043 = vld [vmem:[#allocation5 + $0xe90] sm:$0xff]
        %v1044 = vld [vmem:[#allocation5 + $0xe98] sm:$0xff]
        %v1045 = vld [vmem:[#allocation5 + $0xea0] sm:$0xff]
        %v1046 = vld [vmem:[#allocation5 + $0xea8] sm:$0xff]
        %v1047 = vld [vmem:[#allocation5 + $0xeb0] sm:$0xff]
        %v1048 = vld [vmem:[#allocation5 + $0xeb8] sm:$0xff]
        %v1049 = vld [vmem:[#allocation5 + $0xec0] sm:$0xff]
        %v1050 = vld [vmem:[#allocation5 + $0xec8] sm:$0xff]
        %v1051 = vld [vmem:[#allocation5 + $0xed0] sm:$0xff]
        %v1052 = vld [vmem:[#allocation5 + $0xed8] sm:$0xff]
        %v1053 = vld [vmem:[#allocation5 + $0xee0] sm:$0xff]
        %v1054 = vld [vmem:[#allocation5 + $0xee8] sm:$0xff]
        %v1055 = vld [vmem:[#allocation5 + $0xef0] sm:$0xff]
        %v1056 = vld [vmem:[#allocation5 + $0xef8] sm:$0xff]
        %v1057 = vld [vmem:[#allocation5 + $0xf00] sm:$0xff]
        %v1058 = vld [vmem:[#allocation5 + $0xf08] sm:$0xff]
        %v1059 = vld [vmem:[#allocation5 + $0xf10] sm:$0xff]
        %v1060 = vld [vmem:[#allocation5 + $0xf18] sm:$0xff]
        %v1061 = vld [vmem:[#allocation5 + $0xf20] sm:$0xff]
        %v1062 = vld [vmem:[#allocation5 + $0xf28] sm:$0xff]
        %v1063 = vld [vmem:[#allocation5 + $0xf30] sm:$0xff]
        %v1064 = vld [vmem:[#allocation5 + $0xf38] sm:$0xff]
        %v1065 = vld [vmem:[#allocation5 + $0xf40] sm:$0xff]
        %v1066 = vld [vmem:[#allocation5 + $0xf48] sm:$0xff]
        %v1067 = vld [vmem:[#allocation5 + $0xf50] sm:$0xff]
        %v1068 = vld [vmem:[#allocation5 + $0xf58] sm:$0xff]
        %v1069 = vld [vmem:[#allocation5 + $0xf60] sm:$0xff]
        %v1070 = vld [vmem:[#allocation5 + $0xf68] sm:$0xff]
        %v1071 = vld [vmem:[#allocation5 + $0xf70] sm:$0xff]
        %v1072 = vld [vmem:[#allocation5 + $0xf78] sm:$0xff]
        %v1073 = vld [vmem:[#allocation5 + $0xf80] sm:$0xff]
        %v1074 = vld [vmem:[#allocation5 + $0xf88] sm:$0xff]
        %v1075 = vld [vmem:[#allocation5 + $0xf90] sm:$0xff]
        %v1076 = vld [vmem:[#allocation5 + $0xf98] sm:$0xff]
        %v1077 = vld [vmem:[#allocation5 + $0xfa0] sm:$0xff]
        %v1078 = vld [vmem:[#allocation5 + $0xfa8] sm:$0xff]
        %v1079 = vld [vmem:[#allocation5 + $0xfb0] sm:$0xff]
        %v1080 = vld [vmem:[#allocation5 + $0xfb8] sm:$0xff]
        %v1081 = vld [vmem:[#allocation5 + $0xfc0] sm:$0xff]
        %v1082 = vld [vmem:[#allocation5 + $0xfc8] sm:$0xff]
        %v1083 = vld [vmem:[#allocation5 + $0xfd0] sm:$0xff]
        %v1084 = vld [vmem:[#allocation5 + $0xfd8] sm:$0xff]
        %v1085 = vld [vmem:[#allocation5 + $0xfe0] sm:$0xff]
        %v1086 = vld [vmem:[#allocation5 + $0xfe8] sm:$0xff]
        %v1087 = vld [vmem:[#allocation5 + $0xff0] sm:$0xff]
        %v1088 = vld [vmem:[#allocation5 + $0xff8] sm:$0xff]
        %v1089 = vld [vmem:[#allocation5 + $0x1000] sm:$0xff]
        %v1090 = vld [vmem:[#allocation5 + $0x1008] sm:$0xff]
        %v1091 = vld [vmem:[#allocation5 + $0x1010] sm:$0xff]
        %v1092 = vld [vmem:[#allocation5 + $0x1018] sm:$0xff]
        %v1093 = vld [vmem:[#allocation5 + $0x1020] sm:$0xff]
        %v1094 = vld [vmem:[#allocation5 + $0x1028] sm:$0xff]
        %v1095 = vld [vmem:[#allocation5 + $0x1030] sm:$0xff]
        %v1096 = vld [vmem:[#allocation5 + $0x1038] sm:$0xff]
        %v1097 = vld [vmem:[#allocation5 + $0x1040] sm:$0xff]
        %v1098 = vld [vmem:[#allocation5 + $0x1048] sm:$0xff]
        %v1099 = vld [vmem:[#allocation5 + $0x1050] sm:$0xff]
        %v1100 = vld [vmem:[#allocation5 + $0x1058] sm:$0xff]
        %v1101 = vld [vmem:[#allocation5 + $0x1060] sm:$0xff]
        %v1102 = vld [vmem:[#allocation5 + $0x1068] sm:$0xff]
        %v1103 = vld [vmem:[#allocation5 + $0x1070] sm:$0xff]
        %v1104 = vld [vmem:[#allocation5 + $0x1078] sm:$0xff]
        %v1105 = vld [vmem:[#allocation5 + $0x1080] sm:$0xff]
        %v1106 = vld [vmem:[#allocation5 + $0x1088] sm:$0xff]
        %v1107 = vld [vmem:[#allocation5 + $0x1090] sm:$0xff]
        %v1108 = vld [vmem:[#allocation5 + $0x1098] sm:$0xff]
        %v1109 = vld [vmem:[#allocation5 + $0x10a0] sm:$0xff]
        %v1110 = vld [vmem:[#allocation5 + $0x10a8] sm:$0xff]
        %v1111 = vld [vmem:[#allocation5 + $0x10b0] sm:$0xff]
        %v1112 = vld [vmem:[#allocation5 + $0x10b8] sm:$0xff]
        %v1113 = vld [vmem:[#allocation5 + $0x10c0] sm:$0xff]
        %v1114 = vld [vmem:[#allocation5 + $0x10c8] sm:$0xff]
        %v1115 = vld [vmem:[#allocation5 + $0x10d0] sm:$0xff]
        %v1116 = vld [vmem:[#allocation5 + $0x10d8] sm:$0xff]
        %v1117 = vld [vmem:[#allocation5 + $0x10e0] sm:$0xff]
        %v1118 = vld [vmem:[#allocation5 + $0x10e8] sm:$0xff]
        %v1119 = vld [vmem:[#allocation5 + $0x10f0] sm:$0xff]
        %v1120 = vld [vmem:[#allocation5 + $0x10f8] sm:$0xff]
        %v1121 = vld [vmem:[#allocation5 + $0x1100] sm:$0xff]
        %v1122 = vld [vmem:[#allocation5 + $0x1108] sm:$0xff]
        %v1123 = vld [vmem:[#allocation5 + $0x1110] sm:$0xff]
        %v1124 = vld [vmem:[#allocation5 + $0x1118] sm:$0xff]
        %v1125 = vld [vmem:[#allocation5 + $0x1120] sm:$0xff]
        %v1126 = vld [vmem:[#allocation5 + $0x1128] sm:$0xff]
        %v1127 = vld [vmem:[#allocation5 + $0x1130] sm:$0xff]
        %v1128 = vld [vmem:[#allocation5 + $0x1138] sm:$0xff]
        %v1129 = vld [vmem:[#allocation5 + $0x1140] sm:$0xff]
        %v1130 = vld [vmem:[#allocation5 + $0x1148] sm:$0xff]
        %v1131 = vld [vmem:[#allocation5 + $0x1150] sm:$0xff]
        %v1132 = vld [vmem:[#allocation5 + $0x1158] sm:$0xff]
        %v1133 = vld [vmem:[#allocation5 + $0x1160] sm:$0xff]
        %v1134 = vld [vmem:[#allocation5 + $0x1168] sm:$0xff]
        %v1135 = vld [vmem:[#allocation5 + $0x1170] sm:$0xff]
        %v1136 = vld [vmem:[#allocation5 + $0x1178] sm:$0xff]
        %v1137 = vld [vmem:[#allocation5 + $0x1180] sm:$0xff]
        %v1138 = vld [vmem:[#allocation5 + $0x1188] sm:$0xff]
        %v1139 = vld [vmem:[#allocation5 + $0x1190] sm:$0xff]
        %v1140 = vld [vmem:[#allocation5 + $0x1198] sm:$0xff]
        %v1141 = vld [vmem:[#allocation5 + $0x11a0] sm:$0xff]
        %v1142 = vld [vmem:[#allocation5 + $0x11a8] sm:$0xff]
        %v1143 = vld [vmem:[#allocation5 + $0x11b0] sm:$0xff]
        %v1144 = vld [vmem:[#allocation5 + $0x11b8] sm:$0xff]
        %v1145 = vld [vmem:[#allocation5 + $0x11c0] sm:$0xff]
        %v1146 = vld [vmem:[#allocation5 + $0x11c8] sm:$0xff]
        %v1147 = vld [vmem:[#allocation5 + $0x11d0] sm:$0xff]
        %v1148 = vld [vmem:[#allocation5 + $0x11d8] sm:$0xff]
        %v1149 = vld [vmem:[#allocation5 + $0x11e0] sm:$0xff]
        %v1150 = vld [vmem:[#allocation5 + $0x11e8] sm:$0xff]
        %v1151 = vld [vmem:[#allocation5 + $0x11f0] sm:$0xff]
        %v1152 = vld [vmem:[#allocation5 + $0x11f8] sm:$0xff]
        %v1153 = vld [vmem:[#allocation5 + $0x1200] sm:$0xff]
        %v1154 = vld [vmem:[#allocation5 + $0x1208] sm:$0xff]
        %v1155 = vld [vmem:[#allocation5 + $0x1210] sm:$0xff]
        %v1156 = vld [vmem:[#allocation5 + $0x1218] sm:$0xff]
        %v1157 = vld [vmem:[#allocation5 + $0x1220] sm:$0xff]
        %v1158 = vld [vmem:[#allocation5 + $0x1228] sm:$0xff]
        %v1159 = vld [vmem:[#allocation5 + $0x1230] sm:$0xff]
        %v1160 = vld [vmem:[#allocation5 + $0x1238] sm:$0xff]
        %v1161 = vld [vmem:[#allocation5 + $0x1240] sm:$0xff]
        %v1162 = vld [vmem:[#allocation5 + $0x1248] sm:$0xff]
        %v1163 = vld [vmem:[#allocation5 + $0x1250] sm:$0xff]
        %v1164 = vld [vmem:[#allocation5 + $0x1258] sm:$0xff]
        %v1165 = vld [vmem:[#allocation5 + $0x1260] sm:$0xff]
        %v1166 = vld [vmem:[#allocation5 + $0x1268] sm:$0xff]
        %v1167 = vld [vmem:[#allocation5 + $0x1270] sm:$0xff]
        %v1168 = vld [vmem:[#allocation5 + $0x1278] sm:$0xff]
        %v1169 = vld [vmem:[#allocation5 + $0x1280] sm:$0xff]
        %v1170 = vld [vmem:[#allocation5 + $0x1288] sm:$0xff]
        %v1171 = vld [vmem:[#allocation5 + $0x1290] sm:$0xff]
        %v1172 = vld [vmem:[#allocation5 + $0x1298] sm:$0xff]
        %v1173 = vld [vmem:[#allocation5 + $0x12a0] sm:$0xff]
        %v1174 = vld [vmem:[#allocation5 + $0x12a8] sm:$0xff]
        %v1175 = vld [vmem:[#allocation5 + $0x12b0] sm:$0xff]
        %v1176 = vld [vmem:[#allocation5 + $0x12b8] sm:$0xff]
        %v1177 = vld [vmem:[#allocation5 + $0x12c0] sm:$0xff]
        %v1178 = vld [vmem:[#allocation5 + $0x12c8] sm:$0xff]
        %v1179 = vld [vmem:[#allocation5 + $0x12d0] sm:$0xff]
        %v1180 = vld [vmem:[#allocation5 + $0x12d8] sm:$0xff]
        %v1181 = vld [vmem:[#allocation5 + $0x12e0] sm:$0xff]
        %v1182 = vld [vmem:[#allocation5 + $0x12e8] sm:$0xff]
        %v1183 = vld [vmem:[#allocation5 + $0x12f0] sm:$0xff]
        %v1184 = vld [vmem:[#allocation5 + $0x12f8] sm:$0xff]
        %v1185 = vld [vmem:[#allocation5 + $0x1300] sm:$0xff]
        %v1186 = vld [vmem:[#allocation5 + $0x1308] sm:$0xff]
        %v1187 = vld [vmem:[#allocation5 + $0x1310] sm:$0xff]
        %v1188 = vld [vmem:[#allocation5 + $0x1318] sm:$0xff]
        %v1189 = vld [vmem:[#allocation5 + $0x1320] sm:$0xff]
        %v1190 = vld [vmem:[#allocation5 + $0x1328] sm:$0xff]
        %v1191 = vld [vmem:[#allocation5 + $0x1330] sm:$0xff]
        %v1192 = vld [vmem:[#allocation5 + $0x1338] sm:$0xff]
        %v1193 = vld [vmem:[#allocation5 + $0x1340] sm:$0xff]
        %v1194 = vld [vmem:[#allocation5 + $0x1348] sm:$0xff]
        %v1195 = vld [vmem:[#allocation5 + $0x1350] sm:$0xff]
        %v1196 = vld [vmem:[#allocation5 + $0x1358] sm:$0xff]
        %v1197 = vld [vmem:[#allocation5 + $0x1360] sm:$0xff]
        %v1198 = vld [vmem:[#allocation5 + $0x1368] sm:$0xff]
        %v1199 = vld [vmem:[#allocation5 + $0x1370] sm:$0xff]
        %v1200 = vld [vmem:[#allocation5 + $0x1378] sm:$0xff]
        %v1201 = vld [vmem:[#allocation5 + $0x1380] sm:$0xff]
        %v1202 = vld [vmem:[#allocation5 + $0x1388] sm:$0xff]
        %v1203 = vld [vmem:[#allocation5 + $0x1390] sm:$0xff]
        %v1204 = vld [vmem:[#allocation5 + $0x1398] sm:$0xff]
        %v1205 = vld [vmem:[#allocation5 + $0x13a0] sm:$0xff]
        %v1206 = vld [vmem:[#allocation5 + $0x13a8] sm:$0xff]
        %v1207 = vld [vmem:[#allocation5 + $0x13b0] sm:$0xff]
        %v1208 = vld [vmem:[#allocation5 + $0x13b8] sm:$0xff]
        %v1209 = vld [vmem:[#allocation5 + $0x13c0] sm:$0xff]
        %v1210 = vld [vmem:[#allocation5 + $0x13c8] sm:$0xff]
        %v1211 = vld [vmem:[#allocation5 + $0x13d0] sm:$0xff]
        %v1212 = vld [vmem:[#allocation5 + $0x13d8] sm:$0xff]
        %v1213 = vld [vmem:[#allocation5 + $0x13e0] sm:$0xff]
        %v1214 = vld [vmem:[#allocation5 + $0x13e8] sm:$0xff]
        %v1215 = vld [vmem:[#allocation5 + $0x13f0] sm:$0xff]
        %v1216 = vld [vmem:[#allocation5 + $0x13f8] sm:$0xff]
        %v1217 = vld [vmem:[#allocation5 + $0x1400] sm:$0xff]
        %v1218 = vld [vmem:[#allocation5 + $0x1408] sm:$0xff]
        %v1219 = vld [vmem:[#allocation5 + $0x1410] sm:$0xff]
        %v1220 = vld [vmem:[#allocation5 + $0x1418] sm:$0xff]
        %v1221 = vld [vmem:[#allocation5 + $0x1420] sm:$0xff]
        %v1222 = vld [vmem:[#allocation5 + $0x1428] sm:$0xff]
        %v1223 = vld [vmem:[#allocation5 + $0x1430] sm:$0xff]
        %v1224 = vld [vmem:[#allocation5 + $0x1438] sm:$0xff]
        %v1225 = vld [vmem:[#allocation5 + $0x1440] sm:$0xff]
        %v1226 = vld [vmem:[#allocation5 + $0x1448] sm:$0xff]
        %v1227 = vld [vmem:[#allocation5 + $0x1450] sm:$0xff]
        %v1228 = vld [vmem:[#allocation5 + $0x1458] sm:$0xff]
        %v1229 = vld [vmem:[#allocation5 + $0x1460] sm:$0xff]
        %v1230 = vld [vmem:[#allocation5 + $0x1468] sm:$0xff]
        %v1231 = vld [vmem:[#allocation5 + $0x1470] sm:$0xff]
        %v1232 = vld [vmem:[#allocation5 + $0x1478] sm:$0xff]
        %v1233 = vld [vmem:[#allocation5 + $0x1480] sm:$0xff]
        %v1234 = vld [vmem:[#allocation5 + $0x1488] sm:$0xff]
        %v1235 = vld [vmem:[#allocation5 + $0x1490] sm:$0xff]
        %v1236 = vld [vmem:[#allocation5 + $0x1498] sm:$0xff]
        %v1237 = vld [vmem:[#allocation5 + $0x14a0] sm:$0xff]
        %v1238 = vld [vmem:[#allocation5 + $0x14a8] sm:$0xff]
        %v1239 = vld [vmem:[#allocation5 + $0x14b0] sm:$0xff]
        %v1240 = vld [vmem:[#allocation5 + $0x14b8] sm:$0xff]
        %v1241 = vld [vmem:[#allocation5 + $0x14c0] sm:$0xff]
        %v1242 = vld [vmem:[#allocation5 + $0x14c8] sm:$0xff]
        %v1243 = vld [vmem:[#allocation5 + $0x14d0] sm:$0xff]
        %v1244 = vld [vmem:[#allocation5 + $0x14d8] sm:$0xff]
        %v1245 = vld [vmem:[#allocation5 + $0x14e0] sm:$0xff]
        %v1246 = vld [vmem:[#allocation5 + $0x14e8] sm:$0xff]
        %v1247 = vld [vmem:[#allocation5 + $0x14f0] sm:$0xff]
        %v1248 = vld [vmem:[#allocation5 + $0x14f8] sm:$0xff]
        %v1249 = vld [vmem:[#allocation5 + $0x1500] sm:$0xff]
        %v1250 = vld [vmem:[#allocation5 + $0x1508] sm:$0xff]
        %v1251 = vld [vmem:[#allocation5 + $0x1510] sm:$0xff]
        %v1252 = vld [vmem:[#allocation5 + $0x1518] sm:$0xff]
        %v1253 = vld [vmem:[#allocation5 + $0x1520] sm:$0xff]
        %v1254 = vld [vmem:[#allocation5 + $0x1528] sm:$0xff]
        %v1255 = vld [vmem:[#allocation5 + $0x1530] sm:$0xff]
        %v1256 = vld [vmem:[#allocation5 + $0x1538] sm:$0xff]
        %v1257 = vld [vmem:[#allocation5 + $0x1540] sm:$0xff]
        %v1258 = vld [vmem:[#allocation5 + $0x1548] sm:$0xff]
        %v1259 = vld [vmem:[#allocation5 + $0x1550] sm:$0xff]
        %v1260 = vld [vmem:[#allocation5 + $0x1558] sm:$0xff]
        %v1261 = vld [vmem:[#allocation5 + $0x1560] sm:$0xff]
        %v1262 = vld [vmem:[#allocation5 + $0x1568] sm:$0xff]
        %v1263 = vld [vmem:[#allocation5 + $0x1570] sm:$0xff]
        %v1264 = vld [vmem:[#allocation5 + $0x1578] sm:$0xff]
        %v1265 = vld [vmem:[#allocation5 + $0x1580] sm:$0xff]
        %v1266 = vld [vmem:[#allocation5 + $0x1588] sm:$0xff]
        %v1267 = vld [vmem:[#allocation5 + $0x1590] sm:$0xff]
        %v1268 = vld [vmem:[#allocation5 + $0x1598] sm:$0xff]
        %v1269 = vld [vmem:[#allocation5 + $0x15a0] sm:$0xff]
        %v1270 = vld [vmem:[#allocation5 + $0x15a8] sm:$0xff]
        %v1271 = vld [vmem:[#allocation5 + $0x15b0] sm:$0xff]
        %v1272 = vld [vmem:[#allocation5 + $0x15b8] sm:$0xff]
        %v1273 = vld [vmem:[#allocation5 + $0x15c0] sm:$0xff]
        %v1274 = vld [vmem:[#allocation5 + $0x15c8] sm:$0xff]
        %v1275 = vld [vmem:[#allocation5 + $0x15d0] sm:$0xff]
        %v1276 = vld [vmem:[#allocation5 + $0x15d8] sm:$0xff]
        %v1277 = vld [vmem:[#allocation5 + $0x15e0] sm:$0xff]
        %v1278 = vld [vmem:[#allocation5 + $0x15e8] sm:$0xff]
        %v1279 = vld [vmem:[#allocation5 + $0x15f0] sm:$0xff]
        %v1280 = vld [vmem:[#allocation5 + $0x15f8] sm:$0xff]
        %v1281 = vld [vmem:[#allocation5 + $0x1600] sm:$0xff]
        %v1282 = vld [vmem:[#allocation5 + $0x1608] sm:$0xff]
        %v1283 = vld [vmem:[#allocation5 + $0x1610] sm:$0xff]
        %v1284 = vld [vmem:[#allocation5 + $0x1618] sm:$0xff]
        %v1285 = vld [vmem:[#allocation5 + $0x1620] sm:$0xff]
        %v1286 = vld [vmem:[#allocation5 + $0x1628] sm:$0xff]
        %v1287 = vld [vmem:[#allocation5 + $0x1630] sm:$0xff]
        %v1288 = vld [vmem:[#allocation5 + $0x1638] sm:$0xff]
        %v1289 = vld [vmem:[#allocation5 + $0x1640] sm:$0xff]
        %v1290 = vld [vmem:[#allocation5 + $0x1648] sm:$0xff]
        %v1291 = vld [vmem:[#allocation5 + $0x1650] sm:$0xff]
        %v1292 = vld [vmem:[#allocation5 + $0x1658] sm:$0xff]
        %v1293 = vld [vmem:[#allocation5 + $0x1660] sm:$0xff]
        %v1294 = vld [vmem:[#allocation5 + $0x1668] sm:$0xff]
        %v1295 = vld [vmem:[#allocation5 + $0x1670] sm:$0xff]
        %v1296 = vld [vmem:[#allocation5 + $0x1678] sm:$0xff]
        %v1297 = vld [vmem:[#allocation5 + $0x1680] sm:$0xff]
        %v1298 = vld [vmem:[#allocation5 + $0x1688] sm:$0xff]
        %v1299 = vld [vmem:[#allocation5 + $0x1690] sm:$0xff]
        %v1300 = vld [vmem:[#allocation5 + $0x1698] sm:$0xff]
        %v1301 = vld [vmem:[#allocation5 + $0x16a0] sm:$0xff]
        %v1302 = vld [vmem:[#allocation5 + $0x16a8] sm:$0xff]
        %v1303 = vld [vmem:[#allocation5 + $0x16b0] sm:$0xff]
        %v1304 = vld [vmem:[#allocation5 + $0x16b8] sm:$0xff]
        %v1305 = vld [vmem:[#allocation5 + $0x16c0] sm:$0xff]
        %v1306 = vld [vmem:[#allocation5 + $0x16c8] sm:$0xff]
        %v1307 = vld [vmem:[#allocation5 + $0x16d0] sm:$0xff]
        %v1308 = vld [vmem:[#allocation5 + $0x16d8] sm:$0xff]
        %v1309 = vld [vmem:[#allocation5 + $0x16e0] sm:$0xff]
        %v1310 = vld [vmem:[#allocation5 + $0x16e8] sm:$0xff]
        %v1311 = vld [vmem:[#allocation5 + $0x16f0] sm:$0xff]
        %v1312 = vld [vmem:[#allocation5 + $0x16f8] sm:$0xff]
        %v1313 = vld [vmem:[#allocation5 + $0x1700] sm:$0xff]
        %v1314 = vld [vmem:[#allocation5 + $0x1708] sm:$0xff]
        %v1315 = vld [vmem:[#allocation5 + $0x1710] sm:$0xff]
        %v1316 = vld [vmem:[#allocation5 + $0x1718] sm:$0xff]
        %v1317 = vld [vmem:[#allocation5 + $0x1720] sm:$0xff]
        %v1318 = vld [vmem:[#allocation5 + $0x1728] sm:$0xff]
        %v1319 = vld [vmem:[#allocation5 + $0x1730] sm:$0xff]
        %v1320 = vld [vmem:[#allocation5 + $0x1738] sm:$0xff]
        %v1321 = vld [vmem:[#allocation5 + $0x1740] sm:$0xff]
        %v1322 = vld [vmem:[#allocation5 + $0x1748] sm:$0xff]
        %v1323 = vld [vmem:[#allocation5 + $0x1750] sm:$0xff]
        %v1324 = vld [vmem:[#allocation5 + $0x1758] sm:$0xff]
        %v1325 = vld [vmem:[#allocation5 + $0x1760] sm:$0xff]
        %v1326 = vld [vmem:[#allocation5 + $0x1768] sm:$0xff]
        %v1327 = vld [vmem:[#allocation5 + $0x1770] sm:$0xff]
        %v1328 = vld [vmem:[#allocation5 + $0x1778] sm:$0xff]
        %v1329 = vld [vmem:[#allocation5 + $0x1780] sm:$0xff]
        %v1330 = vld [vmem:[#allocation5 + $0x1788] sm:$0xff]
        %v1331 = vld [vmem:[#allocation5 + $0x1790] sm:$0xff]
        %v1332 = vld [vmem:[#allocation5 + $0x1798] sm:$0xff]
        %v1333 = vld [vmem:[#allocation5 + $0x17a0] sm:$0xff]
        %v1334 = vld [vmem:[#allocation5 + $0x17a8] sm:$0xff]
        %v1335 = vld [vmem:[#allocation5 + $0x17b0] sm:$0xff]
        %v1336 = vld [vmem:[#allocation5 + $0x17b8] sm:$0xff]
        %v1337 = vld [vmem:[#allocation5 + $0x17c0] sm:$0xff]
        %v1338 = vld [vmem:[#allocation5 + $0x17c8] sm:$0xff]
        %v1339 = vld [vmem:[#allocation5 + $0x17d0] sm:$0xff]
        %v1340 = vld [vmem:[#allocation5 + $0x17d8] sm:$0xff]
        %v1341 = vld [vmem:[#allocation5 + $0x17e0] sm:$0xff]
        %v1342 = vld [vmem:[#allocation5 + $0x17e8] sm:$0xff]
        %v1343 = vld [vmem:[#allocation5 + $0x17f0] sm:$0xff]
        %v1344 = vld [vmem:[#allocation5 + $0x17f8] sm:$0xff]
        %v1345 = vld [vmem:[#allocation7] sm:$0xff]
        %v1347 = vlaneseq
        %v1348 = vshrl.u32 %v1347, 7
        %v1349 = vsub.s32 0, %v1348
        %v1350 = vrot.slane %v1345, %v1349
        %v1351 = vlaneseq
        %v1352 = vshrl.u32 %v1351, 7
        %v1353 = vsub.s32 1, %v1352
        %v1354 = vrot.slane %v1345, %v1353
        %v1355 = vlaneseq
        %v1356 = vshrl.u32 %v1355, 7
        %v1357 = vsub.s32 2, %v1356
        %v1358 = vrot.slane %v1345, %v1357
        %v1359 = vlaneseq
        %v1360 = vshrl.u32 %v1359, 7
        %v1361 = vsub.s32 3, %v1360
        %v1362 = vrot.slane %v1345, %v1361
        %v1363 = vlaneseq
        %v1364 = vshrl.u32 %v1363, 7
        %v1365 = vsub.s32 4, %v1364
        %v1366 = vrot.slane %v1345, %v1365
        %v1367 = vlaneseq
        %v1368 = vshrl.u32 %v1367, 7
        %v1369 = vsub.s32 5, %v1368
        %v1370 = vrot.slane %v1345, %v1369
        %v1371 = vlaneseq
        %v1372 = vshrl.u32 %v1371, 7
        %v1373 = vsub.s32 6, %v1372
        %v1374 = vrot.slane %v1345, %v1373
        %v1375 = vlaneseq
        %v1376 = vshrl.u32 %v1375, 7
        %v1377 = vsub.s32 7, %v1376
        %v1378 = vrot.slane %v1345, %v1377
        %v2155 = vunpack.c.l.b16 %v577
        %v2156 = vunpack.c.h.b16 %v577
        %v2157 = vunpack.c.l.b16 %v578
        %v2158 = vunpack.c.h.b16 %v578
        %v2159 = vunpack.c.l.b16 %v579
        %v2160 = vunpack.c.h.b16 %v579
        %v2161 = vunpack.c.l.b16 %v580
        %v2162 = vunpack.c.h.b16 %v580
        %v2163 = vunpack.c.l.b16 %v581
        %v2164 = vunpack.c.h.b16 %v581
        %v2165 = vunpack.c.l.b16 %v582
        %v2166 = vunpack.c.h.b16 %v582
        %v2167 = vunpack.c.l.b16 %v583
        %v2168 = vunpack.c.h.b16 %v583
        %v2169 = vunpack.c.l.b16 %v584
        %v2170 = vunpack.c.h.b16 %v584
        %v2171 = vunpack.c.l.b16 %v585
        %v2172 = vunpack.c.h.b16 %v585
        %v2173 = vunpack.c.l.b16 %v586
        %v2174 = vunpack.c.h.b16 %v586
        %v2175 = vunpack.c.l.b16 %v587
        %v2176 = vunpack.c.h.b16 %v587
        %v2177 = vunpack.c.l.b16 %v588
        %v2178 = vunpack.c.h.b16 %v588
        %v2179 = vunpack.c.l.b16 %v589
        %v2180 = vunpack.c.h.b16 %v589
        %v2181 = vunpack.c.l.b16 %v590
        %v2182 = vunpack.c.h.b16 %v590
        %v2183 = vunpack.c.l.b16 %v591
        %v2184 = vunpack.c.h.b16 %v591
        %v2185 = vunpack.c.l.b16 %v592
        %v2186 = vunpack.c.h.b16 %v592
        %v2187 = vunpack.c.l.b16 %v593
        %v2188 = vunpack.c.h.b16 %v593
        %v2189 = vunpack.c.l.b16 %v594
        %v2190 = vunpack.c.h.b16 %v594
        %v2191 = vunpack.c.l.b16 %v595
        %v2192 = vunpack.c.h.b16 %v595
        %v2193 = vunpack.c.l.b16 %v596
        %v2194 = vunpack.c.h.b16 %v596
        %v2195 = vunpack.c.l.b16 %v597
        %v2196 = vunpack.c.h.b16 %v597
        %v2197 = vunpack.c.l.b16 %v598
        %v2198 = vunpack.c.h.b16 %v598
        %v2199 = vunpack.c.l.b16 %v599
        %v2200 = vunpack.c.h.b16 %v599
        %v2201 = vunpack.c.l.b16 %v600
        %v2202 = vunpack.c.h.b16 %v600
        %v2203 = vunpack.c.l.b16 %v601
        %v2204 = vunpack.c.h.b16 %v601
        %v2205 = vunpack.c.l.b16 %v602
        %v2206 = vunpack.c.h.b16 %v602
        %v2207 = vunpack.c.l.b16 %v603
        %v2208 = vunpack.c.h.b16 %v603
        %v2209 = vunpack.c.l.b16 %v604
        %v2210 = vunpack.c.h.b16 %v604
        %v2211 = vunpack.c.l.b16 %v605
        %v2212 = vunpack.c.h.b16 %v605
        %v2213 = vunpack.c.l.b16 %v606
        %v2214 = vunpack.c.h.b16 %v606
        %v2215 = vunpack.c.l.b16 %v607
        %v2216 = vunpack.c.h.b16 %v607
        %v2217 = vunpack.c.l.b16 %v608
        %v2218 = vunpack.c.h.b16 %v608
        %v2219 = vunpack.c.l.b16 %v609
        %v2220 = vunpack.c.h.b16 %v609
        %v2221 = vunpack.c.l.b16 %v610
        %v2222 = vunpack.c.h.b16 %v610
        %v2223 = vunpack.c.l.b16 %v611
        %v2224 = vunpack.c.h.b16 %v611
        %v2225 = vunpack.c.l.b16 %v612
        %v2226 = vunpack.c.h.b16 %v612
        %v2227 = vunpack.c.l.b16 %v613
        %v2228 = vunpack.c.h.b16 %v613
        %v2229 = vunpack.c.l.b16 %v614
        %v2230 = vunpack.c.h.b16 %v614
        %v2231 = vunpack.c.l.b16 %v615
        %v2232 = vunpack.c.h.b16 %v615
        %v2233 = vunpack.c.l.b16 %v616
        %v2234 = vunpack.c.h.b16 %v616
        %v2235 = vunpack.c.l.b16 %v617
        %v2236 = vunpack.c.h.b16 %v617
        %v2237 = vunpack.c.l.b16 %v618
        %v2238 = vunpack.c.h.b16 %v618
        %v2239 = vunpack.c.l.b16 %v619
        %v2240 = vunpack.c.h.b16 %v619
        %v2241 = vunpack.c.l.b16 %v620
        %v2242 = vunpack.c.h.b16 %v620
        %v2243 = vunpack.c.l.b16 %v621
        %v2244 = vunpack.c.h.b16 %v621
        %v2245 = vunpack.c.l.b16 %v622
        %v2246 = vunpack.c.h.b16 %v622
        %v2247 = vunpack.c.l.b16 %v623
        %v2248 = vunpack.c.h.b16 %v623
        %v2249 = vunpack.c.l.b16 %v624
        %v2250 = vunpack.c.h.b16 %v624
        %v2251 = vunpack.c.l.b16 %v625
        %v2252 = vunpack.c.h.b16 %v625
        %v2253 = vunpack.c.l.b16 %v626
        %v2254 = vunpack.c.h.b16 %v626
        %v2255 = vunpack.c.l.b16 %v627
        %v2256 = vunpack.c.h.b16 %v627
        %v2257 = vunpack.c.l.b16 %v628
        %v2258 = vunpack.c.h.b16 %v628
        %v2259 = vunpack.c.l.b16 %v629
        %v2260 = vunpack.c.h.b16 %v629
        %v2261 = vunpack.c.l.b16 %v630
        %v2262 = vunpack.c.h.b16 %v630
        %v2263 = vunpack.c.l.b16 %v631
        %v2264 = vunpack.c.h.b16 %v631
        %v2265 = vunpack.c.l.b16 %v632
        %v2266 = vunpack.c.h.b16 %v632
        %v2267 = vunpack.c.l.b16 %v633
        %v2268 = vunpack.c.h.b16 %v633
        %v2269 = vunpack.c.l.b16 %v634
        %v2270 = vunpack.c.h.b16 %v634
        %v2271 = vunpack.c.l.b16 %v635
        %v2272 = vunpack.c.h.b16 %v635
        %v2273 = vunpack.c.l.b16 %v636
        %v2274 = vunpack.c.h.b16 %v636
        %v2275 = vunpack.c.l.b16 %v637
        %v2276 = vunpack.c.h.b16 %v637
        %v2277 = vunpack.c.l.b16 %v638
        %v2278 = vunpack.c.h.b16 %v638
        %v2279 = vunpack.c.l.b16 %v639
        %v2280 = vunpack.c.h.b16 %v639
        %v2281 = vunpack.c.l.b16 %v640
        %v2282 = vunpack.c.h.b16 %v640
        %v2283 = vunpack.c.l.b16 %v641
        %v2284 = vunpack.c.h.b16 %v641
        %v2285 = vunpack.c.l.b16 %v642
        %v2286 = vunpack.c.h.b16 %v642
        %v2287 = vunpack.c.l.b16 %v643
        %v2288 = vunpack.c.h.b16 %v643
        %v2289 = vunpack.c.l.b16 %v644
        %v2290 = vunpack.c.h.b16 %v644
        %v2291 = vunpack.c.l.b16 %v645
        %v2292 = vunpack.c.h.b16 %v645
        %v2293 = vunpack.c.l.b16 %v646
        %v2294 = vunpack.c.h.b16 %v646
        %v2295 = vunpack.c.l.b16 %v647
        %v2296 = vunpack.c.h.b16 %v647
        %v2297 = vunpack.c.l.b16 %v648
        %v2298 = vunpack.c.h.b16 %v648
        %v2299 = vunpack.c.l.b16 %v649
        %v2300 = vunpack.c.h.b16 %v649
        %v2301 = vunpack.c.l.b16 %v650
        %v2302 = vunpack.c.h.b16 %v650
        %v2303 = vunpack.c.l.b16 %v651
        %v2304 = vunpack.c.h.b16 %v651
        %v2305 = vunpack.c.l.b16 %v652
        %v2306 = vunpack.c.h.b16 %v652
        %v2307 = vunpack.c.l.b16 %v653
        %v2308 = vunpack.c.h.b16 %v653
        %v2309 = vunpack.c.l.b16 %v654
        %v2310 = vunpack.c.h.b16 %v654
        %v2311 = vunpack.c.l.b16 %v655
        %v2312 = vunpack.c.h.b16 %v655
        %v2313 = vunpack.c.l.b16 %v656
        %v2314 = vunpack.c.h.b16 %v656
        %v2315 = vunpack.c.l.b16 %v657
        %v2316 = vunpack.c.h.b16 %v657
        %v2317 = vunpack.c.l.b16 %v658
        %v2318 = vunpack.c.h.b16 %v658
        %v2319 = vunpack.c.l.b16 %v659
        %v2320 = vunpack.c.h.b16 %v659
        %v2321 = vunpack.c.l.b16 %v660
        %v2322 = vunpack.c.h.b16 %v660
        %v2323 = vunpack.c.l.b16 %v661
        %v2324 = vunpack.c.h.b16 %v661
        %v2325 = vunpack.c.l.b16 %v662
        %v2326 = vunpack.c.h.b16 %v662
        %v2327 = vunpack.c.l.b16 %v663
        %v2328 = vunpack.c.h.b16 %v663
        %v2329 = vunpack.c.l.b16 %v664
        %v2330 = vunpack.c.h.b16 %v664
        %v2331 = vunpack.c.l.b16 %v665
        %v2332 = vunpack.c.h.b16 %v665
        %v2333 = vunpack.c.l.b16 %v666
        %v2334 = vunpack.c.h.b16 %v666
        %v2335 = vunpack.c.l.b16 %v667
        %v2336 = vunpack.c.h.b16 %v667
        %v2337 = vunpack.c.l.b16 %v668
        %v2338 = vunpack.c.h.b16 %v668
        %v2339 = vunpack.c.l.b16 %v669
        %v2340 = vunpack.c.h.b16 %v669
        %v2341 = vunpack.c.l.b16 %v670
        %v2342 = vunpack.c.h.b16 %v670
        %v2343 = vunpack.c.l.b16 %v671
        %v2344 = vunpack.c.h.b16 %v671
        %v2345 = vunpack.c.l.b16 %v672
        %v2346 = vunpack.c.h.b16 %v672
        %v2347 = vunpack.c.l.b16 %v673
        %v2348 = vunpack.c.h.b16 %v673
        %v2349 = vunpack.c.l.b16 %v674
        %v2350 = vunpack.c.h.b16 %v674
        %v2351 = vunpack.c.l.b16 %v675
        %v2352 = vunpack.c.h.b16 %v675
        %v2353 = vunpack.c.l.b16 %v676
        %v2354 = vunpack.c.h.b16 %v676
        %v2355 = vunpack.c.l.b16 %v677
        %v2356 = vunpack.c.h.b16 %v677
        %v2357 = vunpack.c.l.b16 %v678
        %v2358 = vunpack.c.h.b16 %v678
        %v2359 = vunpack.c.l.b16 %v679
        %v2360 = vunpack.c.h.b16 %v679
        %v2361 = vunpack.c.l.b16 %v680
        %v2362 = vunpack.c.h.b16 %v680
        %v2363 = vunpack.c.l.b16 %v681
        %v2364 = vunpack.c.h.b16 %v681
        %v2365 = vunpack.c.l.b16 %v682
        %v2366 = vunpack.c.h.b16 %v682
        %v2367 = vunpack.c.l.b16 %v683
        %v2368 = vunpack.c.h.b16 %v683
        %v2369 = vunpack.c.l.b16 %v684
        %v2370 = vunpack.c.h.b16 %v684
        %v2371 = vunpack.c.l.b16 %v685
        %v2372 = vunpack.c.h.b16 %v685
        %v2373 = vunpack.c.l.b16 %v686
        %v2374 = vunpack.c.h.b16 %v686
        %v2375 = vunpack.c.l.b16 %v687
        %v2376 = vunpack.c.h.b16 %v687
        %v2377 = vunpack.c.l.b16 %v688
        %v2378 = vunpack.c.h.b16 %v688
        %v2379 = vunpack.c.l.b16 %v689
        %v2380 = vunpack.c.h.b16 %v689
        %v2381 = vunpack.c.l.b16 %v690
        %v2382 = vunpack.c.h.b16 %v690
        %v2383 = vunpack.c.l.b16 %v691
        %v2384 = vunpack.c.h.b16 %v691
        %v2385 = vunpack.c.l.b16 %v692
        %v2386 = vunpack.c.h.b16 %v692
        %v2387 = vunpack.c.l.b16 %v693
        %v2388 = vunpack.c.h.b16 %v693
        %v2389 = vunpack.c.l.b16 %v694
        %v2390 = vunpack.c.h.b16 %v694
        %v2391 = vunpack.c.l.b16 %v695
        %v2392 = vunpack.c.h.b16 %v695
        %v2393 = vunpack.c.l.b16 %v696
        %v2394 = vunpack.c.h.b16 %v696
        %v2395 = vunpack.c.l.b16 %v697
        %v2396 = vunpack.c.h.b16 %v697
        %v2397 = vunpack.c.l.b16 %v698
        %v2398 = vunpack.c.h.b16 %v698
        %v2399 = vunpack.c.l.b16 %v699
        %v2400 = vunpack.c.h.b16 %v699
        %v2401 = vunpack.c.l.b16 %v700
        %v2402 = vunpack.c.h.b16 %v700
        %v2403 = vunpack.c.l.b16 %v701
        %v2404 = vunpack.c.h.b16 %v701
        %v2405 = vunpack.c.l.b16 %v702
        %v2406 = vunpack.c.h.b16 %v702
        %v2407 = vunpack.c.l.b16 %v703
        %v2408 = vunpack.c.h.b16 %v703
        %v2409 = vunpack.c.l.b16 %v704
        %v2410 = vunpack.c.h.b16 %v704
        %v2411 = vunpack.c.l.b16 %v705
        %v2412 = vunpack.c.h.b16 %v705
        %v2413 = vunpack.c.l.b16 %v706
        %v2414 = vunpack.c.h.b16 %v706
        %v2415 = vunpack.c.l.b16 %v707
        %v2416 = vunpack.c.h.b16 %v707
        %v2417 = vunpack.c.l.b16 %v708
        %v2418 = vunpack.c.h.b16 %v708
        %v2419 = vunpack.c.l.b16 %v709
        %v2420 = vunpack.c.h.b16 %v709
        %v2421 = vunpack.c.l.b16 %v710
        %v2422 = vunpack.c.h.b16 %v710
        %v2423 = vunpack.c.l.b16 %v711
        %v2424 = vunpack.c.h.b16 %v711
        %v2425 = vunpack.c.l.b16 %v712
        %v2426 = vunpack.c.h.b16 %v712
        %v2427 = vunpack.c.l.b16 %v713
        %v2428 = vunpack.c.h.b16 %v713
        %v2429 = vunpack.c.l.b16 %v714
        %v2430 = vunpack.c.h.b16 %v714
        %v2431 = vunpack.c.l.b16 %v715
        %v2432 = vunpack.c.h.b16 %v715
        %v2433 = vunpack.c.l.b16 %v716
        %v2434 = vunpack.c.h.b16 %v716
        %v2435 = vunpack.c.l.b16 %v717
        %v2436 = vunpack.c.h.b16 %v717
        %v2437 = vunpack.c.l.b16 %v718
        %v2438 = vunpack.c.h.b16 %v718
        %v2439 = vunpack.c.l.b16 %v719
        %v2440 = vunpack.c.h.b16 %v719
        %v2441 = vunpack.c.l.b16 %v720
        %v2442 = vunpack.c.h.b16 %v720
        %v2443 = vunpack.c.l.b16 %v721
        %v2444 = vunpack.c.h.b16 %v721
        %v2445 = vunpack.c.l.b16 %v722
        %v2446 = vunpack.c.h.b16 %v722
        %v2447 = vunpack.c.l.b16 %v723
        %v2448 = vunpack.c.h.b16 %v723
        %v2449 = vunpack.c.l.b16 %v724
        %v2450 = vunpack.c.h.b16 %v724
        %v2451 = vunpack.c.l.b16 %v725
        %v2452 = vunpack.c.h.b16 %v725
        %v2453 = vunpack.c.l.b16 %v726
        %v2454 = vunpack.c.h.b16 %v726
        %v2455 = vunpack.c.l.b16 %v727
        %v2456 = vunpack.c.h.b16 %v727
        %v2457 = vunpack.c.l.b16 %v728
        %v2458 = vunpack.c.h.b16 %v728
        %v2459 = vunpack.c.l.b16 %v729
        %v2460 = vunpack.c.h.b16 %v729
        %v2461 = vunpack.c.l.b16 %v730
        %v2462 = vunpack.c.h.b16 %v730
        %v2463 = vunpack.c.l.b16 %v731
        %v2464 = vunpack.c.h.b16 %v731
        %v2465 = vunpack.c.l.b16 %v732
        %v2466 = vunpack.c.h.b16 %v732
        %v2467 = vunpack.c.l.b16 %v733
        %v2468 = vunpack.c.h.b16 %v733
        %v2469 = vunpack.c.l.b16 %v734
        %v2470 = vunpack.c.h.b16 %v734
        %v2471 = vunpack.c.l.b16 %v735
        %v2472 = vunpack.c.h.b16 %v735
        %v2473 = vunpack.c.l.b16 %v736
        %v2474 = vunpack.c.h.b16 %v736
        %v2475 = vunpack.c.l.b16 %v737
        %v2476 = vunpack.c.h.b16 %v737
        %v2477 = vunpack.c.l.b16 %v738
        %v2478 = vunpack.c.h.b16 %v738
        %v2479 = vunpack.c.l.b16 %v739
        %v2480 = vunpack.c.h.b16 %v739
        %v2481 = vunpack.c.l.b16 %v740
        %v2482 = vunpack.c.h.b16 %v740
        %v2483 = vunpack.c.l.b16 %v741
        %v2484 = vunpack.c.h.b16 %v741
        %v2485 = vunpack.c.l.b16 %v742
        %v2486 = vunpack.c.h.b16 %v742
        %v2487 = vunpack.c.l.b16 %v743
        %v2488 = vunpack.c.h.b16 %v743
        %v2489 = vunpack.c.l.b16 %v744
        %v2490 = vunpack.c.h.b16 %v744
        %v2491 = vunpack.c.l.b16 %v745
        %v2492 = vunpack.c.h.b16 %v745
        %v2493 = vunpack.c.l.b16 %v746
        %v2494 = vunpack.c.h.b16 %v746
        %v2495 = vunpack.c.l.b16 %v747
        %v2496 = vunpack.c.h.b16 %v747
        %v2497 = vunpack.c.l.b16 %v748
        %v2498 = vunpack.c.h.b16 %v748
        %v2499 = vunpack.c.l.b16 %v749
        %v2500 = vunpack.c.h.b16 %v749
        %v2501 = vunpack.c.l.b16 %v750
        %v2502 = vunpack.c.h.b16 %v750
        %v2503 = vunpack.c.l.b16 %v751
        %v2504 = vunpack.c.h.b16 %v751
        %v2505 = vunpack.c.l.b16 %v752
        %v2506 = vunpack.c.h.b16 %v752
        %v2507 = vunpack.c.l.b16 %v753
        %v2508 = vunpack.c.h.b16 %v753
        %v2509 = vunpack.c.l.b16 %v754
        %v2510 = vunpack.c.h.b16 %v754
        %v2511 = vunpack.c.l.b16 %v755
        %v2512 = vunpack.c.h.b16 %v755
        %v2513 = vunpack.c.l.b16 %v756
        %v2514 = vunpack.c.h.b16 %v756
        %v2515 = vunpack.c.l.b16 %v757
        %v2516 = vunpack.c.h.b16 %v757
        %v2517 = vunpack.c.l.b16 %v758
        %v2518 = vunpack.c.h.b16 %v758
        %v2519 = vunpack.c.l.b16 %v759
        %v2520 = vunpack.c.h.b16 %v759
        %v2521 = vunpack.c.l.b16 %v760
        %v2522 = vunpack.c.h.b16 %v760
        %v2523 = vunpack.c.l.b16 %v761
        %v2524 = vunpack.c.h.b16 %v761
        %v2525 = vunpack.c.l.b16 %v762
        %v2526 = vunpack.c.h.b16 %v762
        %v2527 = vunpack.c.l.b16 %v763
        %v2528 = vunpack.c.h.b16 %v763
        %v2529 = vunpack.c.l.b16 %v764
        %v2530 = vunpack.c.h.b16 %v764
        %v2531 = vunpack.c.l.b16 %v765
        %v2532 = vunpack.c.h.b16 %v765
        %v2533 = vunpack.c.l.b16 %v766
        %v2534 = vunpack.c.h.b16 %v766
        %v2535 = vunpack.c.l.b16 %v767
        %v2536 = vunpack.c.h.b16 %v767
        %v2537 = vunpack.c.l.b16 %v768
        %v2538 = vunpack.c.h.b16 %v768
        %v2539 = vunpack.c.l.b16 %v769
        %v2540 = vunpack.c.h.b16 %v769
        %v2541 = vunpack.c.l.b16 %v770
        %v2542 = vunpack.c.h.b16 %v770
        %v2543 = vunpack.c.l.b16 %v771
        %v2544 = vunpack.c.h.b16 %v771
        %v2545 = vunpack.c.l.b16 %v772
        %v2546 = vunpack.c.h.b16 %v772
        %v2547 = vunpack.c.l.b16 %v773
        %v2548 = vunpack.c.h.b16 %v773
        %v2549 = vunpack.c.l.b16 %v774
        %v2550 = vunpack.c.h.b16 %v774
        %v2551 = vunpack.c.l.b16 %v775
        %v2552 = vunpack.c.h.b16 %v775
        %v2553 = vunpack.c.l.b16 %v776
        %v2554 = vunpack.c.h.b16 %v776
        %v2555 = vunpack.c.l.b16 %v777
        %v2556 = vunpack.c.h.b16 %v777
        %v2557 = vunpack.c.l.b16 %v778
        %v2558 = vunpack.c.h.b16 %v778
        %v2559 = vunpack.c.l.b16 %v779
        %v2560 = vunpack.c.h.b16 %v779
        %v2561 = vunpack.c.l.b16 %v780
        %v2562 = vunpack.c.h.b16 %v780
        %v2563 = vunpack.c.l.b16 %v781
        %v2564 = vunpack.c.h.b16 %v781
        %v2565 = vunpack.c.l.b16 %v782
        %v2566 = vunpack.c.h.b16 %v782
        %v2567 = vunpack.c.l.b16 %v783
        %v2568 = vunpack.c.h.b16 %v783
        %v2569 = vunpack.c.l.b16 %v784
        %v2570 = vunpack.c.h.b16 %v784
        %v2571 = vunpack.c.l.b16 %v785
        %v2572 = vunpack.c.h.b16 %v785
        %v2573 = vunpack.c.l.b16 %v786
        %v2574 = vunpack.c.h.b16 %v786
        %v2575 = vunpack.c.l.b16 %v787
        %v2576 = vunpack.c.h.b16 %v787
        %v2577 = vunpack.c.l.b16 %v788
        %v2578 = vunpack.c.h.b16 %v788
        %v2579 = vunpack.c.l.b16 %v789
        %v2580 = vunpack.c.h.b16 %v789
        %v2581 = vunpack.c.l.b16 %v790
        %v2582 = vunpack.c.h.b16 %v790
        %v2583 = vunpack.c.l.b16 %v791
        %v2584 = vunpack.c.h.b16 %v791
        %v2585 = vunpack.c.l.b16 %v792
        %v2586 = vunpack.c.h.b16 %v792
        %v2587 = vunpack.c.l.b16 %v793
        %v2588 = vunpack.c.h.b16 %v793
        %v2589 = vunpack.c.l.b16 %v794
        %v2590 = vunpack.c.h.b16 %v794
        %v2591 = vunpack.c.l.b16 %v795
        %v2592 = vunpack.c.h.b16 %v795
        %v2593 = vunpack.c.l.b16 %v796
        %v2594 = vunpack.c.h.b16 %v796
        %v2595 = vunpack.c.l.b16 %v797
        %v2596 = vunpack.c.h.b16 %v797
        %v2597 = vunpack.c.l.b16 %v798
        %v2598 = vunpack.c.h.b16 %v798
        %v2599 = vunpack.c.l.b16 %v799
        %v2600 = vunpack.c.h.b16 %v799
        %v2601 = vunpack.c.l.b16 %v800
        %v2602 = vunpack.c.h.b16 %v800
        %v2603 = vunpack.c.l.b16 %v801
        %v2604 = vunpack.c.h.b16 %v801
        %v2605 = vunpack.c.l.b16 %v802
        %v2606 = vunpack.c.h.b16 %v802
        %v2607 = vunpack.c.l.b16 %v803
        %v2608 = vunpack.c.h.b16 %v803
        %v2609 = vunpack.c.l.b16 %v804
        %v2610 = vunpack.c.h.b16 %v804
        %v2611 = vunpack.c.l.b16 %v805
        %v2612 = vunpack.c.h.b16 %v805
        %v2613 = vunpack.c.l.b16 %v806
        %v2614 = vunpack.c.h.b16 %v806
        %v2615 = vunpack.c.l.b16 %v807
        %v2616 = vunpack.c.h.b16 %v807
        %v2617 = vunpack.c.l.b16 %v808
        %v2618 = vunpack.c.h.b16 %v808
        %v2619 = vunpack.c.l.b16 %v809
        %v2620 = vunpack.c.h.b16 %v809
        %v2621 = vunpack.c.l.b16 %v810
        %v2622 = vunpack.c.h.b16 %v810
        %v2623 = vunpack.c.l.b16 %v811
        %v2624 = vunpack.c.h.b16 %v811
        %v2625 = vunpack.c.l.b16 %v812
        %v2626 = vunpack.c.h.b16 %v812
        %v2627 = vunpack.c.l.b16 %v813
        %v2628 = vunpack.c.h.b16 %v813
        %v2629 = vunpack.c.l.b16 %v814
        %v2630 = vunpack.c.h.b16 %v814
        %v2631 = vunpack.c.l.b16 %v815
        %v2632 = vunpack.c.h.b16 %v815
        %v2633 = vunpack.c.l.b16 %v816
        %v2634 = vunpack.c.h.b16 %v816
        %v2635 = vunpack.c.l.b16 %v817
        %v2636 = vunpack.c.h.b16 %v817
        %v2637 = vunpack.c.l.b16 %v818
        %v2638 = vunpack.c.h.b16 %v818
        %v2639 = vunpack.c.l.b16 %v819
        %v2640 = vunpack.c.h.b16 %v819
        %v2641 = vunpack.c.l.b16 %v820
        %v2642 = vunpack.c.h.b16 %v820
        %v2643 = vunpack.c.l.b16 %v821
        %v2644 = vunpack.c.h.b16 %v821
        %v2645 = vunpack.c.l.b16 %v822
        %v2646 = vunpack.c.h.b16 %v822
        %v2647 = vunpack.c.l.b16 %v823
        %v2648 = vunpack.c.h.b16 %v823
        %v2649 = vunpack.c.l.b16 %v824
        %v2650 = vunpack.c.h.b16 %v824
        %v2651 = vunpack.c.l.b16 %v825
        %v2652 = vunpack.c.h.b16 %v825
        %v2653 = vunpack.c.l.b16 %v826
        %v2654 = vunpack.c.h.b16 %v826
        %v2655 = vunpack.c.l.b16 %v827
        %v2656 = vunpack.c.h.b16 %v827
        %v2657 = vunpack.c.l.b16 %v828
        %v2658 = vunpack.c.h.b16 %v828
        %v2659 = vunpack.c.l.b16 %v829
        %v2660 = vunpack.c.h.b16 %v829
        %v2661 = vunpack.c.l.b16 %v830
        %v2662 = vunpack.c.h.b16 %v830
        %v2663 = vunpack.c.l.b16 %v831
        %v2664 = vunpack.c.h.b16 %v831
        %v2665 = vunpack.c.l.b16 %v832
        %v2666 = vunpack.c.h.b16 %v832
        %v2667 = vunpack.c.l.b16 %v833
        %v2668 = vunpack.c.h.b16 %v833
        %v2669 = vunpack.c.l.b16 %v834
        %v2670 = vunpack.c.h.b16 %v834
        %v2671 = vunpack.c.l.b16 %v835
        %v2672 = vunpack.c.h.b16 %v835
        %v2673 = vunpack.c.l.b16 %v836
        %v2674 = vunpack.c.h.b16 %v836
        %v2675 = vunpack.c.l.b16 %v837
        %v2676 = vunpack.c.h.b16 %v837
        %v2677 = vunpack.c.l.b16 %v838
        %v2678 = vunpack.c.h.b16 %v838
        %v2679 = vunpack.c.l.b16 %v839
        %v2680 = vunpack.c.h.b16 %v839
        %v2681 = vunpack.c.l.b16 %v840
        %v2682 = vunpack.c.h.b16 %v840
        %v2683 = vunpack.c.l.b16 %v841
        %v2684 = vunpack.c.h.b16 %v841
        %v2685 = vunpack.c.l.b16 %v842
        %v2686 = vunpack.c.h.b16 %v842
        %v2687 = vunpack.c.l.b16 %v843
        %v2688 = vunpack.c.h.b16 %v843
        %v2689 = vunpack.c.l.b16 %v844
        %v2690 = vunpack.c.h.b16 %v844
        %v2691 = vunpack.c.l.b16 %v845
        %v2692 = vunpack.c.h.b16 %v845
        %v2693 = vunpack.c.l.b16 %v846
        %v2694 = vunpack.c.h.b16 %v846
        %v2695 = vunpack.c.l.b16 %v847
        %v2696 = vunpack.c.h.b16 %v847
        %v2697 = vunpack.c.l.b16 %v848
        %v2698 = vunpack.c.h.b16 %v848
        %v2699 = vunpack.c.l.b16 %v849
        %v2700 = vunpack.c.h.b16 %v849
        %v2701 = vunpack.c.l.b16 %v850
        %v2702 = vunpack.c.h.b16 %v850
        %v2703 = vunpack.c.l.b16 %v851
        %v2704 = vunpack.c.h.b16 %v851
        %v2705 = vunpack.c.l.b16 %v852
        %v2706 = vunpack.c.h.b16 %v852
        %v2707 = vunpack.c.l.b16 %v853
        %v2708 = vunpack.c.h.b16 %v853
        %v2709 = vunpack.c.l.b16 %v854
        %v2710 = vunpack.c.h.b16 %v854
        %v2711 = vunpack.c.l.b16 %v855
        %v2712 = vunpack.c.h.b16 %v855
        %v2713 = vunpack.c.l.b16 %v856
        %v2714 = vunpack.c.h.b16 %v856
        %v2715 = vunpack.c.l.b16 %v857
        %v2716 = vunpack.c.h.b16 %v857
        %v2717 = vunpack.c.l.b16 %v858
        %v2718 = vunpack.c.h.b16 %v858
        %v2719 = vunpack.c.l.b16 %v859
        %v2720 = vunpack.c.h.b16 %v859
        %v2721 = vunpack.c.l.b16 %v860
        %v2722 = vunpack.c.h.b16 %v860
        %v2723 = vunpack.c.l.b16 %v861
        %v2724 = vunpack.c.h.b16 %v861
        %v2725 = vunpack.c.l.b16 %v862
        %v2726 = vunpack.c.h.b16 %v862
        %v2727 = vunpack.c.l.b16 %v863
        %v2728 = vunpack.c.h.b16 %v863
        %v2729 = vunpack.c.l.b16 %v864
        %v2730 = vunpack.c.h.b16 %v864
        %v2731 = vunpack.c.l.b16 %v865
        %v2732 = vunpack.c.h.b16 %v865
        %v2733 = vunpack.c.l.b16 %v866
        %v2734 = vunpack.c.h.b16 %v866
        %v2735 = vunpack.c.l.b16 %v867
        %v2736 = vunpack.c.h.b16 %v867
        %v2737 = vunpack.c.l.b16 %v868
        %v2738 = vunpack.c.h.b16 %v868
        %v2739 = vunpack.c.l.b16 %v869
        %v2740 = vunpack.c.h.b16 %v869
        %v2741 = vunpack.c.l.b16 %v870
        %v2742 = vunpack.c.h.b16 %v870
        %v2743 = vunpack.c.l.b16 %v871
        %v2744 = vunpack.c.h.b16 %v871
        %v2745 = vunpack.c.l.b16 %v872
        %v2746 = vunpack.c.h.b16 %v872
        %v2747 = vunpack.c.l.b16 %v873
        %v2748 = vunpack.c.h.b16 %v873
        %v2749 = vunpack.c.l.b16 %v874
        %v2750 = vunpack.c.h.b16 %v874
        %v2751 = vunpack.c.l.b16 %v875
        %v2752 = vunpack.c.h.b16 %v875
        %v2753 = vunpack.c.l.b16 %v876
        %v2754 = vunpack.c.h.b16 %v876
        %v2755 = vunpack.c.l.b16 %v877
        %v2756 = vunpack.c.h.b16 %v877
        %v2757 = vunpack.c.l.b16 %v878
        %v2758 = vunpack.c.h.b16 %v878
        %v2759 = vunpack.c.l.b16 %v879
        %v2760 = vunpack.c.h.b16 %v879
        %v2761 = vunpack.c.l.b16 %v880
        %v2762 = vunpack.c.h.b16 %v880
        %v2763 = vunpack.c.l.b16 %v881
        %v2764 = vunpack.c.h.b16 %v881
        %v2765 = vunpack.c.l.b16 %v882
        %v2766 = vunpack.c.h.b16 %v882
        %v2767 = vunpack.c.l.b16 %v883
        %v2768 = vunpack.c.h.b16 %v883
        %v2769 = vunpack.c.l.b16 %v884
        %v2770 = vunpack.c.h.b16 %v884
        %v2771 = vunpack.c.l.b16 %v885
        %v2772 = vunpack.c.h.b16 %v885
        %v2773 = vunpack.c.l.b16 %v886
        %v2774 = vunpack.c.h.b16 %v886
        %v2775 = vunpack.c.l.b16 %v887
        %v2776 = vunpack.c.h.b16 %v887
        %v2777 = vunpack.c.l.b16 %v888
        %v2778 = vunpack.c.h.b16 %v888
        %v2779 = vunpack.c.l.b16 %v889
        %v2780 = vunpack.c.h.b16 %v889
        %v2781 = vunpack.c.l.b16 %v890
        %v2782 = vunpack.c.h.b16 %v890
        %v2783 = vunpack.c.l.b16 %v891
        %v2784 = vunpack.c.h.b16 %v891
        %v2785 = vunpack.c.l.b16 %v892
        %v2786 = vunpack.c.h.b16 %v892
        %v2787 = vunpack.c.l.b16 %v893
        %v2788 = vunpack.c.h.b16 %v893
        %v2789 = vunpack.c.l.b16 %v894
        %v2790 = vunpack.c.h.b16 %v894
        %v2791 = vunpack.c.l.b16 %v895
        %v2792 = vunpack.c.h.b16 %v895
        %v2793 = vunpack.c.l.b16 %v896
        %v2794 = vunpack.c.h.b16 %v896
        %v2795 = vunpack.c.l.b16 %v897
        %v2796 = vunpack.c.h.b16 %v897
        %v2797 = vunpack.c.l.b16 %v898
        %v2798 = vunpack.c.h.b16 %v898
        %v2799 = vunpack.c.l.b16 %v899
        %v2800 = vunpack.c.h.b16 %v899
        %v2801 = vunpack.c.l.b16 %v900
        %v2802 = vunpack.c.h.b16 %v900
        %v2803 = vunpack.c.l.b16 %v901
        %v2804 = vunpack.c.h.b16 %v901
        %v2805 = vunpack.c.l.b16 %v902
        %v2806 = vunpack.c.h.b16 %v902
        %v2807 = vunpack.c.l.b16 %v903
        %v2808 = vunpack.c.h.b16 %v903
        %v2809 = vunpack.c.l.b16 %v904
        %v2810 = vunpack.c.h.b16 %v904
        %v2811 = vunpack.c.l.b16 %v905
        %v2812 = vunpack.c.h.b16 %v905
        %v2813 = vunpack.c.l.b16 %v906
        %v2814 = vunpack.c.h.b16 %v906
        %v2815 = vunpack.c.l.b16 %v907
        %v2816 = vunpack.c.h.b16 %v907
        %v2817 = vunpack.c.l.b16 %v908
        %v2818 = vunpack.c.h.b16 %v908
        %v2819 = vunpack.c.l.b16 %v909
        %v2820 = vunpack.c.h.b16 %v909
        %v2821 = vunpack.c.l.b16 %v910
        %v2822 = vunpack.c.h.b16 %v910
        %v2823 = vunpack.c.l.b16 %v911
        %v2824 = vunpack.c.h.b16 %v911
        %v2825 = vunpack.c.l.b16 %v912
        %v2826 = vunpack.c.h.b16 %v912
        %v2827 = vunpack.c.l.b16 %v913
        %v2828 = vunpack.c.h.b16 %v913
        %v2829 = vunpack.c.l.b16 %v914
        %v2830 = vunpack.c.h.b16 %v914
        %v2831 = vunpack.c.l.b16 %v915
        %v2832 = vunpack.c.h.b16 %v915
        %v2833 = vunpack.c.l.b16 %v916
        %v2834 = vunpack.c.h.b16 %v916
        %v2835 = vunpack.c.l.b16 %v917
        %v2836 = vunpack.c.h.b16 %v917
        %v2837 = vunpack.c.l.b16 %v918
        %v2838 = vunpack.c.h.b16 %v918
        %v2839 = vunpack.c.l.b16 %v919
        %v2840 = vunpack.c.h.b16 %v919
        %v2841 = vunpack.c.l.b16 %v920
        %v2842 = vunpack.c.h.b16 %v920
        %v2843 = vunpack.c.l.b16 %v921
        %v2844 = vunpack.c.h.b16 %v921
        %v2845 = vunpack.c.l.b16 %v922
        %v2846 = vunpack.c.h.b16 %v922
        %v2847 = vunpack.c.l.b16 %v923
        %v2848 = vunpack.c.h.b16 %v923
        %v2849 = vunpack.c.l.b16 %v924
        %v2850 = vunpack.c.h.b16 %v924
        %v2851 = vunpack.c.l.b16 %v925
        %v2852 = vunpack.c.h.b16 %v925
        %v2853 = vunpack.c.l.b16 %v926
        %v2854 = vunpack.c.h.b16 %v926
        %v2855 = vunpack.c.l.b16 %v927
        %v2856 = vunpack.c.h.b16 %v927
        %v2857 = vunpack.c.l.b16 %v928
        %v2858 = vunpack.c.h.b16 %v928
        %v2859 = vunpack.c.l.b16 %v929
        %v2860 = vunpack.c.h.b16 %v929
        %v2861 = vunpack.c.l.b16 %v930
        %v2862 = vunpack.c.h.b16 %v930
        %v2863 = vunpack.c.l.b16 %v931
        %v2864 = vunpack.c.h.b16 %v931
        %v2865 = vunpack.c.l.b16 %v932
        %v2866 = vunpack.c.h.b16 %v932
        %v2867 = vunpack.c.l.b16 %v933
        %v2868 = vunpack.c.h.b16 %v933
        %v2869 = vunpack.c.l.b16 %v934
        %v2870 = vunpack.c.h.b16 %v934
        %v2871 = vunpack.c.l.b16 %v935
        %v2872 = vunpack.c.h.b16 %v935
        %v2873 = vunpack.c.l.b16 %v936
        %v2874 = vunpack.c.h.b16 %v936
        %v2875 = vunpack.c.l.b16 %v937
        %v2876 = vunpack.c.h.b16 %v937
        %v2877 = vunpack.c.l.b16 %v938
        %v2878 = vunpack.c.h.b16 %v938
        %v2879 = vunpack.c.l.b16 %v939
        %v2880 = vunpack.c.h.b16 %v939
        %v2881 = vunpack.c.l.b16 %v940
        %v2882 = vunpack.c.h.b16 %v940
        %v2883 = vunpack.c.l.b16 %v941
        %v2884 = vunpack.c.h.b16 %v941
        %v2885 = vunpack.c.l.b16 %v942
        %v2886 = vunpack.c.h.b16 %v942
        %v2887 = vunpack.c.l.b16 %v943
        %v2888 = vunpack.c.h.b16 %v943
        %v2889 = vunpack.c.l.b16 %v944
        %v2890 = vunpack.c.h.b16 %v944
        %v2891 = vunpack.c.l.b16 %v945
        %v2892 = vunpack.c.h.b16 %v945
        %v2893 = vunpack.c.l.b16 %v946
        %v2894 = vunpack.c.h.b16 %v946
        %v2895 = vunpack.c.l.b16 %v947
        %v2896 = vunpack.c.h.b16 %v947
        %v2897 = vunpack.c.l.b16 %v948
        %v2898 = vunpack.c.h.b16 %v948
        %v2899 = vunpack.c.l.b16 %v949
        %v2900 = vunpack.c.h.b16 %v949
        %v2901 = vunpack.c.l.b16 %v950
        %v2902 = vunpack.c.h.b16 %v950
        %v2903 = vunpack.c.l.b16 %v951
        %v2904 = vunpack.c.h.b16 %v951
        %v2905 = vunpack.c.l.b16 %v952
        %v2906 = vunpack.c.h.b16 %v952
        %v2907 = vunpack.c.l.b16 %v953
        %v2908 = vunpack.c.h.b16 %v953
        %v2909 = vunpack.c.l.b16 %v954
        %v2910 = vunpack.c.h.b16 %v954
        %v2911 = vunpack.c.l.b16 %v955
        %v2912 = vunpack.c.h.b16 %v955
        %v2913 = vunpack.c.l.b16 %v956
        %v2914 = vunpack.c.h.b16 %v956
        %v2915 = vunpack.c.l.b16 %v957
        %v2916 = vunpack.c.h.b16 %v957
        %v2917 = vunpack.c.l.b16 %v958
        %v2918 = vunpack.c.h.b16 %v958
        %v2919 = vunpack.c.l.b16 %v959
        %v2920 = vunpack.c.h.b16 %v959
        %v2921 = vunpack.c.l.b16 %v960
        %v2922 = vunpack.c.h.b16 %v960
        %v2923 = vunpack.c.l.b16 %v961
        %v2924 = vunpack.c.h.b16 %v961
        %v2925 = vunpack.c.l.b16 %v962
        %v2926 = vunpack.c.h.b16 %v962
        %v2927 = vunpack.c.l.b16 %v963
        %v2928 = vunpack.c.h.b16 %v963
        %v2929 = vunpack.c.l.b16 %v964
        %v2930 = vunpack.c.h.b16 %v964
        %v2931 = vunpack.c.l.b16 %v965
        %v2932 = vunpack.c.h.b16 %v965
        %v2933 = vunpack.c.l.b16 %v966
        %v2934 = vunpack.c.h.b16 %v966
        %v2935 = vunpack.c.l.b16 %v967
        %v2936 = vunpack.c.h.b16 %v967
        %v2937 = vunpack.c.l.b16 %v968
        %v2938 = vunpack.c.h.b16 %v968
        %v2939 = vunpack.c.l.b16 %v969
        %v2940 = vunpack.c.h.b16 %v969
        %v2941 = vunpack.c.l.b16 %v970
        %v2942 = vunpack.c.h.b16 %v970
        %v2943 = vunpack.c.l.b16 %v971
        %v2944 = vunpack.c.h.b16 %v971
        %v2945 = vunpack.c.l.b16 %v972
        %v2946 = vunpack.c.h.b16 %v972
        %v2947 = vunpack.c.l.b16 %v973
        %v2948 = vunpack.c.h.b16 %v973
        %v2949 = vunpack.c.l.b16 %v974
        %v2950 = vunpack.c.h.b16 %v974
        %v2951 = vunpack.c.l.b16 %v975
        %v2952 = vunpack.c.h.b16 %v975
        %v2953 = vunpack.c.l.b16 %v976
        %v2954 = vunpack.c.h.b16 %v976
        %v2955 = vunpack.c.l.b16 %v977
        %v2956 = vunpack.c.h.b16 %v977
        %v2957 = vunpack.c.l.b16 %v978
        %v2958 = vunpack.c.h.b16 %v978
        %v2959 = vunpack.c.l.b16 %v979
        %v2960 = vunpack.c.h.b16 %v979
        %v2961 = vunpack.c.l.b16 %v980
        %v2962 = vunpack.c.h.b16 %v980
        %v2963 = vunpack.c.l.b16 %v981
        %v2964 = vunpack.c.h.b16 %v981
        %v2965 = vunpack.c.l.b16 %v982
        %v2966 = vunpack.c.h.b16 %v982
        %v2967 = vunpack.c.l.b16 %v983
        %v2968 = vunpack.c.h.b16 %v983
        %v2969 = vunpack.c.l.b16 %v984
        %v2970 = vunpack.c.h.b16 %v984
        %v2971 = vunpack.c.l.b16 %v985
        %v2972 = vunpack.c.h.b16 %v985
        %v2973 = vunpack.c.l.b16 %v986
        %v2974 = vunpack.c.h.b16 %v986
        %v2975 = vunpack.c.l.b16 %v987
        %v2976 = vunpack.c.h.b16 %v987
        %v2977 = vunpack.c.l.b16 %v988
        %v2978 = vunpack.c.h.b16 %v988
        %v2979 = vunpack.c.l.b16 %v989
        %v2980 = vunpack.c.h.b16 %v989
        %v2981 = vunpack.c.l.b16 %v990
        %v2982 = vunpack.c.h.b16 %v990
        %v2983 = vunpack.c.l.b16 %v991
        %v2984 = vunpack.c.h.b16 %v991
        %v2985 = vunpack.c.l.b16 %v992
        %v2986 = vunpack.c.h.b16 %v992
        %v2987 = vunpack.c.l.b16 %v993
        %v2988 = vunpack.c.h.b16 %v993
        %v2989 = vunpack.c.l.b16 %v994
        %v2990 = vunpack.c.h.b16 %v994
        %v2991 = vunpack.c.l.b16 %v995
        %v2992 = vunpack.c.h.b16 %v995
        %v2993 = vunpack.c.l.b16 %v996
        %v2994 = vunpack.c.h.b16 %v996
        %v2995 = vunpack.c.l.b16 %v997
        %v2996 = vunpack.c.h.b16 %v997
        %v2997 = vunpack.c.l.b16 %v998
        %v2998 = vunpack.c.h.b16 %v998
        %v2999 = vunpack.c.l.b16 %v999
        %v3000 = vunpack.c.h.b16 %v999
        %v3001 = vunpack.c.l.b16 %v1000
        %v3002 = vunpack.c.h.b16 %v1000
        %v3003 = vunpack.c.l.b16 %v1001
        %v3004 = vunpack.c.h.b16 %v1001
        %v3005 = vunpack.c.l.b16 %v1002
        %v3006 = vunpack.c.h.b16 %v1002
        %v3007 = vunpack.c.l.b16 %v1003
        %v3008 = vunpack.c.h.b16 %v1003
        %v3009 = vunpack.c.l.b16 %v1004
        %v3010 = vunpack.c.h.b16 %v1004
        %v3011 = vunpack.c.l.b16 %v1005
        %v3012 = vunpack.c.h.b16 %v1005
        %v3013 = vunpack.c.l.b16 %v1006
        %v3014 = vunpack.c.h.b16 %v1006
        %v3015 = vunpack.c.l.b16 %v1007
        %v3016 = vunpack.c.h.b16 %v1007
        %v3017 = vunpack.c.l.b16 %v1008
        %v3018 = vunpack.c.h.b16 %v1008
        %v3019 = vunpack.c.l.b16 %v1009
        %v3020 = vunpack.c.h.b16 %v1009
        %v3021 = vunpack.c.l.b16 %v1010
        %v3022 = vunpack.c.h.b16 %v1010
        %v3023 = vunpack.c.l.b16 %v1011
        %v3024 = vunpack.c.h.b16 %v1011
        %v3025 = vunpack.c.l.b16 %v1012
        %v3026 = vunpack.c.h.b16 %v1012
        %v3027 = vunpack.c.l.b16 %v1013
        %v3028 = vunpack.c.h.b16 %v1013
        %v3029 = vunpack.c.l.b16 %v1014
        %v3030 = vunpack.c.h.b16 %v1014
        %v3031 = vunpack.c.l.b16 %v1015
        %v3032 = vunpack.c.h.b16 %v1015
        %v3033 = vunpack.c.l.b16 %v1016
        %v3034 = vunpack.c.h.b16 %v1016
        %v3035 = vunpack.c.l.b16 %v1017
        %v3036 = vunpack.c.h.b16 %v1017
        %v3037 = vunpack.c.l.b16 %v1018
        %v3038 = vunpack.c.h.b16 %v1018
        %v3039 = vunpack.c.l.b16 %v1019
        %v3040 = vunpack.c.h.b16 %v1019
        %v3041 = vunpack.c.l.b16 %v1020
        %v3042 = vunpack.c.h.b16 %v1020
        %v3043 = vunpack.c.l.b16 %v1021
        %v3044 = vunpack.c.h.b16 %v1021
        %v3045 = vunpack.c.l.b16 %v1022
        %v3046 = vunpack.c.h.b16 %v1022
        %v3047 = vunpack.c.l.b16 %v1023
        %v3048 = vunpack.c.h.b16 %v1023
        %v3049 = vunpack.c.l.b16 %v1024
        %v3050 = vunpack.c.h.b16 %v1024
        %v3051 = vunpack.c.l.b16 %v1025
        %v3052 = vunpack.c.h.b16 %v1025
        %v3053 = vunpack.c.l.b16 %v1026
        %v3054 = vunpack.c.h.b16 %v1026
        %v3055 = vunpack.c.l.b16 %v1027
        %v3056 = vunpack.c.h.b16 %v1027
        %v3057 = vunpack.c.l.b16 %v1028
        %v3058 = vunpack.c.h.b16 %v1028
        %v3059 = vunpack.c.l.b16 %v1029
        %v3060 = vunpack.c.h.b16 %v1029
        %v3061 = vunpack.c.l.b16 %v1030
        %v3062 = vunpack.c.h.b16 %v1030
        %v3063 = vunpack.c.l.b16 %v1031
        %v3064 = vunpack.c.h.b16 %v1031
        %v3065 = vunpack.c.l.b16 %v1032
        %v3066 = vunpack.c.h.b16 %v1032
        %v3067 = vunpack.c.l.b16 %v1033
        %v3068 = vunpack.c.h.b16 %v1033
        %v3069 = vunpack.c.l.b16 %v1034
        %v3070 = vunpack.c.h.b16 %v1034
        %v3071 = vunpack.c.l.b16 %v1035
        %v3072 = vunpack.c.h.b16 %v1035
        %v3073 = vunpack.c.l.b16 %v1036
        %v3074 = vunpack.c.h.b16 %v1036
        %v3075 = vunpack.c.l.b16 %v1037
        %v3076 = vunpack.c.h.b16 %v1037
        %v3077 = vunpack.c.l.b16 %v1038
        %v3078 = vunpack.c.h.b16 %v1038
        %v3079 = vunpack.c.l.b16 %v1039
        %v3080 = vunpack.c.h.b16 %v1039
        %v3081 = vunpack.c.l.b16 %v1040
        %v3082 = vunpack.c.h.b16 %v1040
        %v3083 = vunpack.c.l.b16 %v1041
        %v3084 = vunpack.c.h.b16 %v1041
        %v3085 = vunpack.c.l.b16 %v1042
        %v3086 = vunpack.c.h.b16 %v1042
        %v3087 = vunpack.c.l.b16 %v1043
        %v3088 = vunpack.c.h.b16 %v1043
        %v3089 = vunpack.c.l.b16 %v1044
        %v3090 = vunpack.c.h.b16 %v1044
        %v3091 = vunpack.c.l.b16 %v1045
        %v3092 = vunpack.c.h.b16 %v1045
        %v3093 = vunpack.c.l.b16 %v1046
        %v3094 = vunpack.c.h.b16 %v1046
        %v3095 = vunpack.c.l.b16 %v1047
        %v3096 = vunpack.c.h.b16 %v1047
        %v3097 = vunpack.c.l.b16 %v1048
        %v3098 = vunpack.c.h.b16 %v1048
        %v3099 = vunpack.c.l.b16 %v1049
        %v3100 = vunpack.c.h.b16 %v1049
        %v3101 = vunpack.c.l.b16 %v1050
        %v3102 = vunpack.c.h.b16 %v1050
        %v3103 = vunpack.c.l.b16 %v1051
        %v3104 = vunpack.c.h.b16 %v1051
        %v3105 = vunpack.c.l.b16 %v1052
        %v3106 = vunpack.c.h.b16 %v1052
        %v3107 = vunpack.c.l.b16 %v1053
        %v3108 = vunpack.c.h.b16 %v1053
        %v3109 = vunpack.c.l.b16 %v1054
        %v3110 = vunpack.c.h.b16 %v1054
        %v3111 = vunpack.c.l.b16 %v1055
        %v3112 = vunpack.c.h.b16 %v1055
        %v3113 = vunpack.c.l.b16 %v1056
        %v3114 = vunpack.c.h.b16 %v1056
        %v3115 = vunpack.c.l.b16 %v1057
        %v3116 = vunpack.c.h.b16 %v1057
        %v3117 = vunpack.c.l.b16 %v1058
        %v3118 = vunpack.c.h.b16 %v1058
        %v3119 = vunpack.c.l.b16 %v1059
        %v3120 = vunpack.c.h.b16 %v1059
        %v3121 = vunpack.c.l.b16 %v1060
        %v3122 = vunpack.c.h.b16 %v1060
        %v3123 = vunpack.c.l.b16 %v1061
        %v3124 = vunpack.c.h.b16 %v1061
        %v3125 = vunpack.c.l.b16 %v1062
        %v3126 = vunpack.c.h.b16 %v1062
        %v3127 = vunpack.c.l.b16 %v1063
        %v3128 = vunpack.c.h.b16 %v1063
        %v3129 = vunpack.c.l.b16 %v1064
        %v3130 = vunpack.c.h.b16 %v1064
        %v3131 = vunpack.c.l.b16 %v1065
        %v3132 = vunpack.c.h.b16 %v1065
        %v3133 = vunpack.c.l.b16 %v1066
        %v3134 = vunpack.c.h.b16 %v1066
        %v3135 = vunpack.c.l.b16 %v1067
        %v3136 = vunpack.c.h.b16 %v1067
        %v3137 = vunpack.c.l.b16 %v1068
        %v3138 = vunpack.c.h.b16 %v1068
        %v3139 = vunpack.c.l.b16 %v1069
        %v3140 = vunpack.c.h.b16 %v1069
        %v3141 = vunpack.c.l.b16 %v1070
        %v3142 = vunpack.c.h.b16 %v1070
        %v3143 = vunpack.c.l.b16 %v1071
        %v3144 = vunpack.c.h.b16 %v1071
        %v3145 = vunpack.c.l.b16 %v1072
        %v3146 = vunpack.c.h.b16 %v1072
        %v3147 = vunpack.c.l.b16 %v1073
        %v3148 = vunpack.c.h.b16 %v1073
        %v3149 = vunpack.c.l.b16 %v1074
        %v3150 = vunpack.c.h.b16 %v1074
        %v3151 = vunpack.c.l.b16 %v1075
        %v3152 = vunpack.c.h.b16 %v1075
        %v3153 = vunpack.c.l.b16 %v1076
        %v3154 = vunpack.c.h.b16 %v1076
        %v3155 = vunpack.c.l.b16 %v1077
        %v3156 = vunpack.c.h.b16 %v1077
        %v3157 = vunpack.c.l.b16 %v1078
        %v3158 = vunpack.c.h.b16 %v1078
        %v3159 = vunpack.c.l.b16 %v1079
        %v3160 = vunpack.c.h.b16 %v1079
        %v3161 = vunpack.c.l.b16 %v1080
        %v3162 = vunpack.c.h.b16 %v1080
        %v3163 = vunpack.c.l.b16 %v1081
        %v3164 = vunpack.c.h.b16 %v1081
        %v3165 = vunpack.c.l.b16 %v1082
        %v3166 = vunpack.c.h.b16 %v1082
        %v3167 = vunpack.c.l.b16 %v1083
        %v3168 = vunpack.c.h.b16 %v1083
        %v3169 = vunpack.c.l.b16 %v1084
        %v3170 = vunpack.c.h.b16 %v1084
        %v3171 = vunpack.c.l.b16 %v1085
        %v3172 = vunpack.c.h.b16 %v1085
        %v3173 = vunpack.c.l.b16 %v1086
        %v3174 = vunpack.c.h.b16 %v1086
        %v3175 = vunpack.c.l.b16 %v1087
        %v3176 = vunpack.c.h.b16 %v1087
        %v3177 = vunpack.c.l.b16 %v1088
        %v3178 = vunpack.c.h.b16 %v1088
        %v3179 = vunpack.c.l.b16 %v1089
        %v3180 = vunpack.c.h.b16 %v1089
        %v3181 = vunpack.c.l.b16 %v1090
        %v3182 = vunpack.c.h.b16 %v1090
        %v3183 = vunpack.c.l.b16 %v1091
        %v3184 = vunpack.c.h.b16 %v1091
        %v3185 = vunpack.c.l.b16 %v1092
        %v3186 = vunpack.c.h.b16 %v1092
        %v3187 = vunpack.c.l.b16 %v1093
        %v3188 = vunpack.c.h.b16 %v1093
        %v3189 = vunpack.c.l.b16 %v1094
        %v3190 = vunpack.c.h.b16 %v1094
        %v3191 = vunpack.c.l.b16 %v1095
        %v3192 = vunpack.c.h.b16 %v1095
        %v3193 = vunpack.c.l.b16 %v1096
        %v3194 = vunpack.c.h.b16 %v1096
        %v3195 = vunpack.c.l.b16 %v1097
        %v3196 = vunpack.c.h.b16 %v1097
        %v3197 = vunpack.c.l.b16 %v1098
        %v3198 = vunpack.c.h.b16 %v1098
        %v3199 = vunpack.c.l.b16 %v1099
        %v3200 = vunpack.c.h.b16 %v1099
        %v3201 = vunpack.c.l.b16 %v1100
        %v3202 = vunpack.c.h.b16 %v1100
        %v3203 = vunpack.c.l.b16 %v1101
        %v3204 = vunpack.c.h.b16 %v1101
        %v3205 = vunpack.c.l.b16 %v1102
        %v3206 = vunpack.c.h.b16 %v1102
        %v3207 = vunpack.c.l.b16 %v1103
        %v3208 = vunpack.c.h.b16 %v1103
        %v3209 = vunpack.c.l.b16 %v1104
        %v3210 = vunpack.c.h.b16 %v1104
        %v3211 = vunpack.c.l.b16 %v1105
        %v3212 = vunpack.c.h.b16 %v1105
        %v3213 = vunpack.c.l.b16 %v1106
        %v3214 = vunpack.c.h.b16 %v1106
        %v3215 = vunpack.c.l.b16 %v1107
        %v3216 = vunpack.c.h.b16 %v1107
        %v3217 = vunpack.c.l.b16 %v1108
        %v3218 = vunpack.c.h.b16 %v1108
        %v3219 = vunpack.c.l.b16 %v1109
        %v3220 = vunpack.c.h.b16 %v1109
        %v3221 = vunpack.c.l.b16 %v1110
        %v3222 = vunpack.c.h.b16 %v1110
        %v3223 = vunpack.c.l.b16 %v1111
        %v3224 = vunpack.c.h.b16 %v1111
        %v3225 = vunpack.c.l.b16 %v1112
        %v3226 = vunpack.c.h.b16 %v1112
        %v3227 = vunpack.c.l.b16 %v1113
        %v3228 = vunpack.c.h.b16 %v1113
        %v3229 = vunpack.c.l.b16 %v1114
        %v3230 = vunpack.c.h.b16 %v1114
        %v3231 = vunpack.c.l.b16 %v1115
        %v3232 = vunpack.c.h.b16 %v1115
        %v3233 = vunpack.c.l.b16 %v1116
        %v3234 = vunpack.c.h.b16 %v1116
        %v3235 = vunpack.c.l.b16 %v1117
        %v3236 = vunpack.c.h.b16 %v1117
        %v3237 = vunpack.c.l.b16 %v1118
        %v3238 = vunpack.c.h.b16 %v1118
        %v3239 = vunpack.c.l.b16 %v1119
        %v3240 = vunpack.c.h.b16 %v1119
        %v3241 = vunpack.c.l.b16 %v1120
        %v3242 = vunpack.c.h.b16 %v1120
        %v3243 = vunpack.c.l.b16 %v1121
        %v3244 = vunpack.c.h.b16 %v1121
        %v3245 = vunpack.c.l.b16 %v1122
        %v3246 = vunpack.c.h.b16 %v1122
        %v3247 = vunpack.c.l.b16 %v1123
        %v3248 = vunpack.c.h.b16 %v1123
        %v3249 = vunpack.c.l.b16 %v1124
        %v3250 = vunpack.c.h.b16 %v1124
        %v3251 = vunpack.c.l.b16 %v1125
        %v3252 = vunpack.c.h.b16 %v1125
        %v3253 = vunpack.c.l.b16 %v1126
        %v3254 = vunpack.c.h.b16 %v1126
        %v3255 = vunpack.c.l.b16 %v1127
        %v3256 = vunpack.c.h.b16 %v1127
        %v3257 = vunpack.c.l.b16 %v1128
        %v3258 = vunpack.c.h.b16 %v1128
        %v3259 = vunpack.c.l.b16 %v1129
        %v3260 = vunpack.c.h.b16 %v1129
        %v3261 = vunpack.c.l.b16 %v1130
        %v3262 = vunpack.c.h.b16 %v1130
        %v3263 = vunpack.c.l.b16 %v1131
        %v3264 = vunpack.c.h.b16 %v1131
        %v3265 = vunpack.c.l.b16 %v1132
        %v3266 = vunpack.c.h.b16 %v1132
        %v3267 = vunpack.c.l.b16 %v1133
        %v3268 = vunpack.c.h.b16 %v1133
        %v3269 = vunpack.c.l.b16 %v1134
        %v3270 = vunpack.c.h.b16 %v1134
        %v3271 = vunpack.c.l.b16 %v1135
        %v3272 = vunpack.c.h.b16 %v1135
        %v3273 = vunpack.c.l.b16 %v1136
        %v3274 = vunpack.c.h.b16 %v1136
        %v3275 = vunpack.c.l.b16 %v1137
        %v3276 = vunpack.c.h.b16 %v1137
        %v3277 = vunpack.c.l.b16 %v1138
        %v3278 = vunpack.c.h.b16 %v1138
        %v3279 = vunpack.c.l.b16 %v1139
        %v3280 = vunpack.c.h.b16 %v1139
        %v3281 = vunpack.c.l.b16 %v1140
        %v3282 = vunpack.c.h.b16 %v1140
        %v3283 = vunpack.c.l.b16 %v1141
        %v3284 = vunpack.c.h.b16 %v1141
        %v3285 = vunpack.c.l.b16 %v1142
        %v3286 = vunpack.c.h.b16 %v1142
        %v3287 = vunpack.c.l.b16 %v1143
        %v3288 = vunpack.c.h.b16 %v1143
        %v3289 = vunpack.c.l.b16 %v1144
        %v3290 = vunpack.c.h.b16 %v1144
        %v3291 = vunpack.c.l.b16 %v1145
        %v3292 = vunpack.c.h.b16 %v1145
        %v3293 = vunpack.c.l.b16 %v1146
        %v3294 = vunpack.c.h.b16 %v1146
        %v3295 = vunpack.c.l.b16 %v1147
        %v3296 = vunpack.c.h.b16 %v1147
        %v3297 = vunpack.c.l.b16 %v1148
        %v3298 = vunpack.c.h.b16 %v1148
        %v3299 = vunpack.c.l.b16 %v1149
        %v3300 = vunpack.c.h.b16 %v1149
        %v3301 = vunpack.c.l.b16 %v1150
        %v3302 = vunpack.c.h.b16 %v1150
        %v3303 = vunpack.c.l.b16 %v1151
        %v3304 = vunpack.c.h.b16 %v1151
        %v3305 = vunpack.c.l.b16 %v1152
        %v3306 = vunpack.c.h.b16 %v1152
        %v3307 = vunpack.c.l.b16 %v1153
        %v3308 = vunpack.c.h.b16 %v1153
        %v3309 = vunpack.c.l.b16 %v1154
        %v3310 = vunpack.c.h.b16 %v1154
        %v3311 = vunpack.c.l.b16 %v1155
        %v3312 = vunpack.c.h.b16 %v1155
        %v3313 = vunpack.c.l.b16 %v1156
        %v3314 = vunpack.c.h.b16 %v1156
        %v3315 = vunpack.c.l.b16 %v1157
        %v3316 = vunpack.c.h.b16 %v1157
        %v3317 = vunpack.c.l.b16 %v1158
        %v3318 = vunpack.c.h.b16 %v1158
        %v3319 = vunpack.c.l.b16 %v1159
        %v3320 = vunpack.c.h.b16 %v1159
        %v3321 = vunpack.c.l.b16 %v1160
        %v3322 = vunpack.c.h.b16 %v1160
        %v3323 = vunpack.c.l.b16 %v1161
        %v3324 = vunpack.c.h.b16 %v1161
        %v3325 = vunpack.c.l.b16 %v1162
        %v3326 = vunpack.c.h.b16 %v1162
        %v3327 = vunpack.c.l.b16 %v1163
        %v3328 = vunpack.c.h.b16 %v1163
        %v3329 = vunpack.c.l.b16 %v1164
        %v3330 = vunpack.c.h.b16 %v1164
        %v3331 = vunpack.c.l.b16 %v1165
        %v3332 = vunpack.c.h.b16 %v1165
        %v3333 = vunpack.c.l.b16 %v1166
        %v3334 = vunpack.c.h.b16 %v1166
        %v3335 = vunpack.c.l.b16 %v1167
        %v3336 = vunpack.c.h.b16 %v1167
        %v3337 = vunpack.c.l.b16 %v1168
        %v3338 = vunpack.c.h.b16 %v1168
        %v3339 = vunpack.c.l.b16 %v1169
        %v3340 = vunpack.c.h.b16 %v1169
        %v3341 = vunpack.c.l.b16 %v1170
        %v3342 = vunpack.c.h.b16 %v1170
        %v3343 = vunpack.c.l.b16 %v1171
        %v3344 = vunpack.c.h.b16 %v1171
        %v3345 = vunpack.c.l.b16 %v1172
        %v3346 = vunpack.c.h.b16 %v1172
        %v3347 = vunpack.c.l.b16 %v1173
        %v3348 = vunpack.c.h.b16 %v1173
        %v3349 = vunpack.c.l.b16 %v1174
        %v3350 = vunpack.c.h.b16 %v1174
        %v3351 = vunpack.c.l.b16 %v1175
        %v3352 = vunpack.c.h.b16 %v1175
        %v3353 = vunpack.c.l.b16 %v1176
        %v3354 = vunpack.c.h.b16 %v1176
        %v3355 = vunpack.c.l.b16 %v1177
        %v3356 = vunpack.c.h.b16 %v1177
        %v3357 = vunpack.c.l.b16 %v1178
        %v3358 = vunpack.c.h.b16 %v1178
        %v3359 = vunpack.c.l.b16 %v1179
        %v3360 = vunpack.c.h.b16 %v1179
        %v3361 = vunpack.c.l.b16 %v1180
        %v3362 = vunpack.c.h.b16 %v1180
        %v3363 = vunpack.c.l.b16 %v1181
        %v3364 = vunpack.c.h.b16 %v1181
        %v3365 = vunpack.c.l.b16 %v1182
        %v3366 = vunpack.c.h.b16 %v1182
        %v3367 = vunpack.c.l.b16 %v1183
        %v3368 = vunpack.c.h.b16 %v1183
        %v3369 = vunpack.c.l.b16 %v1184
        %v3370 = vunpack.c.h.b16 %v1184
        %v3371 = vunpack.c.l.b16 %v1185
        %v3372 = vunpack.c.h.b16 %v1185
        %v3373 = vunpack.c.l.b16 %v1186
        %v3374 = vunpack.c.h.b16 %v1186
        %v3375 = vunpack.c.l.b16 %v1187
        %v3376 = vunpack.c.h.b16 %v1187
        %v3377 = vunpack.c.l.b16 %v1188
        %v3378 = vunpack.c.h.b16 %v1188
        %v3379 = vunpack.c.l.b16 %v1189
        %v3380 = vunpack.c.h.b16 %v1189
        %v3381 = vunpack.c.l.b16 %v1190
        %v3382 = vunpack.c.h.b16 %v1190
        %v3383 = vunpack.c.l.b16 %v1191
        %v3384 = vunpack.c.h.b16 %v1191
        %v3385 = vunpack.c.l.b16 %v1192
        %v3386 = vunpack.c.h.b16 %v1192
        %v3387 = vunpack.c.l.b16 %v1193
        %v3388 = vunpack.c.h.b16 %v1193
        %v3389 = vunpack.c.l.b16 %v1194
        %v3390 = vunpack.c.h.b16 %v1194
        %v3391 = vunpack.c.l.b16 %v1195
        %v3392 = vunpack.c.h.b16 %v1195
        %v3393 = vunpack.c.l.b16 %v1196
        %v3394 = vunpack.c.h.b16 %v1196
        %v3395 = vunpack.c.l.b16 %v1197
        %v3396 = vunpack.c.h.b16 %v1197
        %v3397 = vunpack.c.l.b16 %v1198
        %v3398 = vunpack.c.h.b16 %v1198
        %v3399 = vunpack.c.l.b16 %v1199
        %v3400 = vunpack.c.h.b16 %v1199
        %v3401 = vunpack.c.l.b16 %v1200
        %v3402 = vunpack.c.h.b16 %v1200
        %v3403 = vunpack.c.l.b16 %v1201
        %v3404 = vunpack.c.h.b16 %v1201
        %v3405 = vunpack.c.l.b16 %v1202
        %v3406 = vunpack.c.h.b16 %v1202
        %v3407 = vunpack.c.l.b16 %v1203
        %v3408 = vunpack.c.h.b16 %v1203
        %v3409 = vunpack.c.l.b16 %v1204
        %v3410 = vunpack.c.h.b16 %v1204
        %v3411 = vunpack.c.l.b16 %v1205
        %v3412 = vunpack.c.h.b16 %v1205
        %v3413 = vunpack.c.l.b16 %v1206
        %v3414 = vunpack.c.h.b16 %v1206
        %v3415 = vunpack.c.l.b16 %v1207
        %v3416 = vunpack.c.h.b16 %v1207
        %v3417 = vunpack.c.l.b16 %v1208
        %v3418 = vunpack.c.h.b16 %v1208
        %v3419 = vunpack.c.l.b16 %v1209
        %v3420 = vunpack.c.h.b16 %v1209
        %v3421 = vunpack.c.l.b16 %v1210
        %v3422 = vunpack.c.h.b16 %v1210
        %v3423 = vunpack.c.l.b16 %v1211
        %v3424 = vunpack.c.h.b16 %v1211
        %v3425 = vunpack.c.l.b16 %v1212
        %v3426 = vunpack.c.h.b16 %v1212
        %v3427 = vunpack.c.l.b16 %v1213
        %v3428 = vunpack.c.h.b16 %v1213
        %v3429 = vunpack.c.l.b16 %v1214
        %v3430 = vunpack.c.h.b16 %v1214
        %v3431 = vunpack.c.l.b16 %v1215
        %v3432 = vunpack.c.h.b16 %v1215
        %v3433 = vunpack.c.l.b16 %v1216
        %v3434 = vunpack.c.h.b16 %v1216
        %v3435 = vunpack.c.l.b16 %v1217
        %v3436 = vunpack.c.h.b16 %v1217
        %v3437 = vunpack.c.l.b16 %v1218
        %v3438 = vunpack.c.h.b16 %v1218
        %v3439 = vunpack.c.l.b16 %v1219
        %v3440 = vunpack.c.h.b16 %v1219
        %v3441 = vunpack.c.l.b16 %v1220
        %v3442 = vunpack.c.h.b16 %v1220
        %v3443 = vunpack.c.l.b16 %v1221
        %v3444 = vunpack.c.h.b16 %v1221
        %v3445 = vunpack.c.l.b16 %v1222
        %v3446 = vunpack.c.h.b16 %v1222
        %v3447 = vunpack.c.l.b16 %v1223
        %v3448 = vunpack.c.h.b16 %v1223
        %v3449 = vunpack.c.l.b16 %v1224
        %v3450 = vunpack.c.h.b16 %v1224
        %v3451 = vunpack.c.l.b16 %v1225
        %v3452 = vunpack.c.h.b16 %v1225
        %v3453 = vunpack.c.l.b16 %v1226
        %v3454 = vunpack.c.h.b16 %v1226
        %v3455 = vunpack.c.l.b16 %v1227
        %v3456 = vunpack.c.h.b16 %v1227
        %v3457 = vunpack.c.l.b16 %v1228
        %v3458 = vunpack.c.h.b16 %v1228
        %v3459 = vunpack.c.l.b16 %v1229
        %v3460 = vunpack.c.h.b16 %v1229
        %v3461 = vunpack.c.l.b16 %v1230
        %v3462 = vunpack.c.h.b16 %v1230
        %v3463 = vunpack.c.l.b16 %v1231
        %v3464 = vunpack.c.h.b16 %v1231
        %v3465 = vunpack.c.l.b16 %v1232
        %v3466 = vunpack.c.h.b16 %v1232
        %v3467 = vunpack.c.l.b16 %v1233
        %v3468 = vunpack.c.h.b16 %v1233
        %v3469 = vunpack.c.l.b16 %v1234
        %v3470 = vunpack.c.h.b16 %v1234
        %v3471 = vunpack.c.l.b16 %v1235
        %v3472 = vunpack.c.h.b16 %v1235
        %v3473 = vunpack.c.l.b16 %v1236
        %v3474 = vunpack.c.h.b16 %v1236
        %v3475 = vunpack.c.l.b16 %v1237
        %v3476 = vunpack.c.h.b16 %v1237
        %v3477 = vunpack.c.l.b16 %v1238
        %v3478 = vunpack.c.h.b16 %v1238
        %v3479 = vunpack.c.l.b16 %v1239
        %v3480 = vunpack.c.h.b16 %v1239
        %v3481 = vunpack.c.l.b16 %v1240
        %v3482 = vunpack.c.h.b16 %v1240
        %v3483 = vunpack.c.l.b16 %v1241
        %v3484 = vunpack.c.h.b16 %v1241
        %v3485 = vunpack.c.l.b16 %v1242
        %v3486 = vunpack.c.h.b16 %v1242
        %v3487 = vunpack.c.l.b16 %v1243
        %v3488 = vunpack.c.h.b16 %v1243
        %v3489 = vunpack.c.l.b16 %v1244
        %v3490 = vunpack.c.h.b16 %v1244
        %v3491 = vunpack.c.l.b16 %v1245
        %v3492 = vunpack.c.h.b16 %v1245
        %v3493 = vunpack.c.l.b16 %v1246
        %v3494 = vunpack.c.h.b16 %v1246
        %v3495 = vunpack.c.l.b16 %v1247
        %v3496 = vunpack.c.h.b16 %v1247
        %v3497 = vunpack.c.l.b16 %v1248
        %v3498 = vunpack.c.h.b16 %v1248
        %v3499 = vunpack.c.l.b16 %v1249
        %v3500 = vunpack.c.h.b16 %v1249
        %v3501 = vunpack.c.l.b16 %v1250
        %v3502 = vunpack.c.h.b16 %v1250
        %v3503 = vunpack.c.l.b16 %v1251
        %v3504 = vunpack.c.h.b16 %v1251
        %v3505 = vunpack.c.l.b16 %v1252
        %v3506 = vunpack.c.h.b16 %v1252
        %v3507 = vunpack.c.l.b16 %v1253
        %v3508 = vunpack.c.h.b16 %v1253
        %v3509 = vunpack.c.l.b16 %v1254
        %v3510 = vunpack.c.h.b16 %v1254
        %v3511 = vunpack.c.l.b16 %v1255
        %v3512 = vunpack.c.h.b16 %v1255
        %v3513 = vunpack.c.l.b16 %v1256
        %v3514 = vunpack.c.h.b16 %v1256
        %v3515 = vunpack.c.l.b16 %v1257
        %v3516 = vunpack.c.h.b16 %v1257
        %v3517 = vunpack.c.l.b16 %v1258
        %v3518 = vunpack.c.h.b16 %v1258
        %v3519 = vunpack.c.l.b16 %v1259
        %v3520 = vunpack.c.h.b16 %v1259
        %v3521 = vunpack.c.l.b16 %v1260
        %v3522 = vunpack.c.h.b16 %v1260
        %v3523 = vunpack.c.l.b16 %v1261
        %v3524 = vunpack.c.h.b16 %v1261
        %v3525 = vunpack.c.l.b16 %v1262
        %v3526 = vunpack.c.h.b16 %v1262
        %v3527 = vunpack.c.l.b16 %v1263
        %v3528 = vunpack.c.h.b16 %v1263
        %v3529 = vunpack.c.l.b16 %v1264
        %v3530 = vunpack.c.h.b16 %v1264
        %v3531 = vunpack.c.l.b16 %v1265
        %v3532 = vunpack.c.h.b16 %v1265
        %v3533 = vunpack.c.l.b16 %v1266
        %v3534 = vunpack.c.h.b16 %v1266
        %v3535 = vunpack.c.l.b16 %v1267
        %v3536 = vunpack.c.h.b16 %v1267
        %v3537 = vunpack.c.l.b16 %v1268
        %v3538 = vunpack.c.h.b16 %v1268
        %v3539 = vunpack.c.l.b16 %v1269
        %v3540 = vunpack.c.h.b16 %v1269
        %v3541 = vunpack.c.l.b16 %v1270
        %v3542 = vunpack.c.h.b16 %v1270
        %v3543 = vunpack.c.l.b16 %v1271
        %v3544 = vunpack.c.h.b16 %v1271
        %v3545 = vunpack.c.l.b16 %v1272
        %v3546 = vunpack.c.h.b16 %v1272
        %v3547 = vunpack.c.l.b16 %v1273
        %v3548 = vunpack.c.h.b16 %v1273
        %v3549 = vunpack.c.l.b16 %v1274
        %v3550 = vunpack.c.h.b16 %v1274
        %v3551 = vunpack.c.l.b16 %v1275
        %v3552 = vunpack.c.h.b16 %v1275
        %v3553 = vunpack.c.l.b16 %v1276
        %v3554 = vunpack.c.h.b16 %v1276
        %v3555 = vunpack.c.l.b16 %v1277
        %v3556 = vunpack.c.h.b16 %v1277
        %v3557 = vunpack.c.l.b16 %v1278
        %v3558 = vunpack.c.h.b16 %v1278
        %v3559 = vunpack.c.l.b16 %v1279
        %v3560 = vunpack.c.h.b16 %v1279
        %v3561 = vunpack.c.l.b16 %v1280
        %v3562 = vunpack.c.h.b16 %v1280
        %v3563 = vunpack.c.l.b16 %v1281
        %v3564 = vunpack.c.h.b16 %v1281
        %v3565 = vunpack.c.l.b16 %v1282
        %v3566 = vunpack.c.h.b16 %v1282
        %v3567 = vunpack.c.l.b16 %v1283
        %v3568 = vunpack.c.h.b16 %v1283
        %v3569 = vunpack.c.l.b16 %v1284
        %v3570 = vunpack.c.h.b16 %v1284
        %v3571 = vunpack.c.l.b16 %v1285
        %v3572 = vunpack.c.h.b16 %v1285
        %v3573 = vunpack.c.l.b16 %v1286
        %v3574 = vunpack.c.h.b16 %v1286
        %v3575 = vunpack.c.l.b16 %v1287
        %v3576 = vunpack.c.h.b16 %v1287
        %v3577 = vunpack.c.l.b16 %v1288
        %v3578 = vunpack.c.h.b16 %v1288
        %v3579 = vunpack.c.l.b16 %v1289
        %v3580 = vunpack.c.h.b16 %v1289
        %v3581 = vunpack.c.l.b16 %v1290
        %v3582 = vunpack.c.h.b16 %v1290
        %v3583 = vunpack.c.l.b16 %v1291
        %v3584 = vunpack.c.h.b16 %v1291
        %v3585 = vunpack.c.l.b16 %v1292
        %v3586 = vunpack.c.h.b16 %v1292
        %v3587 = vunpack.c.l.b16 %v1293
        %v3588 = vunpack.c.h.b16 %v1293
        %v3589 = vunpack.c.l.b16 %v1294
        %v3590 = vunpack.c.h.b16 %v1294
        %v3591 = vunpack.c.l.b16 %v1295
        %v3592 = vunpack.c.h.b16 %v1295
        %v3593 = vunpack.c.l.b16 %v1296
        %v3594 = vunpack.c.h.b16 %v1296
        %v3595 = vunpack.c.l.b16 %v1297
        %v3596 = vunpack.c.h.b16 %v1297
        %v3597 = vunpack.c.l.b16 %v1298
        %v3598 = vunpack.c.h.b16 %v1298
        %v3599 = vunpack.c.l.b16 %v1299
        %v3600 = vunpack.c.h.b16 %v1299
        %v3601 = vunpack.c.l.b16 %v1300
        %v3602 = vunpack.c.h.b16 %v1300
        %v3603 = vunpack.c.l.b16 %v1301
        %v3604 = vunpack.c.h.b16 %v1301
        %v3605 = vunpack.c.l.b16 %v1302
        %v3606 = vunpack.c.h.b16 %v1302
        %v3607 = vunpack.c.l.b16 %v1303
        %v3608 = vunpack.c.h.b16 %v1303
        %v3609 = vunpack.c.l.b16 %v1304
        %v3610 = vunpack.c.h.b16 %v1304
        %v3611 = vunpack.c.l.b16 %v1305
        %v3612 = vunpack.c.h.b16 %v1305
        %v3613 = vunpack.c.l.b16 %v1306
        %v3614 = vunpack.c.h.b16 %v1306
        %v3615 = vunpack.c.l.b16 %v1307
        %v3616 = vunpack.c.h.b16 %v1307
        %v3617 = vunpack.c.l.b16 %v1308
        %v3618 = vunpack.c.h.b16 %v1308
        %v3619 = vunpack.c.l.b16 %v1309
        %v3620 = vunpack.c.h.b16 %v1309
        %v3621 = vunpack.c.l.b16 %v1310
        %v3622 = vunpack.c.h.b16 %v1310
        %v3623 = vunpack.c.l.b16 %v1311
        %v3624 = vunpack.c.h.b16 %v1311
        %v3625 = vunpack.c.l.b16 %v1312
        %v3626 = vunpack.c.h.b16 %v1312
        %v3627 = vunpack.c.l.b16 %v1313
        %v3628 = vunpack.c.h.b16 %v1313
        %v3629 = vunpack.c.l.b16 %v1314
        %v3630 = vunpack.c.h.b16 %v1314
        %v3631 = vunpack.c.l.b16 %v1315
        %v3632 = vunpack.c.h.b16 %v1315
        %v3633 = vunpack.c.l.b16 %v1316
        %v3634 = vunpack.c.h.b16 %v1316
        %v3635 = vunpack.c.l.b16 %v1317
        %v3636 = vunpack.c.h.b16 %v1317
        %v3637 = vunpack.c.l.b16 %v1318
        %v3638 = vunpack.c.h.b16 %v1318
        %v3639 = vunpack.c.l.b16 %v1319
        %v3640 = vunpack.c.h.b16 %v1319
        %v3641 = vunpack.c.l.b16 %v1320
        %v3642 = vunpack.c.h.b16 %v1320
        %v3643 = vunpack.c.l.b16 %v1321
        %v3644 = vunpack.c.h.b16 %v1321
        %v3645 = vunpack.c.l.b16 %v1322
        %v3646 = vunpack.c.h.b16 %v1322
        %v3647 = vunpack.c.l.b16 %v1323
        %v3648 = vunpack.c.h.b16 %v1323
        %v3649 = vunpack.c.l.b16 %v1324
        %v3650 = vunpack.c.h.b16 %v1324
        %v3651 = vunpack.c.l.b16 %v1325
        %v3652 = vunpack.c.h.b16 %v1325
        %v3653 = vunpack.c.l.b16 %v1326
        %v3654 = vunpack.c.h.b16 %v1326
        %v3655 = vunpack.c.l.b16 %v1327
        %v3656 = vunpack.c.h.b16 %v1327
        %v3657 = vunpack.c.l.b16 %v1328
        %v3658 = vunpack.c.h.b16 %v1328
        %v3659 = vunpack.c.l.b16 %v1329
        %v3660 = vunpack.c.h.b16 %v1329
        %v3661 = vunpack.c.l.b16 %v1330
        %v3662 = vunpack.c.h.b16 %v1330
        %v3663 = vunpack.c.l.b16 %v1331
        %v3664 = vunpack.c.h.b16 %v1331
        %v3665 = vunpack.c.l.b16 %v1332
        %v3666 = vunpack.c.h.b16 %v1332
        %v3667 = vunpack.c.l.b16 %v1333
        %v3668 = vunpack.c.h.b16 %v1333
        %v3669 = vunpack.c.l.b16 %v1334
        %v3670 = vunpack.c.h.b16 %v1334
        %v3671 = vunpack.c.l.b16 %v1335
        %v3672 = vunpack.c.h.b16 %v1335
        %v3673 = vunpack.c.l.b16 %v1336
        %v3674 = vunpack.c.h.b16 %v1336
        %v3675 = vunpack.c.l.b16 %v1337
        %v3676 = vunpack.c.h.b16 %v1337
        %v3677 = vunpack.c.l.b16 %v1338
        %v3678 = vunpack.c.h.b16 %v1338
        %v3679 = vunpack.c.l.b16 %v1339
        %v3680 = vunpack.c.h.b16 %v1339
        %v3681 = vunpack.c.l.b16 %v1340
        %v3682 = vunpack.c.h.b16 %v1340
        %v3683 = vunpack.c.l.b16 %v1341
        %v3684 = vunpack.c.h.b16 %v1341
        %v3685 = vunpack.c.l.b16 %v1342
        %v3686 = vunpack.c.h.b16 %v1342
        %v3687 = vunpack.c.l.b16 %v1343
        %v3688 = vunpack.c.h.b16 %v1343
        %v3689 = vunpack.c.l.b16 %v1344
        %v3690 = vunpack.c.h.b16 %v1344
        %v3691 = vpack.c.b16 %v2163, %v2155
        %v3692 = vpack.c.b16 %v2164, %v2156
        %v3693 = vpack.c.b16 %v2165, %v2157
        %v3694 = vpack.c.b16 %v2166, %v2158
        %v3695 = vpack.c.b16 %v2167, %v2159
        %v3696 = vpack.c.b16 %v2168, %v2160
        %v3697 = vpack.c.b16 %v2169, %v2161
        %v3698 = vpack.c.b16 %v2170, %v2162
        %v3699 = vpack.c.b16 %v2179, %v2171
        %v3700 = vpack.c.b16 %v2180, %v2172
        %v3701 = vpack.c.b16 %v2181, %v2173
        %v3702 = vpack.c.b16 %v2182, %v2174
        %v3703 = vpack.c.b16 %v2183, %v2175
        %v3704 = vpack.c.b16 %v2184, %v2176
        %v3705 = vpack.c.b16 %v2185, %v2177
        %v3706 = vpack.c.b16 %v2186, %v2178
        %v3707 = vpack.c.b16 %v2195, %v2187
        %v3708 = vpack.c.b16 %v2196, %v2188
        %v3709 = vpack.c.b16 %v2197, %v2189
        %v3710 = vpack.c.b16 %v2198, %v2190
        %v3711 = vpack.c.b16 %v2199, %v2191
        %v3712 = vpack.c.b16 %v2200, %v2192
        %v3713 = vpack.c.b16 %v2201, %v2193
        %v3714 = vpack.c.b16 %v2202, %v2194
        %v3715 = vpack.c.b16 %v2211, %v2203
        %v3716 = vpack.c.b16 %v2212, %v2204
        %v3717 = vpack.c.b16 %v2213, %v2205
        %v3718 = vpack.c.b16 %v2214, %v2206
        %v3719 = vpack.c.b16 %v2215, %v2207
        %v3720 = vpack.c.b16 %v2216, %v2208
        %v3721 = vpack.c.b16 %v2217, %v2209
        %v3722 = vpack.c.b16 %v2218, %v2210
        %v3723 = vpack.c.b16 %v2227, %v2219
        %v3724 = vpack.c.b16 %v2228, %v2220
        %v3725 = vpack.c.b16 %v2229, %v2221
        %v3726 = vpack.c.b16 %v2230, %v2222
        %v3727 = vpack.c.b16 %v2231, %v2223
        %v3728 = vpack.c.b16 %v2232, %v2224
        %v3729 = vpack.c.b16 %v2233, %v2225
        %v3730 = vpack.c.b16 %v2234, %v2226
        %v3731 = vpack.c.b16 %v2243, %v2235
        %v3732 = vpack.c.b16 %v2244, %v2236
        %v3733 = vpack.c.b16 %v2245, %v2237
        %v3734 = vpack.c.b16 %v2246, %v2238
        %v3735 = vpack.c.b16 %v2247, %v2239
        %v3736 = vpack.c.b16 %v2248, %v2240
        %v3737 = vpack.c.b16 %v2249, %v2241
        %v3738 = vpack.c.b16 %v2250, %v2242
        %v3739 = vpack.c.b16 %v2259, %v2251
        %v3740 = vpack.c.b16 %v2260, %v2252
        %v3741 = vpack.c.b16 %v2261, %v2253
        %v3742 = vpack.c.b16 %v2262, %v2254
        %v3743 = vpack.c.b16 %v2263, %v2255
        %v3744 = vpack.c.b16 %v2264, %v2256
        %v3745 = vpack.c.b16 %v2265, %v2257
        %v3746 = vpack.c.b16 %v2266, %v2258
        %v3747 = vpack.c.b16 %v2275, %v2267
        %v3748 = vpack.c.b16 %v2276, %v2268
        %v3749 = vpack.c.b16 %v2277, %v2269
        %v3750 = vpack.c.b16 %v2278, %v2270
        %v3751 = vpack.c.b16 %v2279, %v2271
        %v3752 = vpack.c.b16 %v2280, %v2272
        %v3753 = vpack.c.b16 %v2281, %v2273
        %v3754 = vpack.c.b16 %v2282, %v2274
        %v3755 = vpack.c.b16 %v2291, %v2283
        %v3756 = vpack.c.b16 %v2292, %v2284
        %v3757 = vpack.c.b16 %v2293, %v2285
        %v3758 = vpack.c.b16 %v2294, %v2286
        %v3759 = vpack.c.b16 %v2295, %v2287
        %v3760 = vpack.c.b16 %v2296, %v2288
        %v3761 = vpack.c.b16 %v2297, %v2289
        %v3762 = vpack.c.b16 %v2298, %v2290
        %v3763 = vpack.c.b16 %v2307, %v2299
        %v3764 = vpack.c.b16 %v2308, %v2300
        %v3765 = vpack.c.b16 %v2309, %v2301
        %v3766 = vpack.c.b16 %v2310, %v2302
        %v3767 = vpack.c.b16 %v2311, %v2303
        %v3768 = vpack.c.b16 %v2312, %v2304
        %v3769 = vpack.c.b16 %v2313, %v2305
        %v3770 = vpack.c.b16 %v2314, %v2306
        %v3771 = vpack.c.b16 %v2323, %v2315
        %v3772 = vpack.c.b16 %v2324, %v2316
        %v3773 = vpack.c.b16 %v2325, %v2317
        %v3774 = vpack.c.b16 %v2326, %v2318
        %v3775 = vpack.c.b16 %v2327, %v2319
        %v3776 = vpack.c.b16 %v2328, %v2320
        %v3777 = vpack.c.b16 %v2329, %v2321
        %v3778 = vpack.c.b16 %v2330, %v2322
        %v3779 = vpack.c.b16 %v2339, %v2331
        %v3780 = vpack.c.b16 %v2340, %v2332
        %v3781 = vpack.c.b16 %v2341, %v2333
        %v3782 = vpack.c.b16 %v2342, %v2334
        %v3783 = vpack.c.b16 %v2343, %v2335
        %v3784 = vpack.c.b16 %v2344, %v2336
        %v3785 = vpack.c.b16 %v2345, %v2337
        %v3786 = vpack.c.b16 %v2346, %v2338
        %v3787 = vpack.c.b16 %v2355, %v2347
        %v3788 = vpack.c.b16 %v2356, %v2348
        %v3789 = vpack.c.b16 %v2357, %v2349
        %v3790 = vpack.c.b16 %v2358, %v2350
        %v3791 = vpack.c.b16 %v2359, %v2351
        %v3792 = vpack.c.b16 %v2360, %v2352
        %v3793 = vpack.c.b16 %v2361, %v2353
        %v3794 = vpack.c.b16 %v2362, %v2354
        %v3795 = vpack.c.b16 %v2371, %v2363
        %v3796 = vpack.c.b16 %v2372, %v2364
        %v3797 = vpack.c.b16 %v2373, %v2365
        %v3798 = vpack.c.b16 %v2374, %v2366
        %v3799 = vpack.c.b16 %v2375, %v2367
        %v3800 = vpack.c.b16 %v2376, %v2368
        %v3801 = vpack.c.b16 %v2377, %v2369
        %v3802 = vpack.c.b16 %v2378, %v2370
        %v3803 = vpack.c.b16 %v2387, %v2379
        %v3804 = vpack.c.b16 %v2388, %v2380
        %v3805 = vpack.c.b16 %v2389, %v2381
        %v3806 = vpack.c.b16 %v2390, %v2382
        %v3807 = vpack.c.b16 %v2391, %v2383
        %v3808 = vpack.c.b16 %v2392, %v2384
        %v3809 = vpack.c.b16 %v2393, %v2385
        %v3810 = vpack.c.b16 %v2394, %v2386
        %v3811 = vpack.c.b16 %v2403, %v2395
        %v3812 = vpack.c.b16 %v2404, %v2396
        %v3813 = vpack.c.b16 %v2405, %v2397
        %v3814 = vpack.c.b16 %v2406, %v2398
        %v3815 = vpack.c.b16 %v2407, %v2399
        %v3816 = vpack.c.b16 %v2408, %v2400
        %v3817 = vpack.c.b16 %v2409, %v2401
        %v3818 = vpack.c.b16 %v2410, %v2402
        %v3819 = vpack.c.b16 %v2419, %v2411
        %v3820 = vpack.c.b16 %v2420, %v2412
        %v3821 = vpack.c.b16 %v2421, %v2413
        %v3822 = vpack.c.b16 %v2422, %v2414
        %v3823 = vpack.c.b16 %v2423, %v2415
        %v3824 = vpack.c.b16 %v2424, %v2416
        %v3825 = vpack.c.b16 %v2425, %v2417
        %v3826 = vpack.c.b16 %v2426, %v2418
        %v3827 = vpack.c.b16 %v2435, %v2427
        %v3828 = vpack.c.b16 %v2436, %v2428
        %v3829 = vpack.c.b16 %v2437, %v2429
        %v3830 = vpack.c.b16 %v2438, %v2430
        %v3831 = vpack.c.b16 %v2439, %v2431
        %v3832 = vpack.c.b16 %v2440, %v2432
        %v3833 = vpack.c.b16 %v2441, %v2433
        %v3834 = vpack.c.b16 %v2442, %v2434
        %v3835 = vpack.c.b16 %v2451, %v2443
        %v3836 = vpack.c.b16 %v2452, %v2444
        %v3837 = vpack.c.b16 %v2453, %v2445
        %v3838 = vpack.c.b16 %v2454, %v2446
        %v3839 = vpack.c.b16 %v2455, %v2447
        %v3840 = vpack.c.b16 %v2456, %v2448
        %v3841 = vpack.c.b16 %v2457, %v2449
        %v3842 = vpack.c.b16 %v2458, %v2450
        %v3843 = vpack.c.b16 %v2467, %v2459
        %v3844 = vpack.c.b16 %v2468, %v2460
        %v3845 = vpack.c.b16 %v2469, %v2461
        %v3846 = vpack.c.b16 %v2470, %v2462
        %v3847 = vpack.c.b16 %v2471, %v2463
        %v3848 = vpack.c.b16 %v2472, %v2464
        %v3849 = vpack.c.b16 %v2473, %v2465
        %v3850 = vpack.c.b16 %v2474, %v2466
        %v3851 = vpack.c.b16 %v2483, %v2475
        %v3852 = vpack.c.b16 %v2484, %v2476
        %v3853 = vpack.c.b16 %v2485, %v2477
        %v3854 = vpack.c.b16 %v2486, %v2478
        %v3855 = vpack.c.b16 %v2487, %v2479
        %v3856 = vpack.c.b16 %v2488, %v2480
        %v3857 = vpack.c.b16 %v2489, %v2481
        %v3858 = vpack.c.b16 %v2490, %v2482
        %v3859 = vpack.c.b16 %v2499, %v2491
        %v3860 = vpack.c.b16 %v2500, %v2492
        %v3861 = vpack.c.b16 %v2501, %v2493
        %v3862 = vpack.c.b16 %v2502, %v2494
        %v3863 = vpack.c.b16 %v2503, %v2495
        %v3864 = vpack.c.b16 %v2504, %v2496
        %v3865 = vpack.c.b16 %v2505, %v2497
        %v3866 = vpack.c.b16 %v2506, %v2498
        %v3867 = vpack.c.b16 %v2515, %v2507
        %v3868 = vpack.c.b16 %v2516, %v2508
        %v3869 = vpack.c.b16 %v2517, %v2509
        %v3870 = vpack.c.b16 %v2518, %v2510
        %v3871 = vpack.c.b16 %v2519, %v2511
        %v3872 = vpack.c.b16 %v2520, %v2512
        %v3873 = vpack.c.b16 %v2521, %v2513
        %v3874 = vpack.c.b16 %v2522, %v2514
        %v3875 = vpack.c.b16 %v2531, %v2523
        %v3876 = vpack.c.b16 %v2532, %v2524
        %v3877 = vpack.c.b16 %v2533, %v2525
        %v3878 = vpack.c.b16 %v2534, %v2526
        %v3879 = vpack.c.b16 %v2535, %v2527
        %v3880 = vpack.c.b16 %v2536, %v2528
        %v3881 = vpack.c.b16 %v2537, %v2529
        %v3882 = vpack.c.b16 %v2538, %v2530
        %v3883 = vpack.c.b16 %v2547, %v2539
        %v3884 = vpack.c.b16 %v2548, %v2540
        %v3885 = vpack.c.b16 %v2549, %v2541
        %v3886 = vpack.c.b16 %v2550, %v2542
        %v3887 = vpack.c.b16 %v2551, %v2543
        %v3888 = vpack.c.b16 %v2552, %v2544
        %v3889 = vpack.c.b16 %v2553, %v2545
        %v3890 = vpack.c.b16 %v2554, %v2546
        %v3891 = vpack.c.b16 %v2563, %v2555
        %v3892 = vpack.c.b16 %v2564, %v2556
        %v3893 = vpack.c.b16 %v2565, %v2557
        %v3894 = vpack.c.b16 %v2566, %v2558
        %v3895 = vpack.c.b16 %v2567, %v2559
        %v3896 = vpack.c.b16 %v2568, %v2560
        %v3897 = vpack.c.b16 %v2569, %v2561
        %v3898 = vpack.c.b16 %v2570, %v2562
        %v3899 = vpack.c.b16 %v2579, %v2571
        %v3900 = vpack.c.b16 %v2580, %v2572
        %v3901 = vpack.c.b16 %v2581, %v2573
        %v3902 = vpack.c.b16 %v2582, %v2574
        %v3903 = vpack.c.b16 %v2583, %v2575
        %v3904 = vpack.c.b16 %v2584, %v2576
        %v3905 = vpack.c.b16 %v2585, %v2577
        %v3906 = vpack.c.b16 %v2586, %v2578
        %v3907 = vpack.c.b16 %v2595, %v2587
        %v3908 = vpack.c.b16 %v2596, %v2588
        %v3909 = vpack.c.b16 %v2597, %v2589
        %v3910 = vpack.c.b16 %v2598, %v2590
        %v3911 = vpack.c.b16 %v2599, %v2591
        %v3912 = vpack.c.b16 %v2600, %v2592
        %v3913 = vpack.c.b16 %v2601, %v2593
        %v3914 = vpack.c.b16 %v2602, %v2594
        %v3915 = vpack.c.b16 %v2611, %v2603
        %v3916 = vpack.c.b16 %v2612, %v2604
        %v3917 = vpack.c.b16 %v2613, %v2605
        %v3918 = vpack.c.b16 %v2614, %v2606
        %v3919 = vpack.c.b16 %v2615, %v2607
        %v3920 = vpack.c.b16 %v2616, %v2608
        %v3921 = vpack.c.b16 %v2617, %v2609
        %v3922 = vpack.c.b16 %v2618, %v2610
        %v3923 = vpack.c.b16 %v2627, %v2619
        %v3924 = vpack.c.b16 %v2628, %v2620
        %v3925 = vpack.c.b16 %v2629, %v2621
        %v3926 = vpack.c.b16 %v2630, %v2622
        %v3927 = vpack.c.b16 %v2631, %v2623
        %v3928 = vpack.c.b16 %v2632, %v2624
        %v3929 = vpack.c.b16 %v2633, %v2625
        %v3930 = vpack.c.b16 %v2634, %v2626
        %v3931 = vpack.c.b16 %v2643, %v2635
        %v3932 = vpack.c.b16 %v2644, %v2636
        %v3933 = vpack.c.b16 %v2645, %v2637
        %v3934 = vpack.c.b16 %v2646, %v2638
        %v3935 = vpack.c.b16 %v2647, %v2639
        %v3936 = vpack.c.b16 %v2648, %v2640
        %v3937 = vpack.c.b16 %v2649, %v2641
        %v3938 = vpack.c.b16 %v2650, %v2642
        %v3939 = vpack.c.b16 %v2659, %v2651
        %v3940 = vpack.c.b16 %v2660, %v2652
        %v3941 = vpack.c.b16 %v2661, %v2653
        %v3942 = vpack.c.b16 %v2662, %v2654
        %v3943 = vpack.c.b16 %v2663, %v2655
        %v3944 = vpack.c.b16 %v2664, %v2656
        %v3945 = vpack.c.b16 %v2665, %v2657
        %v3946 = vpack.c.b16 %v2666, %v2658
        %v3947 = vpack.c.b16 %v2675, %v2667
        %v3948 = vpack.c.b16 %v2676, %v2668
        %v3949 = vpack.c.b16 %v2677, %v2669
        %v3950 = vpack.c.b16 %v2678, %v2670
        %v3951 = vpack.c.b16 %v2679, %v2671
        %v3952 = vpack.c.b16 %v2680, %v2672
        %v3953 = vpack.c.b16 %v2681, %v2673
        %v3954 = vpack.c.b16 %v2682, %v2674
        %v3955 = vpack.c.b16 %v2691, %v2683
        %v3956 = vpack.c.b16 %v2692, %v2684
        %v3957 = vpack.c.b16 %v2693, %v2685
        %v3958 = vpack.c.b16 %v2694, %v2686
        %v3959 = vpack.c.b16 %v2695, %v2687
        %v3960 = vpack.c.b16 %v2696, %v2688
        %v3961 = vpack.c.b16 %v2697, %v2689
        %v3962 = vpack.c.b16 %v2698, %v2690
        %v3963 = vpack.c.b16 %v2707, %v2699
        %v3964 = vpack.c.b16 %v2708, %v2700
        %v3965 = vpack.c.b16 %v2709, %v2701
        %v3966 = vpack.c.b16 %v2710, %v2702
        %v3967 = vpack.c.b16 %v2711, %v2703
        %v3968 = vpack.c.b16 %v2712, %v2704
        %v3969 = vpack.c.b16 %v2713, %v2705
        %v3970 = vpack.c.b16 %v2714, %v2706
        %v3971 = vpack.c.b16 %v2723, %v2715
        %v3972 = vpack.c.b16 %v2724, %v2716
        %v3973 = vpack.c.b16 %v2725, %v2717
        %v3974 = vpack.c.b16 %v2726, %v2718
        %v3975 = vpack.c.b16 %v2727, %v2719
        %v3976 = vpack.c.b16 %v2728, %v2720
        %v3977 = vpack.c.b16 %v2729, %v2721
        %v3978 = vpack.c.b16 %v2730, %v2722
        %v3979 = vpack.c.b16 %v2739, %v2731
        %v3980 = vpack.c.b16 %v2740, %v2732
        %v3981 = vpack.c.b16 %v2741, %v2733
        %v3982 = vpack.c.b16 %v2742, %v2734
        %v3983 = vpack.c.b16 %v2743, %v2735
        %v3984 = vpack.c.b16 %v2744, %v2736
        %v3985 = vpack.c.b16 %v2745, %v2737
        %v3986 = vpack.c.b16 %v2746, %v2738
        %v3987 = vpack.c.b16 %v2755, %v2747
        %v3988 = vpack.c.b16 %v2756, %v2748
        %v3989 = vpack.c.b16 %v2757, %v2749
        %v3990 = vpack.c.b16 %v2758, %v2750
        %v3991 = vpack.c.b16 %v2759, %v2751
        %v3992 = vpack.c.b16 %v2760, %v2752
        %v3993 = vpack.c.b16 %v2761, %v2753
        %v3994 = vpack.c.b16 %v2762, %v2754
        %v3995 = vpack.c.b16 %v2771, %v2763
        %v3996 = vpack.c.b16 %v2772, %v2764
        %v3997 = vpack.c.b16 %v2773, %v2765
        %v3998 = vpack.c.b16 %v2774, %v2766
        %v3999 = vpack.c.b16 %v2775, %v2767
        %v4000 = vpack.c.b16 %v2776, %v2768
        %v4001 = vpack.c.b16 %v2777, %v2769
        %v4002 = vpack.c.b16 %v2778, %v2770
        %v4003 = vpack.c.b16 %v2787, %v2779
        %v4004 = vpack.c.b16 %v2788, %v2780
        %v4005 = vpack.c.b16 %v2789, %v2781
        %v4006 = vpack.c.b16 %v2790, %v2782
        %v4007 = vpack.c.b16 %v2791, %v2783
        %v4008 = vpack.c.b16 %v2792, %v2784
        %v4009 = vpack.c.b16 %v2793, %v2785
        %v4010 = vpack.c.b16 %v2794, %v2786
        %v4011 = vpack.c.b16 %v2803, %v2795
        %v4012 = vpack.c.b16 %v2804, %v2796
        %v4013 = vpack.c.b16 %v2805, %v2797
        %v4014 = vpack.c.b16 %v2806, %v2798
        %v4015 = vpack.c.b16 %v2807, %v2799
        %v4016 = vpack.c.b16 %v2808, %v2800
        %v4017 = vpack.c.b16 %v2809, %v2801
        %v4018 = vpack.c.b16 %v2810, %v2802
        %v4019 = vpack.c.b16 %v2819, %v2811
        %v4020 = vpack.c.b16 %v2820, %v2812
        %v4021 = vpack.c.b16 %v2821, %v2813
        %v4022 = vpack.c.b16 %v2822, %v2814
        %v4023 = vpack.c.b16 %v2823, %v2815
        %v4024 = vpack.c.b16 %v2824, %v2816
        %v4025 = vpack.c.b16 %v2825, %v2817
        %v4026 = vpack.c.b16 %v2826, %v2818
        %v4027 = vpack.c.b16 %v2835, %v2827
        %v4028 = vpack.c.b16 %v2836, %v2828
        %v4029 = vpack.c.b16 %v2837, %v2829
        %v4030 = vpack.c.b16 %v2838, %v2830
        %v4031 = vpack.c.b16 %v2839, %v2831
        %v4032 = vpack.c.b16 %v2840, %v2832
        %v4033 = vpack.c.b16 %v2841, %v2833
        %v4034 = vpack.c.b16 %v2842, %v2834
        %v4035 = vpack.c.b16 %v2851, %v2843
        %v4036 = vpack.c.b16 %v2852, %v2844
        %v4037 = vpack.c.b16 %v2853, %v2845
        %v4038 = vpack.c.b16 %v2854, %v2846
        %v4039 = vpack.c.b16 %v2855, %v2847
        %v4040 = vpack.c.b16 %v2856, %v2848
        %v4041 = vpack.c.b16 %v2857, %v2849
        %v4042 = vpack.c.b16 %v2858, %v2850
        %v4043 = vpack.c.b16 %v2867, %v2859
        %v4044 = vpack.c.b16 %v2868, %v2860
        %v4045 = vpack.c.b16 %v2869, %v2861
        %v4046 = vpack.c.b16 %v2870, %v2862
        %v4047 = vpack.c.b16 %v2871, %v2863
        %v4048 = vpack.c.b16 %v2872, %v2864
        %v4049 = vpack.c.b16 %v2873, %v2865
        %v4050 = vpack.c.b16 %v2874, %v2866
        %v4051 = vpack.c.b16 %v2883, %v2875
        %v4052 = vpack.c.b16 %v2884, %v2876
        %v4053 = vpack.c.b16 %v2885, %v2877
        %v4054 = vpack.c.b16 %v2886, %v2878
        %v4055 = vpack.c.b16 %v2887, %v2879
        %v4056 = vpack.c.b16 %v2888, %v2880
        %v4057 = vpack.c.b16 %v2889, %v2881
        %v4058 = vpack.c.b16 %v2890, %v2882
        %v4059 = vpack.c.b16 %v2899, %v2891
        %v4060 = vpack.c.b16 %v2900, %v2892
        %v4061 = vpack.c.b16 %v2901, %v2893
        %v4062 = vpack.c.b16 %v2902, %v2894
        %v4063 = vpack.c.b16 %v2903, %v2895
        %v4064 = vpack.c.b16 %v2904, %v2896
        %v4065 = vpack.c.b16 %v2905, %v2897
        %v4066 = vpack.c.b16 %v2906, %v2898
        %v4067 = vpack.c.b16 %v2915, %v2907
        %v4068 = vpack.c.b16 %v2916, %v2908
        %v4069 = vpack.c.b16 %v2917, %v2909
        %v4070 = vpack.c.b16 %v2918, %v2910
        %v4071 = vpack.c.b16 %v2919, %v2911
        %v4072 = vpack.c.b16 %v2920, %v2912
        %v4073 = vpack.c.b16 %v2921, %v2913
        %v4074 = vpack.c.b16 %v2922, %v2914
        %v4075 = vpack.c.b16 %v2931, %v2923
        %v4076 = vpack.c.b16 %v2932, %v2924
        %v4077 = vpack.c.b16 %v2933, %v2925
        %v4078 = vpack.c.b16 %v2934, %v2926
        %v4079 = vpack.c.b16 %v2935, %v2927
        %v4080 = vpack.c.b16 %v2936, %v2928
        %v4081 = vpack.c.b16 %v2937, %v2929
        %v4082 = vpack.c.b16 %v2938, %v2930
        %v4083 = vpack.c.b16 %v2947, %v2939
        %v4084 = vpack.c.b16 %v2948, %v2940
        %v4085 = vpack.c.b16 %v2949, %v2941
        %v4086 = vpack.c.b16 %v2950, %v2942
        %v4087 = vpack.c.b16 %v2951, %v2943
        %v4088 = vpack.c.b16 %v2952, %v2944
        %v4089 = vpack.c.b16 %v2953, %v2945
        %v4090 = vpack.c.b16 %v2954, %v2946
        %v4091 = vpack.c.b16 %v2963, %v2955
        %v4092 = vpack.c.b16 %v2964, %v2956
        %v4093 = vpack.c.b16 %v2965, %v2957
        %v4094 = vpack.c.b16 %v2966, %v2958
        %v4095 = vpack.c.b16 %v2967, %v2959
        %v4096 = vpack.c.b16 %v2968, %v2960
        %v4097 = vpack.c.b16 %v2969, %v2961
        %v4098 = vpack.c.b16 %v2970, %v2962
        %v4099 = vpack.c.b16 %v2979, %v2971
        %v4100 = vpack.c.b16 %v2980, %v2972
        %v4101 = vpack.c.b16 %v2981, %v2973
        %v4102 = vpack.c.b16 %v2982, %v2974
        %v4103 = vpack.c.b16 %v2983, %v2975
        %v4104 = vpack.c.b16 %v2984, %v2976
        %v4105 = vpack.c.b16 %v2985, %v2977
        %v4106 = vpack.c.b16 %v2986, %v2978
        %v4107 = vpack.c.b16 %v2995, %v2987
        %v4108 = vpack.c.b16 %v2996, %v2988
        %v4109 = vpack.c.b16 %v2997, %v2989
        %v4110 = vpack.c.b16 %v2998, %v2990
        %v4111 = vpack.c.b16 %v2999, %v2991
        %v4112 = vpack.c.b16 %v3000, %v2992
        %v4113 = vpack.c.b16 %v3001, %v2993
        %v4114 = vpack.c.b16 %v3002, %v2994
        %v4115 = vpack.c.b16 %v3011, %v3003
        %v4116 = vpack.c.b16 %v3012, %v3004
        %v4117 = vpack.c.b16 %v3013, %v3005
        %v4118 = vpack.c.b16 %v3014, %v3006
        %v4119 = vpack.c.b16 %v3015, %v3007
        %v4120 = vpack.c.b16 %v3016, %v3008
        %v4121 = vpack.c.b16 %v3017, %v3009
        %v4122 = vpack.c.b16 %v3018, %v3010
        %v4123 = vpack.c.b16 %v3027, %v3019
        %v4124 = vpack.c.b16 %v3028, %v3020
        %v4125 = vpack.c.b16 %v3029, %v3021
        %v4126 = vpack.c.b16 %v3030, %v3022
        %v4127 = vpack.c.b16 %v3031, %v3023
        %v4128 = vpack.c.b16 %v3032, %v3024
        %v4129 = vpack.c.b16 %v3033, %v3025
        %v4130 = vpack.c.b16 %v3034, %v3026
        %v4131 = vpack.c.b16 %v3043, %v3035
        %v4132 = vpack.c.b16 %v3044, %v3036
        %v4133 = vpack.c.b16 %v3045, %v3037
        %v4134 = vpack.c.b16 %v3046, %v3038
        %v4135 = vpack.c.b16 %v3047, %v3039
        %v4136 = vpack.c.b16 %v3048, %v3040
        %v4137 = vpack.c.b16 %v3049, %v3041
        %v4138 = vpack.c.b16 %v3050, %v3042
        %v4139 = vpack.c.b16 %v3059, %v3051
        %v4140 = vpack.c.b16 %v3060, %v3052
        %v4141 = vpack.c.b16 %v3061, %v3053
        %v4142 = vpack.c.b16 %v3062, %v3054
        %v4143 = vpack.c.b16 %v3063, %v3055
        %v4144 = vpack.c.b16 %v3064, %v3056
        %v4145 = vpack.c.b16 %v3065, %v3057
        %v4146 = vpack.c.b16 %v3066, %v3058
        %v4147 = vpack.c.b16 %v3075, %v3067
        %v4148 = vpack.c.b16 %v3076, %v3068
        %v4149 = vpack.c.b16 %v3077, %v3069
        %v4150 = vpack.c.b16 %v3078, %v3070
        %v4151 = vpack.c.b16 %v3079, %v3071
        %v4152 = vpack.c.b16 %v3080, %v3072
        %v4153 = vpack.c.b16 %v3081, %v3073
        %v4154 = vpack.c.b16 %v3082, %v3074
        %v4155 = vpack.c.b16 %v3091, %v3083
        %v4156 = vpack.c.b16 %v3092, %v3084
        %v4157 = vpack.c.b16 %v3093, %v3085
        %v4158 = vpack.c.b16 %v3094, %v3086
        %v4159 = vpack.c.b16 %v3095, %v3087
        %v4160 = vpack.c.b16 %v3096, %v3088
        %v4161 = vpack.c.b16 %v3097, %v3089
        %v4162 = vpack.c.b16 %v3098, %v3090
        %v4163 = vpack.c.b16 %v3107, %v3099
        %v4164 = vpack.c.b16 %v3108, %v3100
        %v4165 = vpack.c.b16 %v3109, %v3101
        %v4166 = vpack.c.b16 %v3110, %v3102
        %v4167 = vpack.c.b16 %v3111, %v3103
        %v4168 = vpack.c.b16 %v3112, %v3104
        %v4169 = vpack.c.b16 %v3113, %v3105
        %v4170 = vpack.c.b16 %v3114, %v3106
        %v4171 = vpack.c.b16 %v3123, %v3115
        %v4172 = vpack.c.b16 %v3124, %v3116
        %v4173 = vpack.c.b16 %v3125, %v3117
        %v4174 = vpack.c.b16 %v3126, %v3118
        %v4175 = vpack.c.b16 %v3127, %v3119
        %v4176 = vpack.c.b16 %v3128, %v3120
        %v4177 = vpack.c.b16 %v3129, %v3121
        %v4178 = vpack.c.b16 %v3130, %v3122
        %v4179 = vpack.c.b16 %v3139, %v3131
        %v4180 = vpack.c.b16 %v3140, %v3132
        %v4181 = vpack.c.b16 %v3141, %v3133
        %v4182 = vpack.c.b16 %v3142, %v3134
        %v4183 = vpack.c.b16 %v3143, %v3135
        %v4184 = vpack.c.b16 %v3144, %v3136
        %v4185 = vpack.c.b16 %v3145, %v3137
        %v4186 = vpack.c.b16 %v3146, %v3138
        %v4187 = vpack.c.b16 %v3155, %v3147
        %v4188 = vpack.c.b16 %v3156, %v3148
        %v4189 = vpack.c.b16 %v3157, %v3149
        %v4190 = vpack.c.b16 %v3158, %v3150
        %v4191 = vpack.c.b16 %v3159, %v3151
        %v4192 = vpack.c.b16 %v3160, %v3152
        %v4193 = vpack.c.b16 %v3161, %v3153
        %v4194 = vpack.c.b16 %v3162, %v3154
        %v4195 = vpack.c.b16 %v3171, %v3163
        %v4196 = vpack.c.b16 %v3172, %v3164
        %v4197 = vpack.c.b16 %v3173, %v3165
        %v4198 = vpack.c.b16 %v3174, %v3166
        %v4199 = vpack.c.b16 %v3175, %v3167
        %v4200 = vpack.c.b16 %v3176, %v3168
        %v4201 = vpack.c.b16 %v3177, %v3169
        %v4202 = vpack.c.b16 %v3178, %v3170
        %v4203 = vpack.c.b16 %v3187, %v3179
        %v4204 = vpack.c.b16 %v3188, %v3180
        %v4205 = vpack.c.b16 %v3189, %v3181
        %v4206 = vpack.c.b16 %v3190, %v3182
        %v4207 = vpack.c.b16 %v3191, %v3183
        %v4208 = vpack.c.b16 %v3192, %v3184
        %v4209 = vpack.c.b16 %v3193, %v3185
        %v4210 = vpack.c.b16 %v3194, %v3186
        %v4211 = vpack.c.b16 %v3203, %v3195
        %v4212 = vpack.c.b16 %v3204, %v3196
        %v4213 = vpack.c.b16 %v3205, %v3197
        %v4214 = vpack.c.b16 %v3206, %v3198
        %v4215 = vpack.c.b16 %v3207, %v3199
        %v4216 = vpack.c.b16 %v3208, %v3200
        %v4217 = vpack.c.b16 %v3209, %v3201
        %v4218 = vpack.c.b16 %v3210, %v3202
        %v4219 = vpack.c.b16 %v3219, %v3211
        %v4220 = vpack.c.b16 %v3220, %v3212
        %v4221 = vpack.c.b16 %v3221, %v3213
        %v4222 = vpack.c.b16 %v3222, %v3214
        %v4223 = vpack.c.b16 %v3223, %v3215
        %v4224 = vpack.c.b16 %v3224, %v3216
        %v4225 = vpack.c.b16 %v3225, %v3217
        %v4226 = vpack.c.b16 %v3226, %v3218
        %v4227 = vpack.c.b16 %v3235, %v3227
        %v4228 = vpack.c.b16 %v3236, %v3228
        %v4229 = vpack.c.b16 %v3237, %v3229
        %v4230 = vpack.c.b16 %v3238, %v3230
        %v4231 = vpack.c.b16 %v3239, %v3231
        %v4232 = vpack.c.b16 %v3240, %v3232
        %v4233 = vpack.c.b16 %v3241, %v3233
        %v4234 = vpack.c.b16 %v3242, %v3234
        %v4235 = vpack.c.b16 %v3251, %v3243
        %v4236 = vpack.c.b16 %v3252, %v3244
        %v4237 = vpack.c.b16 %v3253, %v3245
        %v4238 = vpack.c.b16 %v3254, %v3246
        %v4239 = vpack.c.b16 %v3255, %v3247
        %v4240 = vpack.c.b16 %v3256, %v3248
        %v4241 = vpack.c.b16 %v3257, %v3249
        %v4242 = vpack.c.b16 %v3258, %v3250
        %v4243 = vpack.c.b16 %v3267, %v3259
        %v4244 = vpack.c.b16 %v3268, %v3260
        %v4245 = vpack.c.b16 %v3269, %v3261
        %v4246 = vpack.c.b16 %v3270, %v3262
        %v4247 = vpack.c.b16 %v3271, %v3263
        %v4248 = vpack.c.b16 %v3272, %v3264
        %v4249 = vpack.c.b16 %v3273, %v3265
        %v4250 = vpack.c.b16 %v3274, %v3266
        %v4251 = vpack.c.b16 %v3283, %v3275
        %v4252 = vpack.c.b16 %v3284, %v3276
        %v4253 = vpack.c.b16 %v3285, %v3277
        %v4254 = vpack.c.b16 %v3286, %v3278
        %v4255 = vpack.c.b16 %v3287, %v3279
        %v4256 = vpack.c.b16 %v3288, %v3280
        %v4257 = vpack.c.b16 %v3289, %v3281
        %v4258 = vpack.c.b16 %v3290, %v3282
        %v4259 = vpack.c.b16 %v3299, %v3291
        %v4260 = vpack.c.b16 %v3300, %v3292
        %v4261 = vpack.c.b16 %v3301, %v3293
        %v4262 = vpack.c.b16 %v3302, %v3294
        %v4263 = vpack.c.b16 %v3303, %v3295
        %v4264 = vpack.c.b16 %v3304, %v3296
        %v4265 = vpack.c.b16 %v3305, %v3297
        %v4266 = vpack.c.b16 %v3306, %v3298
        %v4267 = vpack.c.b16 %v3315, %v3307
        %v4268 = vpack.c.b16 %v3316, %v3308
        %v4269 = vpack.c.b16 %v3317, %v3309
        %v4270 = vpack.c.b16 %v3318, %v3310
        %v4271 = vpack.c.b16 %v3319, %v3311
        %v4272 = vpack.c.b16 %v3320, %v3312
        %v4273 = vpack.c.b16 %v3321, %v3313
        %v4274 = vpack.c.b16 %v3322, %v3314
        %v4275 = vpack.c.b16 %v3331, %v3323
        %v4276 = vpack.c.b16 %v3332, %v3324
        %v4277 = vpack.c.b16 %v3333, %v3325
        %v4278 = vpack.c.b16 %v3334, %v3326
        %v4279 = vpack.c.b16 %v3335, %v3327
        %v4280 = vpack.c.b16 %v3336, %v3328
        %v4281 = vpack.c.b16 %v3337, %v3329
        %v4282 = vpack.c.b16 %v3338, %v3330
        %v4283 = vpack.c.b16 %v3347, %v3339
        %v4284 = vpack.c.b16 %v3348, %v3340
        %v4285 = vpack.c.b16 %v3349, %v3341
        %v4286 = vpack.c.b16 %v3350, %v3342
        %v4287 = vpack.c.b16 %v3351, %v3343
        %v4288 = vpack.c.b16 %v3352, %v3344
        %v4289 = vpack.c.b16 %v3353, %v3345
        %v4290 = vpack.c.b16 %v3354, %v3346
        %v4291 = vpack.c.b16 %v3363, %v3355
        %v4292 = vpack.c.b16 %v3364, %v3356
        %v4293 = vpack.c.b16 %v3365, %v3357
        %v4294 = vpack.c.b16 %v3366, %v3358
        %v4295 = vpack.c.b16 %v3367, %v3359
        %v4296 = vpack.c.b16 %v3368, %v3360
        %v4297 = vpack.c.b16 %v3369, %v3361
        %v4298 = vpack.c.b16 %v3370, %v3362
        %v4299 = vpack.c.b16 %v3379, %v3371
        %v4300 = vpack.c.b16 %v3380, %v3372
        %v4301 = vpack.c.b16 %v3381, %v3373
        %v4302 = vpack.c.b16 %v3382, %v3374
        %v4303 = vpack.c.b16 %v3383, %v3375
        %v4304 = vpack.c.b16 %v3384, %v3376
        %v4305 = vpack.c.b16 %v3385, %v3377
        %v4306 = vpack.c.b16 %v3386, %v3378
        %v4307 = vpack.c.b16 %v3395, %v3387
        %v4308 = vpack.c.b16 %v3396, %v3388
        %v4309 = vpack.c.b16 %v3397, %v3389
        %v4310 = vpack.c.b16 %v3398, %v3390
        %v4311 = vpack.c.b16 %v3399, %v3391
        %v4312 = vpack.c.b16 %v3400, %v3392
        %v4313 = vpack.c.b16 %v3401, %v3393
        %v4314 = vpack.c.b16 %v3402, %v3394
        %v4315 = vpack.c.b16 %v3411, %v3403
        %v4316 = vpack.c.b16 %v3412, %v3404
        %v4317 = vpack.c.b16 %v3413, %v3405
        %v4318 = vpack.c.b16 %v3414, %v3406
        %v4319 = vpack.c.b16 %v3415, %v3407
        %v4320 = vpack.c.b16 %v3416, %v3408
        %v4321 = vpack.c.b16 %v3417, %v3409
        %v4322 = vpack.c.b16 %v3418, %v3410
        %v4323 = vpack.c.b16 %v3427, %v3419
        %v4324 = vpack.c.b16 %v3428, %v3420
        %v4325 = vpack.c.b16 %v3429, %v3421
        %v4326 = vpack.c.b16 %v3430, %v3422
        %v4327 = vpack.c.b16 %v3431, %v3423
        %v4328 = vpack.c.b16 %v3432, %v3424
        %v4329 = vpack.c.b16 %v3433, %v3425
        %v4330 = vpack.c.b16 %v3434, %v3426
        %v4331 = vpack.c.b16 %v3443, %v3435
        %v4332 = vpack.c.b16 %v3444, %v3436
        %v4333 = vpack.c.b16 %v3445, %v3437
        %v4334 = vpack.c.b16 %v3446, %v3438
        %v4335 = vpack.c.b16 %v3447, %v3439
        %v4336 = vpack.c.b16 %v3448, %v3440
        %v4337 = vpack.c.b16 %v3449, %v3441
        %v4338 = vpack.c.b16 %v3450, %v3442
        %v4339 = vpack.c.b16 %v3459, %v3451
        %v4340 = vpack.c.b16 %v3460, %v3452
        %v4341 = vpack.c.b16 %v3461, %v3453
        %v4342 = vpack.c.b16 %v3462, %v3454
        %v4343 = vpack.c.b16 %v3463, %v3455
        %v4344 = vpack.c.b16 %v3464, %v3456
        %v4345 = vpack.c.b16 %v3465, %v3457
        %v4346 = vpack.c.b16 %v3466, %v3458
        %v4347 = vpack.c.b16 %v3475, %v3467
        %v4348 = vpack.c.b16 %v3476, %v3468
        %v4349 = vpack.c.b16 %v3477, %v3469
        %v4350 = vpack.c.b16 %v3478, %v3470
        %v4351 = vpack.c.b16 %v3479, %v3471
        %v4352 = vpack.c.b16 %v3480, %v3472
        %v4353 = vpack.c.b16 %v3481, %v3473
        %v4354 = vpack.c.b16 %v3482, %v3474
        %v4355 = vpack.c.b16 %v3491, %v3483
        %v4356 = vpack.c.b16 %v3492, %v3484
        %v4357 = vpack.c.b16 %v3493, %v3485
        %v4358 = vpack.c.b16 %v3494, %v3486
        %v4359 = vpack.c.b16 %v3495, %v3487
        %v4360 = vpack.c.b16 %v3496, %v3488
        %v4361 = vpack.c.b16 %v3497, %v3489
        %v4362 = vpack.c.b16 %v3498, %v3490
        %v4363 = vpack.c.b16 %v3507, %v3499
        %v4364 = vpack.c.b16 %v3508, %v3500
        %v4365 = vpack.c.b16 %v3509, %v3501
        %v4366 = vpack.c.b16 %v3510, %v3502
        %v4367 = vpack.c.b16 %v3511, %v3503
        %v4368 = vpack.c.b16 %v3512, %v3504
        %v4369 = vpack.c.b16 %v3513, %v3505
        %v4370 = vpack.c.b16 %v3514, %v3506
        %v4371 = vpack.c.b16 %v3523, %v3515
        %v4372 = vpack.c.b16 %v3524, %v3516
        %v4373 = vpack.c.b16 %v3525, %v3517
        %v4374 = vpack.c.b16 %v3526, %v3518
        %v4375 = vpack.c.b16 %v3527, %v3519
        %v4376 = vpack.c.b16 %v3528, %v3520
        %v4377 = vpack.c.b16 %v3529, %v3521
        %v4378 = vpack.c.b16 %v3530, %v3522
        %v4379 = vpack.c.b16 %v3539, %v3531
        %v4380 = vpack.c.b16 %v3540, %v3532
        %v4381 = vpack.c.b16 %v3541, %v3533
        %v4382 = vpack.c.b16 %v3542, %v3534
        %v4383 = vpack.c.b16 %v3543, %v3535
        %v4384 = vpack.c.b16 %v3544, %v3536
        %v4385 = vpack.c.b16 %v3545, %v3537
        %v4386 = vpack.c.b16 %v3546, %v3538
        %v4387 = vpack.c.b16 %v3555, %v3547
        %v4388 = vpack.c.b16 %v3556, %v3548
        %v4389 = vpack.c.b16 %v3557, %v3549
        %v4390 = vpack.c.b16 %v3558, %v3550
        %v4391 = vpack.c.b16 %v3559, %v3551
        %v4392 = vpack.c.b16 %v3560, %v3552
        %v4393 = vpack.c.b16 %v3561, %v3553
        %v4394 = vpack.c.b16 %v3562, %v3554
        %v4395 = vpack.c.b16 %v3571, %v3563
        %v4396 = vpack.c.b16 %v3572, %v3564
        %v4397 = vpack.c.b16 %v3573, %v3565
        %v4398 = vpack.c.b16 %v3574, %v3566
        %v4399 = vpack.c.b16 %v3575, %v3567
        %v4400 = vpack.c.b16 %v3576, %v3568
        %v4401 = vpack.c.b16 %v3577, %v3569
        %v4402 = vpack.c.b16 %v3578, %v3570
        %v4403 = vpack.c.b16 %v3587, %v3579
        %v4404 = vpack.c.b16 %v3588, %v3580
        %v4405 = vpack.c.b16 %v3589, %v3581
        %v4406 = vpack.c.b16 %v3590, %v3582
        %v4407 = vpack.c.b16 %v3591, %v3583
        %v4408 = vpack.c.b16 %v3592, %v3584
        %v4409 = vpack.c.b16 %v3593, %v3585
        %v4410 = vpack.c.b16 %v3594, %v3586
        %v4411 = vpack.c.b16 %v3603, %v3595
        %v4412 = vpack.c.b16 %v3604, %v3596
        %v4413 = vpack.c.b16 %v3605, %v3597
        %v4414 = vpack.c.b16 %v3606, %v3598
        %v4415 = vpack.c.b16 %v3607, %v3599
        %v4416 = vpack.c.b16 %v3608, %v3600
        %v4417 = vpack.c.b16 %v3609, %v3601
        %v4418 = vpack.c.b16 %v3610, %v3602
        %v4419 = vpack.c.b16 %v3619, %v3611
        %v4420 = vpack.c.b16 %v3620, %v3612
        %v4421 = vpack.c.b16 %v3621, %v3613
        %v4422 = vpack.c.b16 %v3622, %v3614
        %v4423 = vpack.c.b16 %v3623, %v3615
        %v4424 = vpack.c.b16 %v3624, %v3616
        %v4425 = vpack.c.b16 %v3625, %v3617
        %v4426 = vpack.c.b16 %v3626, %v3618
        %v4427 = vpack.c.b16 %v3635, %v3627
        %v4428 = vpack.c.b16 %v3636, %v3628
        %v4429 = vpack.c.b16 %v3637, %v3629
        %v4430 = vpack.c.b16 %v3638, %v3630
        %v4431 = vpack.c.b16 %v3639, %v3631
        %v4432 = vpack.c.b16 %v3640, %v3632
        %v4433 = vpack.c.b16 %v3641, %v3633
        %v4434 = vpack.c.b16 %v3642, %v3634
        %v4435 = vpack.c.b16 %v3651, %v3643
        %v4436 = vpack.c.b16 %v3652, %v3644
        %v4437 = vpack.c.b16 %v3653, %v3645
        %v4438 = vpack.c.b16 %v3654, %v3646
        %v4439 = vpack.c.b16 %v3655, %v3647
        %v4440 = vpack.c.b16 %v3656, %v3648
        %v4441 = vpack.c.b16 %v3657, %v3649
        %v4442 = vpack.c.b16 %v3658, %v3650
        %v4443 = vpack.c.b16 %v3667, %v3659
        %v4444 = vpack.c.b16 %v3668, %v3660
        %v4445 = vpack.c.b16 %v3669, %v3661
        %v4446 = vpack.c.b16 %v3670, %v3662
        %v4447 = vpack.c.b16 %v3671, %v3663
        %v4448 = vpack.c.b16 %v3672, %v3664
        %v4449 = vpack.c.b16 %v3673, %v3665
        %v4450 = vpack.c.b16 %v3674, %v3666
        %v4451 = vpack.c.b16 %v3683, %v3675
        %v4452 = vpack.c.b16 %v3684, %v3676
        %v4453 = vpack.c.b16 %v3685, %v3677
        %v4454 = vpack.c.b16 %v3686, %v3678
        %v4455 = vpack.c.b16 %v3687, %v3679
        %v4456 = vpack.c.b16 %v3688, %v3680
        %v4457 = vpack.c.b16 %v3689, %v3681
        %v4458 = vpack.c.b16 %v3690, %v3682
        %5227 = vmatprep.subr.bf16.mxu0 %v3748
        %5228 = vmatpush1.bf16.msra.mxu0 %v3747
        %5229 = vmatprep.subr.bf16.mxu0 %v3740
        %5230 = vmatpush1.bf16.msra.mxu0 %v3739
        %5231 = vmatprep.subr.bf16.mxu0 %v3732
        %5232 = vmatpush1.bf16.msra.mxu0 %v3731
        %5233 = vmatprep.subr.bf16.mxu0 %v3724
        %5234 = vmatpush1.bf16.msra.mxu0 %v3723
        %5235 = vmatprep.subr.bf16.mxu0 %v3716
        %5236 = vmatpush1.bf16.msra.mxu0 %v3715
        %5237 = vmatprep.subr.bf16.mxu0 %v3708
        %5238 = vmatpush1.bf16.msra.mxu0 %v3707
        %5239 = vmatprep.subr.bf16.mxu0 %v3700
        %5240 = vmatpush1.bf16.msra.mxu0 %v3699
        %5241 = vmatprep.subr.bf16.mxu0 %v3692
        %5242 = vmatpush1.bf16.msra.mxu0 %v3691
        %5243 = vmatprep.subr.bf16.mxu0 %v3812
        %5244 = vmatpush2.bf16.msra.mxu0 %v3811
        %5245 = vmatprep.subr.bf16.mxu0 %v3804
        %5246 = vmatpush2.bf16.msra.mxu0 %v3803
        %5247 = vmatprep.subr.bf16.mxu0 %v3796
        %5248 = vmatpush2.bf16.msra.mxu0 %v3795
        %5249 = vmatprep.subr.bf16.mxu0 %v3788
        %5250 = vmatpush2.bf16.msra.mxu0 %v3787
        %5251 = vmatprep.subr.bf16.mxu0 %v3780
        %5252 = vmatpush2.bf16.msra.mxu0 %v3779
        %5253 = vmatprep.subr.bf16.mxu0 %v3772
        %5254 = vmatpush2.bf16.msra.mxu0 %v3771
        %5255 = vmatprep.subr.bf16.mxu0 %v3764
        %5256 = vmatpush2.bf16.msra.mxu0 %v3763
        %5257 = vmatprep.subr.bf16.mxu0 %v3756
        %5258 = vmatpush2.bf16.msra.mxu0 %v3755
        %5259 = vmatprep.mubr.bf16.mxu0 %v482
        %5260 = vmatmul.mubr.bf16.gmra.mxu0 %v481
        %v5261 = vpop.f32.mrf.mxu0
        %v5262 = vadd.f32 %v1350, %v5261
        %v5263 = vpop.f32.mrf.mxu0
        %v5264 = vadd.f32 %v1354, %v5263
        %v5265 = vpop.f32.mrf.mxu0
        %v5266 = vadd.f32 %v1350, %v5265
        %v5267 = vpop.f32.mrf.mxu0
        %v5268 = vadd.f32 %v1354, %v5267
        %5269 = vmatprep.mubr.bf16.mxu0 %v494
        %5270 = vmatmul.mubr.bf16.gmra.mxu0 %v493
        %v5271 = vpop.f32.mrf.mxu0
        %v5272 = vadd.f32 %v1350, %v5271
        %v5273 = vpop.f32.mrf.mxu0
        %v5274 = vadd.f32 %v1354, %v5273
        %v5275 = vpop.f32.mrf.mxu0
        %v5276 = vadd.f32 %v1350, %v5275
        %v5277 = vpop.f32.mrf.mxu0
        %v5278 = vadd.f32 %v1354, %v5277
        %5279 = vmatprep.mubr.bf16.mxu0 %v506
        %5280 = vmatmul.mubr.bf16.gmra.mxu0 %v505
        %v5281 = vpop.f32.mrf.mxu0
        %v5282 = vadd.f32 %v1350, %v5281
        %v5283 = vpop.f32.mrf.mxu0
        %v5284 = vadd.f32 %v1354, %v5283
        %v5285 = vpop.f32.mrf.mxu0
        %v5286 = vadd.f32 %v1350, %v5285
        %v5287 = vpop.f32.mrf.mxu0
        %v5288 = vadd.f32 %v1354, %v5287
        %5289 = vmatprep.mubr.bf16.mxu0 %v518
        %5290 = vmatmul.mubr.bf16.gmra.mxu0 %v517
        %v5291 = vpop.f32.mrf.mxu0
        %v5292 = vadd.f32 %v1350, %v5291
        %v5293 = vpop.f32.mrf.mxu0
        %v5294 = vadd.f32 %v1354, %v5293
        %v5295 = vpop.f32.mrf.mxu0
        %v5296 = vadd.f32 %v1350, %v5295
        %v5297 = vpop.f32.mrf.mxu0
        %v5298 = vadd.f32 %v1354, %v5297
        %5299 = vmatprep.mubr.bf16.mxu0 %v530
        %5300 = vmatmul.mubr.bf16.gmra.mxu0 %v529
        %v5301 = vpop.f32.mrf.mxu0
        %v5302 = vadd.f32 %v1350, %v5301
        %v5303 = vpop.f32.mrf.mxu0
        %v5304 = vadd.f32 %v1354, %v5303
        %v5305 = vpop.f32.mrf.mxu0
        %v5306 = vadd.f32 %v1350, %v5305
        %v5307 = vpop.f32.mrf.mxu0
        %v5308 = vadd.f32 %v1354, %v5307
        %5309 = vmatprep.mubr.bf16.mxu0 %v542
        %5310 = vmatmul.mubr.bf16.gmra.mxu0 %v541
        %v5311 = vpop.f32.mrf.mxu0
        %v5312 = vadd.f32 %v1350, %v5311
        %v5313 = vpop.f32.mrf.mxu0
        %v5314 = vadd.f32 %v1354, %v5313
        %v5315 = vpop.f32.mrf.mxu0
        %v5316 = vadd.f32 %v1350, %v5315
        %v5317 = vpop.f32.mrf.mxu0
        %v5318 = vadd.f32 %v1354, %v5317
        %5319 = vmatprep.mubr.bf16.mxu0 %v554
        %5320 = vmatmul.mubr.bf16.gmra.mxu0 %v553
        %v5321 = vpop.f32.mrf.mxu0
        %v5322 = vadd.f32 %v1350, %v5321
        %v5323 = vpop.f32.mrf.mxu0
        %v5324 = vadd.f32 %v1354, %v5323
        %v5325 = vpop.f32.mrf.mxu0
        %v5326 = vadd.f32 %v1350, %v5325
        %v5327 = vpop.f32.mrf.mxu0
        %v5328 = vadd.f32 %v1354, %v5327
        %5329 = vmatprep.mubr.bf16.mxu0 %v566
        %5330 = vmatmul.mubr.bf16.gmra.mxu0 %v565
        %v5331 = vpop.f32.mrf.mxu0
        %v5332 = vadd.f32 %v1350, %v5331
        %v5333 = vpop.f32.mrf.mxu0
        %v5334 = vadd.f32 %v1354, %v5333
        %v5335 = vpop.f32.mrf.mxu0
        %v5336 = vadd.f32 %v1350, %v5335
        %v5337 = vpop.f32.mrf.mxu0
        %v5338 = vadd.f32 %v1354, %v5337
        %5339 = vdwg.mxu0
        %5340 = vmatprep.subr.bf16.mxu0 %v3876
        %5341 = vmatpush1.bf16.msra.mxu0 %v3875
        %5342 = vmatprep.subr.bf16.mxu0 %v3868
        %5343 = vmatpush1.bf16.msra.mxu0 %v3867
        %5344 = vmatprep.subr.bf16.mxu0 %v3860
        %5345 = vmatpush1.bf16.msra.mxu0 %v3859
        %5346 = vmatprep.subr.bf16.mxu0 %v3852
        %5347 = vmatpush1.bf16.msra.mxu0 %v3851
        %5348 = vmatprep.subr.bf16.mxu0 %v3844
        %5349 = vmatpush1.bf16.msra.mxu0 %v3843
        %5350 = vmatprep.subr.bf16.mxu0 %v3836
        %5351 = vmatpush1.bf16.msra.mxu0 %v3835
        %5352 = vmatprep.subr.bf16.mxu0 %v3828
        %5353 = vmatpush1.bf16.msra.mxu0 %v3827
        %5354 = vmatprep.subr.bf16.mxu0 %v3820
        %5355 = vmatpush1.bf16.msra.mxu0 %v3819
        %5356 = vmatprep.subr.bf16.mxu0 %v3940
        %5357 = vmatpush2.bf16.msra.mxu0 %v3939
        %5358 = vmatprep.subr.bf16.mxu0 %v3932
        %5359 = vmatpush2.bf16.msra.mxu0 %v3931
        %5360 = vmatprep.subr.bf16.mxu0 %v3924
        %5361 = vmatpush2.bf16.msra.mxu0 %v3923
        %5362 = vmatprep.subr.bf16.mxu0 %v3916
        %5363 = vmatpush2.bf16.msra.mxu0 %v3915
        %5364 = vmatprep.subr.bf16.mxu0 %v3908
        %5365 = vmatpush2.bf16.msra.mxu0 %v3907
        %5366 = vmatprep.subr.bf16.mxu0 %v3900
        %5367 = vmatpush2.bf16.msra.mxu0 %v3899
        %5368 = vmatprep.subr.bf16.mxu0 %v3892
        %5369 = vmatpush2.bf16.msra.mxu0 %v3891
        %5370 = vmatprep.subr.bf16.mxu0 %v3884
        %5371 = vmatpush2.bf16.msra.mxu0 %v3883
        %5372 = vmatprep.mubr.bf16.mxu0 %v484
        %5373 = vmatmul.mubr.bf16.gmra.mxu0 %v483
        %v5374 = vpop.f32.mrf.mxu0
        %v5375 = vadd.f32 %v5262, %v5374
        %v5376 = vpop.f32.mrf.mxu0
        %v5377 = vadd.f32 %v5264, %v5376
        %v5378 = vpop.f32.mrf.mxu0
        %v5379 = vadd.f32 %v5266, %v5378
        %v5380 = vpop.f32.mrf.mxu0
        %v5381 = vadd.f32 %v5268, %v5380
        %5382 = vmatprep.mubr.bf16.mxu0 %v496
        %5383 = vmatmul.mubr.bf16.gmra.mxu0 %v495
        %v5384 = vpop.f32.mrf.mxu0
        %v5385 = vadd.f32 %v5272, %v5384
        %v5386 = vpop.f32.mrf.mxu0
        %v5387 = vadd.f32 %v5274, %v5386
        %v5388 = vpop.f32.mrf.mxu0
        %v5389 = vadd.f32 %v5276, %v5388
        %v5390 = vpop.f32.mrf.mxu0
        %v5391 = vadd.f32 %v5278, %v5390
        %5392 = vmatprep.mubr.bf16.mxu0 %v508
        %5393 = vmatmul.mubr.bf16.gmra.mxu0 %v507
        %v5394 = vpop.f32.mrf.mxu0
        %v5395 = vadd.f32 %v5282, %v5394
        %v5396 = vpop.f32.mrf.mxu0
        %v5397 = vadd.f32 %v5284, %v5396
        %v5398 = vpop.f32.mrf.mxu0
        %v5399 = vadd.f32 %v5286, %v5398
        %v5400 = vpop.f32.mrf.mxu0
        %v5401 = vadd.f32 %v5288, %v5400
        %5402 = vmatprep.mubr.bf16.mxu0 %v520
        %5403 = vmatmul.mubr.bf16.gmra.mxu0 %v519
        %v5404 = vpop.f32.mrf.mxu0
        %v5405 = vadd.f32 %v5292, %v5404
        %v5406 = vpop.f32.mrf.mxu0
        %v5407 = vadd.f32 %v5294, %v5406
        %v5408 = vpop.f32.mrf.mxu0
        %v5409 = vadd.f32 %v5296, %v5408
        %v5410 = vpop.f32.mrf.mxu0
        %v5411 = vadd.f32 %v5298, %v5410
        %5412 = vmatprep.mubr.bf16.mxu0 %v532
        %5413 = vmatmul.mubr.bf16.gmra.mxu0 %v531
        %v5414 = vpop.f32.mrf.mxu0
        %v5415 = vadd.f32 %v5302, %v5414
        %v5416 = vpop.f32.mrf.mxu0
        %v5417 = vadd.f32 %v5304, %v5416
        %v5418 = vpop.f32.mrf.mxu0
        %v5419 = vadd.f32 %v5306, %v5418
        %v5420 = vpop.f32.mrf.mxu0
        %v5421 = vadd.f32 %v5308, %v5420
        %5422 = vmatprep.mubr.bf16.mxu0 %v544
        %5423 = vmatmul.mubr.bf16.gmra.mxu0 %v543
        %v5424 = vpop.f32.mrf.mxu0
        %v5425 = vadd.f32 %v5312, %v5424
        %v5426 = vpop.f32.mrf.mxu0
        %v5427 = vadd.f32 %v5314, %v5426
        %v5428 = vpop.f32.mrf.mxu0
        %v5429 = vadd.f32 %v5316, %v5428
        %v5430 = vpop.f32.mrf.mxu0
        %v5431 = vadd.f32 %v5318, %v5430
        %5432 = vmatprep.mubr.bf16.mxu0 %v556
        %5433 = vmatmul.mubr.bf16.gmra.mxu0 %v555
        %v5434 = vpop.f32.mrf.mxu0
        %v5435 = vadd.f32 %v5322, %v5434
        %v5436 = vpop.f32.mrf.mxu0
        %v5437 = vadd.f32 %v5324, %v5436
        %v5438 = vpop.f32.mrf.mxu0
        %v5439 = vadd.f32 %v5326, %v5438
        %v5440 = vpop.f32.mrf.mxu0
        %v5441 = vadd.f32 %v5328, %v5440
        %5442 = vmatprep.mubr.bf16.mxu0 %v568
        %5443 = vmatmul.mubr.bf16.gmra.mxu0 %v567
        %v5444 = vpop.f32.mrf.mxu0
        %v5445 = vadd.f32 %v5332, %v5444
        %v5446 = vpop.f32.mrf.mxu0
        %v5447 = vadd.f32 %v5334, %v5446
        %v5448 = vpop.f32.mrf.mxu0
        %v5449 = vadd.f32 %v5336, %v5448
        %v5450 = vpop.f32.mrf.mxu0
        %v5451 = vadd.f32 %v5338, %v5450
        %5452 = vdwg.mxu0
        %5453 = vmatprep.subr.bf16.mxu0 %v4004
        %5454 = vmatpush1.bf16.msra.mxu0 %v4003
        %5455 = vmatprep.subr.bf16.mxu0 %v3996
        %5456 = vmatpush1.bf16.msra.mxu0 %v3995
        %5457 = vmatprep.subr.bf16.mxu0 %v3988
        %5458 = vmatpush1.bf16.msra.mxu0 %v3987
        %5459 = vmatprep.subr.bf16.mxu0 %v3980
        %5460 = vmatpush1.bf16.msra.mxu0 %v3979
        %5461 = vmatprep.subr.bf16.mxu0 %v3972
        %5462 = vmatpush1.bf16.msra.mxu0 %v3971
        %5463 = vmatprep.subr.bf16.mxu0 %v3964
        %5464 = vmatpush1.bf16.msra.mxu0 %v3963
        %5465 = vmatprep.subr.bf16.mxu0 %v3956
        %5466 = vmatpush1.bf16.msra.mxu0 %v3955
        %5467 = vmatprep.subr.bf16.mxu0 %v3948
        %5468 = vmatpush1.bf16.msra.mxu0 %v3947
        %5469 = vmatprep.subr.bf16.mxu0 %v4068
        %5470 = vmatpush2.bf16.msra.mxu0 %v4067
        %5471 = vmatprep.subr.bf16.mxu0 %v4060
        %5472 = vmatpush2.bf16.msra.mxu0 %v4059
        %5473 = vmatprep.subr.bf16.mxu0 %v4052
        %5474 = vmatpush2.bf16.msra.mxu0 %v4051
        %5475 = vmatprep.subr.bf16.mxu0 %v4044
        %5476 = vmatpush2.bf16.msra.mxu0 %v4043
        %5477 = vmatprep.subr.bf16.mxu0 %v4036
        %5478 = vmatpush2.bf16.msra.mxu0 %v4035
        %5479 = vmatprep.subr.bf16.mxu0 %v4028
        %5480 = vmatpush2.bf16.msra.mxu0 %v4027
        %5481 = vmatprep.subr.bf16.mxu0 %v4020
        %5482 = vmatpush2.bf16.msra.mxu0 %v4019
        %5483 = vmatprep.subr.bf16.mxu0 %v4012
        %5484 = vmatpush2.bf16.msra.mxu0 %v4011
        %5485 = vmatprep.mubr.bf16.mxu0 %v486
        %5486 = vmatmul.mubr.bf16.gmra.mxu0 %v485
        %v5487 = vpop.f32.mrf.mxu0
        %v5488 = vadd.f32 %v5375, %v5487
        %v5489 = vpop.f32.mrf.mxu0
        %v5490 = vadd.f32 %v5377, %v5489
        %v5491 = vpop.f32.mrf.mxu0
        %v5492 = vadd.f32 %v5379, %v5491
        %v5493 = vpop.f32.mrf.mxu0
        %v5494 = vadd.f32 %v5381, %v5493
        %5495 = vmatprep.mubr.bf16.mxu0 %v498
        %5496 = vmatmul.mubr.bf16.gmra.mxu0 %v497
        %v5497 = vpop.f32.mrf.mxu0
        %v5498 = vadd.f32 %v5385, %v5497
        %v5499 = vpop.f32.mrf.mxu0
        %v5500 = vadd.f32 %v5387, %v5499
        %v5501 = vpop.f32.mrf.mxu0
        %v5502 = vadd.f32 %v5389, %v5501
        %v5503 = vpop.f32.mrf.mxu0
        %v5504 = vadd.f32 %v5391, %v5503
        %5505 = vmatprep.mubr.bf16.mxu0 %v510
        %5506 = vmatmul.mubr.bf16.gmra.mxu0 %v509
        %v5507 = vpop.f32.mrf.mxu0
        %v5508 = vadd.f32 %v5395, %v5507
        %v5509 = vpop.f32.mrf.mxu0
        %v5510 = vadd.f32 %v5397, %v5509
        %v5511 = vpop.f32.mrf.mxu0
        %v5512 = vadd.f32 %v5399, %v5511
        %v5513 = vpop.f32.mrf.mxu0
        %v5514 = vadd.f32 %v5401, %v5513
        %5515 = vmatprep.mubr.bf16.mxu0 %v522
        %5516 = vmatmul.mubr.bf16.gmra.mxu0 %v521
        %v5517 = vpop.f32.mrf.mxu0
        %v5518 = vadd.f32 %v5405, %v5517
        %v5519 = vpop.f32.mrf.mxu0
        %v5520 = vadd.f32 %v5407, %v5519
        %v5521 = vpop.f32.mrf.mxu0
        %v5522 = vadd.f32 %v5409, %v5521
        %v5523 = vpop.f32.mrf.mxu0
        %v5524 = vadd.f32 %v5411, %v5523
        %5525 = vmatprep.mubr.bf16.mxu0 %v534
        %5526 = vmatmul.mubr.bf16.gmra.mxu0 %v533
        %v5527 = vpop.f32.mrf.mxu0
        %v5528 = vadd.f32 %v5415, %v5527
        %v5529 = vpop.f32.mrf.mxu0
        %v5530 = vadd.f32 %v5417, %v5529
        %v5531 = vpop.f32.mrf.mxu0
        %v5532 = vadd.f32 %v5419, %v5531
        %v5533 = vpop.f32.mrf.mxu0
        %v5534 = vadd.f32 %v5421, %v5533
        %5535 = vmatprep.mubr.bf16.mxu0 %v546
        %5536 = vmatmul.mubr.bf16.gmra.mxu0 %v545
        %v5537 = vpop.f32.mrf.mxu0
        %v5538 = vadd.f32 %v5425, %v5537
        %v5539 = vpop.f32.mrf.mxu0
        %v5540 = vadd.f32 %v5427, %v5539
        %v5541 = vpop.f32.mrf.mxu0
        %v5542 = vadd.f32 %v5429, %v5541
        %v5543 = vpop.f32.mrf.mxu0
        %v5544 = vadd.f32 %v5431, %v5543
        %5545 = vmatprep.mubr.bf16.mxu0 %v558
        %5546 = vmatmul.mubr.bf16.gmra.mxu0 %v557
        %v5547 = vpop.f32.mrf.mxu0
        %v5548 = vadd.f32 %v5435, %v5547
        %v5549 = vpop.f32.mrf.mxu0
        %v5550 = vadd.f32 %v5437, %v5549
        %v5551 = vpop.f32.mrf.mxu0
        %v5552 = vadd.f32 %v5439, %v5551
        %v5553 = vpop.f32.mrf.mxu0
        %v5554 = vadd.f32 %v5441, %v5553
        %5555 = vmatprep.mubr.bf16.mxu0 %v570
        %5556 = vmatmul.mubr.bf16.gmra.mxu0 %v569
        %v5557 = vpop.f32.mrf.mxu0
        %v5558 = vadd.f32 %v5445, %v5557
        %v5559 = vpop.f32.mrf.mxu0
        %v5560 = vadd.f32 %v5447, %v5559
        %v5561 = vpop.f32.mrf.mxu0
        %v5562 = vadd.f32 %v5449, %v5561
        %v5563 = vpop.f32.mrf.mxu0
        %v5564 = vadd.f32 %v5451, %v5563
        %5565 = vdwg.mxu0
        %5566 = vmatprep.subr.bf16.mxu0 %v4132
        %5567 = vmatpush1.bf16.msra.mxu0 %v4131
        %5568 = vmatprep.subr.bf16.mxu0 %v4124
        %5569 = vmatpush1.bf16.msra.mxu0 %v4123
        %5570 = vmatprep.subr.bf16.mxu0 %v4116
        %5571 = vmatpush1.bf16.msra.mxu0 %v4115
        %5572 = vmatprep.subr.bf16.mxu0 %v4108
        %5573 = vmatpush1.bf16.msra.mxu0 %v4107
        %5574 = vmatprep.subr.bf16.mxu0 %v4100
        %5575 = vmatpush1.bf16.msra.mxu0 %v4099
        %5576 = vmatprep.subr.bf16.mxu0 %v4092
        %5577 = vmatpush1.bf16.msra.mxu0 %v4091
        %5578 = vmatprep.subr.bf16.mxu0 %v4084
        %5579 = vmatpush1.bf16.msra.mxu0 %v4083
        %5580 = vmatprep.subr.bf16.mxu0 %v4076
        %5581 = vmatpush1.bf16.msra.mxu0 %v4075
        %5582 = vmatprep.subr.bf16.mxu0 %v4196
        %5583 = vmatpush2.bf16.msra.mxu0 %v4195
        %5584 = vmatprep.subr.bf16.mxu0 %v4188
        %5585 = vmatpush2.bf16.msra.mxu0 %v4187
        %5586 = vmatprep.subr.bf16.mxu0 %v4180
        %5587 = vmatpush2.bf16.msra.mxu0 %v4179
        %5588 = vmatprep.subr.bf16.mxu0 %v4172
        %5589 = vmatpush2.bf16.msra.mxu0 %v4171
        %5590 = vmatprep.subr.bf16.mxu0 %v4164
        %5591 = vmatpush2.bf16.msra.mxu0 %v4163
        %5592 = vmatprep.subr.bf16.mxu0 %v4156
        %5593 = vmatpush2.bf16.msra.mxu0 %v4155
        %5594 = vmatprep.subr.bf16.mxu0 %v4148
        %5595 = vmatpush2.bf16.msra.mxu0 %v4147
        %5596 = vmatprep.subr.bf16.mxu0 %v4140
        %5597 = vmatpush2.bf16.msra.mxu0 %v4139
        %5598 = vmatprep.mubr.bf16.mxu0 %v488
        %5599 = vmatmul.mubr.bf16.gmra.mxu0 %v487
        %v5600 = vpop.f32.mrf.mxu0
        %v5601 = vadd.f32 %v5488, %v5600
        %v5602 = vpop.f32.mrf.mxu0
        %v5603 = vadd.f32 %v5490, %v5602
        %v5604 = vpop.f32.mrf.mxu0
        %v5605 = vadd.f32 %v5492, %v5604
        %v5606 = vpop.f32.mrf.mxu0
        %v5607 = vadd.f32 %v5494, %v5606
        %5608 = vmatprep.mubr.bf16.mxu0 %v500
        %5609 = vmatmul.mubr.bf16.gmra.mxu0 %v499
        %v5610 = vpop.f32.mrf.mxu0
        %v5611 = vadd.f32 %v5498, %v5610
        %v5612 = vpop.f32.mrf.mxu0
        %v5613 = vadd.f32 %v5500, %v5612
        %v5614 = vpop.f32.mrf.mxu0
        %v5615 = vadd.f32 %v5502, %v5614
        %v5616 = vpop.f32.mrf.mxu0
        %v5617 = vadd.f32 %v5504, %v5616
        %5618 = vmatprep.mubr.bf16.mxu0 %v512
        %5619 = vmatmul.mubr.bf16.gmra.mxu0 %v511
        %v5620 = vpop.f32.mrf.mxu0
        %v5621 = vadd.f32 %v5508, %v5620
        %v5622 = vpop.f32.mrf.mxu0
        %v5623 = vadd.f32 %v5510, %v5622
        %v5624 = vpop.f32.mrf.mxu0
        %v5625 = vadd.f32 %v5512, %v5624
        %v5626 = vpop.f32.mrf.mxu0
        %v5627 = vadd.f32 %v5514, %v5626
        %5628 = vmatprep.mubr.bf16.mxu0 %v524
        %5629 = vmatmul.mubr.bf16.gmra.mxu0 %v523
        %v5630 = vpop.f32.mrf.mxu0
        %v5631 = vadd.f32 %v5518, %v5630
        %v5632 = vpop.f32.mrf.mxu0
        %v5633 = vadd.f32 %v5520, %v5632
        %v5634 = vpop.f32.mrf.mxu0
        %v5635 = vadd.f32 %v5522, %v5634
        %v5636 = vpop.f32.mrf.mxu0
        %v5637 = vadd.f32 %v5524, %v5636
        %5638 = vmatprep.mubr.bf16.mxu0 %v536
        %5639 = vmatmul.mubr.bf16.gmra.mxu0 %v535
        %v5640 = vpop.f32.mrf.mxu0
        %v5641 = vadd.f32 %v5528, %v5640
        %v5642 = vpop.f32.mrf.mxu0
        %v5643 = vadd.f32 %v5530, %v5642
        %v5644 = vpop.f32.mrf.mxu0
        %v5645 = vadd.f32 %v5532, %v5644
        %v5646 = vpop.f32.mrf.mxu0
        %v5647 = vadd.f32 %v5534, %v5646
        %5648 = vmatprep.mubr.bf16.mxu0 %v548
        %5649 = vmatmul.mubr.bf16.gmra.mxu0 %v547
        %v5650 = vpop.f32.mrf.mxu0
        %v5651 = vadd.f32 %v5538, %v5650
        %v5652 = vpop.f32.mrf.mxu0
        %v5653 = vadd.f32 %v5540, %v5652
        %v5654 = vpop.f32.mrf.mxu0
        %v5655 = vadd.f32 %v5542, %v5654
        %v5656 = vpop.f32.mrf.mxu0
        %v5657 = vadd.f32 %v5544, %v5656
        %5658 = vmatprep.mubr.bf16.mxu0 %v560
        %5659 = vmatmul.mubr.bf16.gmra.mxu0 %v559
        %v5660 = vpop.f32.mrf.mxu0
        %v5661 = vadd.f32 %v5548, %v5660
        %v5662 = vpop.f32.mrf.mxu0
        %v5663 = vadd.f32 %v5550, %v5662
        %v5664 = vpop.f32.mrf.mxu0
        %v5665 = vadd.f32 %v5552, %v5664
        %v5666 = vpop.f32.mrf.mxu0
        %v5667 = vadd.f32 %v5554, %v5666
        %5668 = vmatprep.mubr.bf16.mxu0 %v572
        %5669 = vmatmul.mubr.bf16.gmra.mxu0 %v571
        %v5670 = vpop.f32.mrf.mxu0
        %v5671 = vadd.f32 %v5558, %v5670
        %v5672 = vpop.f32.mrf.mxu0
        %v5673 = vadd.f32 %v5560, %v5672
        %v5674 = vpop.f32.mrf.mxu0
        %v5675 = vadd.f32 %v5562, %v5674
        %v5676 = vpop.f32.mrf.mxu0
        %v5677 = vadd.f32 %v5564, %v5676
        %5678 = vdwg.mxu0
        %5679 = vmatprep.subr.bf16.mxu0 %v4260
        %5680 = vmatpush1.bf16.msra.mxu0 %v4259
        %5681 = vmatprep.subr.bf16.mxu0 %v4252
        %5682 = vmatpush1.bf16.msra.mxu0 %v4251
        %5683 = vmatprep.subr.bf16.mxu0 %v4244
        %5684 = vmatpush1.bf16.msra.mxu0 %v4243
        %5685 = vmatprep.subr.bf16.mxu0 %v4236
        %5686 = vmatpush1.bf16.msra.mxu0 %v4235
        %5687 = vmatprep.subr.bf16.mxu0 %v4228
        %5688 = vmatpush1.bf16.msra.mxu0 %v4227
        %5689 = vmatprep.subr.bf16.mxu0 %v4220
        %5690 = vmatpush1.bf16.msra.mxu0 %v4219
        %5691 = vmatprep.subr.bf16.mxu0 %v4212
        %5692 = vmatpush1.bf16.msra.mxu0 %v4211
        %5693 = vmatprep.subr.bf16.mxu0 %v4204
        %5694 = vmatpush1.bf16.msra.mxu0 %v4203
        %5695 = vmatprep.subr.bf16.mxu0 %v4324
        %5696 = vmatpush2.bf16.msra.mxu0 %v4323
        %5697 = vmatprep.subr.bf16.mxu0 %v4316
        %5698 = vmatpush2.bf16.msra.mxu0 %v4315
        %5699 = vmatprep.subr.bf16.mxu0 %v4308
        %5700 = vmatpush2.bf16.msra.mxu0 %v4307
        %5701 = vmatprep.subr.bf16.mxu0 %v4300
        %5702 = vmatpush2.bf16.msra.mxu0 %v4299
        %5703 = vmatprep.subr.bf16.mxu0 %v4292
        %5704 = vmatpush2.bf16.msra.mxu0 %v4291
        %5705 = vmatprep.subr.bf16.mxu0 %v4284
        %5706 = vmatpush2.bf16.msra.mxu0 %v4283
        %5707 = vmatprep.subr.bf16.mxu0 %v4276
        %5708 = vmatpush2.bf16.msra.mxu0 %v4275
        %5709 = vmatprep.subr.bf16.mxu0 %v4268
        %5710 = vmatpush2.bf16.msra.mxu0 %v4267
        %5711 = vmatprep.mubr.bf16.mxu0 %v490
        %5712 = vmatmul.mubr.bf16.gmra.mxu0 %v489
        %v5713 = vpop.f32.mrf.mxu0
        %v5714 = vadd.f32 %v5601, %v5713
        %v5715 = vpop.f32.mrf.mxu0
        %v5716 = vadd.f32 %v5603, %v5715
        %v5717 = vpop.f32.mrf.mxu0
        %v5718 = vadd.f32 %v5605, %v5717
        %v5719 = vpop.f32.mrf.mxu0
        %v5720 = vadd.f32 %v5607, %v5719
        %5721 = vmatprep.mubr.bf16.mxu0 %v502
        %5722 = vmatmul.mubr.bf16.gmra.mxu0 %v501
        %v5723 = vpop.f32.mrf.mxu0
        %v5724 = vadd.f32 %v5611, %v5723
        %v5725 = vpop.f32.mrf.mxu0
        %v5726 = vadd.f32 %v5613, %v5725
        %v5727 = vpop.f32.mrf.mxu0
        %v5728 = vadd.f32 %v5615, %v5727
        %v5729 = vpop.f32.mrf.mxu0
        %v5730 = vadd.f32 %v5617, %v5729
        %5731 = vmatprep.mubr.bf16.mxu0 %v514
        %5732 = vmatmul.mubr.bf16.gmra.mxu0 %v513
        %v5733 = vpop.f32.mrf.mxu0
        %v5734 = vadd.f32 %v5621, %v5733
        %v5735 = vpop.f32.mrf.mxu0
        %v5736 = vadd.f32 %v5623, %v5735
        %v5737 = vpop.f32.mrf.mxu0
        %v5738 = vadd.f32 %v5625, %v5737
        %v5739 = vpop.f32.mrf.mxu0
        %v5740 = vadd.f32 %v5627, %v5739
        %5741 = vmatprep.mubr.bf16.mxu0 %v526
        %5742 = vmatmul.mubr.bf16.gmra.mxu0 %v525
        %v5743 = vpop.f32.mrf.mxu0
        %v5744 = vadd.f32 %v5631, %v5743
        %v5745 = vpop.f32.mrf.mxu0
        %v5746 = vadd.f32 %v5633, %v5745
        %v5747 = vpop.f32.mrf.mxu0
        %v5748 = vadd.f32 %v5635, %v5747
        %v5749 = vpop.f32.mrf.mxu0
        %v5750 = vadd.f32 %v5637, %v5749
        %5751 = vmatprep.mubr.bf16.mxu0 %v538
        %5752 = vmatmul.mubr.bf16.gmra.mxu0 %v537
        %v5753 = vpop.f32.mrf.mxu0
        %v5754 = vadd.f32 %v5641, %v5753
        %v5755 = vpop.f32.mrf.mxu0
        %v5756 = vadd.f32 %v5643, %v5755
        %v5757 = vpop.f32.mrf.mxu0
        %v5758 = vadd.f32 %v5645, %v5757
        %v5759 = vpop.f32.mrf.mxu0
        %v5760 = vadd.f32 %v5647, %v5759
        %5761 = vmatprep.mubr.bf16.mxu0 %v550
        %5762 = vmatmul.mubr.bf16.gmra.mxu0 %v549
        %v5763 = vpop.f32.mrf.mxu0
        %v5764 = vadd.f32 %v5651, %v5763
        %v5765 = vpop.f32.mrf.mxu0
        %v5766 = vadd.f32 %v5653, %v5765
        %v5767 = vpop.f32.mrf.mxu0
        %v5768 = vadd.f32 %v5655, %v5767
        %v5769 = vpop.f32.mrf.mxu0
        %v5770 = vadd.f32 %v5657, %v5769
        %5771 = vmatprep.mubr.bf16.mxu0 %v562
        %5772 = vmatmul.mubr.bf16.gmra.mxu0 %v561
        %v5773 = vpop.f32.mrf.mxu0
        %v5774 = vadd.f32 %v5661, %v5773
        %v5775 = vpop.f32.mrf.mxu0
        %v5776 = vadd.f32 %v5663, %v5775
        %v5777 = vpop.f32.mrf.mxu0
        %v5778 = vadd.f32 %v5665, %v5777
        %v5779 = vpop.f32.mrf.mxu0
        %v5780 = vadd.f32 %v5667, %v5779
        %5781 = vmatprep.mubr.bf16.mxu0 %v574
        %5782 = vmatmul.mubr.bf16.gmra.mxu0 %v573
        %v5783 = vpop.f32.mrf.mxu0
        %v5784 = vadd.f32 %v5671, %v5783
        %v5785 = vpop.f32.mrf.mxu0
        %v5786 = vadd.f32 %v5673, %v5785
        %v5787 = vpop.f32.mrf.mxu0
        %v5788 = vadd.f32 %v5675, %v5787
        %v5789 = vpop.f32.mrf.mxu0
        %v5790 = vadd.f32 %v5677, %v5789
        %5791 = vdwg.mxu0
        %5792 = vmatprep.subr.bf16.mxu0 %v4388
        %5793 = vmatpush1.bf16.msra.mxu0 %v4387
        %5794 = vmatprep.subr.bf16.mxu0 %v4380
        %5795 = vmatpush1.bf16.msra.mxu0 %v4379
        %5796 = vmatprep.subr.bf16.mxu0 %v4372
        %5797 = vmatpush1.bf16.msra.mxu0 %v4371
        %5798 = vmatprep.subr.bf16.mxu0 %v4364
        %5799 = vmatpush1.bf16.msra.mxu0 %v4363
        %5800 = vmatprep.subr.bf16.mxu0 %v4356
        %5801 = vmatpush1.bf16.msra.mxu0 %v4355
        %5802 = vmatprep.subr.bf16.mxu0 %v4348
        %5803 = vmatpush1.bf16.msra.mxu0 %v4347
        %5804 = vmatprep.subr.bf16.mxu0 %v4340
        %5805 = vmatpush1.bf16.msra.mxu0 %v4339
        %5806 = vmatprep.subr.bf16.mxu0 %v4332
        %5807 = vmatpush1.bf16.msra.mxu0 %v4331
        %5808 = vmatprep.subr.bf16.mxu0 %v4452
        %5809 = vmatpush2.bf16.msra.mxu0 %v4451
        %5810 = vmatprep.subr.bf16.mxu0 %v4444
        %5811 = vmatpush2.bf16.msra.mxu0 %v4443
        %5812 = vmatprep.subr.bf16.mxu0 %v4436
        %5813 = vmatpush2.bf16.msra.mxu0 %v4435
        %5814 = vmatprep.subr.bf16.mxu0 %v4428
        %5815 = vmatpush2.bf16.msra.mxu0 %v4427
        %5816 = vmatprep.subr.bf16.mxu0 %v4420
        %5817 = vmatpush2.bf16.msra.mxu0 %v4419
        %5818 = vmatprep.subr.bf16.mxu0 %v4412
        %5819 = vmatpush2.bf16.msra.mxu0 %v4411
        %5820 = vmatprep.subr.bf16.mxu0 %v4404
        %5821 = vmatpush2.bf16.msra.mxu0 %v4403
        %5822 = vmatprep.subr.bf16.mxu0 %v4396
        %5823 = vmatpush2.bf16.msra.mxu0 %v4395
        %5824 = vmatprep.mubr.bf16.mxu0 %v492
        %5825 = vmatmul.mubr.bf16.gmra.mxu0 %v491
        %v5826 = vpop.f32.mrf.mxu0
        %v5827 = vadd.f32 %v5714, %v5826
        %v5828 = vpop.f32.mrf.mxu0
        %v5829 = vadd.f32 %v5716, %v5828
        %v5830 = vpop.f32.mrf.mxu0
        %v5831 = vadd.f32 %v5718, %v5830
        %v5832 = vpop.f32.mrf.mxu0
        %v5833 = vadd.f32 %v5720, %v5832
        %5834 = vmatprep.mubr.bf16.mxu0 %v504
        %5835 = vmatmul.mubr.bf16.gmra.mxu0 %v503
        %v5836 = vpop.f32.mrf.mxu0
        %v5837 = vadd.f32 %v5724, %v5836
        %v5838 = vpop.f32.mrf.mxu0
        %v5839 = vadd.f32 %v5726, %v5838
        %v5840 = vpop.f32.mrf.mxu0
        %v5841 = vadd.f32 %v5728, %v5840
        %v5842 = vpop.f32.mrf.mxu0
        %v5843 = vadd.f32 %v5730, %v5842
        %5844 = vmatprep.mubr.bf16.mxu0 %v516
        %5845 = vmatmul.mubr.bf16.gmra.mxu0 %v515
        %v5846 = vpop.f32.mrf.mxu0
        %v5847 = vadd.f32 %v5734, %v5846
        %v5848 = vpop.f32.mrf.mxu0
        %v5849 = vadd.f32 %v5736, %v5848
        %v5850 = vpop.f32.mrf.mxu0
        %v5851 = vadd.f32 %v5738, %v5850
        %v5852 = vpop.f32.mrf.mxu0
        %v5853 = vadd.f32 %v5740, %v5852
        %5854 = vmatprep.mubr.bf16.mxu0 %v528
        %5855 = vmatmul.mubr.bf16.gmra.mxu0 %v527
        %v5856 = vpop.f32.mrf.mxu0
        %v5857 = vadd.f32 %v5744, %v5856
        %v5858 = vpop.f32.mrf.mxu0
        %v5859 = vadd.f32 %v5746, %v5858
        %v5860 = vpop.f32.mrf.mxu0
        %v5861 = vadd.f32 %v5748, %v5860
        %v5862 = vpop.f32.mrf.mxu0
        %v5863 = vadd.f32 %v5750, %v5862
        %5864 = vmatprep.mubr.bf16.mxu0 %v540
        %5865 = vmatmul.mubr.bf16.gmra.mxu0 %v539
        %v5866 = vpop.f32.mrf.mxu0
        %v5867 = vadd.f32 %v5754, %v5866
        %v5868 = vpop.f32.mrf.mxu0
        %v5869 = vadd.f32 %v5756, %v5868
        %v5870 = vpop.f32.mrf.mxu0
        %v5871 = vadd.f32 %v5758, %v5870
        %v5872 = vpop.f32.mrf.mxu0
        %v5873 = vadd.f32 %v5760, %v5872
        %5874 = vmatprep.mubr.bf16.mxu0 %v552
        %5875 = vmatmul.mubr.bf16.gmra.mxu0 %v551
        %v5876 = vpop.f32.mrf.mxu0
        %v5877 = vadd.f32 %v5764, %v5876
        %v5878 = vpop.f32.mrf.mxu0
        %v5879 = vadd.f32 %v5766, %v5878
        %v5880 = vpop.f32.mrf.mxu0
        %v5881 = vadd.f32 %v5768, %v5880
        %v5882 = vpop.f32.mrf.mxu0
        %v5883 = vadd.f32 %v5770, %v5882
        %5884 = vmatprep.mubr.bf16.mxu0 %v564
        %5885 = vmatmul.mubr.bf16.gmra.mxu0 %v563
        %v5886 = vpop.f32.mrf.mxu0
        %v5887 = vadd.f32 %v5774, %v5886
        %v5888 = vpop.f32.mrf.mxu0
        %v5889 = vadd.f32 %v5776, %v5888
        %v5890 = vpop.f32.mrf.mxu0
        %v5891 = vadd.f32 %v5778, %v5890
        %v5892 = vpop.f32.mrf.mxu0
        %v5893 = vadd.f32 %v5780, %v5892
        %5894 = vmatprep.mubr.bf16.mxu0 %v576
        %5895 = vmatmul.mubr.bf16.gmra.mxu0 %v575
        %v5896 = vpop.f32.mrf.mxu0
        %v5897 = vadd.f32 %v5784, %v5896
        %v5898 = vpop.f32.mrf.mxu0
        %v5899 = vadd.f32 %v5786, %v5898
        %v5900 = vpop.f32.mrf.mxu0
        %v5901 = vadd.f32 %v5788, %v5900
        %v5902 = vpop.f32.mrf.mxu0
        %v5903 = vadd.f32 %v5790, %v5902
        %5904 = vdwg.mxu0
        %5905 = vmatprep.subr.bf16.mxu0 %v3750
        %5906 = vmatpush1.bf16.msra.mxu0 %v3749
        %5907 = vmatprep.subr.bf16.mxu0 %v3742
        %5908 = vmatpush1.bf16.msra.mxu0 %v3741
        %5909 = vmatprep.subr.bf16.mxu0 %v3734
        %5910 = vmatpush1.bf16.msra.mxu0 %v3733
        %5911 = vmatprep.subr.bf16.mxu0 %v3726
        %5912 = vmatpush1.bf16.msra.mxu0 %v3725
        %5913 = vmatprep.subr.bf16.mxu0 %v3718
        %5914 = vmatpush1.bf16.msra.mxu0 %v3717
        %5915 = vmatprep.subr.bf16.mxu0 %v3710
        %5916 = vmatpush1.bf16.msra.mxu0 %v3709
        %5917 = vmatprep.subr.bf16.mxu0 %v3702
        %5918 = vmatpush1.bf16.msra.mxu0 %v3701
        %5919 = vmatprep.subr.bf16.mxu0 %v3694
        %5920 = vmatpush1.bf16.msra.mxu0 %v3693
        %5921 = vmatprep.subr.bf16.mxu0 %v3814
        %5922 = vmatpush2.bf16.msra.mxu0 %v3813
        %5923 = vmatprep.subr.bf16.mxu0 %v3806
        %5924 = vmatpush2.bf16.msra.mxu0 %v3805
        %5925 = vmatprep.subr.bf16.mxu0 %v3798
        %5926 = vmatpush2.bf16.msra.mxu0 %v3797
        %5927 = vmatprep.subr.bf16.mxu0 %v3790
        %5928 = vmatpush2.bf16.msra.mxu0 %v3789
        %5929 = vmatprep.subr.bf16.mxu0 %v3782
        %5930 = vmatpush2.bf16.msra.mxu0 %v3781
        %5931 = vmatprep.subr.bf16.mxu0 %v3774
        %5932 = vmatpush2.bf16.msra.mxu0 %v3773
        %5933 = vmatprep.subr.bf16.mxu0 %v3766
        %5934 = vmatpush2.bf16.msra.mxu0 %v3765
        %5935 = vmatprep.subr.bf16.mxu0 %v3758
        %5936 = vmatpush2.bf16.msra.mxu0 %v3757
        %5937 = vmatprep.mubr.bf16.mxu0 %v482
        %5938 = vmatmul.mubr.bf16.gmra.mxu0 %v481
        %v5939 = vpop.f32.mrf.mxu0
        %v5940 = vadd.f32 %v1358, %v5939
        %v5941 = vpop.f32.mrf.mxu0
        %v5942 = vadd.f32 %v1362, %v5941
        %v5943 = vpop.f32.mrf.mxu0
        %v5944 = vadd.f32 %v1358, %v5943
        %v5945 = vpop.f32.mrf.mxu0
        %v5946 = vadd.f32 %v1362, %v5945
        %5947 = vmatprep.mubr.bf16.mxu0 %v494
        %5948 = vmatmul.mubr.bf16.gmra.mxu0 %v493
        %v5949 = vpop.f32.mrf.mxu0
        %v5950 = vadd.f32 %v1358, %v5949
        %v5951 = vpop.f32.mrf.mxu0
        %v5952 = vadd.f32 %v1362, %v5951
        %v5953 = vpop.f32.mrf.mxu0
        %v5954 = vadd.f32 %v1358, %v5953
        %v5955 = vpop.f32.mrf.mxu0
        %v5956 = vadd.f32 %v1362, %v5955
        %5957 = vmatprep.mubr.bf16.mxu0 %v506
        %5958 = vmatmul.mubr.bf16.gmra.mxu0 %v505
        %v5959 = vpop.f32.mrf.mxu0
        %v5960 = vadd.f32 %v1358, %v5959
        %v5961 = vpop.f32.mrf.mxu0
        %v5962 = vadd.f32 %v1362, %v5961
        %v5963 = vpop.f32.mrf.mxu0
        %v5964 = vadd.f32 %v1358, %v5963
        %v5965 = vpop.f32.mrf.mxu0
        %v5966 = vadd.f32 %v1362, %v5965
        %5967 = vmatprep.mubr.bf16.mxu0 %v518
        %5968 = vmatmul.mubr.bf16.gmra.mxu0 %v517
        %v5969 = vpop.f32.mrf.mxu0
        %v5970 = vadd.f32 %v1358, %v5969
        %v5971 = vpop.f32.mrf.mxu0
        %v5972 = vadd.f32 %v1362, %v5971
        %v5973 = vpop.f32.mrf.mxu0
        %v5974 = vadd.f32 %v1358, %v5973
        %v5975 = vpop.f32.mrf.mxu0
        %v5976 = vadd.f32 %v1362, %v5975
        %5977 = vmatprep.mubr.bf16.mxu0 %v530
        %5978 = vmatmul.mubr.bf16.gmra.mxu0 %v529
        %v5979 = vpop.f32.mrf.mxu0
        %v5980 = vadd.f32 %v1358, %v5979
        %v5981 = vpop.f32.mrf.mxu0
        %v5982 = vadd.f32 %v1362, %v5981
        %v5983 = vpop.f32.mrf.mxu0
        %v5984 = vadd.f32 %v1358, %v5983
        %v5985 = vpop.f32.mrf.mxu0
        %v5986 = vadd.f32 %v1362, %v5985
        %5987 = vmatprep.mubr.bf16.mxu0 %v542
        %5988 = vmatmul.mubr.bf16.gmra.mxu0 %v541
        %v5989 = vpop.f32.mrf.mxu0
        %v5990 = vadd.f32 %v1358, %v5989
        %v5991 = vpop.f32.mrf.mxu0
        %v5992 = vadd.f32 %v1362, %v5991
        %v5993 = vpop.f32.mrf.mxu0
        %v5994 = vadd.f32 %v1358, %v5993
        %v5995 = vpop.f32.mrf.mxu0
        %v5996 = vadd.f32 %v1362, %v5995
        %5997 = vmatprep.mubr.bf16.mxu0 %v554
        %5998 = vmatmul.mubr.bf16.gmra.mxu0 %v553
        %v5999 = vpop.f32.mrf.mxu0
        %v6000 = vadd.f32 %v1358, %v5999
        %v6001 = vpop.f32.mrf.mxu0
        %v6002 = vadd.f32 %v1362, %v6001
        %v6003 = vpop.f32.mrf.mxu0
        %v6004 = vadd.f32 %v1358, %v6003
        %v6005 = vpop.f32.mrf.mxu0
        %v6006 = vadd.f32 %v1362, %v6005
        %6007 = vmatprep.mubr.bf16.mxu0 %v566
        %6008 = vmatmul.mubr.bf16.gmra.mxu0 %v565
        %v6009 = vpop.f32.mrf.mxu0
        %v6010 = vadd.f32 %v1358, %v6009
        %v6011 = vpop.f32.mrf.mxu0
        %v6012 = vadd.f32 %v1362, %v6011
        %v6013 = vpop.f32.mrf.mxu0
        %v6014 = vadd.f32 %v1358, %v6013
        %v6015 = vpop.f32.mrf.mxu0
        %v6016 = vadd.f32 %v1362, %v6015
        %6017 = vdwg.mxu0
        %6018 = vmatprep.subr.bf16.mxu0 %v3878
        %6019 = vmatpush1.bf16.msra.mxu0 %v3877
        %6020 = vmatprep.subr.bf16.mxu0 %v3870
        %6021 = vmatpush1.bf16.msra.mxu0 %v3869
        %6022 = vmatprep.subr.bf16.mxu0 %v3862
        %6023 = vmatpush1.bf16.msra.mxu0 %v3861
        %6024 = vmatprep.subr.bf16.mxu0 %v3854
        %6025 = vmatpush1.bf16.msra.mxu0 %v3853
        %6026 = vmatprep.subr.bf16.mxu0 %v3846
        %6027 = vmatpush1.bf16.msra.mxu0 %v3845
        %6028 = vmatprep.subr.bf16.mxu0 %v3838
        %6029 = vmatpush1.bf16.msra.mxu0 %v3837
        %6030 = vmatprep.subr.bf16.mxu0 %v3830
        %6031 = vmatpush1.bf16.msra.mxu0 %v3829
        %6032 = vmatprep.subr.bf16.mxu0 %v3822
        %6033 = vmatpush1.bf16.msra.mxu0 %v3821
        %6034 = vmatprep.subr.bf16.mxu0 %v3942
        %6035 = vmatpush2.bf16.msra.mxu0 %v3941
        %6036 = vmatprep.subr.bf16.mxu0 %v3934
        %6037 = vmatpush2.bf16.msra.mxu0 %v3933
        %6038 = vmatprep.subr.bf16.mxu0 %v3926
        %6039 = vmatpush2.bf16.msra.mxu0 %v3925
        %6040 = vmatprep.subr.bf16.mxu0 %v3918
        %6041 = vmatpush2.bf16.msra.mxu0 %v3917
        %6042 = vmatprep.subr.bf16.mxu0 %v3910
        %6043 = vmatpush2.bf16.msra.mxu0 %v3909
        %6044 = vmatprep.subr.bf16.mxu0 %v3902
        %6045 = vmatpush2.bf16.msra.mxu0 %v3901
        %6046 = vmatprep.subr.bf16.mxu0 %v3894
        %6047 = vmatpush2.bf16.msra.mxu0 %v3893
        %6048 = vmatprep.subr.bf16.mxu0 %v3886
        %6049 = vmatpush2.bf16.msra.mxu0 %v3885
        %6050 = vmatprep.mubr.bf16.mxu0 %v484
        %6051 = vmatmul.mubr.bf16.gmra.mxu0 %v483
        %v6052 = vpop.f32.mrf.mxu0
        %v6053 = vadd.f32 %v5940, %v6052
        %v6054 = vpop.f32.mrf.mxu0
        %v6055 = vadd.f32 %v5942, %v6054
        %v6056 = vpop.f32.mrf.mxu0
        %v6057 = vadd.f32 %v5944, %v6056
        %v6058 = vpop.f32.mrf.mxu0
        %v6059 = vadd.f32 %v5946, %v6058
        %6060 = vmatprep.mubr.bf16.mxu0 %v496
        %6061 = vmatmul.mubr.bf16.gmra.mxu0 %v495
        %v6062 = vpop.f32.mrf.mxu0
        %v6063 = vadd.f32 %v5950, %v6062
        %v6064 = vpop.f32.mrf.mxu0
        %v6065 = vadd.f32 %v5952, %v6064
        %v6066 = vpop.f32.mrf.mxu0
        %v6067 = vadd.f32 %v5954, %v6066
        %v6068 = vpop.f32.mrf.mxu0
        %v6069 = vadd.f32 %v5956, %v6068
        %6070 = vmatprep.mubr.bf16.mxu0 %v508
        %6071 = vmatmul.mubr.bf16.gmra.mxu0 %v507
        %v6072 = vpop.f32.mrf.mxu0
        %v6073 = vadd.f32 %v5960, %v6072
        %v6074 = vpop.f32.mrf.mxu0
        %v6075 = vadd.f32 %v5962, %v6074
        %v6076 = vpop.f32.mrf.mxu0
        %v6077 = vadd.f32 %v5964, %v6076
        %v6078 = vpop.f32.mrf.mxu0
        %v6079 = vadd.f32 %v5966, %v6078
        %6080 = vmatprep.mubr.bf16.mxu0 %v520
        %6081 = vmatmul.mubr.bf16.gmra.mxu0 %v519
        %v6082 = vpop.f32.mrf.mxu0
        %v6083 = vadd.f32 %v5970, %v6082
        %v6084 = vpop.f32.mrf.mxu0
        %v6085 = vadd.f32 %v5972, %v6084
        %v6086 = vpop.f32.mrf.mxu0
        %v6087 = vadd.f32 %v5974, %v6086
        %v6088 = vpop.f32.mrf.mxu0
        %v6089 = vadd.f32 %v5976, %v6088
        %6090 = vmatprep.mubr.bf16.mxu0 %v532
        %6091 = vmatmul.mubr.bf16.gmra.mxu0 %v531
        %v6092 = vpop.f32.mrf.mxu0
        %v6093 = vadd.f32 %v5980, %v6092
        %v6094 = vpop.f32.mrf.mxu0
        %v6095 = vadd.f32 %v5982, %v6094
        %v6096 = vpop.f32.mrf.mxu0
        %v6097 = vadd.f32 %v5984, %v6096
        %v6098 = vpop.f32.mrf.mxu0
        %v6099 = vadd.f32 %v5986, %v6098
        %6100 = vmatprep.mubr.bf16.mxu0 %v544
        %6101 = vmatmul.mubr.bf16.gmra.mxu0 %v543
        %v6102 = vpop.f32.mrf.mxu0
        %v6103 = vadd.f32 %v5990, %v6102
        %v6104 = vpop.f32.mrf.mxu0
        %v6105 = vadd.f32 %v5992, %v6104
        %v6106 = vpop.f32.mrf.mxu0
        %v6107 = vadd.f32 %v5994, %v6106
        %v6108 = vpop.f32.mrf.mxu0
        %v6109 = vadd.f32 %v5996, %v6108
        %6110 = vmatprep.mubr.bf16.mxu0 %v556
        %6111 = vmatmul.mubr.bf16.gmra.mxu0 %v555
        %v6112 = vpop.f32.mrf.mxu0
        %v6113 = vadd.f32 %v6000, %v6112
        %v6114 = vpop.f32.mrf.mxu0
        %v6115 = vadd.f32 %v6002, %v6114
        %v6116 = vpop.f32.mrf.mxu0
        %v6117 = vadd.f32 %v6004, %v6116
        %v6118 = vpop.f32.mrf.mxu0
        %v6119 = vadd.f32 %v6006, %v6118
        %6120 = vmatprep.mubr.bf16.mxu0 %v568
        %6121 = vmatmul.mubr.bf16.gmra.mxu0 %v567
        %v6122 = vpop.f32.mrf.mxu0
        %v6123 = vadd.f32 %v6010, %v6122
        %v6124 = vpop.f32.mrf.mxu0
        %v6125 = vadd.f32 %v6012, %v6124
        %v6126 = vpop.f32.mrf.mxu0
        %v6127 = vadd.f32 %v6014, %v6126
        %v6128 = vpop.f32.mrf.mxu0
        %v6129 = vadd.f32 %v6016, %v6128
        %6130 = vdwg.mxu0
        %6131 = vmatprep.subr.bf16.mxu0 %v4006
        %6132 = vmatpush1.bf16.msra.mxu0 %v4005
        %6133 = vmatprep.subr.bf16.mxu0 %v3998
        %6134 = vmatpush1.bf16.msra.mxu0 %v3997
        %6135 = vmatprep.subr.bf16.mxu0 %v3990
        %6136 = vmatpush1.bf16.msra.mxu0 %v3989
        %6137 = vmatprep.subr.bf16.mxu0 %v3982
        %6138 = vmatpush1.bf16.msra.mxu0 %v3981
        %6139 = vmatprep.subr.bf16.mxu0 %v3974
        %6140 = vmatpush1.bf16.msra.mxu0 %v3973
        %6141 = vmatprep.subr.bf16.mxu0 %v3966
        %6142 = vmatpush1.bf16.msra.mxu0 %v3965
        %6143 = vmatprep.subr.bf16.mxu0 %v3958
        %6144 = vmatpush1.bf16.msra.mxu0 %v3957
        %6145 = vmatprep.subr.bf16.mxu0 %v3950
        %6146 = vmatpush1.bf16.msra.mxu0 %v3949
        %6147 = vmatprep.subr.bf16.mxu0 %v4070
        %6148 = vmatpush2.bf16.msra.mxu0 %v4069
        %6149 = vmatprep.subr.bf16.mxu0 %v4062
        %6150 = vmatpush2.bf16.msra.mxu0 %v4061
        %6151 = vmatprep.subr.bf16.mxu0 %v4054
        %6152 = vmatpush2.bf16.msra.mxu0 %v4053
        %6153 = vmatprep.subr.bf16.mxu0 %v4046
        %6154 = vmatpush2.bf16.msra.mxu0 %v4045
        %6155 = vmatprep.subr.bf16.mxu0 %v4038
        %6156 = vmatpush2.bf16.msra.mxu0 %v4037
        %6157 = vmatprep.subr.bf16.mxu0 %v4030
        %6158 = vmatpush2.bf16.msra.mxu0 %v4029
        %6159 = vmatprep.subr.bf16.mxu0 %v4022
        %6160 = vmatpush2.bf16.msra.mxu0 %v4021
        %6161 = vmatprep.subr.bf16.mxu0 %v4014
        %6162 = vmatpush2.bf16.msra.mxu0 %v4013
        %6163 = vmatprep.mubr.bf16.mxu0 %v486
        %6164 = vmatmul.mubr.bf16.gmra.mxu0 %v485
        %v6165 = vpop.f32.mrf.mxu0
        %v6166 = vadd.f32 %v6053, %v6165
        %v6167 = vpop.f32.mrf.mxu0
        %v6168 = vadd.f32 %v6055, %v6167
        %v6169 = vpop.f32.mrf.mxu0
        %v6170 = vadd.f32 %v6057, %v6169
        %v6171 = vpop.f32.mrf.mxu0
        %v6172 = vadd.f32 %v6059, %v6171
        %6173 = vmatprep.mubr.bf16.mxu0 %v498
        %6174 = vmatmul.mubr.bf16.gmra.mxu0 %v497
        %v6175 = vpop.f32.mrf.mxu0
        %v6176 = vadd.f32 %v6063, %v6175
        %v6177 = vpop.f32.mrf.mxu0
        %v6178 = vadd.f32 %v6065, %v6177
        %v6179 = vpop.f32.mrf.mxu0
        %v6180 = vadd.f32 %v6067, %v6179
        %v6181 = vpop.f32.mrf.mxu0
        %v6182 = vadd.f32 %v6069, %v6181
        %6183 = vmatprep.mubr.bf16.mxu0 %v510
        %6184 = vmatmul.mubr.bf16.gmra.mxu0 %v509
        %v6185 = vpop.f32.mrf.mxu0
        %v6186 = vadd.f32 %v6073, %v6185
        %v6187 = vpop.f32.mrf.mxu0
        %v6188 = vadd.f32 %v6075, %v6187
        %v6189 = vpop.f32.mrf.mxu0
        %v6190 = vadd.f32 %v6077, %v6189
        %v6191 = vpop.f32.mrf.mxu0
        %v6192 = vadd.f32 %v6079, %v6191
        %6193 = vmatprep.mubr.bf16.mxu0 %v522
        %6194 = vmatmul.mubr.bf16.gmra.mxu0 %v521
        %v6195 = vpop.f32.mrf.mxu0
        %v6196 = vadd.f32 %v6083, %v6195
        %v6197 = vpop.f32.mrf.mxu0
        %v6198 = vadd.f32 %v6085, %v6197
        %v6199 = vpop.f32.mrf.mxu0
        %v6200 = vadd.f32 %v6087, %v6199
        %v6201 = vpop.f32.mrf.mxu0
        %v6202 = vadd.f32 %v6089, %v6201
        %6203 = vmatprep.mubr.bf16.mxu0 %v534
        %6204 = vmatmul.mubr.bf16.gmra.mxu0 %v533
        %v6205 = vpop.f32.mrf.mxu0
        %v6206 = vadd.f32 %v6093, %v6205
        %v6207 = vpop.f32.mrf.mxu0
        %v6208 = vadd.f32 %v6095, %v6207
        %v6209 = vpop.f32.mrf.mxu0
        %v6210 = vadd.f32 %v6097, %v6209
        %v6211 = vpop.f32.mrf.mxu0
        %v6212 = vadd.f32 %v6099, %v6211
        %6213 = vmatprep.mubr.bf16.mxu0 %v546
        %6214 = vmatmul.mubr.bf16.gmra.mxu0 %v545
        %v6215 = vpop.f32.mrf.mxu0
        %v6216 = vadd.f32 %v6103, %v6215
        %v6217 = vpop.f32.mrf.mxu0
        %v6218 = vadd.f32 %v6105, %v6217
        %v6219 = vpop.f32.mrf.mxu0
        %v6220 = vadd.f32 %v6107, %v6219
        %v6221 = vpop.f32.mrf.mxu0
        %v6222 = vadd.f32 %v6109, %v6221
        %6223 = vmatprep.mubr.bf16.mxu0 %v558
        %6224 = vmatmul.mubr.bf16.gmra.mxu0 %v557
        %v6225 = vpop.f32.mrf.mxu0
        %v6226 = vadd.f32 %v6113, %v6225
        %v6227 = vpop.f32.mrf.mxu0
        %v6228 = vadd.f32 %v6115, %v6227
        %v6229 = vpop.f32.mrf.mxu0
        %v6230 = vadd.f32 %v6117, %v6229
        %v6231 = vpop.f32.mrf.mxu0
        %v6232 = vadd.f32 %v6119, %v6231
        %6233 = vmatprep.mubr.bf16.mxu0 %v570
        %6234 = vmatmul.mubr.bf16.gmra.mxu0 %v569
        %v6235 = vpop.f32.mrf.mxu0
        %v6236 = vadd.f32 %v6123, %v6235
        %v6237 = vpop.f32.mrf.mxu0
        %v6238 = vadd.f32 %v6125, %v6237
        %v6239 = vpop.f32.mrf.mxu0
        %v6240 = vadd.f32 %v6127, %v6239
        %v6241 = vpop.f32.mrf.mxu0
        %v6242 = vadd.f32 %v6129, %v6241
        %6243 = vdwg.mxu0
        %6244 = vmatprep.subr.bf16.mxu0 %v4134
        %6245 = vmatpush1.bf16.msra.mxu0 %v4133
        %6246 = vmatprep.subr.bf16.mxu0 %v4126
        %6247 = vmatpush1.bf16.msra.mxu0 %v4125
        %6248 = vmatprep.subr.bf16.mxu0 %v4118
        %6249 = vmatpush1.bf16.msra.mxu0 %v4117
        %6250 = vmatprep.subr.bf16.mxu0 %v4110
        %6251 = vmatpush1.bf16.msra.mxu0 %v4109
        %6252 = vmatprep.subr.bf16.mxu0 %v4102
        %6253 = vmatpush1.bf16.msra.mxu0 %v4101
        %6254 = vmatprep.subr.bf16.mxu0 %v4094
        %6255 = vmatpush1.bf16.msra.mxu0 %v4093
        %6256 = vmatprep.subr.bf16.mxu0 %v4086
        %6257 = vmatpush1.bf16.msra.mxu0 %v4085
        %6258 = vmatprep.subr.bf16.mxu0 %v4078
        %6259 = vmatpush1.bf16.msra.mxu0 %v4077
        %6260 = vmatprep.subr.bf16.mxu0 %v4198
        %6261 = vmatpush2.bf16.msra.mxu0 %v4197
        %6262 = vmatprep.subr.bf16.mxu0 %v4190
        %6263 = vmatpush2.bf16.msra.mxu0 %v4189
        %6264 = vmatprep.subr.bf16.mxu0 %v4182
        %6265 = vmatpush2.bf16.msra.mxu0 %v4181
        %6266 = vmatprep.subr.bf16.mxu0 %v4174
        %6267 = vmatpush2.bf16.msra.mxu0 %v4173
        %6268 = vmatprep.subr.bf16.mxu0 %v4166
        %6269 = vmatpush2.bf16.msra.mxu0 %v4165
        %6270 = vmatprep.subr.bf16.mxu0 %v4158
        %6271 = vmatpush2.bf16.msra.mxu0 %v4157
        %6272 = vmatprep.subr.bf16.mxu0 %v4150
        %6273 = vmatpush2.bf16.msra.mxu0 %v4149
        %6274 = vmatprep.subr.bf16.mxu0 %v4142
        %6275 = vmatpush2.bf16.msra.mxu0 %v4141
        %6276 = vmatprep.mubr.bf16.mxu0 %v488
        %6277 = vmatmul.mubr.bf16.gmra.mxu0 %v487
        %v6278 = vpop.f32.mrf.mxu0
        %v6279 = vadd.f32 %v6166, %v6278
        %v6280 = vpop.f32.mrf.mxu0
        %v6281 = vadd.f32 %v6168, %v6280
        %v6282 = vpop.f32.mrf.mxu0
        %v6283 = vadd.f32 %v6170, %v6282
        %v6284 = vpop.f32.mrf.mxu0
        %v6285 = vadd.f32 %v6172, %v6284
        %6286 = vmatprep.mubr.bf16.mxu0 %v500
        %6287 = vmatmul.mubr.bf16.gmra.mxu0 %v499
        %v6288 = vpop.f32.mrf.mxu0
        %v6289 = vadd.f32 %v6176, %v6288
        %v6290 = vpop.f32.mrf.mxu0
        %v6291 = vadd.f32 %v6178, %v6290
        %v6292 = vpop.f32.mrf.mxu0
        %v6293 = vadd.f32 %v6180, %v6292
        %v6294 = vpop.f32.mrf.mxu0
        %v6295 = vadd.f32 %v6182, %v6294
        %6296 = vmatprep.mubr.bf16.mxu0 %v512
        %6297 = vmatmul.mubr.bf16.gmra.mxu0 %v511
        %v6298 = vpop.f32.mrf.mxu0
        %v6299 = vadd.f32 %v6186, %v6298
        %v6300 = vpop.f32.mrf.mxu0
        %v6301 = vadd.f32 %v6188, %v6300
        %v6302 = vpop.f32.mrf.mxu0
        %v6303 = vadd.f32 %v6190, %v6302
        %v6304 = vpop.f32.mrf.mxu0
        %v6305 = vadd.f32 %v6192, %v6304
        %6306 = vmatprep.mubr.bf16.mxu0 %v524
        %6307 = vmatmul.mubr.bf16.gmra.mxu0 %v523
        %v6308 = vpop.f32.mrf.mxu0
        %v6309 = vadd.f32 %v6196, %v6308
        %v6310 = vpop.f32.mrf.mxu0
        %v6311 = vadd.f32 %v6198, %v6310
        %v6312 = vpop.f32.mrf.mxu0
        %v6313 = vadd.f32 %v6200, %v6312
        %v6314 = vpop.f32.mrf.mxu0
        %v6315 = vadd.f32 %v6202, %v6314
        %6316 = vmatprep.mubr.bf16.mxu0 %v536
        %6317 = vmatmul.mubr.bf16.gmra.mxu0 %v535
        %v6318 = vpop.f32.mrf.mxu0
        %v6319 = vadd.f32 %v6206, %v6318
        %v6320 = vpop.f32.mrf.mxu0
        %v6321 = vadd.f32 %v6208, %v6320
        %v6322 = vpop.f32.mrf.mxu0
        %v6323 = vadd.f32 %v6210, %v6322
        %v6324 = vpop.f32.mrf.mxu0
        %v6325 = vadd.f32 %v6212, %v6324
        %6326 = vmatprep.mubr.bf16.mxu0 %v548
        %6327 = vmatmul.mubr.bf16.gmra.mxu0 %v547
        %v6328 = vpop.f32.mrf.mxu0
        %v6329 = vadd.f32 %v6216, %v6328
        %v6330 = vpop.f32.mrf.mxu0
        %v6331 = vadd.f32 %v6218, %v6330
        %v6332 = vpop.f32.mrf.mxu0
        %v6333 = vadd.f32 %v6220, %v6332
        %v6334 = vpop.f32.mrf.mxu0
        %v6335 = vadd.f32 %v6222, %v6334
        %6336 = vmatprep.mubr.bf16.mxu0 %v560
        %6337 = vmatmul.mubr.bf16.gmra.mxu0 %v559
        %v6338 = vpop.f32.mrf.mxu0
        %v6339 = vadd.f32 %v6226, %v6338
        %v6340 = vpop.f32.mrf.mxu0
        %v6341 = vadd.f32 %v6228, %v6340
        %v6342 = vpop.f32.mrf.mxu0
        %v6343 = vadd.f32 %v6230, %v6342
        %v6344 = vpop.f32.mrf.mxu0
        %v6345 = vadd.f32 %v6232, %v6344
        %6346 = vmatprep.mubr.bf16.mxu0 %v572
        %6347 = vmatmul.mubr.bf16.gmra.mxu0 %v571
        %v6348 = vpop.f32.mrf.mxu0
        %v6349 = vadd.f32 %v6236, %v6348
        %v6350 = vpop.f32.mrf.mxu0
        %v6351 = vadd.f32 %v6238, %v6350
        %v6352 = vpop.f32.mrf.mxu0
        %v6353 = vadd.f32 %v6240, %v6352
        %v6354 = vpop.f32.mrf.mxu0
        %v6355 = vadd.f32 %v6242, %v6354
        %6356 = vdwg.mxu0
        %6357 = vmatprep.subr.bf16.mxu0 %v4262
        %6358 = vmatpush1.bf16.msra.mxu0 %v4261
        %6359 = vmatprep.subr.bf16.mxu0 %v4254
        %6360 = vmatpush1.bf16.msra.mxu0 %v4253
        %6361 = vmatprep.subr.bf16.mxu0 %v4246
        %6362 = vmatpush1.bf16.msra.mxu0 %v4245
        %6363 = vmatprep.subr.bf16.mxu0 %v4238
        %6364 = vmatpush1.bf16.msra.mxu0 %v4237
        %6365 = vmatprep.subr.bf16.mxu0 %v4230
        %6366 = vmatpush1.bf16.msra.mxu0 %v4229
        %6367 = vmatprep.subr.bf16.mxu0 %v4222
        %6368 = vmatpush1.bf16.msra.mxu0 %v4221
        %6369 = vmatprep.subr.bf16.mxu0 %v4214
        %6370 = vmatpush1.bf16.msra.mxu0 %v4213
        %6371 = vmatprep.subr.bf16.mxu0 %v4206
        %6372 = vmatpush1.bf16.msra.mxu0 %v4205
        %6373 = vmatprep.subr.bf16.mxu0 %v4326
        %6374 = vmatpush2.bf16.msra.mxu0 %v4325
        %6375 = vmatprep.subr.bf16.mxu0 %v4318
        %6376 = vmatpush2.bf16.msra.mxu0 %v4317
        %6377 = vmatprep.subr.bf16.mxu0 %v4310
        %6378 = vmatpush2.bf16.msra.mxu0 %v4309
        %6379 = vmatprep.subr.bf16.mxu0 %v4302
        %6380 = vmatpush2.bf16.msra.mxu0 %v4301
        %6381 = vmatprep.subr.bf16.mxu0 %v4294
        %6382 = vmatpush2.bf16.msra.mxu0 %v4293
        %6383 = vmatprep.subr.bf16.mxu0 %v4286
        %6384 = vmatpush2.bf16.msra.mxu0 %v4285
        %6385 = vmatprep.subr.bf16.mxu0 %v4278
        %6386 = vmatpush2.bf16.msra.mxu0 %v4277
        %6387 = vmatprep.subr.bf16.mxu0 %v4270
        %6388 = vmatpush2.bf16.msra.mxu0 %v4269
        %6389 = vmatprep.mubr.bf16.mxu0 %v490
        %6390 = vmatmul.mubr.bf16.gmra.mxu0 %v489
        %v6391 = vpop.f32.mrf.mxu0
        %v6392 = vadd.f32 %v6279, %v6391
        %v6393 = vpop.f32.mrf.mxu0
        %v6394 = vadd.f32 %v6281, %v6393
        %v6395 = vpop.f32.mrf.mxu0
        %v6396 = vadd.f32 %v6283, %v6395
        %v6397 = vpop.f32.mrf.mxu0
        %v6398 = vadd.f32 %v6285, %v6397
        %6399 = vmatprep.mubr.bf16.mxu0 %v502
        %6400 = vmatmul.mubr.bf16.gmra.mxu0 %v501
        %v6401 = vpop.f32.mrf.mxu0
        %v6402 = vadd.f32 %v6289, %v6401
        %v6403 = vpop.f32.mrf.mxu0
        %v6404 = vadd.f32 %v6291, %v6403
        %v6405 = vpop.f32.mrf.mxu0
        %v6406 = vadd.f32 %v6293, %v6405
        %v6407 = vpop.f32.mrf.mxu0
        %v6408 = vadd.f32 %v6295, %v6407
        %6409 = vmatprep.mubr.bf16.mxu0 %v514
        %6410 = vmatmul.mubr.bf16.gmra.mxu0 %v513
        %v6411 = vpop.f32.mrf.mxu0
        %v6412 = vadd.f32 %v6299, %v6411
        %v6413 = vpop.f32.mrf.mxu0
        %v6414 = vadd.f32 %v6301, %v6413
        %v6415 = vpop.f32.mrf.mxu0
        %v6416 = vadd.f32 %v6303, %v6415
        %v6417 = vpop.f32.mrf.mxu0
        %v6418 = vadd.f32 %v6305, %v6417
        %6419 = vmatprep.mubr.bf16.mxu0 %v526
        %6420 = vmatmul.mubr.bf16.gmra.mxu0 %v525
        %v6421 = vpop.f32.mrf.mxu0
        %v6422 = vadd.f32 %v6309, %v6421
        %v6423 = vpop.f32.mrf.mxu0
        %v6424 = vadd.f32 %v6311, %v6423
        %v6425 = vpop.f32.mrf.mxu0
        %v6426 = vadd.f32 %v6313, %v6425
        %v6427 = vpop.f32.mrf.mxu0
        %v6428 = vadd.f32 %v6315, %v6427
        %6429 = vmatprep.mubr.bf16.mxu0 %v538
        %6430 = vmatmul.mubr.bf16.gmra.mxu0 %v537
        %v6431 = vpop.f32.mrf.mxu0
        %v6432 = vadd.f32 %v6319, %v6431
        %v6433 = vpop.f32.mrf.mxu0
        %v6434 = vadd.f32 %v6321, %v6433
        %v6435 = vpop.f32.mrf.mxu0
        %v6436 = vadd.f32 %v6323, %v6435
        %v6437 = vpop.f32.mrf.mxu0
        %v6438 = vadd.f32 %v6325, %v6437
        %6439 = vmatprep.mubr.bf16.mxu0 %v550
        %6440 = vmatmul.mubr.bf16.gmra.mxu0 %v549
        %v6441 = vpop.f32.mrf.mxu0
        %v6442 = vadd.f32 %v6329, %v6441
        %v6443 = vpop.f32.mrf.mxu0
        %v6444 = vadd.f32 %v6331, %v6443
        %v6445 = vpop.f32.mrf.mxu0
        %v6446 = vadd.f32 %v6333, %v6445
        %v6447 = vpop.f32.mrf.mxu0
        %v6448 = vadd.f32 %v6335, %v6447
        %6449 = vmatprep.mubr.bf16.mxu0 %v562
        %6450 = vmatmul.mubr.bf16.gmra.mxu0 %v561
        %v6451 = vpop.f32.mrf.mxu0
        %v6452 = vadd.f32 %v6339, %v6451
        %v6453 = vpop.f32.mrf.mxu0
        %v6454 = vadd.f32 %v6341, %v6453
        %v6455 = vpop.f32.mrf.mxu0
        %v6456 = vadd.f32 %v6343, %v6455
        %v6457 = vpop.f32.mrf.mxu0
        %v6458 = vadd.f32 %v6345, %v6457
        %6459 = vmatprep.mubr.bf16.mxu0 %v574
        %6460 = vmatmul.mubr.bf16.gmra.mxu0 %v573
        %v6461 = vpop.f32.mrf.mxu0
        %v6462 = vadd.f32 %v6349, %v6461
        %v6463 = vpop.f32.mrf.mxu0
        %v6464 = vadd.f32 %v6351, %v6463
        %v6465 = vpop.f32.mrf.mxu0
        %v6466 = vadd.f32 %v6353, %v6465
        %v6467 = vpop.f32.mrf.mxu0
        %v6468 = vadd.f32 %v6355, %v6467
        %6469 = vdwg.mxu0
        %6470 = vmatprep.subr.bf16.mxu0 %v4390
        %6471 = vmatpush1.bf16.msra.mxu0 %v4389
        %6472 = vmatprep.subr.bf16.mxu0 %v4382
        %6473 = vmatpush1.bf16.msra.mxu0 %v4381
        %6474 = vmatprep.subr.bf16.mxu0 %v4374
        %6475 = vmatpush1.bf16.msra.mxu0 %v4373
        %6476 = vmatprep.subr.bf16.mxu0 %v4366
        %6477 = vmatpush1.bf16.msra.mxu0 %v4365
        %6478 = vmatprep.subr.bf16.mxu0 %v4358
        %6479 = vmatpush1.bf16.msra.mxu0 %v4357
        %6480 = vmatprep.subr.bf16.mxu0 %v4350
        %6481 = vmatpush1.bf16.msra.mxu0 %v4349
        %6482 = vmatprep.subr.bf16.mxu0 %v4342
        %6483 = vmatpush1.bf16.msra.mxu0 %v4341
        %6484 = vmatprep.subr.bf16.mxu0 %v4334
        %6485 = vmatpush1.bf16.msra.mxu0 %v4333
        %6486 = vmatprep.subr.bf16.mxu0 %v4454
        %6487 = vmatpush2.bf16.msra.mxu0 %v4453
        %6488 = vmatprep.subr.bf16.mxu0 %v4446
        %6489 = vmatpush2.bf16.msra.mxu0 %v4445
        %6490 = vmatprep.subr.bf16.mxu0 %v4438
        %6491 = vmatpush2.bf16.msra.mxu0 %v4437
        %6492 = vmatprep.subr.bf16.mxu0 %v4430
        %6493 = vmatpush2.bf16.msra.mxu0 %v4429
        %6494 = vmatprep.subr.bf16.mxu0 %v4422
        %6495 = vmatpush2.bf16.msra.mxu0 %v4421
        %6496 = vmatprep.subr.bf16.mxu0 %v4414
        %6497 = vmatpush2.bf16.msra.mxu0 %v4413
        %6498 = vmatprep.subr.bf16.mxu0 %v4406
        %6499 = vmatpush2.bf16.msra.mxu0 %v4405
        %6500 = vmatprep.subr.bf16.mxu0 %v4398
        %6501 = vmatpush2.bf16.msra.mxu0 %v4397
        %6502 = vmatprep.mubr.bf16.mxu0 %v492
        %6503 = vmatmul.mubr.bf16.gmra.mxu0 %v491
        %v6504 = vpop.f32.mrf.mxu0
        %v6505 = vadd.f32 %v6392, %v6504
        %v6506 = vpop.f32.mrf.mxu0
        %v6507 = vadd.f32 %v6394, %v6506
        %v6508 = vpop.f32.mrf.mxu0
        %v6509 = vadd.f32 %v6396, %v6508
        %v6510 = vpop.f32.mrf.mxu0
        %v6511 = vadd.f32 %v6398, %v6510
        %6512 = vmatprep.mubr.bf16.mxu0 %v504
        %6513 = vmatmul.mubr.bf16.gmra.mxu0 %v503
        %v6514 = vpop.f32.mrf.mxu0
        %v6515 = vadd.f32 %v6402, %v6514
        %v6516 = vpop.f32.mrf.mxu0
        %v6517 = vadd.f32 %v6404, %v6516
        %v6518 = vpop.f32.mrf.mxu0
        %v6519 = vadd.f32 %v6406, %v6518
        %v6520 = vpop.f32.mrf.mxu0
        %v6521 = vadd.f32 %v6408, %v6520
        %6522 = vmatprep.mubr.bf16.mxu0 %v516
        %6523 = vmatmul.mubr.bf16.gmra.mxu0 %v515
        %v6524 = vpop.f32.mrf.mxu0
        %v6525 = vadd.f32 %v6412, %v6524
        %v6526 = vpop.f32.mrf.mxu0
        %v6527 = vadd.f32 %v6414, %v6526
        %v6528 = vpop.f32.mrf.mxu0
        %v6529 = vadd.f32 %v6416, %v6528
        %v6530 = vpop.f32.mrf.mxu0
        %v6531 = vadd.f32 %v6418, %v6530
        %6532 = vmatprep.mubr.bf16.mxu0 %v528
        %6533 = vmatmul.mubr.bf16.gmra.mxu0 %v527
        %v6534 = vpop.f32.mrf.mxu0
        %v6535 = vadd.f32 %v6422, %v6534
        %v6536 = vpop.f32.mrf.mxu0
        %v6537 = vadd.f32 %v6424, %v6536
        %v6538 = vpop.f32.mrf.mxu0
        %v6539 = vadd.f32 %v6426, %v6538
        %v6540 = vpop.f32.mrf.mxu0
        %v6541 = vadd.f32 %v6428, %v6540
        %6542 = vmatprep.mubr.bf16.mxu0 %v540
        %6543 = vmatmul.mubr.bf16.gmra.mxu0 %v539
        %v6544 = vpop.f32.mrf.mxu0
        %v6545 = vadd.f32 %v6432, %v6544
        %v6546 = vpop.f32.mrf.mxu0
        %v6547 = vadd.f32 %v6434, %v6546
        %v6548 = vpop.f32.mrf.mxu0
        %v6549 = vadd.f32 %v6436, %v6548
        %v6550 = vpop.f32.mrf.mxu0
        %v6551 = vadd.f32 %v6438, %v6550
        %6552 = vmatprep.mubr.bf16.mxu0 %v552
        %6553 = vmatmul.mubr.bf16.gmra.mxu0 %v551
        %v6554 = vpop.f32.mrf.mxu0
        %v6555 = vadd.f32 %v6442, %v6554
        %v6556 = vpop.f32.mrf.mxu0
        %v6557 = vadd.f32 %v6444, %v6556
        %v6558 = vpop.f32.mrf.mxu0
        %v6559 = vadd.f32 %v6446, %v6558
        %v6560 = vpop.f32.mrf.mxu0
        %v6561 = vadd.f32 %v6448, %v6560
        %6562 = vmatprep.mubr.bf16.mxu0 %v564
        %6563 = vmatmul.mubr.bf16.gmra.mxu0 %v563
        %v6564 = vpop.f32.mrf.mxu0
        %v6565 = vadd.f32 %v6452, %v6564
        %v6566 = vpop.f32.mrf.mxu0
        %v6567 = vadd.f32 %v6454, %v6566
        %v6568 = vpop.f32.mrf.mxu0
        %v6569 = vadd.f32 %v6456, %v6568
        %v6570 = vpop.f32.mrf.mxu0
        %v6571 = vadd.f32 %v6458, %v6570
        %6572 = vmatprep.mubr.bf16.mxu0 %v576
        %6573 = vmatmul.mubr.bf16.gmra.mxu0 %v575
        %v6574 = vpop.f32.mrf.mxu0
        %v6575 = vadd.f32 %v6462, %v6574
        %v6576 = vpop.f32.mrf.mxu0
        %v6577 = vadd.f32 %v6464, %v6576
        %v6578 = vpop.f32.mrf.mxu0
        %v6579 = vadd.f32 %v6466, %v6578
        %v6580 = vpop.f32.mrf.mxu0
        %v6581 = vadd.f32 %v6468, %v6580
        %6582 = vdwg.mxu0
        %6583 = vmatprep.subr.bf16.mxu0 %v3752
        %6584 = vmatpush1.bf16.msra.mxu0 %v3751
        %6585 = vmatprep.subr.bf16.mxu0 %v3744
        %6586 = vmatpush1.bf16.msra.mxu0 %v3743
        %6587 = vmatprep.subr.bf16.mxu0 %v3736
        %6588 = vmatpush1.bf16.msra.mxu0 %v3735
        %6589 = vmatprep.subr.bf16.mxu0 %v3728
        %6590 = vmatpush1.bf16.msra.mxu0 %v3727
        %6591 = vmatprep.subr.bf16.mxu0 %v3720
        %6592 = vmatpush1.bf16.msra.mxu0 %v3719
        %6593 = vmatprep.subr.bf16.mxu0 %v3712
        %6594 = vmatpush1.bf16.msra.mxu0 %v3711
        %6595 = vmatprep.subr.bf16.mxu0 %v3704
        %6596 = vmatpush1.bf16.msra.mxu0 %v3703
        %6597 = vmatprep.subr.bf16.mxu0 %v3696
        %6598 = vmatpush1.bf16.msra.mxu0 %v3695
        %6599 = vmatprep.subr.bf16.mxu0 %v3816
        %6600 = vmatpush2.bf16.msra.mxu0 %v3815
        %6601 = vmatprep.subr.bf16.mxu0 %v3808
        %6602 = vmatpush2.bf16.msra.mxu0 %v3807
        %6603 = vmatprep.subr.bf16.mxu0 %v3800
        %6604 = vmatpush2.bf16.msra.mxu0 %v3799
        %6605 = vmatprep.subr.bf16.mxu0 %v3792
        %6606 = vmatpush2.bf16.msra.mxu0 %v3791
        %6607 = vmatprep.subr.bf16.mxu0 %v3784
        %6608 = vmatpush2.bf16.msra.mxu0 %v3783
        %6609 = vmatprep.subr.bf16.mxu0 %v3776
        %6610 = vmatpush2.bf16.msra.mxu0 %v3775
        %6611 = vmatprep.subr.bf16.mxu0 %v3768
        %6612 = vmatpush2.bf16.msra.mxu0 %v3767
        %6613 = vmatprep.subr.bf16.mxu0 %v3760
        %6614 = vmatpush2.bf16.msra.mxu0 %v3759
        %6615 = vmatprep.mubr.bf16.mxu0 %v482
        %6616 = vmatmul.mubr.bf16.gmra.mxu0 %v481
        %v6617 = vpop.f32.mrf.mxu0
        %v6618 = vadd.f32 %v1366, %v6617
        %v6619 = vpop.f32.mrf.mxu0
        %v6620 = vadd.f32 %v1370, %v6619
        %v6621 = vpop.f32.mrf.mxu0
        %v6622 = vadd.f32 %v1366, %v6621
        %v6623 = vpop.f32.mrf.mxu0
        %v6624 = vadd.f32 %v1370, %v6623
        %6625 = vmatprep.mubr.bf16.mxu0 %v494
        %6626 = vmatmul.mubr.bf16.gmra.mxu0 %v493
        %v6627 = vpop.f32.mrf.mxu0
        %v6628 = vadd.f32 %v1366, %v6627
        %v6629 = vpop.f32.mrf.mxu0
        %v6630 = vadd.f32 %v1370, %v6629
        %v6631 = vpop.f32.mrf.mxu0
        %v6632 = vadd.f32 %v1366, %v6631
        %v6633 = vpop.f32.mrf.mxu0
        %v6634 = vadd.f32 %v1370, %v6633
        %6635 = vmatprep.mubr.bf16.mxu0 %v506
        %6636 = vmatmul.mubr.bf16.gmra.mxu0 %v505
        %v6637 = vpop.f32.mrf.mxu0
        %v6638 = vadd.f32 %v1366, %v6637
        %v6639 = vpop.f32.mrf.mxu0
        %v6640 = vadd.f32 %v1370, %v6639
        %v6641 = vpop.f32.mrf.mxu0
        %v6642 = vadd.f32 %v1366, %v6641
        %v6643 = vpop.f32.mrf.mxu0
        %v6644 = vadd.f32 %v1370, %v6643
        %6645 = vmatprep.mubr.bf16.mxu0 %v518
        %6646 = vmatmul.mubr.bf16.gmra.mxu0 %v517
        %v6647 = vpop.f32.mrf.mxu0
        %v6648 = vadd.f32 %v1366, %v6647
        %v6649 = vpop.f32.mrf.mxu0
        %v6650 = vadd.f32 %v1370, %v6649
        %v6651 = vpop.f32.mrf.mxu0
        %v6652 = vadd.f32 %v1366, %v6651
        %v6653 = vpop.f32.mrf.mxu0
        %v6654 = vadd.f32 %v1370, %v6653
        %6655 = vmatprep.mubr.bf16.mxu0 %v530
        %6656 = vmatmul.mubr.bf16.gmra.mxu0 %v529
        %v6657 = vpop.f32.mrf.mxu0
        %v6658 = vadd.f32 %v1366, %v6657
        %v6659 = vpop.f32.mrf.mxu0
        %v6660 = vadd.f32 %v1370, %v6659
        %v6661 = vpop.f32.mrf.mxu0
        %v6662 = vadd.f32 %v1366, %v6661
        %v6663 = vpop.f32.mrf.mxu0
        %v6664 = vadd.f32 %v1370, %v6663
        %6665 = vmatprep.mubr.bf16.mxu0 %v542
        %6666 = vmatmul.mubr.bf16.gmra.mxu0 %v541
        %v6667 = vpop.f32.mrf.mxu0
        %v6668 = vadd.f32 %v1366, %v6667
        %v6669 = vpop.f32.mrf.mxu0
        %v6670 = vadd.f32 %v1370, %v6669
        %v6671 = vpop.f32.mrf.mxu0
        %v6672 = vadd.f32 %v1366, %v6671
        %v6673 = vpop.f32.mrf.mxu0
        %v6674 = vadd.f32 %v1370, %v6673
        %6675 = vmatprep.mubr.bf16.mxu0 %v554
        %6676 = vmatmul.mubr.bf16.gmra.mxu0 %v553
        %v6677 = vpop.f32.mrf.mxu0
        %v6678 = vadd.f32 %v1366, %v6677
        %v6679 = vpop.f32.mrf.mxu0
        %v6680 = vadd.f32 %v1370, %v6679
        %v6681 = vpop.f32.mrf.mxu0
        %v6682 = vadd.f32 %v1366, %v6681
        %v6683 = vpop.f32.mrf.mxu0
        %v6684 = vadd.f32 %v1370, %v6683
        %6685 = vmatprep.mubr.bf16.mxu0 %v566
        %6686 = vmatmul.mubr.bf16.gmra.mxu0 %v565
        %v6687 = vpop.f32.mrf.mxu0
        %v6688 = vadd.f32 %v1366, %v6687
        %v6689 = vpop.f32.mrf.mxu0
        %v6690 = vadd.f32 %v1370, %v6689
        %v6691 = vpop.f32.mrf.mxu0
        %v6692 = vadd.f32 %v1366, %v6691
        %v6693 = vpop.f32.mrf.mxu0
        %v6694 = vadd.f32 %v1370, %v6693
        %6695 = vdwg.mxu0
        %6696 = vmatprep.subr.bf16.mxu0 %v3880
        %6697 = vmatpush1.bf16.msra.mxu0 %v3879
        %6698 = vmatprep.subr.bf16.mxu0 %v3872
        %6699 = vmatpush1.bf16.msra.mxu0 %v3871
        %6700 = vmatprep.subr.bf16.mxu0 %v3864
        %6701 = vmatpush1.bf16.msra.mxu0 %v3863
        %6702 = vmatprep.subr.bf16.mxu0 %v3856
        %6703 = vmatpush1.bf16.msra.mxu0 %v3855
        %6704 = vmatprep.subr.bf16.mxu0 %v3848
        %6705 = vmatpush1.bf16.msra.mxu0 %v3847
        %6706 = vmatprep.subr.bf16.mxu0 %v3840
        %6707 = vmatpush1.bf16.msra.mxu0 %v3839
        %6708 = vmatprep.subr.bf16.mxu0 %v3832
        %6709 = vmatpush1.bf16.msra.mxu0 %v3831
        %6710 = vmatprep.subr.bf16.mxu0 %v3824
        %6711 = vmatpush1.bf16.msra.mxu0 %v3823
        %6712 = vmatprep.subr.bf16.mxu0 %v3944
        %6713 = vmatpush2.bf16.msra.mxu0 %v3943
        %6714 = vmatprep.subr.bf16.mxu0 %v3936
        %6715 = vmatpush2.bf16.msra.mxu0 %v3935
        %6716 = vmatprep.subr.bf16.mxu0 %v3928
        %6717 = vmatpush2.bf16.msra.mxu0 %v3927
        %6718 = vmatprep.subr.bf16.mxu0 %v3920
        %6719 = vmatpush2.bf16.msra.mxu0 %v3919
        %6720 = vmatprep.subr.bf16.mxu0 %v3912
        %6721 = vmatpush2.bf16.msra.mxu0 %v3911
        %6722 = vmatprep.subr.bf16.mxu0 %v3904
        %6723 = vmatpush2.bf16.msra.mxu0 %v3903
        %6724 = vmatprep.subr.bf16.mxu0 %v3896
        %6725 = vmatpush2.bf16.msra.mxu0 %v3895
        %6726 = vmatprep.subr.bf16.mxu0 %v3888
        %6727 = vmatpush2.bf16.msra.mxu0 %v3887
        %6728 = vmatprep.mubr.bf16.mxu0 %v484
        %6729 = vmatmul.mubr.bf16.gmra.mxu0 %v483
        %v6730 = vpop.f32.mrf.mxu0
        %v6731 = vadd.f32 %v6618, %v6730
        %v6732 = vpop.f32.mrf.mxu0
        %v6733 = vadd.f32 %v6620, %v6732
        %v6734 = vpop.f32.mrf.mxu0
        %v6735 = vadd.f32 %v6622, %v6734
        %v6736 = vpop.f32.mrf.mxu0
        %v6737 = vadd.f32 %v6624, %v6736
        %6738 = vmatprep.mubr.bf16.mxu0 %v496
        %6739 = vmatmul.mubr.bf16.gmra.mxu0 %v495
        %v6740 = vpop.f32.mrf.mxu0
        %v6741 = vadd.f32 %v6628, %v6740
        %v6742 = vpop.f32.mrf.mxu0
        %v6743 = vadd.f32 %v6630, %v6742
        %v6744 = vpop.f32.mrf.mxu0
        %v6745 = vadd.f32 %v6632, %v6744
        %v6746 = vpop.f32.mrf.mxu0
        %v6747 = vadd.f32 %v6634, %v6746
        %6748 = vmatprep.mubr.bf16.mxu0 %v508
        %6749 = vmatmul.mubr.bf16.gmra.mxu0 %v507
        %v6750 = vpop.f32.mrf.mxu0
        %v6751 = vadd.f32 %v6638, %v6750
        %v6752 = vpop.f32.mrf.mxu0
        %v6753 = vadd.f32 %v6640, %v6752
        %v6754 = vpop.f32.mrf.mxu0
        %v6755 = vadd.f32 %v6642, %v6754
        %v6756 = vpop.f32.mrf.mxu0
        %v6757 = vadd.f32 %v6644, %v6756
        %6758 = vmatprep.mubr.bf16.mxu0 %v520
        %6759 = vmatmul.mubr.bf16.gmra.mxu0 %v519
        %v6760 = vpop.f32.mrf.mxu0
        %v6761 = vadd.f32 %v6648, %v6760
        %v6762 = vpop.f32.mrf.mxu0
        %v6763 = vadd.f32 %v6650, %v6762
        %v6764 = vpop.f32.mrf.mxu0
        %v6765 = vadd.f32 %v6652, %v6764
        %v6766 = vpop.f32.mrf.mxu0
        %v6767 = vadd.f32 %v6654, %v6766
        %6768 = vmatprep.mubr.bf16.mxu0 %v532
        %6769 = vmatmul.mubr.bf16.gmra.mxu0 %v531
        %v6770 = vpop.f32.mrf.mxu0
        %v6771 = vadd.f32 %v6658, %v6770
        %v6772 = vpop.f32.mrf.mxu0
        %v6773 = vadd.f32 %v6660, %v6772
        %v6774 = vpop.f32.mrf.mxu0
        %v6775 = vadd.f32 %v6662, %v6774
        %v6776 = vpop.f32.mrf.mxu0
        %v6777 = vadd.f32 %v6664, %v6776
        %6778 = vmatprep.mubr.bf16.mxu0 %v544
        %6779 = vmatmul.mubr.bf16.gmra.mxu0 %v543
        %v6780 = vpop.f32.mrf.mxu0
        %v6781 = vadd.f32 %v6668, %v6780
        %v6782 = vpop.f32.mrf.mxu0
        %v6783 = vadd.f32 %v6670, %v6782
        %v6784 = vpop.f32.mrf.mxu0
        %v6785 = vadd.f32 %v6672, %v6784
        %v6786 = vpop.f32.mrf.mxu0
        %v6787 = vadd.f32 %v6674, %v6786
        %6788 = vmatprep.mubr.bf16.mxu0 %v556
        %6789 = vmatmul.mubr.bf16.gmra.mxu0 %v555
        %v6790 = vpop.f32.mrf.mxu0
        %v6791 = vadd.f32 %v6678, %v6790
        %v6792 = vpop.f32.mrf.mxu0
        %v6793 = vadd.f32 %v6680, %v6792
        %v6794 = vpop.f32.mrf.mxu0
        %v6795 = vadd.f32 %v6682, %v6794
        %v6796 = vpop.f32.mrf.mxu0
        %v6797 = vadd.f32 %v6684, %v6796
        %6798 = vmatprep.mubr.bf16.mxu0 %v568
        %6799 = vmatmul.mubr.bf16.gmra.mxu0 %v567
        %v6800 = vpop.f32.mrf.mxu0
        %v6801 = vadd.f32 %v6688, %v6800
        %v6802 = vpop.f32.mrf.mxu0
        %v6803 = vadd.f32 %v6690, %v6802
        %v6804 = vpop.f32.mrf.mxu0
        %v6805 = vadd.f32 %v6692, %v6804
        %v6806 = vpop.f32.mrf.mxu0
        %v6807 = vadd.f32 %v6694, %v6806
        %6808 = vdwg.mxu0
        %6809 = vmatprep.subr.bf16.mxu0 %v4008
        %6810 = vmatpush1.bf16.msra.mxu0 %v4007
        %6811 = vmatprep.subr.bf16.mxu0 %v4000
        %6812 = vmatpush1.bf16.msra.mxu0 %v3999
        %6813 = vmatprep.subr.bf16.mxu0 %v3992
        %6814 = vmatpush1.bf16.msra.mxu0 %v3991
        %6815 = vmatprep.subr.bf16.mxu0 %v3984
        %6816 = vmatpush1.bf16.msra.mxu0 %v3983
        %6817 = vmatprep.subr.bf16.mxu0 %v3976
        %6818 = vmatpush1.bf16.msra.mxu0 %v3975
        %6819 = vmatprep.subr.bf16.mxu0 %v3968
        %6820 = vmatpush1.bf16.msra.mxu0 %v3967
        %6821 = vmatprep.subr.bf16.mxu0 %v3960
        %6822 = vmatpush1.bf16.msra.mxu0 %v3959
        %6823 = vmatprep.subr.bf16.mxu0 %v3952
        %6824 = vmatpush1.bf16.msra.mxu0 %v3951
        %6825 = vmatprep.subr.bf16.mxu0 %v4072
        %6826 = vmatpush2.bf16.msra.mxu0 %v4071
        %6827 = vmatprep.subr.bf16.mxu0 %v4064
        %6828 = vmatpush2.bf16.msra.mxu0 %v4063
        %6829 = vmatprep.subr.bf16.mxu0 %v4056
        %6830 = vmatpush2.bf16.msra.mxu0 %v4055
        %6831 = vmatprep.subr.bf16.mxu0 %v4048
        %6832 = vmatpush2.bf16.msra.mxu0 %v4047
        %6833 = vmatprep.subr.bf16.mxu0 %v4040
        %6834 = vmatpush2.bf16.msra.mxu0 %v4039
        %6835 = vmatprep.subr.bf16.mxu0 %v4032
        %6836 = vmatpush2.bf16.msra.mxu0 %v4031
        %6837 = vmatprep.subr.bf16.mxu0 %v4024
        %6838 = vmatpush2.bf16.msra.mxu0 %v4023
        %6839 = vmatprep.subr.bf16.mxu0 %v4016
        %6840 = vmatpush2.bf16.msra.mxu0 %v4015
        %6841 = vmatprep.mubr.bf16.mxu0 %v486
        %6842 = vmatmul.mubr.bf16.gmra.mxu0 %v485
        %v6843 = vpop.f32.mrf.mxu0
        %v6844 = vadd.f32 %v6731, %v6843
        %v6845 = vpop.f32.mrf.mxu0
        %v6846 = vadd.f32 %v6733, %v6845
        %v6847 = vpop.f32.mrf.mxu0
        %v6848 = vadd.f32 %v6735, %v6847
        %v6849 = vpop.f32.mrf.mxu0
        %v6850 = vadd.f32 %v6737, %v6849
        %6851 = vmatprep.mubr.bf16.mxu0 %v498
        %6852 = vmatmul.mubr.bf16.gmra.mxu0 %v497
        %v6853 = vpop.f32.mrf.mxu0
        %v6854 = vadd.f32 %v6741, %v6853
        %v6855 = vpop.f32.mrf.mxu0
        %v6856 = vadd.f32 %v6743, %v6855
        %v6857 = vpop.f32.mrf.mxu0
        %v6858 = vadd.f32 %v6745, %v6857
        %v6859 = vpop.f32.mrf.mxu0
        %v6860 = vadd.f32 %v6747, %v6859
        %6861 = vmatprep.mubr.bf16.mxu0 %v510
        %6862 = vmatmul.mubr.bf16.gmra.mxu0 %v509
        %v6863 = vpop.f32.mrf.mxu0
        %v6864 = vadd.f32 %v6751, %v6863
        %v6865 = vpop.f32.mrf.mxu0
        %v6866 = vadd.f32 %v6753, %v6865
        %v6867 = vpop.f32.mrf.mxu0
        %v6868 = vadd.f32 %v6755, %v6867
        %v6869 = vpop.f32.mrf.mxu0
        %v6870 = vadd.f32 %v6757, %v6869
        %6871 = vmatprep.mubr.bf16.mxu0 %v522
        %6872 = vmatmul.mubr.bf16.gmra.mxu0 %v521
        %v6873 = vpop.f32.mrf.mxu0
        %v6874 = vadd.f32 %v6761, %v6873
        %v6875 = vpop.f32.mrf.mxu0
        %v6876 = vadd.f32 %v6763, %v6875
        %v6877 = vpop.f32.mrf.mxu0
        %v6878 = vadd.f32 %v6765, %v6877
        %v6879 = vpop.f32.mrf.mxu0
        %v6880 = vadd.f32 %v6767, %v6879
        %6881 = vmatprep.mubr.bf16.mxu0 %v534
        %6882 = vmatmul.mubr.bf16.gmra.mxu0 %v533
        %v6883 = vpop.f32.mrf.mxu0
        %v6884 = vadd.f32 %v6771, %v6883
        %v6885 = vpop.f32.mrf.mxu0
        %v6886 = vadd.f32 %v6773, %v6885
        %v6887 = vpop.f32.mrf.mxu0
        %v6888 = vadd.f32 %v6775, %v6887
        %v6889 = vpop.f32.mrf.mxu0
        %v6890 = vadd.f32 %v6777, %v6889
        %6891 = vmatprep.mubr.bf16.mxu0 %v546
        %6892 = vmatmul.mubr.bf16.gmra.mxu0 %v545
        %v6893 = vpop.f32.mrf.mxu0
        %v6894 = vadd.f32 %v6781, %v6893
        %v6895 = vpop.f32.mrf.mxu0
        %v6896 = vadd.f32 %v6783, %v6895
        %v6897 = vpop.f32.mrf.mxu0
        %v6898 = vadd.f32 %v6785, %v6897
        %v6899 = vpop.f32.mrf.mxu0
        %v6900 = vadd.f32 %v6787, %v6899
        %6901 = vmatprep.mubr.bf16.mxu0 %v558
        %6902 = vmatmul.mubr.bf16.gmra.mxu0 %v557
        %v6903 = vpop.f32.mrf.mxu0
        %v6904 = vadd.f32 %v6791, %v6903
        %v6905 = vpop.f32.mrf.mxu0
        %v6906 = vadd.f32 %v6793, %v6905
        %v6907 = vpop.f32.mrf.mxu0
        %v6908 = vadd.f32 %v6795, %v6907
        %v6909 = vpop.f32.mrf.mxu0
        %v6910 = vadd.f32 %v6797, %v6909
        %6911 = vmatprep.mubr.bf16.mxu0 %v570
        %6912 = vmatmul.mubr.bf16.gmra.mxu0 %v569
        %v6913 = vpop.f32.mrf.mxu0
        %v6914 = vadd.f32 %v6801, %v6913
        %v6915 = vpop.f32.mrf.mxu0
        %v6916 = vadd.f32 %v6803, %v6915
        %v6917 = vpop.f32.mrf.mxu0
        %v6918 = vadd.f32 %v6805, %v6917
        %v6919 = vpop.f32.mrf.mxu0
        %v6920 = vadd.f32 %v6807, %v6919
        %6921 = vdwg.mxu0
        %6922 = vmatprep.subr.bf16.mxu0 %v4136
        %6923 = vmatpush1.bf16.msra.mxu0 %v4135
        %6924 = vmatprep.subr.bf16.mxu0 %v4128
        %6925 = vmatpush1.bf16.msra.mxu0 %v4127
        %6926 = vmatprep.subr.bf16.mxu0 %v4120
        %6927 = vmatpush1.bf16.msra.mxu0 %v4119
        %6928 = vmatprep.subr.bf16.mxu0 %v4112
        %6929 = vmatpush1.bf16.msra.mxu0 %v4111
        %6930 = vmatprep.subr.bf16.mxu0 %v4104
        %6931 = vmatpush1.bf16.msra.mxu0 %v4103
        %6932 = vmatprep.subr.bf16.mxu0 %v4096
        %6933 = vmatpush1.bf16.msra.mxu0 %v4095
        %6934 = vmatprep.subr.bf16.mxu0 %v4088
        %6935 = vmatpush1.bf16.msra.mxu0 %v4087
        %6936 = vmatprep.subr.bf16.mxu0 %v4080
        %6937 = vmatpush1.bf16.msra.mxu0 %v4079
        %6938 = vmatprep.subr.bf16.mxu0 %v4200
        %6939 = vmatpush2.bf16.msra.mxu0 %v4199
        %6940 = vmatprep.subr.bf16.mxu0 %v4192
        %6941 = vmatpush2.bf16.msra.mxu0 %v4191
        %6942 = vmatprep.subr.bf16.mxu0 %v4184
        %6943 = vmatpush2.bf16.msra.mxu0 %v4183
        %6944 = vmatprep.subr.bf16.mxu0 %v4176
        %6945 = vmatpush2.bf16.msra.mxu0 %v4175
        %6946 = vmatprep.subr.bf16.mxu0 %v4168
        %6947 = vmatpush2.bf16.msra.mxu0 %v4167
        %6948 = vmatprep.subr.bf16.mxu0 %v4160
        %6949 = vmatpush2.bf16.msra.mxu0 %v4159
        %6950 = vmatprep.subr.bf16.mxu0 %v4152
        %6951 = vmatpush2.bf16.msra.mxu0 %v4151
        %6952 = vmatprep.subr.bf16.mxu0 %v4144
        %6953 = vmatpush2.bf16.msra.mxu0 %v4143
        %6954 = vmatprep.mubr.bf16.mxu0 %v488
        %6955 = vmatmul.mubr.bf16.gmra.mxu0 %v487
        %v6956 = vpop.f32.mrf.mxu0
        %v6957 = vadd.f32 %v6844, %v6956
        %v6958 = vpop.f32.mrf.mxu0
        %v6959 = vadd.f32 %v6846, %v6958
        %v6960 = vpop.f32.mrf.mxu0
        %v6961 = vadd.f32 %v6848, %v6960
        %v6962 = vpop.f32.mrf.mxu0
        %v6963 = vadd.f32 %v6850, %v6962
        %6964 = vmatprep.mubr.bf16.mxu0 %v500
        %6965 = vmatmul.mubr.bf16.gmra.mxu0 %v499
        %v6966 = vpop.f32.mrf.mxu0
        %v6967 = vadd.f32 %v6854, %v6966
        %v6968 = vpop.f32.mrf.mxu0
        %v6969 = vadd.f32 %v6856, %v6968
        %v6970 = vpop.f32.mrf.mxu0
        %v6971 = vadd.f32 %v6858, %v6970
        %v6972 = vpop.f32.mrf.mxu0
        %v6973 = vadd.f32 %v6860, %v6972
        %6974 = vmatprep.mubr.bf16.mxu0 %v512
        %6975 = vmatmul.mubr.bf16.gmra.mxu0 %v511
        %v6976 = vpop.f32.mrf.mxu0
        %v6977 = vadd.f32 %v6864, %v6976
        %v6978 = vpop.f32.mrf.mxu0
        %v6979 = vadd.f32 %v6866, %v6978
        %v6980 = vpop.f32.mrf.mxu0
        %v6981 = vadd.f32 %v6868, %v6980
        %v6982 = vpop.f32.mrf.mxu0
        %v6983 = vadd.f32 %v6870, %v6982
        %6984 = vmatprep.mubr.bf16.mxu0 %v524
        %6985 = vmatmul.mubr.bf16.gmra.mxu0 %v523
        %v6986 = vpop.f32.mrf.mxu0
        %v6987 = vadd.f32 %v6874, %v6986
        %v6988 = vpop.f32.mrf.mxu0
        %v6989 = vadd.f32 %v6876, %v6988
        %v6990 = vpop.f32.mrf.mxu0
        %v6991 = vadd.f32 %v6878, %v6990
        %v6992 = vpop.f32.mrf.mxu0
        %v6993 = vadd.f32 %v6880, %v6992
        %6994 = vmatprep.mubr.bf16.mxu0 %v536
        %6995 = vmatmul.mubr.bf16.gmra.mxu0 %v535
        %v6996 = vpop.f32.mrf.mxu0
        %v6997 = vadd.f32 %v6884, %v6996
        %v6998 = vpop.f32.mrf.mxu0
        %v6999 = vadd.f32 %v6886, %v6998
        %v7000 = vpop.f32.mrf.mxu0
        %v7001 = vadd.f32 %v6888, %v7000
        %v7002 = vpop.f32.mrf.mxu0
        %v7003 = vadd.f32 %v6890, %v7002
        %7004 = vmatprep.mubr.bf16.mxu0 %v548
        %7005 = vmatmul.mubr.bf16.gmra.mxu0 %v547
        %v7006 = vpop.f32.mrf.mxu0
        %v7007 = vadd.f32 %v6894, %v7006
        %v7008 = vpop.f32.mrf.mxu0
        %v7009 = vadd.f32 %v6896, %v7008
        %v7010 = vpop.f32.mrf.mxu0
        %v7011 = vadd.f32 %v6898, %v7010
        %v7012 = vpop.f32.mrf.mxu0
        %v7013 = vadd.f32 %v6900, %v7012
        %7014 = vmatprep.mubr.bf16.mxu0 %v560
        %7015 = vmatmul.mubr.bf16.gmra.mxu0 %v559
        %v7016 = vpop.f32.mrf.mxu0
        %v7017 = vadd.f32 %v6904, %v7016
        %v7018 = vpop.f32.mrf.mxu0
        %v7019 = vadd.f32 %v6906, %v7018
        %v7020 = vpop.f32.mrf.mxu0
        %v7021 = vadd.f32 %v6908, %v7020
        %v7022 = vpop.f32.mrf.mxu0
        %v7023 = vadd.f32 %v6910, %v7022
        %7024 = vmatprep.mubr.bf16.mxu0 %v572
        %7025 = vmatmul.mubr.bf16.gmra.mxu0 %v571
        %v7026 = vpop.f32.mrf.mxu0
        %v7027 = vadd.f32 %v6914, %v7026
        %v7028 = vpop.f32.mrf.mxu0
        %v7029 = vadd.f32 %v6916, %v7028
        %v7030 = vpop.f32.mrf.mxu0
        %v7031 = vadd.f32 %v6918, %v7030
        %v7032 = vpop.f32.mrf.mxu0
        %v7033 = vadd.f32 %v6920, %v7032
        %7034 = vdwg.mxu0
        %7035 = vmatprep.subr.bf16.mxu0 %v4264
        %7036 = vmatpush1.bf16.msra.mxu0 %v4263
        %7037 = vmatprep.subr.bf16.mxu0 %v4256
        %7038 = vmatpush1.bf16.msra.mxu0 %v4255
        %7039 = vmatprep.subr.bf16.mxu0 %v4248
        %7040 = vmatpush1.bf16.msra.mxu0 %v4247
        %7041 = vmatprep.subr.bf16.mxu0 %v4240
        %7042 = vmatpush1.bf16.msra.mxu0 %v4239
        %7043 = vmatprep.subr.bf16.mxu0 %v4232
        %7044 = vmatpush1.bf16.msra.mxu0 %v4231
        %7045 = vmatprep.subr.bf16.mxu0 %v4224
        %7046 = vmatpush1.bf16.msra.mxu0 %v4223
        %7047 = vmatprep.subr.bf16.mxu0 %v4216
        %7048 = vmatpush1.bf16.msra.mxu0 %v4215
        %7049 = vmatprep.subr.bf16.mxu0 %v4208
        %7050 = vmatpush1.bf16.msra.mxu0 %v4207
        %7051 = vmatprep.subr.bf16.mxu0 %v4328
        %7052 = vmatpush2.bf16.msra.mxu0 %v4327
        %7053 = vmatprep.subr.bf16.mxu0 %v4320
        %7054 = vmatpush2.bf16.msra.mxu0 %v4319
        %7055 = vmatprep.subr.bf16.mxu0 %v4312
        %7056 = vmatpush2.bf16.msra.mxu0 %v4311
        %7057 = vmatprep.subr.bf16.mxu0 %v4304
        %7058 = vmatpush2.bf16.msra.mxu0 %v4303
        %7059 = vmatprep.subr.bf16.mxu0 %v4296
        %7060 = vmatpush2.bf16.msra.mxu0 %v4295
        %7061 = vmatprep.subr.bf16.mxu0 %v4288
        %7062 = vmatpush2.bf16.msra.mxu0 %v4287
        %7063 = vmatprep.subr.bf16.mxu0 %v4280
        %7064 = vmatpush2.bf16.msra.mxu0 %v4279
        %7065 = vmatprep.subr.bf16.mxu0 %v4272
        %7066 = vmatpush2.bf16.msra.mxu0 %v4271
        %7067 = vmatprep.mubr.bf16.mxu0 %v490
        %7068 = vmatmul.mubr.bf16.gmra.mxu0 %v489
        %v7069 = vpop.f32.mrf.mxu0
        %v7070 = vadd.f32 %v6957, %v7069
        %v7071 = vpop.f32.mrf.mxu0
        %v7072 = vadd.f32 %v6959, %v7071
        %v7073 = vpop.f32.mrf.mxu0
        %v7074 = vadd.f32 %v6961, %v7073
        %v7075 = vpop.f32.mrf.mxu0
        %v7076 = vadd.f32 %v6963, %v7075
        %7077 = vmatprep.mubr.bf16.mxu0 %v502
        %7078 = vmatmul.mubr.bf16.gmra.mxu0 %v501
        %v7079 = vpop.f32.mrf.mxu0
        %v7080 = vadd.f32 %v6967, %v7079
        %v7081 = vpop.f32.mrf.mxu0
        %v7082 = vadd.f32 %v6969, %v7081
        %v7083 = vpop.f32.mrf.mxu0
        %v7084 = vadd.f32 %v6971, %v7083
        %v7085 = vpop.f32.mrf.mxu0
        %v7086 = vadd.f32 %v6973, %v7085
        %7087 = vmatprep.mubr.bf16.mxu0 %v514
        %7088 = vmatmul.mubr.bf16.gmra.mxu0 %v513
        %v7089 = vpop.f32.mrf.mxu0
        %v7090 = vadd.f32 %v6977, %v7089
        %v7091 = vpop.f32.mrf.mxu0
        %v7092 = vadd.f32 %v6979, %v7091
        %v7093 = vpop.f32.mrf.mxu0
        %v7094 = vadd.f32 %v6981, %v7093
        %v7095 = vpop.f32.mrf.mxu0
        %v7096 = vadd.f32 %v6983, %v7095
        %7097 = vmatprep.mubr.bf16.mxu0 %v526
        %7098 = vmatmul.mubr.bf16.gmra.mxu0 %v525
        %v7099 = vpop.f32.mrf.mxu0
        %v7100 = vadd.f32 %v6987, %v7099
        %v7101 = vpop.f32.mrf.mxu0
        %v7102 = vadd.f32 %v6989, %v7101
        %v7103 = vpop.f32.mrf.mxu0
        %v7104 = vadd.f32 %v6991, %v7103
        %v7105 = vpop.f32.mrf.mxu0
        %v7106 = vadd.f32 %v6993, %v7105
        %7107 = vmatprep.mubr.bf16.mxu0 %v538
        %7108 = vmatmul.mubr.bf16.gmra.mxu0 %v537
        %v7109 = vpop.f32.mrf.mxu0
        %v7110 = vadd.f32 %v6997, %v7109
        %v7111 = vpop.f32.mrf.mxu0
        %v7112 = vadd.f32 %v6999, %v7111
        %v7113 = vpop.f32.mrf.mxu0
        %v7114 = vadd.f32 %v7001, %v7113
        %v7115 = vpop.f32.mrf.mxu0
        %v7116 = vadd.f32 %v7003, %v7115
        %7117 = vmatprep.mubr.bf16.mxu0 %v550
        %7118 = vmatmul.mubr.bf16.gmra.mxu0 %v549
        %v7119 = vpop.f32.mrf.mxu0
        %v7120 = vadd.f32 %v7007, %v7119
        %v7121 = vpop.f32.mrf.mxu0
        %v7122 = vadd.f32 %v7009, %v7121
        %v7123 = vpop.f32.mrf.mxu0
        %v7124 = vadd.f32 %v7011, %v7123
        %v7125 = vpop.f32.mrf.mxu0
        %v7126 = vadd.f32 %v7013, %v7125
        %7127 = vmatprep.mubr.bf16.mxu0 %v562
        %7128 = vmatmul.mubr.bf16.gmra.mxu0 %v561
        %v7129 = vpop.f32.mrf.mxu0
        %v7130 = vadd.f32 %v7017, %v7129
        %v7131 = vpop.f32.mrf.mxu0
        %v7132 = vadd.f32 %v7019, %v7131
        %v7133 = vpop.f32.mrf.mxu0
        %v7134 = vadd.f32 %v7021, %v7133
        %v7135 = vpop.f32.mrf.mxu0
        %v7136 = vadd.f32 %v7023, %v7135
        %7137 = vmatprep.mubr.bf16.mxu0 %v574
        %7138 = vmatmul.mubr.bf16.gmra.mxu0 %v573
        %v7139 = vpop.f32.mrf.mxu0
        %v7140 = vadd.f32 %v7027, %v7139
        %v7141 = vpop.f32.mrf.mxu0
        %v7142 = vadd.f32 %v7029, %v7141
        %v7143 = vpop.f32.mrf.mxu0
        %v7144 = vadd.f32 %v7031, %v7143
        %v7145 = vpop.f32.mrf.mxu0
        %v7146 = vadd.f32 %v7033, %v7145
        %7147 = vdwg.mxu0
        %7148 = vmatprep.subr.bf16.mxu0 %v4392
        %7149 = vmatpush1.bf16.msra.mxu0 %v4391
        %7150 = vmatprep.subr.bf16.mxu0 %v4384
        %7151 = vmatpush1.bf16.msra.mxu0 %v4383
        %7152 = vmatprep.subr.bf16.mxu0 %v4376
        %7153 = vmatpush1.bf16.msra.mxu0 %v4375
        %7154 = vmatprep.subr.bf16.mxu0 %v4368
        %7155 = vmatpush1.bf16.msra.mxu0 %v4367
        %7156 = vmatprep.subr.bf16.mxu0 %v4360
        %7157 = vmatpush1.bf16.msra.mxu0 %v4359
        %7158 = vmatprep.subr.bf16.mxu0 %v4352
        %7159 = vmatpush1.bf16.msra.mxu0 %v4351
        %7160 = vmatprep.subr.bf16.mxu0 %v4344
        %7161 = vmatpush1.bf16.msra.mxu0 %v4343
        %7162 = vmatprep.subr.bf16.mxu0 %v4336
        %7163 = vmatpush1.bf16.msra.mxu0 %v4335
        %7164 = vmatprep.subr.bf16.mxu0 %v4456
        %7165 = vmatpush2.bf16.msra.mxu0 %v4455
        %7166 = vmatprep.subr.bf16.mxu0 %v4448
        %7167 = vmatpush2.bf16.msra.mxu0 %v4447
        %7168 = vmatprep.subr.bf16.mxu0 %v4440
        %7169 = vmatpush2.bf16.msra.mxu0 %v4439
        %7170 = vmatprep.subr.bf16.mxu0 %v4432
        %7171 = vmatpush2.bf16.msra.mxu0 %v4431
        %7172 = vmatprep.subr.bf16.mxu0 %v4424
        %7173 = vmatpush2.bf16.msra.mxu0 %v4423
        %7174 = vmatprep.subr.bf16.mxu0 %v4416
        %7175 = vmatpush2.bf16.msra.mxu0 %v4415
        %7176 = vmatprep.subr.bf16.mxu0 %v4408
        %7177 = vmatpush2.bf16.msra.mxu0 %v4407
        %7178 = vmatprep.subr.bf16.mxu0 %v4400
        %7179 = vmatpush2.bf16.msra.mxu0 %v4399
        %7180 = vmatprep.mubr.bf16.mxu0 %v492
        %7181 = vmatmul.mubr.bf16.gmra.mxu0 %v491
        %v7182 = vpop.f32.mrf.mxu0
        %v7183 = vadd.f32 %v7070, %v7182
        %v7184 = vpop.f32.mrf.mxu0
        %v7185 = vadd.f32 %v7072, %v7184
        %v7186 = vpop.f32.mrf.mxu0
        %v7187 = vadd.f32 %v7074, %v7186
        %v7188 = vpop.f32.mrf.mxu0
        %v7189 = vadd.f32 %v7076, %v7188
        %7190 = vmatprep.mubr.bf16.mxu0 %v504
        %7191 = vmatmul.mubr.bf16.gmra.mxu0 %v503
        %v7192 = vpop.f32.mrf.mxu0
        %v7193 = vadd.f32 %v7080, %v7192
        %v7194 = vpop.f32.mrf.mxu0
        %v7195 = vadd.f32 %v7082, %v7194
        %v7196 = vpop.f32.mrf.mxu0
        %v7197 = vadd.f32 %v7084, %v7196
        %v7198 = vpop.f32.mrf.mxu0
        %v7199 = vadd.f32 %v7086, %v7198
        %7200 = vmatprep.mubr.bf16.mxu0 %v516
        %7201 = vmatmul.mubr.bf16.gmra.mxu0 %v515
        %v7202 = vpop.f32.mrf.mxu0
        %v7203 = vadd.f32 %v7090, %v7202
        %v7204 = vpop.f32.mrf.mxu0
        %v7205 = vadd.f32 %v7092, %v7204
        %v7206 = vpop.f32.mrf.mxu0
        %v7207 = vadd.f32 %v7094, %v7206
        %v7208 = vpop.f32.mrf.mxu0
        %v7209 = vadd.f32 %v7096, %v7208
        %7210 = vmatprep.mubr.bf16.mxu0 %v528
        %7211 = vmatmul.mubr.bf16.gmra.mxu0 %v527
        %v7212 = vpop.f32.mrf.mxu0
        %v7213 = vadd.f32 %v7100, %v7212
        %v7214 = vpop.f32.mrf.mxu0
        %v7215 = vadd.f32 %v7102, %v7214
        %v7216 = vpop.f32.mrf.mxu0
        %v7217 = vadd.f32 %v7104, %v7216
        %v7218 = vpop.f32.mrf.mxu0
        %v7219 = vadd.f32 %v7106, %v7218
        %7220 = vmatprep.mubr.bf16.mxu0 %v540
        %7221 = vmatmul.mubr.bf16.gmra.mxu0 %v539
        %v7222 = vpop.f32.mrf.mxu0
        %v7223 = vadd.f32 %v7110, %v7222
        %v7224 = vpop.f32.mrf.mxu0
        %v7225 = vadd.f32 %v7112, %v7224
        %v7226 = vpop.f32.mrf.mxu0
        %v7227 = vadd.f32 %v7114, %v7226
        %v7228 = vpop.f32.mrf.mxu0
        %v7229 = vadd.f32 %v7116, %v7228
        %7230 = vmatprep.mubr.bf16.mxu0 %v552
        %7231 = vmatmul.mubr.bf16.gmra.mxu0 %v551
        %v7232 = vpop.f32.mrf.mxu0
        %v7233 = vadd.f32 %v7120, %v7232
        %v7234 = vpop.f32.mrf.mxu0
        %v7235 = vadd.f32 %v7122, %v7234
        %v7236 = vpop.f32.mrf.mxu0
        %v7237 = vadd.f32 %v7124, %v7236
        %v7238 = vpop.f32.mrf.mxu0
        %v7239 = vadd.f32 %v7126, %v7238
        %7240 = vmatprep.mubr.bf16.mxu0 %v564
        %7241 = vmatmul.mubr.bf16.gmra.mxu0 %v563
        %v7242 = vpop.f32.mrf.mxu0
        %v7243 = vadd.f32 %v7130, %v7242
        %v7244 = vpop.f32.mrf.mxu0
        %v7245 = vadd.f32 %v7132, %v7244
        %v7246 = vpop.f32.mrf.mxu0
        %v7247 = vadd.f32 %v7134, %v7246
        %v7248 = vpop.f32.mrf.mxu0
        %v7249 = vadd.f32 %v7136, %v7248
        %7250 = vmatprep.mubr.bf16.mxu0 %v576
        %7251 = vmatmul.mubr.bf16.gmra.mxu0 %v575
        %v7252 = vpop.f32.mrf.mxu0
        %v7253 = vadd.f32 %v7140, %v7252
        %v7254 = vpop.f32.mrf.mxu0
        %v7255 = vadd.f32 %v7142, %v7254
        %v7256 = vpop.f32.mrf.mxu0
        %v7257 = vadd.f32 %v7144, %v7256
        %v7258 = vpop.f32.mrf.mxu0
        %v7259 = vadd.f32 %v7146, %v7258
        %7260 = vdwg.mxu0
        %7261 = vmatprep.subr.bf16.mxu0 %v3754
        %7262 = vmatpush1.bf16.msra.mxu0 %v3753
        %7263 = vmatprep.subr.bf16.mxu0 %v3746
        %7264 = vmatpush1.bf16.msra.mxu0 %v3745
        %7265 = vmatprep.subr.bf16.mxu0 %v3738
        %7266 = vmatpush1.bf16.msra.mxu0 %v3737
        %7267 = vmatprep.subr.bf16.mxu0 %v3730
        %7268 = vmatpush1.bf16.msra.mxu0 %v3729
        %7269 = vmatprep.subr.bf16.mxu0 %v3722
        %7270 = vmatpush1.bf16.msra.mxu0 %v3721
        %7271 = vmatprep.subr.bf16.mxu0 %v3714
        %7272 = vmatpush1.bf16.msra.mxu0 %v3713
        %7273 = vmatprep.subr.bf16.mxu0 %v3706
        %7274 = vmatpush1.bf16.msra.mxu0 %v3705
        %7275 = vmatprep.subr.bf16.mxu0 %v3698
        %7276 = vmatpush1.bf16.msra.mxu0 %v3697
        %7277 = vmatprep.subr.bf16.mxu0 %v3818
        %7278 = vmatpush2.bf16.msra.mxu0 %v3817
        %7279 = vmatprep.subr.bf16.mxu0 %v3810
        %7280 = vmatpush2.bf16.msra.mxu0 %v3809
        %7281 = vmatprep.subr.bf16.mxu0 %v3802
        %7282 = vmatpush2.bf16.msra.mxu0 %v3801
        %7283 = vmatprep.subr.bf16.mxu0 %v3794
        %7284 = vmatpush2.bf16.msra.mxu0 %v3793
        %7285 = vmatprep.subr.bf16.mxu0 %v3786
        %7286 = vmatpush2.bf16.msra.mxu0 %v3785
        %7287 = vmatprep.subr.bf16.mxu0 %v3778
        %7288 = vmatpush2.bf16.msra.mxu0 %v3777
        %7289 = vmatprep.subr.bf16.mxu0 %v3770
        %7290 = vmatpush2.bf16.msra.mxu0 %v3769
        %7291 = vmatprep.subr.bf16.mxu0 %v3762
        %7292 = vmatpush2.bf16.msra.mxu0 %v3761
        %7293 = vmatprep.mubr.bf16.mxu0 %v482
        %7294 = vmatmul.mubr.bf16.gmra.mxu0 %v481
        %v7295 = vpop.f32.mrf.mxu0
        %v7296 = vadd.f32 %v1374, %v7295
        %v7297 = vpop.f32.mrf.mxu0
        %v7298 = vadd.f32 %v1378, %v7297
        %v7299 = vpop.f32.mrf.mxu0
        %v7300 = vadd.f32 %v1374, %v7299
        %v7301 = vpop.f32.mrf.mxu0
        %v7302 = vadd.f32 %v1378, %v7301
        %7303 = vmatprep.mubr.bf16.mxu0 %v494
        %7304 = vmatmul.mubr.bf16.gmra.mxu0 %v493
        %v7305 = vpop.f32.mrf.mxu0
        %v7306 = vadd.f32 %v1374, %v7305
        %v7307 = vpop.f32.mrf.mxu0
        %v7308 = vadd.f32 %v1378, %v7307
        %v7309 = vpop.f32.mrf.mxu0
        %v7310 = vadd.f32 %v1374, %v7309
        %v7311 = vpop.f32.mrf.mxu0
        %v7312 = vadd.f32 %v1378, %v7311
        %7313 = vmatprep.mubr.bf16.mxu0 %v506
        %7314 = vmatmul.mubr.bf16.gmra.mxu0 %v505
        %v7315 = vpop.f32.mrf.mxu0
        %v7316 = vadd.f32 %v1374, %v7315
        %v7317 = vpop.f32.mrf.mxu0
        %v7318 = vadd.f32 %v1378, %v7317
        %v7319 = vpop.f32.mrf.mxu0
        %v7320 = vadd.f32 %v1374, %v7319
        %v7321 = vpop.f32.mrf.mxu0
        %v7322 = vadd.f32 %v1378, %v7321
        %7323 = vmatprep.mubr.bf16.mxu0 %v518
        %7324 = vmatmul.mubr.bf16.gmra.mxu0 %v517
        %v7325 = vpop.f32.mrf.mxu0
        %v7326 = vadd.f32 %v1374, %v7325
        %v7327 = vpop.f32.mrf.mxu0
        %v7328 = vadd.f32 %v1378, %v7327
        %v7329 = vpop.f32.mrf.mxu0
        %v7330 = vadd.f32 %v1374, %v7329
        %v7331 = vpop.f32.mrf.mxu0
        %v7332 = vadd.f32 %v1378, %v7331
        %7333 = vmatprep.mubr.bf16.mxu0 %v530
        %7334 = vmatmul.mubr.bf16.gmra.mxu0 %v529
        %v7335 = vpop.f32.mrf.mxu0
        %v7336 = vadd.f32 %v1374, %v7335
        %v7337 = vpop.f32.mrf.mxu0
        %v7338 = vadd.f32 %v1378, %v7337
        %v7339 = vpop.f32.mrf.mxu0
        %v7340 = vadd.f32 %v1374, %v7339
        %v7341 = vpop.f32.mrf.mxu0
        %v7342 = vadd.f32 %v1378, %v7341
        %7343 = vmatprep.mubr.bf16.mxu0 %v542
        %7344 = vmatmul.mubr.bf16.gmra.mxu0 %v541
        %v7345 = vpop.f32.mrf.mxu0
        %v7346 = vadd.f32 %v1374, %v7345
        %v7347 = vpop.f32.mrf.mxu0
        %v7348 = vadd.f32 %v1378, %v7347
        %v7349 = vpop.f32.mrf.mxu0
        %v7350 = vadd.f32 %v1374, %v7349
        %v7351 = vpop.f32.mrf.mxu0
        %v7352 = vadd.f32 %v1378, %v7351
        %7353 = vmatprep.mubr.bf16.mxu0 %v554
        %7354 = vmatmul.mubr.bf16.gmra.mxu0 %v553
        %v7355 = vpop.f32.mrf.mxu0
        %v7356 = vadd.f32 %v1374, %v7355
        %v7357 = vpop.f32.mrf.mxu0
        %v7358 = vadd.f32 %v1378, %v7357
        %v7359 = vpop.f32.mrf.mxu0
        %v7360 = vadd.f32 %v1374, %v7359
        %v7361 = vpop.f32.mrf.mxu0
        %v7362 = vadd.f32 %v1378, %v7361
        %7363 = vmatprep.mubr.bf16.mxu0 %v566
        %7364 = vmatmul.mubr.bf16.gmra.mxu0 %v565
        %v7365 = vpop.f32.mrf.mxu0
        %v7366 = vadd.f32 %v1374, %v7365
        %v7367 = vpop.f32.mrf.mxu0
        %v7368 = vadd.f32 %v1378, %v7367
        %v7369 = vpop.f32.mrf.mxu0
        %v7370 = vadd.f32 %v1374, %v7369
        %v7371 = vpop.f32.mrf.mxu0
        %v7372 = vadd.f32 %v1378, %v7371
        %7373 = vdwg.mxu0
        %7374 = vmatprep.subr.bf16.mxu0 %v3882
        %7375 = vmatpush1.bf16.msra.mxu0 %v3881
        %7376 = vmatprep.subr.bf16.mxu0 %v3874
        %7377 = vmatpush1.bf16.msra.mxu0 %v3873
        %7378 = vmatprep.subr.bf16.mxu0 %v3866
        %7379 = vmatpush1.bf16.msra.mxu0 %v3865
        %7380 = vmatprep.subr.bf16.mxu0 %v3858
        %7381 = vmatpush1.bf16.msra.mxu0 %v3857
        %7382 = vmatprep.subr.bf16.mxu0 %v3850
        %7383 = vmatpush1.bf16.msra.mxu0 %v3849
        %7384 = vmatprep.subr.bf16.mxu0 %v3842
        %7385 = vmatpush1.bf16.msra.mxu0 %v3841
        %7386 = vmatprep.subr.bf16.mxu0 %v3834
        %7387 = vmatpush1.bf16.msra.mxu0 %v3833
        %7388 = vmatprep.subr.bf16.mxu0 %v3826
        %7389 = vmatpush1.bf16.msra.mxu0 %v3825
        %7390 = vmatprep.subr.bf16.mxu0 %v3946
        %7391 = vmatpush2.bf16.msra.mxu0 %v3945
        %7392 = vmatprep.subr.bf16.mxu0 %v3938
        %7393 = vmatpush2.bf16.msra.mxu0 %v3937
        %7394 = vmatprep.subr.bf16.mxu0 %v3930
        %7395 = vmatpush2.bf16.msra.mxu0 %v3929
        %7396 = vmatprep.subr.bf16.mxu0 %v3922
        %7397 = vmatpush2.bf16.msra.mxu0 %v3921
        %7398 = vmatprep.subr.bf16.mxu0 %v3914
        %7399 = vmatpush2.bf16.msra.mxu0 %v3913
        %7400 = vmatprep.subr.bf16.mxu0 %v3906
        %7401 = vmatpush2.bf16.msra.mxu0 %v3905
        %7402 = vmatprep.subr.bf16.mxu0 %v3898
        %7403 = vmatpush2.bf16.msra.mxu0 %v3897
        %7404 = vmatprep.subr.bf16.mxu0 %v3890
        %7405 = vmatpush2.bf16.msra.mxu0 %v3889
        %7406 = vmatprep.mubr.bf16.mxu0 %v484
        %7407 = vmatmul.mubr.bf16.gmra.mxu0 %v483
        %v7408 = vpop.f32.mrf.mxu0
        %v7409 = vadd.f32 %v7296, %v7408
        %v7410 = vpop.f32.mrf.mxu0
        %v7411 = vadd.f32 %v7298, %v7410
        %v7412 = vpop.f32.mrf.mxu0
        %v7413 = vadd.f32 %v7300, %v7412
        %v7414 = vpop.f32.mrf.mxu0
        %v7415 = vadd.f32 %v7302, %v7414
        %7416 = vmatprep.mubr.bf16.mxu0 %v496
        %7417 = vmatmul.mubr.bf16.gmra.mxu0 %v495
        %v7418 = vpop.f32.mrf.mxu0
        %v7419 = vadd.f32 %v7306, %v7418
        %v7420 = vpop.f32.mrf.mxu0
        %v7421 = vadd.f32 %v7308, %v7420
        %v7422 = vpop.f32.mrf.mxu0
        %v7423 = vadd.f32 %v7310, %v7422
        %v7424 = vpop.f32.mrf.mxu0
        %v7425 = vadd.f32 %v7312, %v7424
        %7426 = vmatprep.mubr.bf16.mxu0 %v508
        %7427 = vmatmul.mubr.bf16.gmra.mxu0 %v507
        %v7428 = vpop.f32.mrf.mxu0
        %v7429 = vadd.f32 %v7316, %v7428
        %v7430 = vpop.f32.mrf.mxu0
        %v7431 = vadd.f32 %v7318, %v7430
        %v7432 = vpop.f32.mrf.mxu0
        %v7433 = vadd.f32 %v7320, %v7432
        %v7434 = vpop.f32.mrf.mxu0
        %v7435 = vadd.f32 %v7322, %v7434
        %7436 = vmatprep.mubr.bf16.mxu0 %v520
        %7437 = vmatmul.mubr.bf16.gmra.mxu0 %v519
        %v7438 = vpop.f32.mrf.mxu0
        %v7439 = vadd.f32 %v7326, %v7438
        %v7440 = vpop.f32.mrf.mxu0
        %v7441 = vadd.f32 %v7328, %v7440
        %v7442 = vpop.f32.mrf.mxu0
        %v7443 = vadd.f32 %v7330, %v7442
        %v7444 = vpop.f32.mrf.mxu0
        %v7445 = vadd.f32 %v7332, %v7444
        %7446 = vmatprep.mubr.bf16.mxu0 %v532
        %7447 = vmatmul.mubr.bf16.gmra.mxu0 %v531
        %v7448 = vpop.f32.mrf.mxu0
        %v7449 = vadd.f32 %v7336, %v7448
        %v7450 = vpop.f32.mrf.mxu0
        %v7451 = vadd.f32 %v7338, %v7450
        %v7452 = vpop.f32.mrf.mxu0
        %v7453 = vadd.f32 %v7340, %v7452
        %v7454 = vpop.f32.mrf.mxu0
        %v7455 = vadd.f32 %v7342, %v7454
        %7456 = vmatprep.mubr.bf16.mxu0 %v544
        %7457 = vmatmul.mubr.bf16.gmra.mxu0 %v543
        %v7458 = vpop.f32.mrf.mxu0
        %v7459 = vadd.f32 %v7346, %v7458
        %v7460 = vpop.f32.mrf.mxu0
        %v7461 = vadd.f32 %v7348, %v7460
        %v7462 = vpop.f32.mrf.mxu0
        %v7463 = vadd.f32 %v7350, %v7462
        %v7464 = vpop.f32.mrf.mxu0
        %v7465 = vadd.f32 %v7352, %v7464
        %7466 = vmatprep.mubr.bf16.mxu0 %v556
        %7467 = vmatmul.mubr.bf16.gmra.mxu0 %v555
        %v7468 = vpop.f32.mrf.mxu0
        %v7469 = vadd.f32 %v7356, %v7468
        %v7470 = vpop.f32.mrf.mxu0
        %v7471 = vadd.f32 %v7358, %v7470
        %v7472 = vpop.f32.mrf.mxu0
        %v7473 = vadd.f32 %v7360, %v7472
        %v7474 = vpop.f32.mrf.mxu0
        %v7475 = vadd.f32 %v7362, %v7474
        %7476 = vmatprep.mubr.bf16.mxu0 %v568
        %7477 = vmatmul.mubr.bf16.gmra.mxu0 %v567
        %v7478 = vpop.f32.mrf.mxu0
        %v7479 = vadd.f32 %v7366, %v7478
        %v7480 = vpop.f32.mrf.mxu0
        %v7481 = vadd.f32 %v7368, %v7480
        %v7482 = vpop.f32.mrf.mxu0
        %v7483 = vadd.f32 %v7370, %v7482
        %v7484 = vpop.f32.mrf.mxu0
        %v7485 = vadd.f32 %v7372, %v7484
        %7486 = vdwg.mxu0
        %7487 = vmatprep.subr.bf16.mxu0 %v4010
        %7488 = vmatpush1.bf16.msra.mxu0 %v4009
        %7489 = vmatprep.subr.bf16.mxu0 %v4002
        %7490 = vmatpush1.bf16.msra.mxu0 %v4001
        %7491 = vmatprep.subr.bf16.mxu0 %v3994
        %7492 = vmatpush1.bf16.msra.mxu0 %v3993
        %7493 = vmatprep.subr.bf16.mxu0 %v3986
        %7494 = vmatpush1.bf16.msra.mxu0 %v3985
        %7495 = vmatprep.subr.bf16.mxu0 %v3978
        %7496 = vmatpush1.bf16.msra.mxu0 %v3977
        %7497 = vmatprep.subr.bf16.mxu0 %v3970
        %7498 = vmatpush1.bf16.msra.mxu0 %v3969
        %7499 = vmatprep.subr.bf16.mxu0 %v3962
        %7500 = vmatpush1.bf16.msra.mxu0 %v3961
        %7501 = vmatprep.subr.bf16.mxu0 %v3954
        %7502 = vmatpush1.bf16.msra.mxu0 %v3953
        %7503 = vmatprep.subr.bf16.mxu0 %v4074
        %7504 = vmatpush2.bf16.msra.mxu0 %v4073
        %7505 = vmatprep.subr.bf16.mxu0 %v4066
        %7506 = vmatpush2.bf16.msra.mxu0 %v4065
        %7507 = vmatprep.subr.bf16.mxu0 %v4058
        %7508 = vmatpush2.bf16.msra.mxu0 %v4057
        %7509 = vmatprep.subr.bf16.mxu0 %v4050
        %7510 = vmatpush2.bf16.msra.mxu0 %v4049
        %7511 = vmatprep.subr.bf16.mxu0 %v4042
        %7512 = vmatpush2.bf16.msra.mxu0 %v4041
        %7513 = vmatprep.subr.bf16.mxu0 %v4034
        %7514 = vmatpush2.bf16.msra.mxu0 %v4033
        %7515 = vmatprep.subr.bf16.mxu0 %v4026
        %7516 = vmatpush2.bf16.msra.mxu0 %v4025
        %7517 = vmatprep.subr.bf16.mxu0 %v4018
        %7518 = vmatpush2.bf16.msra.mxu0 %v4017
        %7519 = vmatprep.mubr.bf16.mxu0 %v486
        %7520 = vmatmul.mubr.bf16.gmra.mxu0 %v485
        %v7521 = vpop.f32.mrf.mxu0
        %v7522 = vadd.f32 %v7409, %v7521
        %v7523 = vpop.f32.mrf.mxu0
        %v7524 = vadd.f32 %v7411, %v7523
        %v7525 = vpop.f32.mrf.mxu0
        %v7526 = vadd.f32 %v7413, %v7525
        %v7527 = vpop.f32.mrf.mxu0
        %v7528 = vadd.f32 %v7415, %v7527
        %7529 = vmatprep.mubr.bf16.mxu0 %v498
        %7530 = vmatmul.mubr.bf16.gmra.mxu0 %v497
        %v7531 = vpop.f32.mrf.mxu0
        %v7532 = vadd.f32 %v7419, %v7531
        %v7533 = vpop.f32.mrf.mxu0
        %v7534 = vadd.f32 %v7421, %v7533
        %v7535 = vpop.f32.mrf.mxu0
        %v7536 = vadd.f32 %v7423, %v7535
        %v7537 = vpop.f32.mrf.mxu0
        %v7538 = vadd.f32 %v7425, %v7537
        %7539 = vmatprep.mubr.bf16.mxu0 %v510
        %7540 = vmatmul.mubr.bf16.gmra.mxu0 %v509
        %v7541 = vpop.f32.mrf.mxu0
        %v7542 = vadd.f32 %v7429, %v7541
        %v7543 = vpop.f32.mrf.mxu0
        %v7544 = vadd.f32 %v7431, %v7543
        %v7545 = vpop.f32.mrf.mxu0
        %v7546 = vadd.f32 %v7433, %v7545
        %v7547 = vpop.f32.mrf.mxu0
        %v7548 = vadd.f32 %v7435, %v7547
        %7549 = vmatprep.mubr.bf16.mxu0 %v522
        %7550 = vmatmul.mubr.bf16.gmra.mxu0 %v521
        %v7551 = vpop.f32.mrf.mxu0
        %v7552 = vadd.f32 %v7439, %v7551
        %v7553 = vpop.f32.mrf.mxu0
        %v7554 = vadd.f32 %v7441, %v7553
        %v7555 = vpop.f32.mrf.mxu0
        %v7556 = vadd.f32 %v7443, %v7555
        %v7557 = vpop.f32.mrf.mxu0
        %v7558 = vadd.f32 %v7445, %v7557
        %7559 = vmatprep.mubr.bf16.mxu0 %v534
        %7560 = vmatmul.mubr.bf16.gmra.mxu0 %v533
        %v7561 = vpop.f32.mrf.mxu0
        %v7562 = vadd.f32 %v7449, %v7561
        %v7563 = vpop.f32.mrf.mxu0
        %v7564 = vadd.f32 %v7451, %v7563
        %v7565 = vpop.f32.mrf.mxu0
        %v7566 = vadd.f32 %v7453, %v7565
        %v7567 = vpop.f32.mrf.mxu0
        %v7568 = vadd.f32 %v7455, %v7567
        %7569 = vmatprep.mubr.bf16.mxu0 %v546
        %7570 = vmatmul.mubr.bf16.gmra.mxu0 %v545
        %v7571 = vpop.f32.mrf.mxu0
        %v7572 = vadd.f32 %v7459, %v7571
        %v7573 = vpop.f32.mrf.mxu0
        %v7574 = vadd.f32 %v7461, %v7573
        %v7575 = vpop.f32.mrf.mxu0
        %v7576 = vadd.f32 %v7463, %v7575
        %v7577 = vpop.f32.mrf.mxu0
        %v7578 = vadd.f32 %v7465, %v7577
        %7579 = vmatprep.mubr.bf16.mxu0 %v558
        %7580 = vmatmul.mubr.bf16.gmra.mxu0 %v557
        %v7581 = vpop.f32.mrf.mxu0
        %v7582 = vadd.f32 %v7469, %v7581
        %v7583 = vpop.f32.mrf.mxu0
        %v7584 = vadd.f32 %v7471, %v7583
        %v7585 = vpop.f32.mrf.mxu0
        %v7586 = vadd.f32 %v7473, %v7585
        %v7587 = vpop.f32.mrf.mxu0
        %v7588 = vadd.f32 %v7475, %v7587
        %7589 = vmatprep.mubr.bf16.mxu0 %v570
        %7590 = vmatmul.mubr.bf16.gmra.mxu0 %v569
        %v7591 = vpop.f32.mrf.mxu0
        %v7592 = vadd.f32 %v7479, %v7591
        %v7593 = vpop.f32.mrf.mxu0
        %v7594 = vadd.f32 %v7481, %v7593
        %v7595 = vpop.f32.mrf.mxu0
        %v7596 = vadd.f32 %v7483, %v7595
        %v7597 = vpop.f32.mrf.mxu0
        %v7598 = vadd.f32 %v7485, %v7597
        %7599 = vdwg.mxu0
        %7600 = vmatprep.subr.bf16.mxu0 %v4138
        %7601 = vmatpush1.bf16.msra.mxu0 %v4137
        %7602 = vmatprep.subr.bf16.mxu0 %v4130
        %7603 = vmatpush1.bf16.msra.mxu0 %v4129
        %7604 = vmatprep.subr.bf16.mxu0 %v4122
        %7605 = vmatpush1.bf16.msra.mxu0 %v4121
        %7606 = vmatprep.subr.bf16.mxu0 %v4114
        %7607 = vmatpush1.bf16.msra.mxu0 %v4113
        %7608 = vmatprep.subr.bf16.mxu0 %v4106
        %7609 = vmatpush1.bf16.msra.mxu0 %v4105
        %7610 = vmatprep.subr.bf16.mxu0 %v4098
        %7611 = vmatpush1.bf16.msra.mxu0 %v4097
        %7612 = vmatprep.subr.bf16.mxu0 %v4090
        %7613 = vmatpush1.bf16.msra.mxu0 %v4089
        %7614 = vmatprep.subr.bf16.mxu0 %v4082
        %7615 = vmatpush1.bf16.msra.mxu0 %v4081
        %7616 = vmatprep.subr.bf16.mxu0 %v4202
        %7617 = vmatpush2.bf16.msra.mxu0 %v4201
        %7618 = vmatprep.subr.bf16.mxu0 %v4194
        %7619 = vmatpush2.bf16.msra.mxu0 %v4193
        %7620 = vmatprep.subr.bf16.mxu0 %v4186
        %7621 = vmatpush2.bf16.msra.mxu0 %v4185
        %7622 = vmatprep.subr.bf16.mxu0 %v4178
        %7623 = vmatpush2.bf16.msra.mxu0 %v4177
        %7624 = vmatprep.subr.bf16.mxu0 %v4170
        %7625 = vmatpush2.bf16.msra.mxu0 %v4169
        %7626 = vmatprep.subr.bf16.mxu0 %v4162
        %7627 = vmatpush2.bf16.msra.mxu0 %v4161
        %7628 = vmatprep.subr.bf16.mxu0 %v4154
        %7629 = vmatpush2.bf16.msra.mxu0 %v4153
        %7630 = vmatprep.subr.bf16.mxu0 %v4146
        %7631 = vmatpush2.bf16.msra.mxu0 %v4145
        %7632 = vmatprep.mubr.bf16.mxu0 %v488
        %7633 = vmatmul.mubr.bf16.gmra.mxu0 %v487
        %v7634 = vpop.f32.mrf.mxu0
        %v7635 = vadd.f32 %v7522, %v7634
        %v7636 = vpop.f32.mrf.mxu0
        %v7637 = vadd.f32 %v7524, %v7636
        %v7638 = vpop.f32.mrf.mxu0
        %v7639 = vadd.f32 %v7526, %v7638
        %v7640 = vpop.f32.mrf.mxu0
        %v7641 = vadd.f32 %v7528, %v7640
        %7642 = vmatprep.mubr.bf16.mxu0 %v500
        %7643 = vmatmul.mubr.bf16.gmra.mxu0 %v499
        %v7644 = vpop.f32.mrf.mxu0
        %v7645 = vadd.f32 %v7532, %v7644
        %v7646 = vpop.f32.mrf.mxu0
        %v7647 = vadd.f32 %v7534, %v7646
        %v7648 = vpop.f32.mrf.mxu0
        %v7649 = vadd.f32 %v7536, %v7648
        %v7650 = vpop.f32.mrf.mxu0
        %v7651 = vadd.f32 %v7538, %v7650
        %7652 = vmatprep.mubr.bf16.mxu0 %v512
        %7653 = vmatmul.mubr.bf16.gmra.mxu0 %v511
        %v7654 = vpop.f32.mrf.mxu0
        %v7655 = vadd.f32 %v7542, %v7654
        %v7656 = vpop.f32.mrf.mxu0
        %v7657 = vadd.f32 %v7544, %v7656
        %v7658 = vpop.f32.mrf.mxu0
        %v7659 = vadd.f32 %v7546, %v7658
        %v7660 = vpop.f32.mrf.mxu0
        %v7661 = vadd.f32 %v7548, %v7660
        %7662 = vmatprep.mubr.bf16.mxu0 %v524
        %7663 = vmatmul.mubr.bf16.gmra.mxu0 %v523
        %v7664 = vpop.f32.mrf.mxu0
        %v7665 = vadd.f32 %v7552, %v7664
        %v7666 = vpop.f32.mrf.mxu0
        %v7667 = vadd.f32 %v7554, %v7666
        %v7668 = vpop.f32.mrf.mxu0
        %v7669 = vadd.f32 %v7556, %v7668
        %v7670 = vpop.f32.mrf.mxu0
        %v7671 = vadd.f32 %v7558, %v7670
        %7672 = vmatprep.mubr.bf16.mxu0 %v536
        %7673 = vmatmul.mubr.bf16.gmra.mxu0 %v535
        %v7674 = vpop.f32.mrf.mxu0
        %v7675 = vadd.f32 %v7562, %v7674
        %v7676 = vpop.f32.mrf.mxu0
        %v7677 = vadd.f32 %v7564, %v7676
        %v7678 = vpop.f32.mrf.mxu0
        %v7679 = vadd.f32 %v7566, %v7678
        %v7680 = vpop.f32.mrf.mxu0
        %v7681 = vadd.f32 %v7568, %v7680
        %7682 = vmatprep.mubr.bf16.mxu0 %v548
        %7683 = vmatmul.mubr.bf16.gmra.mxu0 %v547
        %v7684 = vpop.f32.mrf.mxu0
        %v7685 = vadd.f32 %v7572, %v7684
        %v7686 = vpop.f32.mrf.mxu0
        %v7687 = vadd.f32 %v7574, %v7686
        %v7688 = vpop.f32.mrf.mxu0
        %v7689 = vadd.f32 %v7576, %v7688
        %v7690 = vpop.f32.mrf.mxu0
        %v7691 = vadd.f32 %v7578, %v7690
        %7692 = vmatprep.mubr.bf16.mxu0 %v560
        %7693 = vmatmul.mubr.bf16.gmra.mxu0 %v559
        %v7694 = vpop.f32.mrf.mxu0
        %v7695 = vadd.f32 %v7582, %v7694
        %v7696 = vpop.f32.mrf.mxu0
        %v7697 = vadd.f32 %v7584, %v7696
        %v7698 = vpop.f32.mrf.mxu0
        %v7699 = vadd.f32 %v7586, %v7698
        %v7700 = vpop.f32.mrf.mxu0
        %v7701 = vadd.f32 %v7588, %v7700
        %7702 = vmatprep.mubr.bf16.mxu0 %v572
        %7703 = vmatmul.mubr.bf16.gmra.mxu0 %v571
        %v7704 = vpop.f32.mrf.mxu0
        %v7705 = vadd.f32 %v7592, %v7704
        %v7706 = vpop.f32.mrf.mxu0
        %v7707 = vadd.f32 %v7594, %v7706
        %v7708 = vpop.f32.mrf.mxu0
        %v7709 = vadd.f32 %v7596, %v7708
        %v7710 = vpop.f32.mrf.mxu0
        %v7711 = vadd.f32 %v7598, %v7710
        %7712 = vdwg.mxu0
        %7713 = vmatprep.subr.bf16.mxu0 %v4266
        %7714 = vmatpush1.bf16.msra.mxu0 %v4265
        %7715 = vmatprep.subr.bf16.mxu0 %v4258
        %7716 = vmatpush1.bf16.msra.mxu0 %v4257
        %7717 = vmatprep.subr.bf16.mxu0 %v4250
        %7718 = vmatpush1.bf16.msra.mxu0 %v4249
        %7719 = vmatprep.subr.bf16.mxu0 %v4242
        %7720 = vmatpush1.bf16.msra.mxu0 %v4241
        %7721 = vmatprep.subr.bf16.mxu0 %v4234
        %7722 = vmatpush1.bf16.msra.mxu0 %v4233
        %7723 = vmatprep.subr.bf16.mxu0 %v4226
        %7724 = vmatpush1.bf16.msra.mxu0 %v4225
        %7725 = vmatprep.subr.bf16.mxu0 %v4218
        %7726 = vmatpush1.bf16.msra.mxu0 %v4217
        %7727 = vmatprep.subr.bf16.mxu0 %v4210
        %7728 = vmatpush1.bf16.msra.mxu0 %v4209
        %7729 = vmatprep.subr.bf16.mxu0 %v4330
        %7730 = vmatpush2.bf16.msra.mxu0 %v4329
        %7731 = vmatprep.subr.bf16.mxu0 %v4322
        %7732 = vmatpush2.bf16.msra.mxu0 %v4321
        %7733 = vmatprep.subr.bf16.mxu0 %v4314
        %7734 = vmatpush2.bf16.msra.mxu0 %v4313
        %7735 = vmatprep.subr.bf16.mxu0 %v4306
        %7736 = vmatpush2.bf16.msra.mxu0 %v4305
        %7737 = vmatprep.subr.bf16.mxu0 %v4298
        %7738 = vmatpush2.bf16.msra.mxu0 %v4297
        %7739 = vmatprep.subr.bf16.mxu0 %v4290
        %7740 = vmatpush2.bf16.msra.mxu0 %v4289
        %7741 = vmatprep.subr.bf16.mxu0 %v4282
        %7742 = vmatpush2.bf16.msra.mxu0 %v4281
        %7743 = vmatprep.subr.bf16.mxu0 %v4274
        %7744 = vmatpush2.bf16.msra.mxu0 %v4273
        %7745 = vmatprep.mubr.bf16.mxu0 %v490
        %7746 = vmatmul.mubr.bf16.gmra.mxu0 %v489
        %v7747 = vpop.f32.mrf.mxu0
        %v7748 = vadd.f32 %v7635, %v7747
        %v7749 = vpop.f32.mrf.mxu0
        %v7750 = vadd.f32 %v7637, %v7749
        %v7751 = vpop.f32.mrf.mxu0
        %v7752 = vadd.f32 %v7639, %v7751
        %v7753 = vpop.f32.mrf.mxu0
        %v7754 = vadd.f32 %v7641, %v7753
        %7755 = vmatprep.mubr.bf16.mxu0 %v502
        %7756 = vmatmul.mubr.bf16.gmra.mxu0 %v501
        %v7757 = vpop.f32.mrf.mxu0
        %v7758 = vadd.f32 %v7645, %v7757
        %v7759 = vpop.f32.mrf.mxu0
        %v7760 = vadd.f32 %v7647, %v7759
        %v7761 = vpop.f32.mrf.mxu0
        %v7762 = vadd.f32 %v7649, %v7761
        %v7763 = vpop.f32.mrf.mxu0
        %v7764 = vadd.f32 %v7651, %v7763
        %7765 = vmatprep.mubr.bf16.mxu0 %v514
        %7766 = vmatmul.mubr.bf16.gmra.mxu0 %v513
        %v7767 = vpop.f32.mrf.mxu0
        %v7768 = vadd.f32 %v7655, %v7767
        %v7769 = vpop.f32.mrf.mxu0
        %v7770 = vadd.f32 %v7657, %v7769
        %v7771 = vpop.f32.mrf.mxu0
        %v7772 = vadd.f32 %v7659, %v7771
        %v7773 = vpop.f32.mrf.mxu0
        %v7774 = vadd.f32 %v7661, %v7773
        %7775 = vmatprep.mubr.bf16.mxu0 %v526
        %7776 = vmatmul.mubr.bf16.gmra.mxu0 %v525
        %v7777 = vpop.f32.mrf.mxu0
        %v7778 = vadd.f32 %v7665, %v7777
        %v7779 = vpop.f32.mrf.mxu0
        %v7780 = vadd.f32 %v7667, %v7779
        %v7781 = vpop.f32.mrf.mxu0
        %v7782 = vadd.f32 %v7669, %v7781
        %v7783 = vpop.f32.mrf.mxu0
        %v7784 = vadd.f32 %v7671, %v7783
        %7785 = vmatprep.mubr.bf16.mxu0 %v538
        %7786 = vmatmul.mubr.bf16.gmra.mxu0 %v537
        %v7787 = vpop.f32.mrf.mxu0
        %v7788 = vadd.f32 %v7675, %v7787
        %v7789 = vpop.f32.mrf.mxu0
        %v7790 = vadd.f32 %v7677, %v7789
        %v7791 = vpop.f32.mrf.mxu0
        %v7792 = vadd.f32 %v7679, %v7791
        %v7793 = vpop.f32.mrf.mxu0
        %v7794 = vadd.f32 %v7681, %v7793
        %7795 = vmatprep.mubr.bf16.mxu0 %v550
        %7796 = vmatmul.mubr.bf16.gmra.mxu0 %v549
        %v7797 = vpop.f32.mrf.mxu0
        %v7798 = vadd.f32 %v7685, %v7797
        %v7799 = vpop.f32.mrf.mxu0
        %v7800 = vadd.f32 %v7687, %v7799
        %v7801 = vpop.f32.mrf.mxu0
        %v7802 = vadd.f32 %v7689, %v7801
        %v7803 = vpop.f32.mrf.mxu0
        %v7804 = vadd.f32 %v7691, %v7803
        %7805 = vmatprep.mubr.bf16.mxu0 %v562
        %7806 = vmatmul.mubr.bf16.gmra.mxu0 %v561
        %v7807 = vpop.f32.mrf.mxu0
        %v7808 = vadd.f32 %v7695, %v7807
        %v7809 = vpop.f32.mrf.mxu0
        %v7810 = vadd.f32 %v7697, %v7809
        %v7811 = vpop.f32.mrf.mxu0
        %v7812 = vadd.f32 %v7699, %v7811
        %v7813 = vpop.f32.mrf.mxu0
        %v7814 = vadd.f32 %v7701, %v7813
        %7815 = vmatprep.mubr.bf16.mxu0 %v574
        %7816 = vmatmul.mubr.bf16.gmra.mxu0 %v573
        %v7817 = vpop.f32.mrf.mxu0
        %v7818 = vadd.f32 %v7705, %v7817
        %v7819 = vpop.f32.mrf.mxu0
        %v7820 = vadd.f32 %v7707, %v7819
        %v7821 = vpop.f32.mrf.mxu0
        %v7822 = vadd.f32 %v7709, %v7821
        %v7823 = vpop.f32.mrf.mxu0
        %v7824 = vadd.f32 %v7711, %v7823
        %7825 = vdwg.mxu0
        %7826 = vmatprep.subr.bf16.mxu0 %v4394
        %7827 = vmatpush1.bf16.msra.mxu0 %v4393
        %7828 = vmatprep.subr.bf16.mxu0 %v4386
        %7829 = vmatpush1.bf16.msra.mxu0 %v4385
        %7830 = vmatprep.subr.bf16.mxu0 %v4378
        %7831 = vmatpush1.bf16.msra.mxu0 %v4377
        %7832 = vmatprep.subr.bf16.mxu0 %v4370
        %7833 = vmatpush1.bf16.msra.mxu0 %v4369
        %7834 = vmatprep.subr.bf16.mxu0 %v4362
        %7835 = vmatpush1.bf16.msra.mxu0 %v4361
        %7836 = vmatprep.subr.bf16.mxu0 %v4354
        %7837 = vmatpush1.bf16.msra.mxu0 %v4353
        %7838 = vmatprep.subr.bf16.mxu0 %v4346
        %7839 = vmatpush1.bf16.msra.mxu0 %v4345
        %7840 = vmatprep.subr.bf16.mxu0 %v4338
        %7841 = vmatpush1.bf16.msra.mxu0 %v4337
        %7842 = vmatprep.subr.bf16.mxu0 %v4458
        %7843 = vmatpush2.bf16.msra.mxu0 %v4457
        %7844 = vmatprep.subr.bf16.mxu0 %v4450
        %7845 = vmatpush2.bf16.msra.mxu0 %v4449
        %7846 = vmatprep.subr.bf16.mxu0 %v4442
        %7847 = vmatpush2.bf16.msra.mxu0 %v4441
        %7848 = vmatprep.subr.bf16.mxu0 %v4434
        %7849 = vmatpush2.bf16.msra.mxu0 %v4433
        %7850 = vmatprep.subr.bf16.mxu0 %v4426
        %7851 = vmatpush2.bf16.msra.mxu0 %v4425
        %7852 = vmatprep.subr.bf16.mxu0 %v4418
        %7853 = vmatpush2.bf16.msra.mxu0 %v4417
        %7854 = vmatprep.subr.bf16.mxu0 %v4410
        %7855 = vmatpush2.bf16.msra.mxu0 %v4409
        %7856 = vmatprep.subr.bf16.mxu0 %v4402
        %7857 = vmatpush2.bf16.msra.mxu0 %v4401
        %7858 = vmatprep.mubr.bf16.mxu0 %v492
        %7859 = vmatmul.mubr.bf16.gmra.mxu0 %v491
        %v7860 = vpop.f32.mrf.mxu0
        %v7861 = vadd.f32 %v7748, %v7860
        %v7862 = vpop.f32.mrf.mxu0
        %v7863 = vadd.f32 %v7750, %v7862
        %v7864 = vpop.f32.mrf.mxu0
        %v7865 = vadd.f32 %v7752, %v7864
        %v7866 = vpop.f32.mrf.mxu0
        %v7867 = vadd.f32 %v7754, %v7866
        %7868 = vmatprep.mubr.bf16.mxu0 %v504
        %7869 = vmatmul.mubr.bf16.gmra.mxu0 %v503
        %v7870 = vpop.f32.mrf.mxu0
        %v7871 = vadd.f32 %v7758, %v7870
        %v7872 = vpop.f32.mrf.mxu0
        %v7873 = vadd.f32 %v7760, %v7872
        %v7874 = vpop.f32.mrf.mxu0
        %v7875 = vadd.f32 %v7762, %v7874
        %v7876 = vpop.f32.mrf.mxu0
        %v7877 = vadd.f32 %v7764, %v7876
        %7878 = vmatprep.mubr.bf16.mxu0 %v516
        %7879 = vmatmul.mubr.bf16.gmra.mxu0 %v515
        %v7880 = vpop.f32.mrf.mxu0
        %v7881 = vadd.f32 %v7768, %v7880
        %v7882 = vpop.f32.mrf.mxu0
        %v7883 = vadd.f32 %v7770, %v7882
        %v7884 = vpop.f32.mrf.mxu0
        %v7885 = vadd.f32 %v7772, %v7884
        %v7886 = vpop.f32.mrf.mxu0
        %v7887 = vadd.f32 %v7774, %v7886
        %7888 = vmatprep.mubr.bf16.mxu0 %v528
        %7889 = vmatmul.mubr.bf16.gmra.mxu0 %v527
        %v7890 = vpop.f32.mrf.mxu0
        %v7891 = vadd.f32 %v7778, %v7890
        %v7892 = vpop.f32.mrf.mxu0
        %v7893 = vadd.f32 %v7780, %v7892
        %v7894 = vpop.f32.mrf.mxu0
        %v7895 = vadd.f32 %v7782, %v7894
        %v7896 = vpop.f32.mrf.mxu0
        %v7897 = vadd.f32 %v7784, %v7896
        %7898 = vmatprep.mubr.bf16.mxu0 %v540
        %7899 = vmatmul.mubr.bf16.gmra.mxu0 %v539
        %v7900 = vpop.f32.mrf.mxu0
        %v7901 = vadd.f32 %v7788, %v7900
        %v7902 = vpop.f32.mrf.mxu0
        %v7903 = vadd.f32 %v7790, %v7902
        %v7904 = vpop.f32.mrf.mxu0
        %v7905 = vadd.f32 %v7792, %v7904
        %v7906 = vpop.f32.mrf.mxu0
        %v7907 = vadd.f32 %v7794, %v7906
        %7908 = vmatprep.mubr.bf16.mxu0 %v552
        %7909 = vmatmul.mubr.bf16.gmra.mxu0 %v551
        %v7910 = vpop.f32.mrf.mxu0
        %v7911 = vadd.f32 %v7798, %v7910
        %v7912 = vpop.f32.mrf.mxu0
        %v7913 = vadd.f32 %v7800, %v7912
        %v7914 = vpop.f32.mrf.mxu0
        %v7915 = vadd.f32 %v7802, %v7914
        %v7916 = vpop.f32.mrf.mxu0
        %v7917 = vadd.f32 %v7804, %v7916
        %7918 = vmatprep.mubr.bf16.mxu0 %v564
        %7919 = vmatmul.mubr.bf16.gmra.mxu0 %v563
        %v7920 = vpop.f32.mrf.mxu0
        %v7921 = vadd.f32 %v7808, %v7920
        %v7922 = vpop.f32.mrf.mxu0
        %v7923 = vadd.f32 %v7810, %v7922
        %v7924 = vpop.f32.mrf.mxu0
        %v7925 = vadd.f32 %v7812, %v7924
        %v7926 = vpop.f32.mrf.mxu0
        %v7927 = vadd.f32 %v7814, %v7926
        %7928 = vmatprep.mubr.bf16.mxu0 %v576
        %7929 = vmatmul.mubr.bf16.gmra.mxu0 %v575
        %v7930 = vpop.f32.mrf.mxu0
        %v7931 = vadd.f32 %v7818, %v7930
        %v7932 = vpop.f32.mrf.mxu0
        %v7933 = vadd.f32 %v7820, %v7932
        %v7934 = vpop.f32.mrf.mxu0
        %v7935 = vadd.f32 %v7822, %v7934
        %v7936 = vpop.f32.mrf.mxu0
        %v7937 = vadd.f32 %v7824, %v7936
        %7938 = vdwg.mxu0
        %v7939 = vmax.f32 %v5827, 0.0
        %v7940 = vmax.f32 %v5829, 0.0
        %v7941 = vmax.f32 %v6505, 0.0
        %v7942 = vmax.f32 %v6507, 0.0
        %v7943 = vmax.f32 %v7183, 0.0
        %v7944 = vmax.f32 %v7185, 0.0
        %v7945 = vmax.f32 %v7861, 0.0
        %v7946 = vmax.f32 %v7863, 0.0
        %v7947 = vmax.f32 %v5831, 0.0
        %v7948 = vmax.f32 %v5833, 0.0
        %v7949 = vmax.f32 %v6509, 0.0
        %v7950 = vmax.f32 %v6511, 0.0
        %v7951 = vmax.f32 %v7187, 0.0
        %v7952 = vmax.f32 %v7189, 0.0
        %v7953 = vmax.f32 %v7865, 0.0
        %v7954 = vmax.f32 %v7867, 0.0
        %v7955 = vmax.f32 %v5837, 0.0
        %v7956 = vmax.f32 %v5839, 0.0
        %v7957 = vmax.f32 %v6515, 0.0
        %v7958 = vmax.f32 %v6517, 0.0
        %v7959 = vmax.f32 %v7193, 0.0
        %v7960 = vmax.f32 %v7195, 0.0
        %v7961 = vmax.f32 %v7871, 0.0
        %v7962 = vmax.f32 %v7873, 0.0
        %v7963 = vmax.f32 %v5841, 0.0
        %v7964 = vmax.f32 %v5843, 0.0
        %v7965 = vmax.f32 %v6519, 0.0
        %v7966 = vmax.f32 %v6521, 0.0
        %v7967 = vmax.f32 %v7197, 0.0
        %v7968 = vmax.f32 %v7199, 0.0
        %v7969 = vmax.f32 %v7875, 0.0
        %v7970 = vmax.f32 %v7877, 0.0
        %v7971 = vmax.f32 %v5847, 0.0
        %v7972 = vmax.f32 %v5849, 0.0
        %v7973 = vmax.f32 %v6525, 0.0
        %v7974 = vmax.f32 %v6527, 0.0
        %v7975 = vmax.f32 %v7203, 0.0
        %v7976 = vmax.f32 %v7205, 0.0
        %v7977 = vmax.f32 %v7881, 0.0
        %v7978 = vmax.f32 %v7883, 0.0
        %v7979 = vmax.f32 %v5851, 0.0
        %v7980 = vmax.f32 %v5853, 0.0
        %v7981 = vmax.f32 %v6529, 0.0
        %v7982 = vmax.f32 %v6531, 0.0
        %v7983 = vmax.f32 %v7207, 0.0
        %v7984 = vmax.f32 %v7209, 0.0
        %v7985 = vmax.f32 %v7885, 0.0
        %v7986 = vmax.f32 %v7887, 0.0
        %v7987 = vmax.f32 %v5857, 0.0
        %v7988 = vmax.f32 %v5859, 0.0
        %v7989 = vmax.f32 %v6535, 0.0
        %v7990 = vmax.f32 %v6537, 0.0
        %v7991 = vmax.f32 %v7213, 0.0
        %v7992 = vmax.f32 %v7215, 0.0
        %v7993 = vmax.f32 %v7891, 0.0
        %v7994 = vmax.f32 %v7893, 0.0
        %v7995 = vmax.f32 %v5861, 0.0
        %v7996 = vmax.f32 %v5863, 0.0
        %v7997 = vmax.f32 %v6539, 0.0
        %v7998 = vmax.f32 %v6541, 0.0
        %v7999 = vmax.f32 %v7217, 0.0
        %v8000 = vmax.f32 %v7219, 0.0
        %v8001 = vmax.f32 %v7895, 0.0
        %v8002 = vmax.f32 %v7897, 0.0
        %v8003 = vmax.f32 %v5867, 0.0
        %v8004 = vmax.f32 %v5869, 0.0
        %v8005 = vmax.f32 %v6545, 0.0
        %v8006 = vmax.f32 %v6547, 0.0
        %v8007 = vmax.f32 %v7223, 0.0
        %v8008 = vmax.f32 %v7225, 0.0
        %v8009 = vmax.f32 %v7901, 0.0
        %v8010 = vmax.f32 %v7903, 0.0
        %v8011 = vmax.f32 %v5871, 0.0
        %v8012 = vmax.f32 %v5873, 0.0
        %v8013 = vmax.f32 %v6549, 0.0
        %v8014 = vmax.f32 %v6551, 0.0
        %v8015 = vmax.f32 %v7227, 0.0
        %v8016 = vmax.f32 %v7229, 0.0
        %v8017 = vmax.f32 %v7905, 0.0
        %v8018 = vmax.f32 %v7907, 0.0
        %v8019 = vmax.f32 %v5877, 0.0
        %v8020 = vmax.f32 %v5879, 0.0
        %v8021 = vmax.f32 %v6555, 0.0
        %v8022 = vmax.f32 %v6557, 0.0
        %v8023 = vmax.f32 %v7233, 0.0
        %v8024 = vmax.f32 %v7235, 0.0
        %v8025 = vmax.f32 %v7911, 0.0
        %v8026 = vmax.f32 %v7913, 0.0
        %v8027 = vmax.f32 %v5881, 0.0
        %v8028 = vmax.f32 %v5883, 0.0
        %v8029 = vmax.f32 %v6559, 0.0
        %v8030 = vmax.f32 %v6561, 0.0
        %v8031 = vmax.f32 %v7237, 0.0
        %v8032 = vmax.f32 %v7239, 0.0
        %v8033 = vmax.f32 %v7915, 0.0
        %v8034 = vmax.f32 %v7917, 0.0
        %v8035 = vmax.f32 %v5887, 0.0
        %v8036 = vmax.f32 %v5889, 0.0
        %v8037 = vmax.f32 %v6565, 0.0
        %v8038 = vmax.f32 %v6567, 0.0
        %v8039 = vmax.f32 %v7243, 0.0
        %v8040 = vmax.f32 %v7245, 0.0
        %v8041 = vmax.f32 %v7921, 0.0
        %v8042 = vmax.f32 %v7923, 0.0
        %v8043 = vmax.f32 %v5891, 0.0
        %v8044 = vmax.f32 %v5893, 0.0
        %v8045 = vmax.f32 %v6569, 0.0
        %v8046 = vmax.f32 %v6571, 0.0
        %v8047 = vmax.f32 %v7247, 0.0
        %v8048 = vmax.f32 %v7249, 0.0
        %v8049 = vmax.f32 %v7925, 0.0
        %v8050 = vmax.f32 %v7927, 0.0
        %v8051 = vmax.f32 %v5897, 0.0
        %v8052 = vmax.f32 %v5899, 0.0
        %v8053 = vmax.f32 %v6575, 0.0
        %v8054 = vmax.f32 %v6577, 0.0
        %v8055 = vmax.f32 %v7253, 0.0
        %v8056 = vmax.f32 %v7255, 0.0
        %v8057 = vmax.f32 %v7931, 0.0
        %v8058 = vmax.f32 %v7933, 0.0
        %v8059 = vmax.f32 %v5901, 0.0
        %v8060 = vmax.f32 %v5903, 0.0
        %v8061 = vmax.f32 %v6579, 0.0
        %v8062 = vmax.f32 %v6581, 0.0
        %v8063 = vmax.f32 %v7257, 0.0
        %v8064 = vmax.f32 %v7259, 0.0
        %v8065 = vmax.f32 %v7935, 0.0
        %v8066 = vmax.f32 %v7937, 0.0
        %v8067 = vld [vmem:[#allocation8] sm:$0xff]
        %v8069 = vlaneseq
        %v8070 = vshrl.u32 %v8069, 7
        %v8071 = vsub.s32 0, %v8070
        %v8072 = vrot.slane %v8067, %v8071
        %v8073 = vlaneseq
        %v8074 = vshrl.u32 %v8073, 7
        %v8075 = vsub.s32 1, %v8074
        %v8076 = vrot.slane %v8067, %v8075
        %v8077 = vlaneseq
        %v8078 = vshrl.u32 %v8077, 7
        %v8079 = vsub.s32 2, %v8078
        %v8080 = vrot.slane %v8067, %v8079
        %v8081 = vlaneseq
        %v8082 = vshrl.u32 %v8081, 7
        %v8083 = vsub.s32 3, %v8082
        %v8084 = vrot.slane %v8067, %v8083
        %v8085 = vlaneseq
        %v8086 = vshrl.u32 %v8085, 7
        %v8087 = vsub.s32 4, %v8086
        %v8088 = vrot.slane %v8067, %v8087
        %v8089 = vlaneseq
        %v8090 = vshrl.u32 %v8089, 7
        %v8091 = vsub.s32 5, %v8090
        %v8092 = vrot.slane %v8067, %v8091
        %v8093 = vlaneseq
        %v8094 = vshrl.u32 %v8093, 7
        %v8095 = vsub.s32 6, %v8094
        %v8096 = vrot.slane %v8067, %v8095
        %v8097 = vlaneseq
        %v8098 = vshrl.u32 %v8097, 7
        %v8099 = vsub.s32 7, %v8098
        %v8100 = vrot.slane %v8067, %v8099
        %v8109 = vmul.f32 %v7939, %v8072
        %v8110 = vmul.f32 %v7940, %v8076
        %v8111 = vmul.f32 %v7941, %v8080
        %v8112 = vmul.f32 %v7942, %v8084
        %v8113 = vmul.f32 %v7943, %v8088
        %v8114 = vmul.f32 %v7944, %v8092
        %v8115 = vmul.f32 %v7945, %v8096
        %v8116 = vmul.f32 %v7946, %v8100
        %v8117 = vmul.f32 %v7947, %v8072
        %v8118 = vmul.f32 %v7948, %v8076
        %v8119 = vmul.f32 %v7949, %v8080
        %v8120 = vmul.f32 %v7950, %v8084
        %v8121 = vmul.f32 %v7951, %v8088
        %v8122 = vmul.f32 %v7952, %v8092
        %v8123 = vmul.f32 %v7953, %v8096
        %v8124 = vmul.f32 %v7954, %v8100
        %v8125 = vmul.f32 %v7955, %v8072
        %v8126 = vmul.f32 %v7956, %v8076
        %v8127 = vmul.f32 %v7957, %v8080
        %v8128 = vmul.f32 %v7958, %v8084
        %v8129 = vmul.f32 %v7959, %v8088
        %v8130 = vmul.f32 %v7960, %v8092
        %v8131 = vmul.f32 %v7961, %v8096
        %v8132 = vmul.f32 %v7962, %v8100
        %v8133 = vmul.f32 %v7963, %v8072
        %v8134 = vmul.f32 %v7964, %v8076
        %v8135 = vmul.f32 %v7965, %v8080
        %v8136 = vmul.f32 %v7966, %v8084
        %v8137 = vmul.f32 %v7967, %v8088
        %v8138 = vmul.f32 %v7968, %v8092
        %v8139 = vmul.f32 %v7969, %v8096
        %v8140 = vmul.f32 %v7970, %v8100
        %v8141 = vmul.f32 %v7971, %v8072
        %v8142 = vmul.f32 %v7972, %v8076
        %v8143 = vmul.f32 %v7973, %v8080
        %v8144 = vmul.f32 %v7974, %v8084
        %v8145 = vmul.f32 %v7975, %v8088
        %v8146 = vmul.f32 %v7976, %v8092
        %v8147 = vmul.f32 %v7977, %v8096
        %v8148 = vmul.f32 %v7978, %v8100
        %v8149 = vmul.f32 %v7979, %v8072
        %v8150 = vmul.f32 %v7980, %v8076
        %v8151 = vmul.f32 %v7981, %v8080
        %v8152 = vmul.f32 %v7982, %v8084
        %v8153 = vmul.f32 %v7983, %v8088
        %v8154 = vmul.f32 %v7984, %v8092
        %v8155 = vmul.f32 %v7985, %v8096
        %v8156 = vmul.f32 %v7986, %v8100
        %v8157 = vmul.f32 %v7987, %v8072
        %v8158 = vmul.f32 %v7988, %v8076
        %v8159 = vmul.f32 %v7989, %v8080
        %v8160 = vmul.f32 %v7990, %v8084
        %v8161 = vmul.f32 %v7991, %v8088
        %v8162 = vmul.f32 %v7992, %v8092
        %v8163 = vmul.f32 %v7993, %v8096
        %v8164 = vmul.f32 %v7994, %v8100
        %v8165 = vmul.f32 %v7995, %v8072
        %v8166 = vmul.f32 %v7996, %v8076
        %v8167 = vmul.f32 %v7997, %v8080
        %v8168 = vmul.f32 %v7998, %v8084
        %v8169 = vmul.f32 %v7999, %v8088
        %v8170 = vmul.f32 %v8000, %v8092
        %v8171 = vmul.f32 %v8001, %v8096
        %v8172 = vmul.f32 %v8002, %v8100
        %v8173 = vmul.f32 %v8003, %v8072
        %v8174 = vmul.f32 %v8004, %v8076
        %v8175 = vmul.f32 %v8005, %v8080
        %v8176 = vmul.f32 %v8006, %v8084
        %v8177 = vmul.f32 %v8007, %v8088
        %v8178 = vmul.f32 %v8008, %v8092
        %v8179 = vmul.f32 %v8009, %v8096
        %v8180 = vmul.f32 %v8010, %v8100
        %v8181 = vmul.f32 %v8011, %v8072
        %v8182 = vmul.f32 %v8012, %v8076
        %v8183 = vmul.f32 %v8013, %v8080
        %v8184 = vmul.f32 %v8014, %v8084
        %v8185 = vmul.f32 %v8015, %v8088
        %v8186 = vmul.f32 %v8016, %v8092
        %v8187 = vmul.f32 %v8017, %v8096
        %v8188 = vmul.f32 %v8018, %v8100
        %v8189 = vmul.f32 %v8019, %v8072
        %v8190 = vmul.f32 %v8020, %v8076
        %v8191 = vmul.f32 %v8021, %v8080
        %v8192 = vmul.f32 %v8022, %v8084
        %v8193 = vmul.f32 %v8023, %v8088
        %v8194 = vmul.f32 %v8024, %v8092
        %v8195 = vmul.f32 %v8025, %v8096
        %v8196 = vmul.f32 %v8026, %v8100
        %v8197 = vmul.f32 %v8027, %v8072
        %v8198 = vmul.f32 %v8028, %v8076
        %v8199 = vmul.f32 %v8029, %v8080
        %v8200 = vmul.f32 %v8030, %v8084
        %v8201 = vmul.f32 %v8031, %v8088
        %v8202 = vmul.f32 %v8032, %v8092
        %v8203 = vmul.f32 %v8033, %v8096
        %v8204 = vmul.f32 %v8034, %v8100
        %v8205 = vmul.f32 %v8035, %v8072
        %v8206 = vmul.f32 %v8036, %v8076
        %v8207 = vmul.f32 %v8037, %v8080
        %v8208 = vmul.f32 %v8038, %v8084
        %v8209 = vmul.f32 %v8039, %v8088
        %v8210 = vmul.f32 %v8040, %v8092
        %v8211 = vmul.f32 %v8041, %v8096
        %v8212 = vmul.f32 %v8042, %v8100
        %v8213 = vmul.f32 %v8043, %v8072
        %v8214 = vmul.f32 %v8044, %v8076
        %v8215 = vmul.f32 %v8045, %v8080
        %v8216 = vmul.f32 %v8046, %v8084
        %v8217 = vmul.f32 %v8047, %v8088
        %v8218 = vmul.f32 %v8048, %v8092
        %v8219 = vmul.f32 %v8049, %v8096
        %v8220 = vmul.f32 %v8050, %v8100
        %v8221 = vmul.f32 %v8051, %v8072
        %v8222 = vmul.f32 %v8052, %v8076
        %v8223 = vmul.f32 %v8053, %v8080
        %v8224 = vmul.f32 %v8054, %v8084
        %v8225 = vmul.f32 %v8055, %v8088
        %v8226 = vmul.f32 %v8056, %v8092
        %v8227 = vmul.f32 %v8057, %v8096
        %v8228 = vmul.f32 %v8058, %v8100
        %v8229 = vmul.f32 %v8059, %v8072
        %v8230 = vmul.f32 %v8060, %v8076
        %v8231 = vmul.f32 %v8061, %v8080
        %v8232 = vmul.f32 %v8062, %v8084
        %v8233 = vmul.f32 %v8063, %v8088
        %v8234 = vmul.f32 %v8064, %v8092
        %v8235 = vmul.f32 %v8065, %v8096
        %v8236 = vmul.f32 %v8066, %v8100
        %v8237 = vadd.f32 %v8109, %v8110
        %v8238 = vadd.f32 %v8237, %v8111
        %v8239 = vadd.f32 %v8238, %v8112
        %v8240 = vadd.f32 %v8239, %v8113
        %v8241 = vadd.f32 %v8240, %v8114
        %v8242 = vadd.f32 %v8241, %v8115
        %v8243 = vadd.f32 %v8242, %v8116
        %8244 = vadd.xlane.f32.xlu0 %v8243
        %v8245 = vpop.xlane.xlu0 %8244
        %v8246 = vadd.f32 %v8117, %v8118
        %v8247 = vadd.f32 %v8246, %v8119
        %v8248 = vadd.f32 %v8247, %v8120
        %v8249 = vadd.f32 %v8248, %v8121
        %v8250 = vadd.f32 %v8249, %v8122
        %v8251 = vadd.f32 %v8250, %v8123
        %v8252 = vadd.f32 %v8251, %v8124
        %8253 = vadd.xlane.f32.xlu0 %v8252
        %v8254 = vpop.xlane.xlu0 %8253
        %v8255 = vadd.f32 %v8125, %v8126
        %v8256 = vadd.f32 %v8255, %v8127
        %v8257 = vadd.f32 %v8256, %v8128
        %v8258 = vadd.f32 %v8257, %v8129
        %v8259 = vadd.f32 %v8258, %v8130
        %v8260 = vadd.f32 %v8259, %v8131
        %v8261 = vadd.f32 %v8260, %v8132
        %8262 = vadd.xlane.f32.xlu0 %v8261
        %v8263 = vpop.xlane.xlu0 %8262
        %v8264 = vadd.f32 %v8133, %v8134
        %v8265 = vadd.f32 %v8264, %v8135
        %v8266 = vadd.f32 %v8265, %v8136
        %v8267 = vadd.f32 %v8266, %v8137
        %v8268 = vadd.f32 %v8267, %v8138
        %v8269 = vadd.f32 %v8268, %v8139
        %v8270 = vadd.f32 %v8269, %v8140
        %8271 = vadd.xlane.f32.xlu0 %v8270
        %v8272 = vpop.xlane.xlu0 %8271
        %v8273 = vadd.f32 %v8141, %v8142
        %v8274 = vadd.f32 %v8273, %v8143
        %v8275 = vadd.f32 %v8274, %v8144
        %v8276 = vadd.f32 %v8275, %v8145
        %v8277 = vadd.f32 %v8276, %v8146
        %v8278 = vadd.f32 %v8277, %v8147
        %v8279 = vadd.f32 %v8278, %v8148
        %8280 = vadd.xlane.f32.xlu0 %v8279
        %v8281 = vpop.xlane.xlu0 %8280
        %v8282 = vadd.f32 %v8149, %v8150
        %v8283 = vadd.f32 %v8282, %v8151
        %v8284 = vadd.f32 %v8283, %v8152
        %v8285 = vadd.f32 %v8284, %v8153
        %v8286 = vadd.f32 %v8285, %v8154
        %v8287 = vadd.f32 %v8286, %v8155
        %v8288 = vadd.f32 %v8287, %v8156
        %8289 = vadd.xlane.f32.xlu0 %v8288
        %v8290 = vpop.xlane.xlu0 %8289
        %v8291 = vadd.f32 %v8157, %v8158
        %v8292 = vadd.f32 %v8291, %v8159
        %v8293 = vadd.f32 %v8292, %v8160
        %v8294 = vadd.f32 %v8293, %v8161
        %v8295 = vadd.f32 %v8294, %v8162
        %v8296 = vadd.f32 %v8295, %v8163
        %v8297 = vadd.f32 %v8296, %v8164
        %8298 = vadd.xlane.f32.xlu0 %v8297
        %v8299 = vpop.xlane.xlu0 %8298
        %v8300 = vadd.f32 %v8165, %v8166
        %v8301 = vadd.f32 %v8300, %v8167
        %v8302 = vadd.f32 %v8301, %v8168
        %v8303 = vadd.f32 %v8302, %v8169
        %v8304 = vadd.f32 %v8303, %v8170
        %v8305 = vadd.f32 %v8304, %v8171
        %v8306 = vadd.f32 %v8305, %v8172
        %8307 = vadd.xlane.f32.xlu0 %v8306
        %v8308 = vpop.xlane.xlu0 %8307
        %v8309 = vadd.f32 %v8173, %v8174
        %v8310 = vadd.f32 %v8309, %v8175
        %v8311 = vadd.f32 %v8310, %v8176
        %v8312 = vadd.f32 %v8311, %v8177
        %v8313 = vadd.f32 %v8312, %v8178
        %v8314 = vadd.f32 %v8313, %v8179
        %v8315 = vadd.f32 %v8314, %v8180
        %8316 = vadd.xlane.f32.xlu0 %v8315
        %v8317 = vpop.xlane.xlu0 %8316
        %v8318 = vadd.f32 %v8181, %v8182
        %v8319 = vadd.f32 %v8318, %v8183
        %v8320 = vadd.f32 %v8319, %v8184
        %v8321 = vadd.f32 %v8320, %v8185
        %v8322 = vadd.f32 %v8321, %v8186
        %v8323 = vadd.f32 %v8322, %v8187
        %v8324 = vadd.f32 %v8323, %v8188
        %8325 = vadd.xlane.f32.xlu0 %v8324
        %v8326 = vpop.xlane.xlu0 %8325
        %v8327 = vadd.f32 %v8189, %v8190
        %v8328 = vadd.f32 %v8327, %v8191
        %v8329 = vadd.f32 %v8328, %v8192
        %v8330 = vadd.f32 %v8329, %v8193
        %v8331 = vadd.f32 %v8330, %v8194
        %v8332 = vadd.f32 %v8331, %v8195
        %v8333 = vadd.f32 %v8332, %v8196
        %8334 = vadd.xlane.f32.xlu0 %v8333
        %v8335 = vpop.xlane.xlu0 %8334
        %v8336 = vadd.f32 %v8197, %v8198
        %v8337 = vadd.f32 %v8336, %v8199
        %v8338 = vadd.f32 %v8337, %v8200
        %v8339 = vadd.f32 %v8338, %v8201
        %v8340 = vadd.f32 %v8339, %v8202
        %v8341 = vadd.f32 %v8340, %v8203
        %v8342 = vadd.f32 %v8341, %v8204
        %8343 = vadd.xlane.f32.xlu0 %v8342
        %v8344 = vpop.xlane.xlu0 %8343
        %v8345 = vadd.f32 %v8205, %v8206
        %v8346 = vadd.f32 %v8345, %v8207
        %v8347 = vadd.f32 %v8346, %v8208
        %v8348 = vadd.f32 %v8347, %v8209
        %v8349 = vadd.f32 %v8348, %v8210
        %v8350 = vadd.f32 %v8349, %v8211
        %v8351 = vadd.f32 %v8350, %v8212
        %8352 = vadd.xlane.f32.xlu0 %v8351
        %v8353 = vpop.xlane.xlu0 %8352
        %v8354 = vadd.f32 %v8213, %v8214
        %v8355 = vadd.f32 %v8354, %v8215
        %v8356 = vadd.f32 %v8355, %v8216
        %v8357 = vadd.f32 %v8356, %v8217
        %v8358 = vadd.f32 %v8357, %v8218
        %v8359 = vadd.f32 %v8358, %v8219
        %v8360 = vadd.f32 %v8359, %v8220
        %8361 = vadd.xlane.f32.xlu0 %v8360
        %v8362 = vpop.xlane.xlu0 %8361
        %v8363 = vadd.f32 %v8221, %v8222
        %v8364 = vadd.f32 %v8363, %v8223
        %v8365 = vadd.f32 %v8364, %v8224
        %v8366 = vadd.f32 %v8365, %v8225
        %v8367 = vadd.f32 %v8366, %v8226
        %v8368 = vadd.f32 %v8367, %v8227
        %v8369 = vadd.f32 %v8368, %v8228
        %8370 = vadd.xlane.f32.xlu0 %v8369
        %v8371 = vpop.xlane.xlu0 %8370
        %v8372 = vadd.f32 %v8229, %v8230
        %v8373 = vadd.f32 %v8372, %v8231
        %v8374 = vadd.f32 %v8373, %v8232
        %v8375 = vadd.f32 %v8374, %v8233
        %v8376 = vadd.f32 %v8375, %v8234
        %v8377 = vadd.f32 %v8376, %v8235
        %v8378 = vadd.f32 %v8377, %v8236
        %8379 = vadd.xlane.f32.xlu0 %v8378
        %v8380 = vpop.xlane.xlu0 %8379
        %s8381 = sld [smem:[#allocation2]]
        %v8382 = vstv %s8381
        %v8383 = vadd.f32 %v8245, %v8382
        %v8384 = vadd.f32 %v8254, %v8382
        %v8385 = vadd.f32 %v8263, %v8382
        %v8386 = vadd.f32 %v8272, %v8382
        %v8387 = vadd.f32 %v8281, %v8382
        %v8388 = vadd.f32 %v8290, %v8382
        %v8389 = vadd.f32 %v8299, %v8382
        %v8390 = vadd.f32 %v8308, %v8382
        %v8391 = vadd.f32 %v8317, %v8382
        %v8392 = vadd.f32 %v8326, %v8382
        %v8393 = vadd.f32 %v8335, %v8382
        %v8394 = vadd.f32 %v8344, %v8382
        %v8395 = vadd.f32 %v8353, %v8382
        %v8396 = vadd.f32 %v8362, %v8382
        %v8397 = vadd.f32 %v8371, %v8382
        %v8398 = vadd.f32 %v8380, %v8382
        %v8399 = vxor.u32 %v8383, 2147483648
        %v8400 = vxor.u32 %v8384, 2147483648
        %v8401 = vxor.u32 %v8385, 2147483648
        %v8402 = vxor.u32 %v8386, 2147483648
        %v8403 = vxor.u32 %v8387, 2147483648
        %v8404 = vxor.u32 %v8388, 2147483648
        %v8405 = vxor.u32 %v8389, 2147483648
        %v8406 = vxor.u32 %v8390, 2147483648
        %v8407 = vxor.u32 %v8391, 2147483648
        %v8408 = vxor.u32 %v8392, 2147483648
        %v8409 = vxor.u32 %v8393, 2147483648
        %v8410 = vxor.u32 %v8394, 2147483648
        %v8411 = vxor.u32 %v8395, 2147483648
        %v8412 = vxor.u32 %v8396, 2147483648
        %v8413 = vxor.u32 %v8397, 2147483648
        %v8414 = vxor.u32 %v8398, 2147483648
        %v8415 = vmul.f32 %v8399, 1.442695
        %v8416 = vpow.pop %v8415
        %v8417 = vmul.f32 %v8400, 1.442695
        %v8418 = vpow.pop %v8417
        %v8419 = vmul.f32 %v8401, 1.442695
        %v8420 = vpow.pop %v8419
        %v8421 = vmul.f32 %v8402, 1.442695
        %v8422 = vpow.pop %v8421
        %v8423 = vmul.f32 %v8403, 1.442695
        %v8424 = vpow.pop %v8423
        %v8425 = vmul.f32 %v8404, 1.442695
        %v8426 = vpow.pop %v8425
        %v8427 = vmul.f32 %v8405, 1.442695
        %v8428 = vpow.pop %v8427
        %v8429 = vmul.f32 %v8406, 1.442695
        %v8430 = vpow.pop %v8429
        %v8431 = vmul.f32 %v8407, 1.442695
        %v8432 = vpow.pop %v8431
        %v8433 = vmul.f32 %v8408, 1.442695
        %v8434 = vpow.pop %v8433
        %v8435 = vmul.f32 %v8409, 1.442695
        %v8436 = vpow.pop %v8435
        %v8437 = vmul.f32 %v8410, 1.442695
        %v8438 = vpow.pop %v8437
        %v8439 = vmul.f32 %v8411, 1.442695
        %v8440 = vpow.pop %v8439
        %v8441 = vmul.f32 %v8412, 1.442695
        %v8442 = vpow.pop %v8441
        %v8443 = vmul.f32 %v8413, 1.442695
        %v8444 = vpow.pop %v8443
        %v8445 = vmul.f32 %v8414, 1.442695
        %v8446 = vpow.pop %v8445
        %v8447 = vadd.f32 %v8416, 1.0
        %v8448 = vadd.f32 %v8418, 1.0
        %v8449 = vadd.f32 %v8420, 1.0
        %v8450 = vadd.f32 %v8422, 1.0
        %v8451 = vadd.f32 %v8424, 1.0
        %v8452 = vadd.f32 %v8426, 1.0
        %v8453 = vadd.f32 %v8428, 1.0
        %v8454 = vadd.f32 %v8430, 1.0
        %v8455 = vadd.f32 %v8432, 1.0
        %v8456 = vadd.f32 %v8434, 1.0
        %v8457 = vadd.f32 %v8436, 1.0
        %v8458 = vadd.f32 %v8438, 1.0
        %v8459 = vadd.f32 %v8440, 1.0
        %v8460 = vadd.f32 %v8442, 1.0
        %v8461 = vadd.f32 %v8444, 1.0
        %v8462 = vadd.f32 %v8446, 1.0
        %v8463 = vrcp.pop %v8447
        %v8464 = vmul.f32 1.0, %v8463
        %v8465 = vrcp.pop %v8448
        %v8466 = vmul.f32 1.0, %v8465
        %v8467 = vrcp.pop %v8449
        %v8468 = vmul.f32 1.0, %v8467
        %v8469 = vrcp.pop %v8450
        %v8470 = vmul.f32 1.0, %v8469
        %v8471 = vrcp.pop %v8451
        %v8472 = vmul.f32 1.0, %v8471
        %v8473 = vrcp.pop %v8452
        %v8474 = vmul.f32 1.0, %v8473
        %v8475 = vrcp.pop %v8453
        %v8476 = vmul.f32 1.0, %v8475
        %v8477 = vrcp.pop %v8454
        %v8478 = vmul.f32 1.0, %v8477
        %v8479 = vrcp.pop %v8455
        %v8480 = vmul.f32 1.0, %v8479
        %v8481 = vrcp.pop %v8456
        %v8482 = vmul.f32 1.0, %v8481
        %v8483 = vrcp.pop %v8457
        %v8484 = vmul.f32 1.0, %v8483
        %v8485 = vrcp.pop %v8458
        %v8486 = vmul.f32 1.0, %v8485
        %v8487 = vrcp.pop %v8459
        %v8488 = vmul.f32 1.0, %v8487
        %v8489 = vrcp.pop %v8460
        %v8490 = vmul.f32 1.0, %v8489
        %v8491 = vrcp.pop %v8461
        %v8492 = vmul.f32 1.0, %v8491
        %v8493 = vrcp.pop %v8462
        %v8494 = vmul.f32 1.0, %v8493
        %vm8495 = vcmask 7168
        %8496 = vst.msk [vmem:[%s287] sm:$0xff] %vm8495, %v8464
        %8497 = vst.msk [vmem:[%s287 + $0x8] sm:$0xff] %vm8495, %v8466
        %8498 = vst.msk [vmem:[%s287 + $0x10] sm:$0xff] %vm8495, %v8468
        %8499 = vst.msk [vmem:[%s287 + $0x18] sm:$0xff] %vm8495, %v8470
        %8500 = vst.msk [vmem:[%s287 + $0x20] sm:$0xff] %vm8495, %v8472
        %8501 = vst.msk [vmem:[%s287 + $0x28] sm:$0xff] %vm8495, %v8474
        %8502 = vst.msk [vmem:[%s287 + $0x30] sm:$0xff] %vm8495, %v8476
        %8503 = vst.msk [vmem:[%s287 + $0x38] sm:$0xff] %vm8495, %v8478
        %8504 = vst.msk [vmem:[%s287 + $0x40] sm:$0xff] %vm8495, %v8480
        %8505 = vst.msk [vmem:[%s287 + $0x48] sm:$0xff] %vm8495, %v8482
        %8506 = vst.msk [vmem:[%s287 + $0x50] sm:$0xff] %vm8495, %v8484
        %8507 = vst.msk [vmem:[%s287 + $0x58] sm:$0xff] %vm8495, %v8486
        %8508 = vst.msk [vmem:[%s287 + $0x60] sm:$0xff] %vm8495, %v8488
        %8509 = vst.msk [vmem:[%s287 + $0x68] sm:$0xff] %vm8495, %v8490
        %8510 = vst.msk [vmem:[%s287 + $0x70] sm:$0xff] %vm8495, %v8492
        %8511 = vst.msk [vmem:[%s287 + $0x78] sm:$0xff] %vm8495, %v8494
        %s8512 = smul.u32 16, %s22
        %p8513 = scmp.lt.s32.totalorder %s8512, 31
        %s8514 = scalar_select %p8513, %s8512, 31
        %s8515 = smul.addr %s8514, 8
        %s8516 = scalar_lea.vmem %s5, %s8515
        // Predicated region
        $region57: #{tpu_custom_call.1} parent=39 // pred_check
          %p8517 = pneg %p150
        $region58: #{tpu_custom_call.1} parent=39 // pred_check_branch
          %8519 = sbr.rel (%p8517) target = $region60
        $region59: #{tpu_custom_call.1} parent=39 // pred_region
          %s8520 = smul.u32 16, %s22
        $region60: #{tpu_custom_call.1} parent=39 // pred_fallthru
          _
      $region40: #{tpu_custom_call.1} parent=5 // pred_fallthru
        _
      %p8521 = scmp.le.s32.totalorder 2, %s17
      // Predicated region
      $region61: #{tpu_custom_call.1} parent=5 // pred_check
        %p8522 = pneg %p8521
      $region62: #{tpu_custom_call.1} parent=5 // pred_check_branch
        %8524 = sbr.rel (%p8522) target = $region64
      $region63: #{tpu_custom_call.1} parent=5 // pred_region
        %s8525 = ssub.s32 %s17, 2
        // Predicated region
        $region65: #{tpu_custom_call.1} parent=63 // pred_check
          %p8526 = pneg %p156
        $region66: #{tpu_custom_call.1} parent=63 // pred_check_branch
          %8528 = sbr.rel (%p8526) target = $region68
        $region67: #{tpu_custom_call.1} parent=63 // pred_region
          %s8529 = smul.u32 16, %s23
          %p8530 = scmp.lt.s32.totalorder %s8529, 31
          %s8531 = scalar_select %p8530, %s8529, 31
          %s8532 = smul.addr %s8531, 8
          %s8533 = scalar_lea.vmem %s5, %s8532
        $region68: #{tpu_custom_call.1} parent=63 // pred_fallthru
          _
      $region64: #{tpu_custom_call.1} parent=5 // pred_fallthru
        _
    $region6: #{tpu_custom_call.1} parent=1 // loop_footer
      %s21 = sadd.s32 1, %s17
    $region7: #{tpu_custom_call.1} parent=1 // loop_footer_branch
      %16 = sbr.rel target = $region3
    $region8: #{tpu_custom_call.1} parent=1 // loop_exit
      _
    %8534 = vsyncpa [#allocation4], 1
    %s8535 = scalar_lea.sflag [#allocation4], 1
    %8536 = vsyncpa %s8535, 1
    %8537 = vsyncpa [#allocation6], 1
    %8538 = vsyncpa [#allocation9], 1

</llo_original>
